<compile_context>
chip_gen: v7x
topology: tpu7x:2x2x1
jax: 0.10.0
libtpu: 0.0.40
codegen_flags: <defaults>
</compile_context>

<pallas_src>
import functools
import math

import jax
import jax.numpy as jnp
from jax import lax
from jax.experimental import pallas as pl
from jax.experimental.pallas import tpu as pltpu


def _round_up(x, m):
    return ((x + m - 1) // m) * m


def _vmem_limit_bytes(resident, streamed):
    est = int(resident + 2 * streamed) + (4 << 20)
    return max(32 << 20, min(est, 96 << 20))


# ----------------------------------------------------------------------------
# Shared gate math (PyTorch gate order i, f, g, o); gates/elementwise in f32,
# matmuls in bf16 with f32 accumulation.
# ----------------------------------------------------------------------------
def _gates(g, c, Hp):
    i = jax.nn.sigmoid(g[:, 0 * Hp:1 * Hp])
    f = jax.nn.sigmoid(g[:, 1 * Hp:2 * Hp])
    gg = jnp.tanh(g[:, 2 * Hp:3 * Hp])
    o = jax.nn.sigmoid(g[:, 3 * Hp:4 * Hp])
    c_new = f * c + i * gg
    h_new = o * jnp.tanh(c_new)
    return h_new, c_new


def _lstm_cell(x, h, c, wx, wh, b, Hp):
    """x:(B,In) h,c:(B,Hp) wx:(In,4Hp) wh:(Hp,4Hp) bf16, b:(1,4Hp) f32."""
    g = (jnp.dot(x.astype(jnp.bfloat16), wx, preferred_element_type=jnp.float32)
         + jnp.dot(h.astype(jnp.bfloat16), wh, preferred_element_type=jnp.float32)
         + b)
    return _gates(g, c, Hp)


# ----------------------------------------------------------------------------
# Encoder: fused, time-blocked recurrence.  Layer-0 input projection is
# precomputed outside (streamed pre-activations); only h@W_hh runs in here.
# ----------------------------------------------------------------------------
def _encoder_seq_kernel(pre_ref, wh0_ref, wx1_ref, wh1_ref, b1_ref,
                        h0_ref, c0_ref, h1_ref, c1_ref, *, Hp, TS):
    tb = pl.program_id(0)

    @pl.when(tb == 0)
    def _init():
        z = jnp.zeros(h0_ref.shape, jnp.float32)
        h0_ref[...] = z
        c0_ref[...] = z
        h1_ref[...] = z
        c1_ref[...] = z

    wh0 = wh0_ref[...]
    wx1 = wx1_ref[...]
    wh1 = wh1_ref[...]
    b1 = b1_ref[...]

    def body(ts, carry):
        h0, c0, h1, c1 = carry
        g0 = pre_ref[ts] + jnp.dot(h0.astype(jnp.bfloat16), wh0,
                                   preferred_element_type=jnp.float32)
        h0, c0 = _gates(g0, c0, Hp)
        # TODO(synk): inter-layer dropout (p=0.5) treated as identity (eval mode)
        g1 = (jnp.dot(h0.astype(jnp.bfloat16), wx1, preferred_element_type=jnp.float32)
              + jnp.dot(h1.astype(jnp.bfloat16), wh1, preferred_element_type=jnp.float32)
              + b1)
        h1, c1 = _gates(g1, c1, Hp)
        return h0, c0, h1, c1

    h0, c0, h1, c1 = lax.fori_loop(
        0, TS, body,
        (h0_ref[...], c0_ref[...], h1_ref[...], c1_ref[...]),
        unroll=True)
    h0_ref[...] = h0
    c0_ref[...] = c0
    h1_ref[...] = h1
    c1_ref[...] = c1


def encoder_forward(pre0, wh0, wx1, wh1, b1):
    """pre0: (S, Bp, 4Hp) f32 precomputed x@W_ih0+b0.  Returns final h0,c0,h1,c1."""
    S, Bp, G = pre0.shape
    Hp = G // 4
    TS = next(t for t in (8, 4, 2, 1) if S % t == 0)
    resident = (wh0.size + wx1.size + wh1.size) * 2 + b1.size * 4 + 4 * Bp * Hp * 4
    streamed = TS * Bp * G * 4
    kernel = functools.partial(_encoder_seq_kernel, Hp=Hp, TS=TS)
    state_spec = pl.BlockSpec((Bp, Hp), lambda tb: (0, 0))
    return pl.pallas_call(
        kernel,
        grid=(S // TS,),
        in_specs=[
            pl.BlockSpec((TS, Bp, G), lambda tb: (tb, 0, 0)),   # streamed pre-activations
            pl.BlockSpec((Hp, G), lambda tb: (0, 0)),           # resident W_hh0 (bf16)
            pl.BlockSpec((Hp, G), lambda tb: (0, 0)),           # resident W_ih1 (bf16)
            pl.BlockSpec((Hp, G), lambda tb: (0, 0)),           # resident W_hh1 (bf16)
            pl.BlockSpec((1, G), lambda tb: (0, 0)),            # resident b1
        ],
        out_specs=tuple(state_spec for _ in range(4)),
        out_shape=tuple(jax.ShapeDtypeStruct((Bp, Hp), jnp.float32) for _ in range(4)),
        compiler_params=pltpu.CompilerParams(
            dimension_semantics=("arbitrary",),
            vmem_limit_bytes=_vmem_limit_bytes(resident, streamed)),
    )(pre0, wh0, wx1, wh1, b1)


# ----------------------------------------------------------------------------
# Decoder: ONE fused kernel for the whole decode loop.
#   grid = (T-1, Vp//TV); weights/embedding table resident, fc_w streamed per
#   vocab tile, h/c + running argmax in VMEM scratch, TF flags in SMEM.
# ----------------------------------------------------------------------------
def _pick_v_tile(Vp, Hp, Bp, resident_bytes, budget=40 << 20):
    for cand in (4096, 2048, 1024, 512, 256, 128):
        if Vp % cand == 0:
            tile_bytes = 2 * (Hp * cand * 2 + cand * 4 + Bp * cand * 4)
            if resident_bytes + tile_bytes <= budget:
                return cand
    return 128


def _decoder_seq_kernel(tf_ref, xt_ref, h0i_ref, c0i_ref, h1i_ref, c1i_ref,
                        wx0_ref, wh0_ref, b0_ref, wx1_ref, wh1_ref, b1_ref,
                        emb_ref, fcw_ref, fcb_ref,
                        out_ref,
                        h0_scr, c0_scr, h1_scr, c1_scr, m_scr, a_scr,
                        *, Hp, V, TV):
    s = pl.program_id(0)
    j = pl.program_id(1)
    Bp = h0_scr.shape[0]
    Vp = emb_ref.shape[0]

    @pl.when(j == 0)
    def _recurrence():
        @pl.when(s == 0)
        def _init():
            h0_scr[...] = h0i_ref[...]
            c0_scr[...] = c0i_ref[...]
            h1_scr[...] = h1i_ref[...]
            c1_scr[...] = c1i_ref[...]
            a_scr[...] = jnp.zeros(a_scr.shape, jnp.float32)

        # Input embedding: teacher token (streamed) or previous step's argmax,
        # gathered from the resident embedding table via a one-hot matmul.
        onehot = (lax.broadcasted_iota(jnp.int32, (Bp, Vp), 1).astype(jnp.float32)
                  == a_scr[...]).astype(jnp.bfloat16)
        x_pred = jnp.dot(onehot, emb_ref[...],
                         preferred_element_type=jnp.float32).astype(jnp.bfloat16)
        use_tf = tf_ref[s] != 0
        x = jnp.where(use_tf, xt_ref[...], x_pred)

        h0, c0 = _lstm_cell(x, h0_scr[...], c0_scr[...],
                            wx0_ref[...], wh0_ref[...], b0_ref[...], Hp)
        h0_scr[...] = h0
        c0_scr[...] = c0
        # TODO(synk): inter-layer dropout (p=0.5) treated as identity (eval mode)
        h1, c1 = _lstm_cell(h0, h1_scr[...], c1_scr[...],
                            wx1_ref[...], wh1_ref[...], b1_ref[...], Hp)
        h1_scr[...] = h1
        c1_scr[...] = c1

        m_scr[...] = jnp.full(m_scr.shape, -jnp.inf, jnp.float32)

    # fc_out vocab tile (lane-dense output block).
    logits = (jnp.dot(h1_scr[...].astype(jnp.bfloat16), fcw_ref[...],
                      preferred_element_type=jnp.float32) + fcb_ref[...])
    out_ref[...] = logits

    # Running (masked) argmax across vocab tiles -> feeds the next step's input.
    gcol = j * TV + lax.broadcasted_iota(jnp.int32, (Bp, TV), 1)
    masked = jnp.where(gcol < V, logits, -jnp.inf)
    t_max = jnp.max(masked, axis=1, keepdims=True)
    t_arg = jnp.min(jnp.where(masked == t_max, gcol.astype(jnp.float32), 1e9),
                    axis=1, keepdims=True)
    better = t_max > m_scr[...]
    a_scr[...] = jnp.where(better, t_arg, a_scr[...])
    m_scr[...] = jnp.maximum(t_max, m_scr[...])


def decoder_forward(tf_use, tf_emb, h0, c0, h1, c1,
                    wx0, wh0, b0, wx1, wh1, b1, emb_p, fc_w, fc_b, V):
    """tf_use:(T-1,) i32  tf_emb:(T-1,Bp,Ep) bf16  states:(Bp,Hp) f32
       emb_p:(Vp,Ep) bf16  fc_w:(Hp,Vp) bf16 -> logits (T-1,Bp,Vp) f32."""
    Tm1, Bp, Ep = tf_emb.shape
    Hp = h0.shape[1]
    Vp = fc_w.shape[1]
    G = 4 * Hp
    resident = ((wx0.size + wh0.size + wx1.size + wh1.size + emb_p.size) * 2
                + (b0.size + b1.size) * 4
                + 8 * Bp * Hp * 4 + 2 * Bp * 4)
    TV = _pick_v_tile(Vp, Hp, Bp, resident)
    streamed = Bp * Ep * 2 + Hp * TV * 2 + TV * 4 + Bp * TV * 4
    kernel = functools.partial(_decoder_seq_kernel, Hp=Hp, V=V, TV=TV)
    const = lambda s, j, tf: (0, 0)

    grid_spec = pltpu.PrefetchScalarGridSpec(
        num_scalar_prefetch=1,                       # tf_use -> SMEM
        grid=(Tm1, Vp // TV),
        in_specs=[
            pl.BlockSpec((None, Bp, Ep), lambda s, j, tf: (s, 0, 0)),  # teacher x_t
            pl.BlockSpec((Bp, Hp), const), pl.BlockSpec((Bp, Hp), const),
            pl.BlockSpec((Bp, Hp), const), pl.BlockSpec((Bp, Hp), const),
            pl.BlockSpec((Ep, G), const),            # resident W_ih0 (bf16)
            pl.BlockSpec((Hp, G), const),            # resident W_hh0
            pl.BlockSpec((1, G), const),             # resident b0
            pl.BlockSpec((Hp, G), const),            # resident W_ih1
            pl.BlockSpec((Hp, G), const),            # resident W_hh1
            pl.BlockSpec((1, G), const),             # resident b1
            pl.BlockSpec((Vp, Ep), const),           # resident decoder embedding table
            pl.BlockSpec((Hp, TV), lambda s, j, tf: (0, j)),   # streamed fc_w tile
            pl.BlockSpec((1, TV), lambda s, j, tf: (0, j)),    # streamed fc_b tile
        ],
        out_specs=pl.BlockSpec((None, Bp, TV), lambda s, j, tf: (s, 0, j)),
        scratch_shapes=[pltpu.VMEM((Bp, Hp), jnp.float32) for _ in range(4)]
                       + [pltpu.VMEM((Bp, 1), jnp.float32),    # running max
                          pltpu.VMEM((Bp, 1), jnp.float32)],   # running argmax (as f32)
    )
    return pl.pallas_call(
        kernel,
        grid_spec=grid_spec,
        out_shape=jax.ShapeDtypeStruct((Tm1, Bp, Vp), jnp.float32),
        compiler_params=pltpu.CompilerParams(
            dimension_semantics=("arbitrary", "arbitrary"),
            vmem_limit_bytes=_vmem_limit_bytes(resident, streamed)),
    )(tf_use, tf_emb, h0, c0, h1, c1, wx0, wh0, b0, wx1, wh1, b1, emb_p, fc_w, fc_b)


# ----------------------------------------------------------------------------
# Full Seq2Seq forward (jittable; teacher-forcing flags precomputed on device)
# ----------------------------------------------------------------------------
@functools.partial(jax.jit, static_argnames=("output_dim",))
def seq2seq_forward(src, trg, tf_flags, params, output_dim):
    """src:(B,S) trg:(B,T) int32, tf_flags:(T,) bool -> outputs (B,T,V)."""
    B, S = src.shape
    _, T = trg.shape
    V = output_dim
    Bp = _round_up(B, 8)

    src_p = jnp.pad(src, ((0, Bp - B), (0, 0)))
    trg_p = jnp.pad(trg, ((0, Bp - B), (0, 0)))

    # -------- encoder --------
    # time-major gather + hoisted layer-0 input projection (one big matmul)
    emb = jnp.take(params["enc_emb"], src_p.T, axis=0)               # (S, Bp, Ep) bf16
    pre0 = (jnp.einsum("sbe,eg->sbg", emb, params["enc_wx0"],
                       preferred_element_type=jnp.float32)
            + params["enc_b0"])                                      # (S, Bp, 4Hp) f32
    h0, c0, h1, c1 = encoder_forward(pre0, params["enc_wh0"], params["enc_wx1"],
                                     params["enc_wh1"], params["enc_b1"])

    # -------- decoder: single fused kernel over all T-1 steps --------
    # tf_use[s]: step 0 always uses trg[:,0]; step s>0 uses trg[:,s] iff tf_flags[s].
    tf_use = jnp.concatenate(
        [jnp.ones((1,), jnp.int32), tf_flags[1:T - 1].astype(jnp.int32)])   # (T-1,)
    tf_emb = jnp.take(params["dec_emb"], trg_p[:, :T - 1].T, axis=0)        # (T-1,Bp,Ep)
    logits_seq = decoder_forward(
        tf_use, tf_emb, h0, c0, h1, c1,
        params["dec_wx0"], params["dec_wh0"], params["dec_b0"],
        params["dec_wx1"], params["dec_wh1"], params["dec_b1"],
        params["dec_emb"], params["fc_w"], params["fc_b"], V)               # (T-1,Bp,Vp)

    outputs = jnp.concatenate(
        [jnp.zeros((1, Bp, V), jnp.float32), logits_seq[:, :, :V]], axis=0)  # (T,Bp,V)
    return jnp.transpose(outputs, (1, 0, 2))[:B]                             # (B,T,V)


# ----------------------------------------------------------------------------
# Deterministic parameter construction (padded, zero-fill => exact math; bf16)
# ----------------------------------------------------------------------------
def _make_lstm_layer(key, in_dim, hid_dim, in_pad, hid_pad):
    k1, k2, k3, k4 = jax.random.split(key, 4)
    bound = 1.0 / math.sqrt(hid_dim)
    w_ih = jax.random.uniform(k1, (4 * hid_dim, in_dim), jnp.float32, -bound, bound)
    w_hh = jax.random.uniform(k2, (4 * hid_dim, hid_dim), jnp.float32, -bound, bound)
    b_ih = jax.random.uniform(k3, (4 * hid_dim,), jnp.float32, -bound, bound)
    b_hh = jax.random.uniform(k4, (4 * hid_dim,), jnp.float32, -bound, bound)
    wx = jnp.zeros((in_pad, 4 * hid_pad), jnp.float32)
    wh = jnp.zeros((hid_pad, 4 * hid_pad), jnp.float32)
    b = jnp.zeros((1, 4 * hid_pad), jnp.float32)
    for g in range(4):
        col = g * hid_pad
        wx = wx.at[:in_dim, col:col + hid_dim].set(
            w_ih[g * hid_dim:(g + 1) * hid_dim, :].T)
        wh = wh.at[:hid_dim, col:col + hid_dim].set(
            w_hh[g * hid_dim:(g + 1) * hid_dim, :].T)
        b = b.at[0, col:col + hid_dim].set(
            b_ih[g * hid_dim:(g + 1) * hid_dim] + b_hh[g * hid_dim:(g + 1) * hid_dim])
    return wx.astype(jnp.bfloat16), wh.astype(jnp.bfloat16), b


def make_params(key, input_dim, output_dim, emb_dim, hid_dim):
    Ep = _round_up(emb_dim, 128)
    Hp = _round_up(hid_dim, 128)
    Vp = _round_up(output_dim, 128)
    keys = jax.random.split(key, 8)
    enc_emb = jax.random.normal(keys[0], (input_dim, emb_dim), jnp.float32)
    dec_emb = jax.random.normal(keys[1], (output_dim, emb_dim), jnp.float32)
    enc_emb = jnp.pad(enc_emb, ((0, 0), (0, Ep - emb_dim))).astype(jnp.bfloat16)
    dec_emb = jnp.pad(dec_emb, ((0, Vp - output_dim),
                                (0, Ep - emb_dim))).astype(jnp.bfloat16)
    enc_wx0, enc_wh0, enc_b0 = _make_lstm_layer(keys[2], emb_dim, hid_dim, Ep, Hp)
    enc_wx1, enc_wh1, enc_b1 = _make_lstm_layer(keys[3], hid_dim, hid_dim, Hp, Hp)
    dec_wx0, dec_wh0, dec_b0 = _make_lstm_layer(keys[4], emb_dim, hid_dim, Ep, Hp)
    dec_wx1, dec_wh1, dec_b1 = _make_lstm_layer(keys[5], hid_dim, hid_dim, Hp, Hp)
    bound = 1.0 / math.sqrt(hid_dim)
    fc_w = jax.random.uniform(keys[6], (output_dim, hid_dim), jnp.float32, -bound, bound)
    fc_b = jax.random.uniform(keys[7], (output_dim,), jnp.float32, -bound, bound)
    fc_w_t = (jnp.zeros((Hp, Vp), jnp.float32)
              .at[:hid_dim, :output_dim].set(fc_w.T)).astype(jnp.bfloat16)
    fc_b_p = jnp.zeros((1, Vp), jnp.float32).at[0, :output_dim].set(fc_b)
    return dict(enc_emb=enc_emb, dec_emb=dec_emb,
                enc_wx0=enc_wx0, enc_wh0=enc_wh0, enc_b0=enc_b0,
                enc_wx1=enc_wx1, enc_wh1=enc_wh1, enc_b1=enc_b1,
                dec_wx0=dec_wx0, dec_wh0=dec_wh0, dec_b0=dec_b0,
                dec_wx1=dec_wx1, dec_wh1=dec_wh1, dec_b1=dec_b1,
                fc_w=fc_w_t, fc_b=fc_b_p)


# ----------------------------------------------------------------------------
if __name__ == "__main__":
    # Small, self-consistent shapes (reference uses 256/512/2-layer; scaled down)
    BATCH = 2
    SRC_LEN = 8
    TRG_LEN = 8
    EMB_DIM = 32
    HID_DIM = 32
    INPUT_DIM = 50    # len(TEXT_VOCAB)    (synthetic)
    OUTPUT_DIM = 40   # len(SUMMARY_VOCAB) (synthetic)

    root = jax.random.PRNGKey(0)
    k_params, k_src, k_trg, k_tf = jax.random.split(root, 4)

    params = make_params(k_params, INPUT_DIM, OUTPUT_DIM, EMB_DIM, HID_DIM)

    src = jax.random.randint(k_src, (BATCH, SRC_LEN), 0, INPUT_DIM, dtype=jnp.int32)
    trg = jax.random.randint(k_trg, (BATCH, TRG_LEN), 0, OUTPUT_DIM, dtype=jnp.int32)
    # one Bernoulli teacher-forcing decision per step (like torch.rand(1) per
    # loop iteration), drawn once on device -> whole forward is jittable.
    tf_flags = jax.random.uniform(k_tf, (TRG_LEN,)) < 0.5

    outputs = seq2seq_forward(src, trg, tf_flags, params, output_dim=OUTPUT_DIM)
    outputs = jax.block_until_ready(outputs)

    assert outputs.shape == (BATCH, TRG_LEN, OUTPUT_DIM)
    assert bool(jnp.all(jnp.isfinite(outputs)))
    print("KERNEL_OK")
</pallas_src>

<mosaic_0001>
module attributes {stable_mosaic.version = 11 : i64} {
  func.func @_encoder_seq_kernel(%arg0: i32, %arg1: memref<8x8x512xf32, #tpu.memory_space<vmem>>, %arg2: memref<128x512xbf16, #tpu.memory_space<vmem>>, %arg3: memref<128x512xbf16, #tpu.memory_space<vmem>>, %arg4: memref<128x512xbf16, #tpu.memory_space<vmem>>, %arg5: memref<1x512xf32, #tpu.memory_space<vmem>>, %arg6: memref<8x128xf32, #tpu.memory_space<vmem>>, %arg7: memref<8x128xf32, #tpu.memory_space<vmem>>, %arg8: memref<8x128xf32, #tpu.memory_space<vmem>>, %arg9: memref<8x128xf32, #tpu.memory_space<vmem>>) attributes {dimension_semantics = [#tpu.dimension_semantics<arbitrary>], iteration_bounds = array<i64: 1>, scalar_prefetch = 0 : i64, scratch_operands = 0 : i64, tpu.core_type = #tpu.core_type<tc>, window_params = [{transform_indices = @transform_0, window_bounds = array<i64: 8, 8, 512>}, {pipeline_mode = #tpu.pipeline_mode<synchronous>, transform_indices = @transform_1, window_bounds = array<i64: 128, 512>}, {pipeline_mode = #tpu.pipeline_mode<synchronous>, transform_indices = @transform_2, window_bounds = array<i64: 128, 512>}, {pipeline_mode = #tpu.pipeline_mode<synchronous>, transform_indices = @transform_3, window_bounds = array<i64: 128, 512>}, {pipeline_mode = #tpu.pipeline_mode<synchronous>, transform_indices = @transform_4, window_bounds = array<i64: 1, 512>}, {pipeline_mode = #tpu.pipeline_mode<synchronous>, transform_indices = @transform_5, window_bounds = array<i64: 8, 128>}, {pipeline_mode = #tpu.pipeline_mode<synchronous>, transform_indices = @transform_6, window_bounds = array<i64: 8, 128>}, {pipeline_mode = #tpu.pipeline_mode<synchronous>, transform_indices = @transform_7, window_bounds = array<i64: 8, 128>}, {pipeline_mode = #tpu.pipeline_mode<synchronous>, transform_indices = @transform_8, window_bounds = array<i64: 8, 128>}]} {
    %c0_i32 = arith.constant 0 : i32
    %0 = arith.cmpi eq, %arg0, %c0_i32 : i32
    %1 = arith.extui %0 : i1 to i32
    %c0_i32_0 = arith.constant 0 : i32
    %2 = arith.cmpi ne, %1, %c0_i32_0 : i32
    scf.if %2 {
      %cst_112 = arith.constant 0.000000e+00 : f32
      %519 = vector.broadcast %cst_112 : f32 to vector<8x128xf32>
      %c0_113 = arith.constant 0 : index
      %c0_114 = arith.constant 0 : index
      %520 = vector.load %arg6[%c0_113, %c0_114] : memref<8x128xf32, #tpu.memory_space<vmem>>, vector<8x128xf32>
      tpu.vector_store %arg6[%c0_113, %c0_114], %519 {strides = array<i32>} : memref<8x128xf32, #tpu.memory_space<vmem>>, vector<8x128xf32>,
      %c0_115 = arith.constant 0 : index
      %c0_116 = arith.constant 0 : index
      %521 = vector.load %arg7[%c0_115, %c0_116] : memref<8x128xf32, #tpu.memory_space<vmem>>, vector<8x128xf32>
      tpu.vector_store %arg7[%c0_115, %c0_116], %519 {strides = array<i32>} : memref<8x128xf32, #tpu.memory_space<vmem>>, vector<8x128xf32>,
      %c0_117 = arith.constant 0 : index
      %c0_118 = arith.constant 0 : index
      %522 = vector.load %arg8[%c0_117, %c0_118] : memref<8x128xf32, #tpu.memory_space<vmem>>, vector<8x128xf32>
      tpu.vector_store %arg8[%c0_117, %c0_118], %519 {strides = array<i32>} : memref<8x128xf32, #tpu.memory_space<vmem>>, vector<8x128xf32>,
      %c0_119 = arith.constant 0 : index
      %c0_120 = arith.constant 0 : index
      %523 = vector.load %arg9[%c0_119, %c0_120] : memref<8x128xf32, #tpu.memory_space<vmem>>, vector<8x128xf32>
      tpu.vector_store %arg9[%c0_119, %c0_120], %519 {strides = array<i32>} : memref<8x128xf32, #tpu.memory_space<vmem>>, vector<8x128xf32>,
    } else {
    }
    %c0 = arith.constant 0 : index
    %c0_1 = arith.constant 0 : index
    %3 = vector.load %arg2[%c0, %c0_1] : memref<128x512xbf16, #tpu.memory_space<vmem>>, vector<128x512xbf16>
    %c0_2 = arith.constant 0 : index
    %c0_3 = arith.constant 0 : index
    %4 = vector.load %arg3[%c0_2, %c0_3] : memref<128x512xbf16, #tpu.memory_space<vmem>>, vector<128x512xbf16>
    %c0_4 = arith.constant 0 : index
    %c0_5 = arith.constant 0 : index
    %5 = vector.load %arg4[%c0_4, %c0_5] : memref<128x512xbf16, #tpu.memory_space<vmem>>, vector<128x512xbf16>
    %c0_6 = arith.constant 0 : index
    %c0_7 = arith.constant 0 : index
    %6 = vector.load %arg5[%c0_6, %c0_7] : memref<1x512xf32, #tpu.memory_space<vmem>>, vector<1x512xf32>
    %c0_8 = arith.constant 0 : index
    %c0_9 = arith.constant 0 : index
    %7 = vector.load %arg6[%c0_8, %c0_9] : memref<8x128xf32, #tpu.memory_space<vmem>>, vector<8x128xf32>
    %c0_10 = arith.constant 0 : index
    %c0_11 = arith.constant 0 : index
    %8 = vector.load %arg7[%c0_10, %c0_11] : memref<8x128xf32, #tpu.memory_space<vmem>>, vector<8x128xf32>
    %c0_12 = arith.constant 0 : index
    %c0_13 = arith.constant 0 : index
    %9 = vector.load %arg8[%c0_12, %c0_13] : memref<8x128xf32, #tpu.memory_space<vmem>>, vector<8x128xf32>
    %c0_14 = arith.constant 0 : index
    %c0_15 = arith.constant 0 : index
    %10 = vector.load %arg9[%c0_14, %c0_15] : memref<8x128xf32, #tpu.memory_space<vmem>>, vector<8x128xf32>
    %c0_i32_16 = arith.constant 0 : i32
    %11 = arith.index_cast %c0_i32_16 : i32 to index
    %c0_17 = arith.constant 0 : index
    %c0_18 = arith.constant 0 : index
    %12 = vector.load %arg1[%11, %c0_17, %c0_18] : memref<8x8x512xf32, #tpu.memory_space<vmem>>, vector<1x8x512xf32>
    %13 = vector.shape_cast %12 : vector<1x8x512xf32> to vector<8x512xf32>
    %14 = arith.truncf %7 : vector<8x128xf32> to vector<8x128xbf16>
    %cst = arith.constant dense<0.000000e+00> : vector<8x512xf32>
    %15 = tpu.matmul %14, %3, %cst {dimension_numbers = #tpu.dot_dimension_numbers<[1], [0], [0], [1], [0, 0, 1, 1], [], []>} : vector<8x128xbf16>, vector<128x512xbf16>, vector<8x512xf32> -> vector<8x512xf32>
    %16 = arith.addf %13, %15 : vector<8x512xf32>
    %17 = vector.extract_strided_slice %16 {offsets = [0, 0], sizes = [8, 128], strides = [1, 1]} : vector<8x512xf32> to vector<8x128xf32>
    %18 = arith.negf %17 : vector<8x128xf32>
    %19 = math.exp %18 : vector<8x128xf32>
    %cst_19 = arith.constant 1.000000e+00 : f32
    %20 = vector.broadcast %cst_19 : f32 to vector<8x128xf32>
    %21 = arith.addf %20, %19 : vector<8x128xf32>
    %22 = arith.divf %20, %21 : vector<8x128xf32>
    %23 = vector.extract_strided_slice %16 {offsets = [0, 128], sizes = [8, 128], strides = [1, 1]} : vector<8x512xf32> to vector<8x128xf32>
    %24 = arith.negf %23 : vector<8x128xf32>
    %25 = math.exp %24 : vector<8x128xf32>
    %cst_20 = arith.constant 1.000000e+00 : f32
    %26 = vector.broadcast %cst_20 : f32 to vector<8x128xf32>
    %27 = arith.addf %26, %25 : vector<8x128xf32>
    %28 = arith.divf %26, %27 : vector<8x128xf32>
    %29 = vector.extract_strided_slice %16 {offsets = [0, 256], sizes = [8, 128], strides = [1, 1]} : vector<8x512xf32> to vector<8x128xf32>
    %30 = math.tanh %29 : vector<8x128xf32>
    %31 = vector.extract_strided_slice %16 {offsets = [0, 384], sizes = [8, 128], strides = [1, 1]} : vector<8x512xf32> to vector<8x128xf32>
    %32 = arith.negf %31 : vector<8x128xf32>
    %33 = math.exp %32 : vector<8x128xf32>
    %cst_21 = arith.constant 1.000000e+00 : f32
    %34 = vector.broadcast %cst_21 : f32 to vector<8x128xf32>
    %35 = arith.addf %34, %33 : vector<8x128xf32>
    %36 = arith.divf %34, %35 : vector<8x128xf32>
    %37 = arith.mulf %28, %8 : vector<8x128xf32>
    %38 = arith.mulf %22, %30 : vector<8x128xf32>
    %39 = arith.addf %37, %38 : vector<8x128xf32>
    %40 = math.tanh %39 : vector<8x128xf32>
    %41 = arith.mulf %36, %40 : vector<8x128xf32>
    %42 = arith.truncf %41 : vector<8x128xf32> to vector<8x128xbf16>
    %cst_22 = arith.constant dense<0.000000e+00> : vector<8x512xf32>
    %43 = tpu.matmul %42, %4, %cst_22 {dimension_numbers = #tpu.dot_dimension_numbers<[1], [0], [0], [1], [0, 0, 1, 1], [], []>} : vector<8x128xbf16>, vector<128x512xbf16>, vector<8x512xf32> -> vector<8x512xf32>
    %44 = arith.truncf %9 : vector<8x128xf32> to vector<8x128xbf16>
    %cst_23 = arith.constant dense<0.000000e+00> : vector<8x512xf32>
    %45 = tpu.matmul %44, %5, %cst_23 {dimension_numbers = #tpu.dot_dimension_numbers<[1], [0], [0], [1], [0, 0, 1, 1], [], []>} : vector<8x128xbf16>, vector<128x512xbf16>, vector<8x512xf32> -> vector<8x512xf32>
    %46 = arith.addf %43, %45 : vector<8x512xf32>
    %47 = vector.broadcast %6 : vector<1x512xf32> to vector<8x512xf32>
    %48 = arith.addf %46, %47 : vector<8x512xf32>
    %49 = vector.extract_strided_slice %48 {offsets = [0, 0], sizes = [8, 128], strides = [1, 1]} : vector<8x512xf32> to vector<8x128xf32>
    %50 = arith.negf %49 : vector<8x128xf32>
    %51 = math.exp %50 : vector<8x128xf32>
    %cst_24 = arith.constant 1.000000e+00 : f32
    %52 = vector.broadcast %cst_24 : f32 to vector<8x128xf32>
    %53 = arith.addf %52, %51 : vector<8x128xf32>
    %54 = arith.divf %52, %53 : vector<8x128xf32>
    %55 = vector.extract_strided_slice %48 {offsets = [0, 128], sizes = [8, 128], strides = [1, 1]} : vector<8x512xf32> to vector<8x128xf32>
    %56 = arith.negf %55 : vector<8x128xf32>
    %57 = math.exp %56 : vector<8x128xf32>
    %cst_25 = arith.constant 1.000000e+00 : f32
    %58 = vector.broadcast %cst_25 : f32 to vector<8x128xf32>
    %59 = arith.addf %58, %57 : vector<8x128xf32>
    %60 = arith.divf %58, %59 : vector<8x128xf32>
    %61 = vector.extract_strided_slice %48 {offsets = [0, 256], sizes = [8, 128], strides = [1, 1]} : vector<8x512xf32> to vector<8x128xf32>
    %62 = math.tanh %61 : vector<8x128xf32>
    %63 = vector.extract_strided_slice %48 {offsets = [0, 384], sizes = [8, 128], strides = [1, 1]} : vector<8x512xf32> to vector<8x128xf32>
    %64 = arith.negf %63 : vector<8x128xf32>
    %65 = math.exp %64 : vector<8x128xf32>
    %cst_26 = arith.constant 1.000000e+00 : f32
    %66 = vector.broadcast %cst_26 : f32 to vector<8x128xf32>
    %67 = arith.addf %66, %65 : vector<8x128xf32>
    %68 = arith.divf %66, %67 : vector<8x128xf32>
    %69 = arith.mulf %60, %10 : vector<8x128xf32>
    %70 = arith.mulf %54, %62 : vector<8x128xf32>
    %71 = arith.addf %69, %70 : vector<8x128xf32>
    %72 = math.tanh %71 : vector<8x128xf32>
    %73 = arith.mulf %68, %72 : vector<8x128xf32>
    %c1_i32 = arith.constant 1 : i32
    %74 = arith.index_cast %c1_i32 : i32 to index
    %c0_27 = arith.constant 0 : index
    %c0_28 = arith.constant 0 : index
    %75 = vector.load %arg1[%74, %c0_27, %c0_28] : memref<8x8x512xf32, #tpu.memory_space<vmem>>, vector<1x8x512xf32>
    %76 = vector.shape_cast %75 : vector<1x8x512xf32> to vector<8x512xf32>
    %77 = arith.truncf %41 : vector<8x128xf32> to vector<8x128xbf16>
    %cst_29 = arith.constant dense<0.000000e+00> : vector<8x512xf32>
    %78 = tpu.matmul %77, %3, %cst_29 {dimension_numbers = #tpu.dot_dimension_numbers<[1], [0], [0], [1], [0, 0, 1, 1], [], []>} : vector<8x128xbf16>, vector<128x512xbf16>, vector<8x512xf32> -> vector<8x512xf32>
    %79 = arith.addf %76, %78 : vector<8x512xf32>
    %80 = vector.extract_strided_slice %79 {offsets = [0, 0], sizes = [8, 128], strides = [1, 1]} : vector<8x512xf32> to vector<8x128xf32>
    %81 = arith.negf %80 : vector<8x128xf32>
    %82 = math.exp %81 : vector<8x128xf32>
    %cst_30 = arith.constant 1.000000e+00 : f32
    %83 = vector.broadcast %cst_30 : f32 to vector<8x128xf32>
    %84 = arith.addf %83, %82 : vector<8x128xf32>
    %85 = arith.divf %83, %84 : vector<8x128xf32>
    %86 = vector.extract_strided_slice %79 {offsets = [0, 128], sizes = [8, 128], strides = [1, 1]} : vector<8x512xf32> to vector<8x128xf32>
    %87 = arith.negf %86 : vector<8x128xf32>
    %88 = math.exp %87 : vector<8x128xf32>
    %cst_31 = arith.constant 1.000000e+00 : f32
    %89 = vector.broadcast %cst_31 : f32 to vector<8x128xf32>
    %90 = arith.addf %89, %88 : vector<8x128xf32>
    %91 = arith.divf %89, %90 : vector<8x128xf32>
    %92 = vector.extract_strided_slice %79 {offsets = [0, 256], sizes = [8, 128], strides = [1, 1]} : vector<8x512xf32> to vector<8x128xf32>
    %93 = math.tanh %92 : vector<8x128xf32>
    %94 = vector.extract_strided_slice %79 {offsets = [0, 384], sizes = [8, 128], strides = [1, 1]} : vector<8x512xf32> to vector<8x128xf32>
    %95 = arith.negf %94 : vector<8x128xf32>
    %96 = math.exp %95 : vector<8x128xf32>
    %cst_32 = arith.constant 1.000000e+00 : f32
    %97 = vector.broadcast %cst_32 : f32 to vector<8x128xf32>
    %98 = arith.addf %97, %96 : vector<8x128xf32>
    %99 = arith.divf %97, %98 : vector<8x128xf32>
    %100 = arith.mulf %91, %39 : vector<8x128xf32>
    %101 = arith.mulf %85, %93 : vector<8x128xf32>
    %102 = arith.addf %100, %101 : vector<8x128xf32>
    %103 = math.tanh %102 : vector<8x128xf32>
    %104 = arith.mulf %99, %103 : vector<8x128xf32>
    %105 = arith.truncf %104 : vector<8x128xf32> to vector<8x128xbf16>
    %cst_33 = arith.constant dense<0.000000e+00> : vector<8x512xf32>
    %106 = tpu.matmul %105, %4, %cst_33 {dimension_numbers = #tpu.dot_dimension_numbers<[1], [0], [0], [1], [0, 0, 1, 1], [], []>} : vector<8x128xbf16>, vector<128x512xbf16>, vector<8x512xf32> -> vector<8x512xf32>
    %107 = arith.truncf %73 : vector<8x128xf32> to vector<8x128xbf16>
    %cst_34 = arith.constant dense<0.000000e+00> : vector<8x512xf32>
    %108 = tpu.matmul %107, %5, %cst_34 {dimension_numbers = #tpu.dot_dimension_numbers<[1], [0], [0], [1], [0, 0, 1, 1], [], []>} : vector<8x128xbf16>, vector<128x512xbf16>, vector<8x512xf32> -> vector<8x512xf32>
    %109 = arith.addf %106, %108 : vector<8x512xf32>
    %110 = vector.broadcast %6 : vector<1x512xf32> to vector<8x512xf32>
    %111 = arith.addf %109, %110 : vector<8x512xf32>
    %112 = vector.extract_strided_slice %111 {offsets = [0, 0], sizes = [8, 128], strides = [1, 1]} : vector<8x512xf32> to vector<8x128xf32>
    %113 = arith.negf %112 : vector<8x128xf32>
    %114 = math.exp %113 : vector<8x128xf32>
    %cst_35 = arith.constant 1.000000e+00 : f32
    %115 = vector.broadcast %cst_35 : f32 to vector<8x128xf32>
    %116 = arith.addf %115, %114 : vector<8x128xf32>
    %117 = arith.divf %115, %116 : vector<8x128xf32>
    %118 = vector.extract_strided_slice %111 {offsets = [0, 128], sizes = [8, 128], strides = [1, 1]} : vector<8x512xf32> to vector<8x128xf32>
    %119 = arith.negf %118 : vector<8x128xf32>
    %120 = math.exp %119 : vector<8x128xf32>
    %cst_36 = arith.constant 1.000000e+00 : f32
    %121 = vector.broadcast %cst_36 : f32 to vector<8x128xf32>
    %122 = arith.addf %121, %120 : vector<8x128xf32>
    %123 = arith.divf %121, %122 : vector<8x128xf32>
    %124 = vector.extract_strided_slice %111 {offsets = [0, 256], sizes = [8, 128], strides = [1, 1]} : vector<8x512xf32> to vector<8x128xf32>
    %125 = math.tanh %124 : vector<8x128xf32>
    %126 = vector.extract_strided_slice %111 {offsets = [0, 384], sizes = [8, 128], strides = [1, 1]} : vector<8x512xf32> to vector<8x128xf32>
    %127 = arith.negf %126 : vector<8x128xf32>
    %128 = math.exp %127 : vector<8x128xf32>
    %cst_37 = arith.constant 1.000000e+00 : f32
    %129 = vector.broadcast %cst_37 : f32 to vector<8x128xf32>
    %130 = arith.addf %129, %128 : vector<8x128xf32>
    %131 = arith.divf %129, %130 : vector<8x128xf32>
    %132 = arith.mulf %123, %71 : vector<8x128xf32>
    %133 = arith.mulf %117, %125 : vector<8x128xf32>
    %134 = arith.addf %132, %133 : vector<8x128xf32>
    %135 = math.tanh %134 : vector<8x128xf32>
    %136 = arith.mulf %131, %135 : vector<8x128xf32>
    %c2_i32 = arith.constant 2 : i32
    %137 = arith.index_cast %c2_i32 : i32 to index
    %c0_38 = arith.constant 0 : index
    %c0_39 = arith.constant 0 : index
    %138 = vector.load %arg1[%137, %c0_38, %c0_39] : memref<8x8x512xf32, #tpu.memory_space<vmem>>, vector<1x8x512xf32>
    %139 = vector.shape_cast %138 : vector<1x8x512xf32> to vector<8x512xf32>
    %140 = arith.truncf %104 : vector<8x128xf32> to vector<8x128xbf16>
    %cst_40 = arith.constant dense<0.000000e+00> : vector<8x512xf32>
    %141 = tpu.matmul %140, %3, %cst_40 {dimension_numbers = #tpu.dot_dimension_numbers<[1], [0], [0], [1], [0, 0, 1, 1], [], []>} : vector<8x128xbf16>, vector<128x512xbf16>, vector<8x512xf32> -> vector<8x512xf32>
    %142 = arith.addf %139, %141 : vector<8x512xf32>
    %143 = vector.extract_strided_slice %142 {offsets = [0, 0], sizes = [8, 128], strides = [1, 1]} : vector<8x512xf32> to vector<8x128xf32>
    %144 = arith.negf %143 : vector<8x128xf32>
    %145 = math.exp %144 : vector<8x128xf32>
    %cst_41 = arith.constant 1.000000e+00 : f32
    %146 = vector.broadcast %cst_41 : f32 to vector<8x128xf32>
    %147 = arith.addf %146, %145 : vector<8x128xf32>
    %148 = arith.divf %146, %147 : vector<8x128xf32>
    %149 = vector.extract_strided_slice %142 {offsets = [0, 128], sizes = [8, 128], strides = [1, 1]} : vector<8x512xf32> to vector<8x128xf32>
    %150 = arith.negf %149 : vector<8x128xf32>
    %151 = math.exp %150 : vector<8x128xf32>
    %cst_42 = arith.constant 1.000000e+00 : f32
    %152 = vector.broadcast %cst_42 : f32 to vector<8x128xf32>
    %153 = arith.addf %152, %151 : vector<8x128xf32>
    %154 = arith.divf %152, %153 : vector<8x128xf32>
    %155 = vector.extract_strided_slice %142 {offsets = [0, 256], sizes = [8, 128], strides = [1, 1]} : vector<8x512xf32> to vector<8x128xf32>
    %156 = math.tanh %155 : vector<8x128xf32>
    %157 = vector.extract_strided_slice %142 {offsets = [0, 384], sizes = [8, 128], strides = [1, 1]} : vector<8x512xf32> to vector<8x128xf32>
    %158 = arith.negf %157 : vector<8x128xf32>
    %159 = math.exp %158 : vector<8x128xf32>
    %cst_43 = arith.constant 1.000000e+00 : f32
    %160 = vector.broadcast %cst_43 : f32 to vector<8x128xf32>
    %161 = arith.addf %160, %159 : vector<8x128xf32>
    %162 = arith.divf %160, %161 : vector<8x128xf32>
    %163 = arith.mulf %154, %102 : vector<8x128xf32>
    %164 = arith.mulf %148, %156 : vector<8x128xf32>
    %165 = arith.addf %163, %164 : vector<8x128xf32>
    %166 = math.tanh %165 : vector<8x128xf32>
    %167 = arith.mulf %162, %166 : vector<8x128xf32>
    %168 = arith.truncf %167 : vector<8x128xf32> to vector<8x128xbf16>
    %cst_44 = arith.constant dense<0.000000e+00> : vector<8x512xf32>
    %169 = tpu.matmul %168, %4, %cst_44 {dimension_numbers = #tpu.dot_dimension_numbers<[1], [0], [0], [1], [0, 0, 1, 1], [], []>} : vector<8x128xbf16>, vector<128x512xbf16>, vector<8x512xf32> -> vector<8x512xf32>
    %170 = arith.truncf %136 : vector<8x128xf32> to vector<8x128xbf16>
    %cst_45 = arith.constant dense<0.000000e+00> : vector<8x512xf32>
    %171 = tpu.matmul %170, %5, %cst_45 {dimension_numbers = #tpu.dot_dimension_numbers<[1], [0], [0], [1], [0, 0, 1, 1], [], []>} : vector<8x128xbf16>, vector<128x512xbf16>, vector<8x512xf32> -> vector<8x512xf32>
    %172 = arith.addf %169, %171 : vector<8x512xf32>
    %173 = vector.broadcast %6 : vector<1x512xf32> to vector<8x512xf32>
    %174 = arith.addf %172, %173 : vector<8x512xf32>
    %175 = vector.extract_strided_slice %174 {offsets = [0, 0], sizes = [8, 128], strides = [1, 1]} : vector<8x512xf32> to vector<8x128xf32>
    %176 = arith.negf %175 : vector<8x128xf32>
    %177 = math.exp %176 : vector<8x128xf32>
    %cst_46 = arith.constant 1.000000e+00 : f32
    %178 = vector.broadcast %cst_46 : f32 to vector<8x128xf32>
    %179 = arith.addf %178, %177 : vector<8x128xf32>
    %180 = arith.divf %178, %179 : vector<8x128xf32>
    %181 = vector.extract_strided_slice %174 {offsets = [0, 128], sizes = [8, 128], strides = [1, 1]} : vector<8x512xf32> to vector<8x128xf32>
    %182 = arith.negf %181 : vector<8x128xf32>
    %183 = math.exp %182 : vector<8x128xf32>
    %cst_47 = arith.constant 1.000000e+00 : f32
    %184 = vector.broadcast %cst_47 : f32 to vector<8x128xf32>
    %185 = arith.addf %184, %183 : vector<8x128xf32>
    %186 = arith.divf %184, %185 : vector<8x128xf32>
    %187 = vector.extract_strided_slice %174 {offsets = [0, 256], sizes = [8, 128], strides = [1, 1]} : vector<8x512xf32> to vector<8x128xf32>
    %188 = math.tanh %187 : vector<8x128xf32>
    %189 = vector.extract_strided_slice %174 {offsets = [0, 384], sizes = [8, 128], strides = [1, 1]} : vector<8x512xf32> to vector<8x128xf32>
    %190 = arith.negf %189 : vector<8x128xf32>
    %191 = math.exp %190 : vector<8x128xf32>
    %cst_48 = arith.constant 1.000000e+00 : f32
    %192 = vector.broadcast %cst_48 : f32 to vector<8x128xf32>
    %193 = arith.addf %192, %191 : vector<8x128xf32>
    %194 = arith.divf %192, %193 : vector<8x128xf32>
    %195 = arith.mulf %186, %134 : vector<8x128xf32>
    %196 = arith.mulf %180, %188 : vector<8x128xf32>
    %197 = arith.addf %195, %196 : vector<8x128xf32>
    %198 = math.tanh %197 : vector<8x128xf32>
    %199 = arith.mulf %194, %198 : vector<8x128xf32>
    %c3_i32 = arith.constant 3 : i32
    %200 = arith.index_cast %c3_i32 : i32 to index
    %c0_49 = arith.constant 0 : index
    %c0_50 = arith.constant 0 : index
    %201 = vector.load %arg1[%200, %c0_49, %c0_50] : memref<8x8x512xf32, #tpu.memory_space<vmem>>, vector<1x8x512xf32>
    %202 = vector.shape_cast %201 : vector<1x8x512xf32> to vector<8x512xf32>
    %203 = arith.truncf %167 : vector<8x128xf32> to vector<8x128xbf16>
    %cst_51 = arith.constant dense<0.000000e+00> : vector<8x512xf32>
    %204 = tpu.matmul %203, %3, %cst_51 {dimension_numbers = #tpu.dot_dimension_numbers<[1], [0], [0], [1], [0, 0, 1, 1], [], []>} : vector<8x128xbf16>, vector<128x512xbf16>, vector<8x512xf32> -> vector<8x512xf32>
    %205 = arith.addf %202, %204 : vector<8x512xf32>
    %206 = vector.extract_strided_slice %205 {offsets = [0, 0], sizes = [8, 128], strides = [1, 1]} : vector<8x512xf32> to vector<8x128xf32>
    %207 = arith.negf %206 : vector<8x128xf32>
    %208 = math.exp %207 : vector<8x128xf32>
    %cst_52 = arith.constant 1.000000e+00 : f32
    %209 = vector.broadcast %cst_52 : f32 to vector<8x128xf32>
    %210 = arith.addf %209, %208 : vector<8x128xf32>
    %211 = arith.divf %209, %210 : vector<8x128xf32>
    %212 = vector.extract_strided_slice %205 {offsets = [0, 128], sizes = [8, 128], strides = [1, 1]} : vector<8x512xf32> to vector<8x128xf32>
    %213 = arith.negf %212 : vector<8x128xf32>
    %214 = math.exp %213 : vector<8x128xf32>
    %cst_53 = arith.constant 1.000000e+00 : f32
    %215 = vector.broadcast %cst_53 : f32 to vector<8x128xf32>
    %216 = arith.addf %215, %214 : vector<8x128xf32>
    %217 = arith.divf %215, %216 : vector<8x128xf32>
    %218 = vector.extract_strided_slice %205 {offsets = [0, 256], sizes = [8, 128], strides = [1, 1]} : vector<8x512xf32> to vector<8x128xf32>
    %219 = math.tanh %218 : vector<8x128xf32>
    %220 = vector.extract_strided_slice %205 {offsets = [0, 384], sizes = [8, 128], strides = [1, 1]} : vector<8x512xf32> to vector<8x128xf32>
    %221 = arith.negf %220 : vector<8x128xf32>
    %222 = math.exp %221 : vector<8x128xf32>
    %cst_54 = arith.constant 1.000000e+00 : f32
    %223 = vector.broadcast %cst_54 : f32 to vector<8x128xf32>
    %224 = arith.addf %223, %222 : vector<8x128xf32>
    %225 = arith.divf %223, %224 : vector<8x128xf32>
    %226 = arith.mulf %217, %165 : vector<8x128xf32>
    %227 = arith.mulf %211, %219 : vector<8x128xf32>
    %228 = arith.addf %226, %227 : vector<8x128xf32>
    %229 = math.tanh %228 : vector<8x128xf32>
    %230 = arith.mulf %225, %229 : vector<8x128xf32>
    %231 = arith.truncf %230 : vector<8x128xf32> to vector<8x128xbf16>
    %cst_55 = arith.constant dense<0.000000e+00> : vector<8x512xf32>
    %232 = tpu.matmul %231, %4, %cst_55 {dimension_numbers = #tpu.dot_dimension_numbers<[1], [0], [0], [1], [0, 0, 1, 1], [], []>} : vector<8x128xbf16>, vector<128x512xbf16>, vector<8x512xf32> -> vector<8x512xf32>
    %233 = arith.truncf %199 : vector<8x128xf32> to vector<8x128xbf16>
    %cst_56 = arith.constant dense<0.000000e+00> : vector<8x512xf32>
    %234 = tpu.matmul %233, %5, %cst_56 {dimension_numbers = #tpu.dot_dimension_numbers<[1], [0], [0], [1], [0, 0, 1, 1], [], []>} : vector<8x128xbf16>, vector<128x512xbf16>, vector<8x512xf32> -> vector<8x512xf32>
    %235 = arith.addf %232, %234 : vector<8x512xf32>
    %236 = vector.broadcast %6 : vector<1x512xf32> to vector<8x512xf32>
    %237 = arith.addf %235, %236 : vector<8x512xf32>
    %238 = vector.extract_strided_slice %237 {offsets = [0, 0], sizes = [8, 128], strides = [1, 1]} : vector<8x512xf32> to vector<8x128xf32>
    %239 = arith.negf %238 : vector<8x128xf32>
    %240 = math.exp %239 : vector<8x128xf32>
    %cst_57 = arith.constant 1.000000e+00 : f32
    %241 = vector.broadcast %cst_57 : f32 to vector<8x128xf32>
    %242 = arith.addf %241, %240 : vector<8x128xf32>
    %243 = arith.divf %241, %242 : vector<8x128xf32>
    %244 = vector.extract_strided_slice %237 {offsets = [0, 128], sizes = [8, 128], strides = [1, 1]} : vector<8x512xf32> to vector<8x128xf32>
    %245 = arith.negf %244 : vector<8x128xf32>
    %246 = math.exp %245 : vector<8x128xf32>
    %cst_58 = arith.constant 1.000000e+00 : f32
    %247 = vector.broadcast %cst_58 : f32 to vector<8x128xf32>
    %248 = arith.addf %247, %246 : vector<8x128xf32>
    %249 = arith.divf %247, %248 : vector<8x128xf32>
    %250 = vector.extract_strided_slice %237 {offsets = [0, 256], sizes = [8, 128], strides = [1, 1]} : vector<8x512xf32> to vector<8x128xf32>
    %251 = math.tanh %250 : vector<8x128xf32>
    %252 = vector.extract_strided_slice %237 {offsets = [0, 384], sizes = [8, 128], strides = [1, 1]} : vector<8x512xf32> to vector<8x128xf32>
    %253 = arith.negf %252 : vector<8x128xf32>
    %254 = math.exp %253 : vector<8x128xf32>
    %cst_59 = arith.constant 1.000000e+00 : f32
    %255 = vector.broadcast %cst_59 : f32 to vector<8x128xf32>
    %256 = arith.addf %255, %254 : vector<8x128xf32>
    %257 = arith.divf %255, %256 : vector<8x128xf32>
    %258 = arith.mulf %249, %197 : vector<8x128xf32>
    %259 = arith.mulf %243, %251 : vector<8x128xf32>
    %260 = arith.addf %258, %259 : vector<8x128xf32>
    %261 = math.tanh %260 : vector<8x128xf32>
    %262 = arith.mulf %257, %261 : vector<8x128xf32>
    %c4_i32 = arith.constant 4 : i32
    %263 = arith.index_cast %c4_i32 : i32 to index
    %c0_60 = arith.constant 0 : index
    %c0_61 = arith.constant 0 : index
    %264 = vector.load %arg1[%263, %c0_60, %c0_61] : memref<8x8x512xf32, #tpu.memory_space<vmem>>, vector<1x8x512xf32>
    %265 = vector.shape_cast %264 : vector<1x8x512xf32> to vector<8x512xf32>
    %266 = arith.truncf %230 : vector<8x128xf32> to vector<8x128xbf16>
    %cst_62 = arith.constant dense<0.000000e+00> : vector<8x512xf32>
    %267 = tpu.matmul %266, %3, %cst_62 {dimension_numbers = #tpu.dot_dimension_numbers<[1], [0], [0], [1], [0, 0, 1, 1], [], []>} : vector<8x128xbf16>, vector<128x512xbf16>, vector<8x512xf32> -> vector<8x512xf32>
    %268 = arith.addf %265, %267 : vector<8x512xf32>
    %269 = vector.extract_strided_slice %268 {offsets = [0, 0], sizes = [8, 128], strides = [1, 1]} : vector<8x512xf32> to vector<8x128xf32>
    %270 = arith.negf %269 : vector<8x128xf32>
    %271 = math.exp %270 : vector<8x128xf32>
    %cst_63 = arith.constant 1.000000e+00 : f32
    %272 = vector.broadcast %cst_63 : f32 to vector<8x128xf32>
    %273 = arith.addf %272, %271 : vector<8x128xf32>
    %274 = arith.divf %272, %273 : vector<8x128xf32>
    %275 = vector.extract_strided_slice %268 {offsets = [0, 128], sizes = [8, 128], strides = [1, 1]} : vector<8x512xf32> to vector<8x128xf32>
    %276 = arith.negf %275 : vector<8x128xf32>
    %277 = math.exp %276 : vector<8x128xf32>
    %cst_64 = arith.constant 1.000000e+00 : f32
    %278 = vector.broadcast %cst_64 : f32 to vector<8x128xf32>
    %279 = arith.addf %278, %277 : vector<8x128xf32>
    %280 = arith.divf %278, %279 : vector<8x128xf32>
    %281 = vector.extract_strided_slice %268 {offsets = [0, 256], sizes = [8, 128], strides = [1, 1]} : vector<8x512xf32> to vector<8x128xf32>
    %282 = math.tanh %281 : vector<8x128xf32>
    %283 = vector.extract_strided_slice %268 {offsets = [0, 384], sizes = [8, 128], strides = [1, 1]} : vector<8x512xf32> to vector<8x128xf32>
    %284 = arith.negf %283 : vector<8x128xf32>
    %285 = math.exp %284 : vector<8x128xf32>
    %cst_65 = arith.constant 1.000000e+00 : f32
    %286 = vector.broadcast %cst_65 : f32 to vector<8x128xf32>
    %287 = arith.addf %286, %285 : vector<8x128xf32>
    %288 = arith.divf %286, %287 : vector<8x128xf32>
    %289 = arith.mulf %280, %228 : vector<8x128xf32>
    %290 = arith.mulf %274, %282 : vector<8x128xf32>
    %291 = arith.addf %289, %290 : vector<8x128xf32>
    %292 = math.tanh %291 : vector<8x128xf32>
    %293 = arith.mulf %288, %292 : vector<8x128xf32>
    %294 = arith.truncf %293 : vector<8x128xf32> to vector<8x128xbf16>
    %cst_66 = arith.constant dense<0.000000e+00> : vector<8x512xf32>
    %295 = tpu.matmul %294, %4, %cst_66 {dimension_numbers = #tpu.dot_dimension_numbers<[1], [0], [0], [1], [0, 0, 1, 1], [], []>} : vector<8x128xbf16>, vector<128x512xbf16>, vector<8x512xf32> -> vector<8x512xf32>
    %296 = arith.truncf %262 : vector<8x128xf32> to vector<8x128xbf16>
    %cst_67 = arith.constant dense<0.000000e+00> : vector<8x512xf32>
    %297 = tpu.matmul %296, %5, %cst_67 {dimension_numbers = #tpu.dot_dimension_numbers<[1], [0], [0], [1], [0, 0, 1, 1], [], []>} : vector<8x128xbf16>, vector<128x512xbf16>, vector<8x512xf32> -> vector<8x512xf32>
    %298 = arith.addf %295, %297 : vector<8x512xf32>
    %299 = vector.broadcast %6 : vector<1x512xf32> to vector<8x512xf32>
    %300 = arith.addf %298, %299 : vector<8x512xf32>
    %301 = vector.extract_strided_slice %300 {offsets = [0, 0], sizes = [8, 128], strides = [1, 1]} : vector<8x512xf32> to vector<8x128xf32>
    %302 = arith.negf %301 : vector<8x128xf32>
    %303 = math.exp %302 : vector<8x128xf32>
    %cst_68 = arith.constant 1.000000e+00 : f32
    %304 = vector.broadcast %cst_68 : f32 to vector<8x128xf32>
    %305 = arith.addf %304, %303 : vector<8x128xf32>
    %306 = arith.divf %304, %305 : vector<8x128xf32>
    %307 = vector.extract_strided_slice %300 {offsets = [0, 128], sizes = [8, 128], strides = [1, 1]} : vector<8x512xf32> to vector<8x128xf32>
    %308 = arith.negf %307 : vector<8x128xf32>
    %309 = math.exp %308 : vector<8x128xf32>
    %cst_69 = arith.constant 1.000000e+00 : f32
    %310 = vector.broadcast %cst_69 : f32 to vector<8x128xf32>
    %311 = arith.addf %310, %309 : vector<8x128xf32>
    %312 = arith.divf %310, %311 : vector<8x128xf32>
    %313 = vector.extract_strided_slice %300 {offsets = [0, 256], sizes = [8, 128], strides = [1, 1]} : vector<8x512xf32> to vector<8x128xf32>
    %314 = math.tanh %313 : vector<8x128xf32>
    %315 = vector.extract_strided_slice %300 {offsets = [0, 384], sizes = [8, 128], strides = [1, 1]} : vector<8x512xf32> to vector<8x128xf32>
    %316 = arith.negf %315 : vector<8x128xf32>
    %317 = math.exp %316 : vector<8x128xf32>
    %cst_70 = arith.constant 1.000000e+00 : f32
    %318 = vector.broadcast %cst_70 : f32 to vector<8x128xf32>
    %319 = arith.addf %318, %317 : vector<8x128xf32>
    %320 = arith.divf %318, %319 : vector<8x128xf32>
    %321 = arith.mulf %312, %260 : vector<8x128xf32>
    %322 = arith.mulf %306, %314 : vector<8x128xf32>
    %323 = arith.addf %321, %322 : vector<8x128xf32>
    %324 = math.tanh %323 : vector<8x128xf32>
    %325 = arith.mulf %320, %324 : vector<8x128xf32>
    %c5_i32 = arith.constant 5 : i32
    %326 = arith.index_cast %c5_i32 : i32 to index
    %c0_71 = arith.constant 0 : index
    %c0_72 = arith.constant 0 : index
    %327 = vector.load %arg1[%326, %c0_71, %c0_72] : memref<8x8x512xf32, #tpu.memory_space<vmem>>, vector<1x8x512xf32>
    %328 = vector.shape_cast %327 : vector<1x8x512xf32> to vector<8x512xf32>
    %329 = arith.truncf %293 : vector<8x128xf32> to vector<8x128xbf16>
    %cst_73 = arith.constant dense<0.000000e+00> : vector<8x512xf32>
    %330 = tpu.matmul %329, %3, %cst_73 {dimension_numbers = #tpu.dot_dimension_numbers<[1], [0], [0], [1], [0, 0, 1, 1], [], []>} : vector<8x128xbf16>, vector<128x512xbf16>, vector<8x512xf32> -> vector<8x512xf32>
    %331 = arith.addf %328, %330 : vector<8x512xf32>
    %332 = vector.extract_strided_slice %331 {offsets = [0, 0], sizes = [8, 128], strides = [1, 1]} : vector<8x512xf32> to vector<8x128xf32>
    %333 = arith.negf %332 : vector<8x128xf32>
    %334 = math.exp %333 : vector<8x128xf32>
    %cst_74 = arith.constant 1.000000e+00 : f32
    %335 = vector.broadcast %cst_74 : f32 to vector<8x128xf32>
    %336 = arith.addf %335, %334 : vector<8x128xf32>
    %337 = arith.divf %335, %336 : vector<8x128xf32>
    %338 = vector.extract_strided_slice %331 {offsets = [0, 128], sizes = [8, 128], strides = [1, 1]} : vector<8x512xf32> to vector<8x128xf32>
    %339 = arith.negf %338 : vector<8x128xf32>
    %340 = math.exp %339 : vector<8x128xf32>
    %cst_75 = arith.constant 1.000000e+00 : f32
    %341 = vector.broadcast %cst_75 : f32 to vector<8x128xf32>
    %342 = arith.addf %341, %340 : vector<8x128xf32>
    %343 = arith.divf %341, %342 : vector<8x128xf32>
    %344 = vector.extract_strided_slice %331 {offsets = [0, 256], sizes = [8, 128], strides = [1, 1]} : vector<8x512xf32> to vector<8x128xf32>
    %345 = math.tanh %344 : vector<8x128xf32>
    %346 = vector.extract_strided_slice %331 {offsets = [0, 384], sizes = [8, 128], strides = [1, 1]} : vector<8x512xf32> to vector<8x128xf32>
    %347 = arith.negf %346 : vector<8x128xf32>
    %348 = math.exp %347 : vector<8x128xf32>
    %cst_76 = arith.constant 1.000000e+00 : f32
    %349 = vector.broadcast %cst_76 : f32 to vector<8x128xf32>
    %350 = arith.addf %349, %348 : vector<8x128xf32>
    %351 = arith.divf %349, %350 : vector<8x128xf32>
    %352 = arith.mulf %343, %291 : vector<8x128xf32>
    %353 = arith.mulf %337, %345 : vector<8x128xf32>
    %354 = arith.addf %352, %353 : vector<8x128xf32>
    %355 = math.tanh %354 : vector<8x128xf32>
    %356 = arith.mulf %351, %355 : vector<8x128xf32>
    %357 = arith.truncf %356 : vector<8x128xf32> to vector<8x128xbf16>
    %cst_77 = arith.constant dense<0.000000e+00> : vector<8x512xf32>
    %358 = tpu.matmul %357, %4, %cst_77 {dimension_numbers = #tpu.dot_dimension_numbers<[1], [0], [0], [1], [0, 0, 1, 1], [], []>} : vector<8x128xbf16>, vector<128x512xbf16>, vector<8x512xf32> -> vector<8x512xf32>
    %359 = arith.truncf %325 : vector<8x128xf32> to vector<8x128xbf16>
    %cst_78 = arith.constant dense<0.000000e+00> : vector<8x512xf32>
    %360 = tpu.matmul %359, %5, %cst_78 {dimension_numbers = #tpu.dot_dimension_numbers<[1], [0], [0], [1], [0, 0, 1, 1], [], []>} : vector<8x128xbf16>, vector<128x512xbf16>, vector<8x512xf32> -> vector<8x512xf32>
    %361 = arith.addf %358, %360 : vector<8x512xf32>
    %362 = vector.broadcast %6 : vector<1x512xf32> to vector<8x512xf32>
    %363 = arith.addf %361, %362 : vector<8x512xf32>
    %364 = vector.extract_strided_slice %363 {offsets = [0, 0], sizes = [8, 128], strides = [1, 1]} : vector<8x512xf32> to vector<8x128xf32>
    %365 = arith.negf %364 : vector<8x128xf32>
    %366 = math.exp %365 : vector<8x128xf32>
    %cst_79 = arith.constant 1.000000e+00 : f32
    %367 = vector.broadcast %cst_79 : f32 to vector<8x128xf32>
    %368 = arith.addf %367, %366 : vector<8x128xf32>
    %369 = arith.divf %367, %368 : vector<8x128xf32>
    %370 = vector.extract_strided_slice %363 {offsets = [0, 128], sizes = [8, 128], strides = [1, 1]} : vector<8x512xf32> to vector<8x128xf32>
    %371 = arith.negf %370 : vector<8x128xf32>
    %372 = math.exp %371 : vector<8x128xf32>
    %cst_80 = arith.constant 1.000000e+00 : f32
    %373 = vector.broadcast %cst_80 : f32 to vector<8x128xf32>
    %374 = arith.addf %373, %372 : vector<8x128xf32>
    %375 = arith.divf %373, %374 : vector<8x128xf32>
    %376 = vector.extract_strided_slice %363 {offsets = [0, 256], sizes = [8, 128], strides = [1, 1]} : vector<8x512xf32> to vector<8x128xf32>
    %377 = math.tanh %376 : vector<8x128xf32>
    %378 = vector.extract_strided_slice %363 {offsets = [0, 384], sizes = [8, 128], strides = [1, 1]} : vector<8x512xf32> to vector<8x128xf32>
    %379 = arith.negf %378 : vector<8x128xf32>
    %380 = math.exp %379 : vector<8x128xf32>
    %cst_81 = arith.constant 1.000000e+00 : f32
    %381 = vector.broadcast %cst_81 : f32 to vector<8x128xf32>
    %382 = arith.addf %381, %380 : vector<8x128xf32>
    %383 = arith.divf %381, %382 : vector<8x128xf32>
    %384 = arith.mulf %375, %323 : vector<8x128xf32>
    %385 = arith.mulf %369, %377 : vector<8x128xf32>
    %386 = arith.addf %384, %385 : vector<8x128xf32>
    %387 = math.tanh %386 : vector<8x128xf32>
    %388 = arith.mulf %383, %387 : vector<8x128xf32>
    %c6_i32 = arith.constant 6 : i32
    %389 = arith.index_cast %c6_i32 : i32 to index
    %c0_82 = arith.constant 0 : index
    %c0_83 = arith.constant 0 : index
    %390 = vector.load %arg1[%389, %c0_82, %c0_83] : memref<8x8x512xf32, #tpu.memory_space<vmem>>, vector<1x8x512xf32>
    %391 = vector.shape_cast %390 : vector<1x8x512xf32> to vector<8x512xf32>
    %392 = arith.truncf %356 : vector<8x128xf32> to vector<8x128xbf16>
    %cst_84 = arith.constant dense<0.000000e+00> : vector<8x512xf32>
    %393 = tpu.matmul %392, %3, %cst_84 {dimension_numbers = #tpu.dot_dimension_numbers<[1], [0], [0], [1], [0, 0, 1, 1], [], []>} : vector<8x128xbf16>, vector<128x512xbf16>, vector<8x512xf32> -> vector<8x512xf32>
    %394 = arith.addf %391, %393 : vector<8x512xf32>
    %395 = vector.extract_strided_slice %394 {offsets = [0, 0], sizes = [8, 128], strides = [1, 1]} : vector<8x512xf32> to vector<8x128xf32>
    %396 = arith.negf %395 : vector<8x128xf32>
    %397 = math.exp %396 : vector<8x128xf32>
    %cst_85 = arith.constant 1.000000e+00 : f32
    %398 = vector.broadcast %cst_85 : f32 to vector<8x128xf32>
    %399 = arith.addf %398, %397 : vector<8x128xf32>
    %400 = arith.divf %398, %399 : vector<8x128xf32>
    %401 = vector.extract_strided_slice %394 {offsets = [0, 128], sizes = [8, 128], strides = [1, 1]} : vector<8x512xf32> to vector<8x128xf32>
    %402 = arith.negf %401 : vector<8x128xf32>
    %403 = math.exp %402 : vector<8x128xf32>
    %cst_86 = arith.constant 1.000000e+00 : f32
    %404 = vector.broadcast %cst_86 : f32 to vector<8x128xf32>
    %405 = arith.addf %404, %403 : vector<8x128xf32>
    %406 = arith.divf %404, %405 : vector<8x128xf32>
    %407 = vector.extract_strided_slice %394 {offsets = [0, 256], sizes = [8, 128], strides = [1, 1]} : vector<8x512xf32> to vector<8x128xf32>
    %408 = math.tanh %407 : vector<8x128xf32>
    %409 = vector.extract_strided_slice %394 {offsets = [0, 384], sizes = [8, 128], strides = [1, 1]} : vector<8x512xf32> to vector<8x128xf32>
    %410 = arith.negf %409 : vector<8x128xf32>
    %411 = math.exp %410 : vector<8x128xf32>
    %cst_87 = arith.constant 1.000000e+00 : f32
    %412 = vector.broadcast %cst_87 : f32 to vector<8x128xf32>
    %413 = arith.addf %412, %411 : vector<8x128xf32>
    %414 = arith.divf %412, %413 : vector<8x128xf32>
    %415 = arith.mulf %406, %354 : vector<8x128xf32>
    %416 = arith.mulf %400, %408 : vector<8x128xf32>
    %417 = arith.addf %415, %416 : vector<8x128xf32>
    %418 = math.tanh %417 : vector<8x128xf32>
    %419 = arith.mulf %414, %418 : vector<8x128xf32>
    %420 = arith.truncf %419 : vector<8x128xf32> to vector<8x128xbf16>
    %cst_88 = arith.constant dense<0.000000e+00> : vector<8x512xf32>
    %421 = tpu.matmul %420, %4, %cst_88 {dimension_numbers = #tpu.dot_dimension_numbers<[1], [0], [0], [1], [0, 0, 1, 1], [], []>} : vector<8x128xbf16>, vector<128x512xbf16>, vector<8x512xf32> -> vector<8x512xf32>
    %422 = arith.truncf %388 : vector<8x128xf32> to vector<8x128xbf16>
    %cst_89 = arith.constant dense<0.000000e+00> : vector<8x512xf32>
    %423 = tpu.matmul %422, %5, %cst_89 {dimension_numbers = #tpu.dot_dimension_numbers<[1], [0], [0], [1], [0, 0, 1, 1], [], []>} : vector<8x128xbf16>, vector<128x512xbf16>, vector<8x512xf32> -> vector<8x512xf32>
    %424 = arith.addf %421, %423 : vector<8x512xf32>
    %425 = vector.broadcast %6 : vector<1x512xf32> to vector<8x512xf32>
    %426 = arith.addf %424, %425 : vector<8x512xf32>
    %427 = vector.extract_strided_slice %426 {offsets = [0, 0], sizes = [8, 128], strides = [1, 1]} : vector<8x512xf32> to vector<8x128xf32>
    %428 = arith.negf %427 : vector<8x128xf32>
    %429 = math.exp %428 : vector<8x128xf32>
    %cst_90 = arith.constant 1.000000e+00 : f32
    %430 = vector.broadcast %cst_90 : f32 to vector<8x128xf32>
    %431 = arith.addf %430, %429 : vector<8x128xf32>
    %432 = arith.divf %430, %431 : vector<8x128xf32>
    %433 = vector.extract_strided_slice %426 {offsets = [0, 128], sizes = [8, 128], strides = [1, 1]} : vector<8x512xf32> to vector<8x128xf32>
    %434 = arith.negf %433 : vector<8x128xf32>
    %435 = math.exp %434 : vector<8x128xf32>
    %cst_91 = arith.constant 1.000000e+00 : f32
    %436 = vector.broadcast %cst_91 : f32 to vector<8x128xf32>
    %437 = arith.addf %436, %435 : vector<8x128xf32>
    %438 = arith.divf %436, %437 : vector<8x128xf32>
    %439 = vector.extract_strided_slice %426 {offsets = [0, 256], sizes = [8, 128], strides = [1, 1]} : vector<8x512xf32> to vector<8x128xf32>
    %440 = math.tanh %439 : vector<8x128xf32>
    %441 = vector.extract_strided_slice %426 {offsets = [0, 384], sizes = [8, 128], strides = [1, 1]} : vector<8x512xf32> to vector<8x128xf32>
    %442 = arith.negf %441 : vector<8x128xf32>
    %443 = math.exp %442 : vector<8x128xf32>
    %cst_92 = arith.constant 1.000000e+00 : f32
    %444 = vector.broadcast %cst_92 : f32 to vector<8x128xf32>
    %445 = arith.addf %444, %443 : vector<8x128xf32>
    %446 = arith.divf %444, %445 : vector<8x128xf32>
    %447 = arith.mulf %438, %386 : vector<8x128xf32>
    %448 = arith.mulf %432, %440 : vector<8x128xf32>
    %449 = arith.addf %447, %448 : vector<8x128xf32>
    %450 = math.tanh %449 : vector<8x128xf32>
    %451 = arith.mulf %446, %450 : vector<8x128xf32>
    %c7_i32 = arith.constant 7 : i32
    %452 = arith.index_cast %c7_i32 : i32 to index
    %c0_93 = arith.constant 0 : index
    %c0_94 = arith.constant 0 : index
    %453 = vector.load %arg1[%452, %c0_93, %c0_94] : memref<8x8x512xf32, #tpu.memory_space<vmem>>, vector<1x8x512xf32>
    %454 = vector.shape_cast %453 : vector<1x8x512xf32> to vector<8x512xf32>
    %455 = arith.truncf %419 : vector<8x128xf32> to vector<8x128xbf16>
    %cst_95 = arith.constant dense<0.000000e+00> : vector<8x512xf32>
    %456 = tpu.matmul %455, %3, %cst_95 {dimension_numbers = #tpu.dot_dimension_numbers<[1], [0], [0], [1], [0, 0, 1, 1], [], []>} : vector<8x128xbf16>, vector<128x512xbf16>, vector<8x512xf32> -> vector<8x512xf32>
    %457 = arith.addf %454, %456 : vector<8x512xf32>
    %458 = vector.extract_strided_slice %457 {offsets = [0, 0], sizes = [8, 128], strides = [1, 1]} : vector<8x512xf32> to vector<8x128xf32>
    %459 = arith.negf %458 : vector<8x128xf32>
    %460 = math.exp %459 : vector<8x128xf32>
    %cst_96 = arith.constant 1.000000e+00 : f32
    %461 = vector.broadcast %cst_96 : f32 to vector<8x128xf32>
    %462 = arith.addf %461, %460 : vector<8x128xf32>
    %463 = arith.divf %461, %462 : vector<8x128xf32>
    %464 = vector.extract_strided_slice %457 {offsets = [0, 128], sizes = [8, 128], strides = [1, 1]} : vector<8x512xf32> to vector<8x128xf32>
    %465 = arith.negf %464 : vector<8x128xf32>
    %466 = math.exp %465 : vector<8x128xf32>
    %cst_97 = arith.constant 1.000000e+00 : f32
    %467 = vector.broadcast %cst_97 : f32 to vector<8x128xf32>
    %468 = arith.addf %467, %466 : vector<8x128xf32>
    %469 = arith.divf %467, %468 : vector<8x128xf32>
    %470 = vector.extract_strided_slice %457 {offsets = [0, 256], sizes = [8, 128], strides = [1, 1]} : vector<8x512xf32> to vector<8x128xf32>
    %471 = math.tanh %470 : vector<8x128xf32>
    %472 = vector.extract_strided_slice %457 {offsets = [0, 384], sizes = [8, 128], strides = [1, 1]} : vector<8x512xf32> to vector<8x128xf32>
    %473 = arith.negf %472 : vector<8x128xf32>
    %474 = math.exp %473 : vector<8x128xf32>
    %cst_98 = arith.constant 1.000000e+00 : f32
    %475 = vector.broadcast %cst_98 : f32 to vector<8x128xf32>
    %476 = arith.addf %475, %474 : vector<8x128xf32>
    %477 = arith.divf %475, %476 : vector<8x128xf32>
    %478 = arith.mulf %469, %417 : vector<8x128xf32>
    %479 = arith.mulf %463, %471 : vector<8x128xf32>
    %480 = arith.addf %478, %479 : vector<8x128xf32>
    %481 = math.tanh %480 : vector<8x128xf32>
    %482 = arith.mulf %477, %481 : vector<8x128xf32>
    %483 = arith.truncf %482 : vector<8x128xf32> to vector<8x128xbf16>
    %cst_99 = arith.constant dense<0.000000e+00> : vector<8x512xf32>
    %484 = tpu.matmul %483, %4, %cst_99 {dimension_numbers = #tpu.dot_dimension_numbers<[1], [0], [0], [1], [0, 0, 1, 1], [], []>} : vector<8x128xbf16>, vector<128x512xbf16>, vector<8x512xf32> -> vector<8x512xf32>
    %485 = arith.truncf %451 : vector<8x128xf32> to vector<8x128xbf16>
    %cst_100 = arith.constant dense<0.000000e+00> : vector<8x512xf32>
    %486 = tpu.matmul %485, %5, %cst_100 {dimension_numbers = #tpu.dot_dimension_numbers<[1], [0], [0], [1], [0, 0, 1, 1], [], []>} : vector<8x128xbf16>, vector<128x512xbf16>, vector<8x512xf32> -> vector<8x512xf32>
    %487 = arith.addf %484, %486 : vector<8x512xf32>
    %488 = vector.broadcast %6 : vector<1x512xf32> to vector<8x512xf32>
    %489 = arith.addf %487, %488 : vector<8x512xf32>
    %490 = vector.extract_strided_slice %489 {offsets = [0, 0], sizes = [8, 128], strides = [1, 1]} : vector<8x512xf32> to vector<8x128xf32>
    %491 = arith.negf %490 : vector<8x128xf32>
    %492 = math.exp %491 : vector<8x128xf32>
    %cst_101 = arith.constant 1.000000e+00 : f32
    %493 = vector.broadcast %cst_101 : f32 to vector<8x128xf32>
    %494 = arith.addf %493, %492 : vector<8x128xf32>
    %495 = arith.divf %493, %494 : vector<8x128xf32>
    %496 = vector.extract_strided_slice %489 {offsets = [0, 128], sizes = [8, 128], strides = [1, 1]} : vector<8x512xf32> to vector<8x128xf32>
    %497 = arith.negf %496 : vector<8x128xf32>
    %498 = math.exp %497 : vector<8x128xf32>
    %cst_102 = arith.constant 1.000000e+00 : f32
    %499 = vector.broadcast %cst_102 : f32 to vector<8x128xf32>
    %500 = arith.addf %499, %498 : vector<8x128xf32>
    %501 = arith.divf %499, %500 : vector<8x128xf32>
    %502 = vector.extract_strided_slice %489 {offsets = [0, 256], sizes = [8, 128], strides = [1, 1]} : vector<8x512xf32> to vector<8x128xf32>
    %503 = math.tanh %502 : vector<8x128xf32>
    %504 = vector.extract_strided_slice %489 {offsets = [0, 384], sizes = [8, 128], strides = [1, 1]} : vector<8x512xf32> to vector<8x128xf32>
    %505 = arith.negf %504 : vector<8x128xf32>
    %506 = math.exp %505 : vector<8x128xf32>
    %cst_103 = arith.constant 1.000000e+00 : f32
    %507 = vector.broadcast %cst_103 : f32 to vector<8x128xf32>
    %508 = arith.addf %507, %506 : vector<8x128xf32>
    %509 = arith.divf %507, %508 : vector<8x128xf32>
    %510 = arith.mulf %501, %449 : vector<8x128xf32>
    %511 = arith.mulf %495, %503 : vector<8x128xf32>
    %512 = arith.addf %510, %511 : vector<8x128xf32>
    %513 = math.tanh %512 : vector<8x128xf32>
    %514 = arith.mulf %509, %513 : vector<8x128xf32>
    %c8_i32 = arith.constant 8 : i32
    %c0_104 = arith.constant 0 : index
    %c0_105 = arith.constant 0 : index
    %515 = vector.load %arg6[%c0_104, %c0_105] : memref<8x128xf32, #tpu.memory_space<vmem>>, vector<8x128xf32>
    tpu.vector_store %arg6[%c0_104, %c0_105], %482 {strides = array<i32>} : memref<8x128xf32, #tpu.memory_space<vmem>>, vector<8x128xf32>,
    %c0_106 = arith.constant 0 : index
    %c0_107 = arith.constant 0 : index
    %516 = vector.load %arg7[%c0_106, %c0_107] : memref<8x128xf32, #tpu.memory_space<vmem>>, vector<8x128xf32>
    tpu.vector_store %arg7[%c0_106, %c0_107], %480 {strides = array<i32>} : memref<8x128xf32, #tpu.memory_space<vmem>>, vector<8x128xf32>,
    %c0_108 = arith.constant 0 : index
    %c0_109 = arith.constant 0 : index
    %517 = vector.load %arg8[%c0_108, %c0_109] : memref<8x128xf32, #tpu.memory_space<vmem>>, vector<8x128xf32>
    tpu.vector_store %arg8[%c0_108, %c0_109], %514 {strides = array<i32>} : memref<8x128xf32, #tpu.memory_space<vmem>>, vector<8x128xf32>,
    %c0_110 = arith.constant 0 : index
    %c0_111 = arith.constant 0 : index
    %518 = vector.load %arg9[%c0_110, %c0_111] : memref<8x128xf32, #tpu.memory_space<vmem>>, vector<8x128xf32>
    tpu.vector_store %arg9[%c0_110, %c0_111], %512 {strides = array<i32>} : memref<8x128xf32, #tpu.memory_space<vmem>>, vector<8x128xf32>,
    return
  }
  func.func @transform_0(%arg0: i32) -> (i32, i32, i32) {
    %c0_i32 = arith.constant 0 : i32
    %c0_i32_0 = arith.constant 0 : i32
    %c0_i32_1 = arith.constant 0 : i32
    return %arg0, %c0_i32, %c0_i32_0 : i32, i32, i32
  }
  func.func @transform_1(%arg0: i32) -> (i32, i32) {
    %c0_i32 = arith.constant 0 : i32
    %c0_i32_0 = arith.constant 0 : i32
    %c0_i32_1 = arith.constant 0 : i32
    return %c0_i32, %c0_i32_0 : i32, i32
  }
  func.func @transform_2(%arg0: i32) -> (i32, i32) {
    %c0_i32 = arith.constant 0 : i32
    %c0_i32_0 = arith.constant 0 : i32
    %c0_i32_1 = arith.constant 0 : i32
    return %c0_i32, %c0_i32_0 : i32, i32
  }
  func.func @transform_3(%arg0: i32) -> (i32, i32) {
    %c0_i32 = arith.constant 0 : i32
    %c0_i32_0 = arith.constant 0 : i32
    %c0_i32_1 = arith.constant 0 : i32
    return %c0_i32, %c0_i32_0 : i32, i32
  }
  func.func @transform_4(%arg0: i32) -> (i32, i32) {
    %c0_i32 = arith.constant 0 : i32
    %c0_i32_0 = arith.constant 0 : i32
    %c0_i32_1 = arith.constant 0 : i32
    return %c0_i32, %c0_i32_0 : i32, i32
  }
  func.func @transform_5(%arg0: i32) -> (i32, i32) {
    %c0_i32 = arith.constant 0 : i32
    %c0_i32_0 = arith.constant 0 : i32
    %c0_i32_1 = arith.constant 0 : i32
    return %c0_i32, %c0_i32_0 : i32, i32
  }
  func.func @transform_6(%arg0: i32) -> (i32, i32) {
    %c0_i32 = arith.constant 0 : i32
    %c0_i32_0 = arith.constant 0 : i32
    %c0_i32_1 = arith.constant 0 : i32
    return %c0_i32, %c0_i32_0 : i32, i32
  }
  func.func @transform_7(%arg0: i32) -> (i32, i32) {
    %c0_i32 = arith.constant 0 : i32
    %c0_i32_0 = arith.constant 0 : i32
    %c0_i32_1 = arith.constant 0 : i32
    return %c0_i32, %c0_i32_0 : i32, i32
  }
  func.func @transform_8(%arg0: i32) -> (i32, i32) {
    %c0_i32 = arith.constant 0 : i32
    %c0_i32_0 = arith.constant 0 : i32
    %c0_i32_1 = arith.constant 0 : i32
    return %c0_i32, %c0_i32_0 : i32, i32
  }
}

module attributes {stable_mosaic.version = 11 : i64} {
  func.func @_decoder_seq_kernel(%arg0: i32, %arg1: i32, %arg2: memref<7xi32, #tpu.memory_space<smem>>, %arg3: memref<1x8x128xbf16, #tpu.memory_space<vmem>>, %arg4: memref<8x128xf32, #tpu.memory_space<vmem>>, %arg5: memref<8x128xf32, #tpu.memory_space<vmem>>, %arg6: memref<8x128xf32, #tpu.memory_space<vmem>>, %arg7: memref<8x128xf32, #tpu.memory_space<vmem>>, %arg8: memref<128x512xbf16, #tpu.memory_space<vmem>>, %arg9: memref<128x512xbf16, #tpu.memory_space<vmem>>, %arg10: memref<1x512xf32, #tpu.memory_space<vmem>>, %arg11: memref<128x512xbf16, #tpu.memory_space<vmem>>, %arg12: memref<128x512xbf16, #tpu.memory_space<vmem>>, %arg13: memref<1x512xf32, #tpu.memory_space<vmem>>, %arg14: memref<128x128xbf16, #tpu.memory_space<vmem>>, %arg15: memref<128x128xbf16, #tpu.memory_space<vmem>>, %arg16: memref<1x128xf32, #tpu.memory_space<vmem>>, %arg17: memref<1x8x128xf32, #tpu.memory_space<vmem>>, %arg18: memref<8x128xf32, #tpu.memory_space<vmem>>, %arg19: memref<8x128xf32, #tpu.memory_space<vmem>>, %arg20: memref<8x128xf32, #tpu.memory_space<vmem>>, %arg21: memref<8x128xf32, #tpu.memory_space<vmem>>, %arg22: memref<8x1xf32, #tpu.memory_space<vmem>>, %arg23: memref<8x1xf32, #tpu.memory_space<vmem>>) attributes {dimension_semantics = [#tpu.dimension_semantics<arbitrary>, #tpu.dimension_semantics<arbitrary>], iteration_bounds = array<i64: 7, 1>, scalar_prefetch = 1 : i64, scratch_operands = 6 : i64, tpu.core_type = #tpu.core_type<tc>, window_params = [{transform_indices = @transform_0, window_bounds = array<i64: 1, 8, 128>}, {pipeline_mode = #tpu.pipeline_mode<synchronous>, transform_indices = @transform_1, window_bounds = array<i64: 8, 128>}, {pipeline_mode = #tpu.pipeline_mode<synchronous>, transform_indices = @transform_2, window_bounds = array<i64: 8, 128>}, {pipeline_mode = #tpu.pipeline_mode<synchronous>, transform_indices = @transform_3, window_bounds = array<i64: 8, 128>}, {pipeline_mode = #tpu.pipeline_mode<synchronous>, transform_indices = @transform_4, window_bounds = array<i64: 8, 128>}, {pipeline_mode = #tpu.pipeline_mode<synchronous>, transform_indices = @transform_5, window_bounds = array<i64: 128, 512>}, {pipeline_mode = #tpu.pipeline_mode<synchronous>, transform_indices = @transform_6, window_bounds = array<i64: 128, 512>}, {pipeline_mode = #tpu.pipeline_mode<synchronous>, transform_indices = @transform_7, window_bounds = array<i64: 1, 512>}, {pipeline_mode = #tpu.pipeline_mode<synchronous>, transform_indices = @transform_8, window_bounds = array<i64: 128, 512>}, {pipeline_mode = #tpu.pipeline_mode<synchronous>, transform_indices = @transform_9, window_bounds = array<i64: 128, 512>}, {pipeline_mode = #tpu.pipeline_mode<synchronous>, transform_indices = @transform_10, window_bounds = array<i64: 1, 512>}, {pipeline_mode = #tpu.pipeline_mode<synchronous>, transform_indices = @transform_11, window_bounds = array<i64: 128, 128>}, {transform_indices = @transform_12, window_bounds = array<i64: 128, 128>}, {transform_indices = @transform_13, window_bounds = array<i64: 1, 128>}, {transform_indices = @transform_14, window_bounds = array<i64: 1, 8, 128>}]} {
    %c0_i32 = arith.constant 0 : i32
    %0 = arith.cmpi eq, %arg1, %c0_i32 : i32
    %1 = arith.extui %0 : i1 to i32
    %c0_i32_0 = arith.constant 0 : i32
    %2 = arith.cmpi ne, %1, %c0_i32_0 : i32
    scf.if %2 {
      %c0_i32_23 = arith.constant 0 : i32
      %38 = arith.cmpi eq, %arg0, %c0_i32_23 : i32
      %39 = arith.extui %38 : i1 to i32
      %c0_i32_24 = arith.constant 0 : i32
      %40 = arith.cmpi ne, %39, %c0_i32_24 : i32
      scf.if %40 {
        %c0_75 = arith.constant 0 : index
        %c0_76 = arith.constant 0 : index
        %137 = vector.load %arg4[%c0_75, %c0_76] : memref<8x128xf32, #tpu.memory_space<vmem>>, vector<8x128xf32>
        %c0_77 = arith.constant 0 : index
        %c0_78 = arith.constant 0 : index
        %138 = vector.load %arg18[%c0_77, %c0_78] : memref<8x128xf32, #tpu.memory_space<vmem>>, vector<8x128xf32>
        tpu.vector_store %arg18[%c0_77, %c0_78], %137 {strides = array<i32>} : memref<8x128xf32, #tpu.memory_space<vmem>>, vector<8x128xf32>,
        %c0_79 = arith.constant 0 : index
        %c0_80 = arith.constant 0 : index
        %139 = vector.load %arg5[%c0_79, %c0_80] : memref<8x128xf32, #tpu.memory_space<vmem>>, vector<8x128xf32>
        %c0_81 = arith.constant 0 : index
        %c0_82 = arith.constant 0 : index
        %140 = vector.load %arg19[%c0_81, %c0_82] : memref<8x128xf32, #tpu.memory_space<vmem>>, vector<8x128xf32>
        tpu.vector_store %arg19[%c0_81, %c0_82], %139 {strides = array<i32>} : memref<8x128xf32, #tpu.memory_space<vmem>>, vector<8x128xf32>,
        %c0_83 = arith.constant 0 : index
        %c0_84 = arith.constant 0 : index
        %141 = vector.load %arg6[%c0_83, %c0_84] : memref<8x128xf32, #tpu.memory_space<vmem>>, vector<8x128xf32>
        %c0_85 = arith.constant 0 : index
        %c0_86 = arith.constant 0 : index
        %142 = vector.load %arg20[%c0_85, %c0_86] : memref<8x128xf32, #tpu.memory_space<vmem>>, vector<8x128xf32>
        tpu.vector_store %arg20[%c0_85, %c0_86], %141 {strides = array<i32>} : memref<8x128xf32, #tpu.memory_space<vmem>>, vector<8x128xf32>,
        %c0_87 = arith.constant 0 : index
        %c0_88 = arith.constant 0 : index
        %143 = vector.load %arg7[%c0_87, %c0_88] : memref<8x128xf32, #tpu.memory_space<vmem>>, vector<8x128xf32>
        %c0_89 = arith.constant 0 : index
        %c0_90 = arith.constant 0 : index
        %144 = vector.load %arg21[%c0_89, %c0_90] : memref<8x128xf32, #tpu.memory_space<vmem>>, vector<8x128xf32>
        tpu.vector_store %arg21[%c0_89, %c0_90], %143 {strides = array<i32>} : memref<8x128xf32, #tpu.memory_space<vmem>>, vector<8x128xf32>,
        %cst_91 = arith.constant 0.000000e+00 : f32
        %145 = vector.broadcast %cst_91 : f32 to vector<8x1xf32>
        %c0_92 = arith.constant 0 : index
        %c0_93 = arith.constant 0 : index
        %146 = vector.load %arg23[%c0_92, %c0_93] : memref<8x1xf32, #tpu.memory_space<vmem>>, vector<8x1xf32>
        tpu.vector_store %arg23[%c0_92, %c0_93], %145 {strides = array<i32>} : memref<8x1xf32, #tpu.memory_space<vmem>>, vector<8x1xf32>,
      } else {
      }
      %41 = tpu.iota {dimensions = array<i32: 1>} : vector<8x128xi32>
      %42 = arith.sitofp %41 : vector<8x128xi32> to vector<8x128xf32>
      %c0_25 = arith.constant 0 : index
      %c0_26 = arith.constant 0 : index
      %43 = vector.load %arg23[%c0_25, %c0_26] : memref<8x1xf32, #tpu.memory_space<vmem>>, vector<8x1xf32>
      %44 = vector.broadcast %43 : vector<8x1xf32> to vector<8x128xf32>
      %45 = arith.cmpf oeq, %42, %44 : vector<8x128xf32>
      %46 = arith.extui %45 : vector<8x128xi1> to vector<8x128xi32>
      %47 = arith.sitofp %46 : vector<8x128xi32> to vector<8x128xf32>
      %48 = arith.truncf %47 : vector<8x128xf32> to vector<8x128xbf16>
      %c0_27 = arith.constant 0 : index
      %c0_28 = arith.constant 0 : index
      %49 = vector.load %arg14[%c0_27, %c0_28] : memref<128x128xbf16, #tpu.memory_space<vmem>>, vector<128x128xbf16>
      %cst_29 = arith.constant dense<0.000000e+00> : vector<8x128xf32>
      %50 = tpu.matmul %48, %49, %cst_29 {dimension_numbers = #tpu.dot_dimension_numbers<[1], [0], [0], [1], [0, 0, 1, 1], [], []>} : vector<8x128xbf16>, vector<128x128xbf16>, vector<8x128xf32> -> vector<8x128xf32>
      %51 = arith.truncf %50 : vector<8x128xf32> to vector<8x128xbf16>
      %52 = arith.index_cast %arg0 : i32 to index
      %53 = memref.load %arg2[%52] : memref<7xi32, #tpu.memory_space<smem>>
      %c0_i32_30 = arith.constant 0 : i32
      %54 = arith.cmpi ne, %53, %c0_i32_30 : i32
      %c0_31 = arith.constant 0 : index
      %c0_32 = arith.constant 0 : index
      %c0_33 = arith.constant 0 : index
      %55 = vector.load %arg3[%c0_31, %c0_32, %c0_33] : memref<1x8x128xbf16, #tpu.memory_space<vmem>>, vector<1x8x128xbf16>
      %56 = vector.shape_cast %55 : vector<1x8x128xbf16> to vector<8x128xbf16>
      %57 = arith.select %54, %56, %51 : vector<8x128xbf16>
      %c0_34 = arith.constant 0 : index
      %c0_35 = arith.constant 0 : index
      %58 = vector.load %arg18[%c0_34, %c0_35] : memref<8x128xf32, #tpu.memory_space<vmem>>, vector<8x128xf32>
      %c0_36 = arith.constant 0 : index
      %c0_37 = arith.constant 0 : index
      %59 = vector.load %arg19[%c0_36, %c0_37] : memref<8x128xf32, #tpu.memory_space<vmem>>, vector<8x128xf32>
      %c0_38 = arith.constant 0 : index
      %c0_39 = arith.constant 0 : index
      %60 = vector.load %arg8[%c0_38, %c0_39] : memref<128x512xbf16, #tpu.memory_space<vmem>>, vector<128x512xbf16>
      %c0_40 = arith.constant 0 : index
      %c0_41 = arith.constant 0 : index
      %61 = vector.load %arg9[%c0_40, %c0_41] : memref<128x512xbf16, #tpu.memory_space<vmem>>, vector<128x512xbf16>
      %c0_42 = arith.constant 0 : index
      %c0_43 = arith.constant 0 : index
      %62 = vector.load %arg10[%c0_42, %c0_43] : memref<1x512xf32, #tpu.memory_space<vmem>>, vector<1x512xf32>
      %cst_44 = arith.constant dense<0.000000e+00> : vector<8x512xf32>
      %63 = tpu.matmul %57, %60, %cst_44 {dimension_numbers = #tpu.dot_dimension_numbers<[1], [0], [0], [1], [0, 0, 1, 1], [], []>} : vector<8x128xbf16>, vector<128x512xbf16>, vector<8x512xf32> -> vector<8x512xf32>
      %64 = arith.truncf %58 : vector<8x128xf32> to vector<8x128xbf16>
      %cst_45 = arith.constant dense<0.000000e+00> : vector<8x512xf32>
      %65 = tpu.matmul %64, %61, %cst_45 {dimension_numbers = #tpu.dot_dimension_numbers<[1], [0], [0], [1], [0, 0, 1, 1], [], []>} : vector<8x128xbf16>, vector<128x512xbf16>, vector<8x512xf32> -> vector<8x512xf32>
      %66 = arith.addf %63, %65 : vector<8x512xf32>
      %67 = vector.broadcast %62 : vector<1x512xf32> to vector<8x512xf32>
      %68 = arith.addf %66, %67 : vector<8x512xf32>
      %69 = vector.extract_strided_slice %68 {offsets = [0, 0], sizes = [8, 128], strides = [1, 1]} : vector<8x512xf32> to vector<8x128xf32>
      %70 = arith.negf %69 : vector<8x128xf32>
      %71 = math.exp %70 : vector<8x128xf32>
      %cst_46 = arith.constant 1.000000e+00 : f32
      %72 = vector.broadcast %cst_46 : f32 to vector<8x128xf32>
      %73 = arith.addf %72, %71 : vector<8x128xf32>
      %74 = arith.divf %72, %73 : vector<8x128xf32>
      %75 = vector.extract_strided_slice %68 {offsets = [0, 128], sizes = [8, 128], strides = [1, 1]} : vector<8x512xf32> to vector<8x128xf32>
      %76 = arith.negf %75 : vector<8x128xf32>
      %77 = math.exp %76 : vector<8x128xf32>
      %cst_47 = arith.constant 1.000000e+00 : f32
      %78 = vector.broadcast %cst_47 : f32 to vector<8x128xf32>
      %79 = arith.addf %78, %77 : vector<8x128xf32>
      %80 = arith.divf %78, %79 : vector<8x128xf32>
      %81 = vector.extract_strided_slice %68 {offsets = [0, 256], sizes = [8, 128], strides = [1, 1]} : vector<8x512xf32> to vector<8x128xf32>
      %82 = math.tanh %81 : vector<8x128xf32>
      %83 = vector.extract_strided_slice %68 {offsets = [0, 384], sizes = [8, 128], strides = [1, 1]} : vector<8x512xf32> to vector<8x128xf32>
      %84 = arith.negf %83 : vector<8x128xf32>
      %85 = math.exp %84 : vector<8x128xf32>
      %cst_48 = arith.constant 1.000000e+00 : f32
      %86 = vector.broadcast %cst_48 : f32 to vector<8x128xf32>
      %87 = arith.addf %86, %85 : vector<8x128xf32>
      %88 = arith.divf %86, %87 : vector<8x128xf32>
      %89 = arith.mulf %80, %59 : vector<8x128xf32>
      %90 = arith.mulf %74, %82 : vector<8x128xf32>
      %91 = arith.addf %89, %90 : vector<8x128xf32>
      %92 = math.tanh %91 : vector<8x128xf32>
      %93 = arith.mulf %88, %92 : vector<8x128xf32>
      %c0_49 = arith.constant 0 : index
      %c0_50 = arith.constant 0 : index
      %94 = vector.load %arg18[%c0_49, %c0_50] : memref<8x128xf32, #tpu.memory_space<vmem>>, vector<8x128xf32>
      tpu.vector_store %arg18[%c0_49, %c0_50], %93 {strides = array<i32>} : memref<8x128xf32, #tpu.memory_space<vmem>>, vector<8x128xf32>,
      %c0_51 = arith.constant 0 : index
      %c0_52 = arith.constant 0 : index
      %95 = vector.load %arg19[%c0_51, %c0_52] : memref<8x128xf32, #tpu.memory_space<vmem>>, vector<8x128xf32>
      tpu.vector_store %arg19[%c0_51, %c0_52], %91 {strides = array<i32>} : memref<8x128xf32, #tpu.memory_space<vmem>>, vector<8x128xf32>,
      %c0_53 = arith.constant 0 : index
      %c0_54 = arith.constant 0 : index
      %96 = vector.load %arg20[%c0_53, %c0_54] : memref<8x128xf32, #tpu.memory_space<vmem>>, vector<8x128xf32>
      %c0_55 = arith.constant 0 : index
      %c0_56 = arith.constant 0 : index
      %97 = vector.load %arg21[%c0_55, %c0_56] : memref<8x128xf32, #tpu.memory_space<vmem>>, vector<8x128xf32>
      %c0_57 = arith.constant 0 : index
      %c0_58 = arith.constant 0 : index
      %98 = vector.load %arg11[%c0_57, %c0_58] : memref<128x512xbf16, #tpu.memory_space<vmem>>, vector<128x512xbf16>
      %c0_59 = arith.constant 0 : index
      %c0_60 = arith.constant 0 : index
      %99 = vector.load %arg12[%c0_59, %c0_60] : memref<128x512xbf16, #tpu.memory_space<vmem>>, vector<128x512xbf16>
      %c0_61 = arith.constant 0 : index
      %c0_62 = arith.constant 0 : index
      %100 = vector.load %arg13[%c0_61, %c0_62] : memref<1x512xf32, #tpu.memory_space<vmem>>, vector<1x512xf32>
      %101 = arith.truncf %93 : vector<8x128xf32> to vector<8x128xbf16>
      %cst_63 = arith.constant dense<0.000000e+00> : vector<8x512xf32>
      %102 = tpu.matmul %101, %98, %cst_63 {dimension_numbers = #tpu.dot_dimension_numbers<[1], [0], [0], [1], [0, 0, 1, 1], [], []>} : vector<8x128xbf16>, vector<128x512xbf16>, vector<8x512xf32> -> vector<8x512xf32>
      %103 = arith.truncf %96 : vector<8x128xf32> to vector<8x128xbf16>
      %cst_64 = arith.constant dense<0.000000e+00> : vector<8x512xf32>
      %104 = tpu.matmul %103, %99, %cst_64 {dimension_numbers = #tpu.dot_dimension_numbers<[1], [0], [0], [1], [0, 0, 1, 1], [], []>} : vector<8x128xbf16>, vector<128x512xbf16>, vector<8x512xf32> -> vector<8x512xf32>
      %105 = arith.addf %102, %104 : vector<8x512xf32>
      %106 = vector.broadcast %100 : vector<1x512xf32> to vector<8x512xf32>
      %107 = arith.addf %105, %106 : vector<8x512xf32>
      %108 = vector.extract_strided_slice %107 {offsets = [0, 0], sizes = [8, 128], strides = [1, 1]} : vector<8x512xf32> to vector<8x128xf32>
      %109 = arith.negf %108 : vector<8x128xf32>
      %110 = math.exp %109 : vector<8x128xf32>
      %cst_65 = arith.constant 1.000000e+00 : f32
      %111 = vector.broadcast %cst_65 : f32 to vector<8x128xf32>
      %112 = arith.addf %111, %110 : vector<8x128xf32>
      %113 = arith.divf %111, %112 : vector<8x128xf32>
      %114 = vector.extract_strided_slice %107 {offsets = [0, 128], sizes = [8, 128], strides = [1, 1]} : vector<8x512xf32> to vector<8x128xf32>
      %115 = arith.negf %114 : vector<8x128xf32>
      %116 = math.exp %115 : vector<8x128xf32>
      %cst_66 = arith.constant 1.000000e+00 : f32
      %117 = vector.broadcast %cst_66 : f32 to vector<8x128xf32>
      %118 = arith.addf %117, %116 : vector<8x128xf32>
      %119 = arith.divf %117, %118 : vector<8x128xf32>
      %120 = vector.extract_strided_slice %107 {offsets = [0, 256], sizes = [8, 128], strides = [1, 1]} : vector<8x512xf32> to vector<8x128xf32>
      %121 = math.tanh %120 : vector<8x128xf32>
      %122 = vector.extract_strided_slice %107 {offsets = [0, 384], sizes = [8, 128], strides = [1, 1]} : vector<8x512xf32> to vector<8x128xf32>
      %123 = arith.negf %122 : vector<8x128xf32>
      %124 = math.exp %123 : vector<8x128xf32>
      %cst_67 = arith.constant 1.000000e+00 : f32
      %125 = vector.broadcast %cst_67 : f32 to vector<8x128xf32>
      %126 = arith.addf %125, %124 : vector<8x128xf32>
      %127 = arith.divf %125, %126 : vector<8x128xf32>
      %128 = arith.mulf %119, %97 : vector<8x128xf32>
      %129 = arith.mulf %113, %121 : vector<8x128xf32>
      %130 = arith.addf %128, %129 : vector<8x128xf32>
      %131 = math.tanh %130 : vector<8x128xf32>
      %132 = arith.mulf %127, %131 : vector<8x128xf32>
      %c0_68 = arith.constant 0 : index
      %c0_69 = arith.constant 0 : index
      %133 = vector.load %arg20[%c0_68, %c0_69] : memref<8x128xf32, #tpu.memory_space<vmem>>, vector<8x128xf32>
      tpu.vector_store %arg20[%c0_68, %c0_69], %132 {strides = array<i32>} : memref<8x128xf32, #tpu.memory_space<vmem>>, vector<8x128xf32>,
      %c0_70 = arith.constant 0 : index
      %c0_71 = arith.constant 0 : index
      %134 = vector.load %arg21[%c0_70, %c0_71] : memref<8x128xf32, #tpu.memory_space<vmem>>, vector<8x128xf32>
      tpu.vector_store %arg21[%c0_70, %c0_71], %130 {strides = array<i32>} : memref<8x128xf32, #tpu.memory_space<vmem>>, vector<8x128xf32>,
      %cst_72 = arith.constant 0xFF800000 : f32
      %135 = vector.broadcast %cst_72 : f32 to vector<8x1xf32>
      %c0_73 = arith.constant 0 : index
      %c0_74 = arith.constant 0 : index
      %136 = vector.load %arg22[%c0_73, %c0_74] : memref<8x1xf32, #tpu.memory_space<vmem>>, vector<8x1xf32>
      tpu.vector_store %arg22[%c0_73, %c0_74], %135 {strides = array<i32>} : memref<8x1xf32, #tpu.memory_space<vmem>>, vector<8x1xf32>,
    } else {
    }
    %c0 = arith.constant 0 : index
    %c0_1 = arith.constant 0 : index
    %3 = vector.load %arg20[%c0, %c0_1] : memref<8x128xf32, #tpu.memory_space<vmem>>, vector<8x128xf32>
    %4 = arith.truncf %3 : vector<8x128xf32> to vector<8x128xbf16>
    %c0_2 = arith.constant 0 : index
    %c0_3 = arith.constant 0 : index
    %5 = vector.load %arg15[%c0_2, %c0_3] : memref<128x128xbf16, #tpu.memory_space<vmem>>, vector<128x128xbf16>
    %cst = arith.constant dense<0.000000e+00> : vector<8x128xf32>
    %6 = tpu.matmul %4, %5, %cst {dimension_numbers = #tpu.dot_dimension_numbers<[1], [0], [0], [1], [0, 0, 1, 1], [], []>} : vector<8x128xbf16>, vector<128x128xbf16>, vector<8x128xf32> -> vector<8x128xf32>
    %c0_4 = arith.constant 0 : index
    %c0_5 = arith.constant 0 : index
    %7 = vector.load %arg16[%c0_4, %c0_5] : memref<1x128xf32, #tpu.memory_space<vmem>>, vector<1x128xf32>
    %8 = vector.broadcast %7 : vector<1x128xf32> to vector<8x128xf32>
    %9 = arith.addf %6, %8 : vector<8x128xf32>
    %c0_6 = arith.constant 0 : index
    %c0_7 = arith.constant 0 : index
    %c0_8 = arith.constant 0 : index
    %10 = vector.load %arg17[%c0_6, %c0_7, %c0_8] : memref<1x8x128xf32, #tpu.memory_space<vmem>>, vector<1x8x128xf32>
    %11 = vector.shape_cast %10 : vector<1x8x128xf32> to vector<8x128xf32>
    %12 = vector.shape_cast %9 : vector<8x128xf32> to vector<1x8x128xf32>
    tpu.vector_store %arg17[%c0_6, %c0_7, %c0_8], %12 {strides = array<i32>} : memref<1x8x128xf32, #tpu.memory_space<vmem>>, vector<1x8x128xf32>,
    %c128_i32 = arith.constant 128 : i32
    %13 = arith.muli %arg1, %c128_i32 : i32
    %14 = tpu.iota {dimensions = array<i32: 1>} : vector<8x128xi32>
    %15 = vector.broadcast %13 : i32 to vector<8x128xi32>
    %16 = arith.addi %15, %14 : vector<8x128xi32>
    %c40_i32 = arith.constant 40 : i32
    %17 = vector.broadcast %c40_i32 : i32 to vector<8x128xi32>
    %18 = arith.cmpi slt, %16, %17 : vector<8x128xi32>
    %cst_9 = arith.constant 0xFF800000 : f32
    %19 = vector.broadcast %cst_9 : f32 to vector<8x128xf32>
    %20 = arith.select %18, %9, %19 : vector<8x128xi1>, vector<8x128xf32>
    %cst_10 = arith.constant dense<0xFF800000> : vector<8xf32>
    %21 = vector.multi_reduction <maximumf>, %20, %cst_10 [1] : vector<8x128xf32> to vector<8xf32>
    %22 = vector.shape_cast %21 : vector<8xf32> to vector<8x1xf32>
    %23 = vector.broadcast %22 : vector<8x1xf32> to vector<8x128xf32>
    %24 = arith.cmpf oeq, %20, %23 : vector<8x128xf32>
    %25 = arith.sitofp %16 : vector<8x128xi32> to vector<8x128xf32>
    %cst_11 = arith.constant 1.000000e+09 : f32
    %26 = vector.broadcast %cst_11 : f32 to vector<8x128xf32>
    %27 = arith.select %24, %25, %26 : vector<8x128xi1>, vector<8x128xf32>
    %cst_12 = arith.constant dense<0x7F800000> : vector<8xf32>
    %28 = vector.multi_reduction <minimumf>, %27, %cst_12 [1] : vector<8x128xf32> to vector<8xf32>
    %29 = vector.shape_cast %28 : vector<8xf32> to vector<8x1xf32>
    %c0_13 = arith.constant 0 : index
    %c0_14 = arith.constant 0 : index
    %30 = vector.load %arg22[%c0_13, %c0_14] : memref<8x1xf32, #tpu.memory_space<vmem>>, vector<8x1xf32>
    %31 = arith.cmpf ogt, %22, %30 : vector<8x1xf32>
    %c0_15 = arith.constant 0 : index
    %c0_16 = arith.constant 0 : index
    %32 = vector.load %arg23[%c0_15, %c0_16] : memref<8x1xf32, #tpu.memory_space<vmem>>, vector<8x1xf32>
    %33 = arith.select %31, %29, %32 : vector<8x1xi1>, vector<8x1xf32>
    %c0_17 = arith.constant 0 : index
    %c0_18 = arith.constant 0 : index
    %34 = vector.load %arg23[%c0_17, %c0_18] : memref<8x1xf32, #tpu.memory_space<vmem>>, vector<8x1xf32>
    tpu.vector_store %arg23[%c0_17, %c0_18], %33 {strides = array<i32>} : memref<8x1xf32, #tpu.memory_space<vmem>>, vector<8x1xf32>,
    %c0_19 = arith.constant 0 : index
    %c0_20 = arith.constant 0 : index
    %35 = vector.load %arg22[%c0_19, %c0_20] : memref<8x1xf32, #tpu.memory_space<vmem>>, vector<8x1xf32>
    %36 = arith.maximumf %22, %35 : vector<8x1xf32>
    %c0_21 = arith.constant 0 : index
    %c0_22 = arith.constant 0 : index
    %37 = vector.load %arg22[%c0_21, %c0_22] : memref<8x1xf32, #tpu.memory_space<vmem>>, vector<8x1xf32>
    tpu.vector_store %arg22[%c0_21, %c0_22], %36 {strides = array<i32>} : memref<8x1xf32, #tpu.memory_space<vmem>>, vector<8x1xf32>,
    return
  }
  func.func @transform_0(%arg0: i32, %arg1: i32, %arg2: memref<7xi32, #tpu.memory_space<smem>>) -> (i32, i32, i32) {
    %c0_i32 = arith.constant 0 : i32
    %c0_i32_0 = arith.constant 0 : i32
    %c0_i32_1 = arith.constant 0 : i32
    return %arg0, %c0_i32, %c0_i32_0 : i32, i32, i32
  }
  func.func @transform_1(%arg0: i32, %arg1: i32, %arg2: memref<7xi32, #tpu.memory_space<smem>>) -> (i32, i32) {
    %c0_i32 = arith.constant 0 : i32
    %c0_i32_0 = arith.constant 0 : i32
    %c0_i32_1 = arith.constant 0 : i32
    return %c0_i32, %c0_i32_0 : i32, i32
  }
  func.func @transform_2(%arg0: i32, %arg1: i32, %arg2: memref<7xi32, #tpu.memory_space<smem>>) -> (i32, i32) {
    %c0_i32 = arith.constant 0 : i32
    %c0_i32_0 = arith.constant 0 : i32
    %c0_i32_1 = arith.constant 0 : i32
    return %c0_i32, %c0_i32_0 : i32, i32
  }
  func.func @transform_3(%arg0: i32, %arg1: i32, %arg2: memref<7xi32, #tpu.memory_space<smem>>) -> (i32, i32) {
    %c0_i32 = arith.constant 0 : i32
    %c0_i32_0 = arith.constant 0 : i32
    %c0_i32_1 = arith.constant 0 : i32
    return %c0_i32, %c0_i32_0 : i32, i32
  }
  func.func @transform_4(%arg0: i32, %arg1: i32, %arg2: memref<7xi32, #tpu.memory_space<smem>>) -> (i32, i32) {
    %c0_i32 = arith.constant 0 : i32
    %c0_i32_0 = arith.constant 0 : i32
    %c0_i32_1 = arith.constant 0 : i32
    return %c0_i32, %c0_i32_0 : i32, i32
  }
  func.func @transform_5(%arg0: i32, %arg1: i32, %arg2: memref<7xi32, #tpu.memory_space<smem>>) -> (i32, i32) {
    %c0_i32 = arith.constant 0 : i32
    %c0_i32_0 = arith.constant 0 : i32
    %c0_i32_1 = arith.constant 0 : i32
    return %c0_i32, %c0_i32_0 : i32, i32
  }
  func.func @transform_6(%arg0: i32, %arg1: i32, %arg2: memref<7xi32, #tpu.memory_space<smem>>) -> (i32, i32) {
    %c0_i32 = arith.constant 0 : i32
    %c0_i32_0 = arith.constant 0 : i32
    %c0_i32_1 = arith.constant 0 : i32
    return %c0_i32, %c0_i32_0 : i32, i32
  }
  func.func @transform_7(%arg0: i32, %arg1: i32, %arg2: memref<7xi32, #tpu.memory_space<smem>>) -> (i32, i32) {
    %c0_i32 = arith.constant 0 : i32
    %c0_i32_0 = arith.constant 0 : i32
    %c0_i32_1 = arith.constant 0 : i32
    return %c0_i32, %c0_i32_0 : i32, i32
  }
  func.func @transform_8(%arg0: i32, %arg1: i32, %arg2: memref<7xi32, #tpu.memory_space<smem>>) -> (i32, i32) {
    %c0_i32 = arith.constant 0 : i32
    %c0_i32_0 = arith.constant 0 : i32
    %c0_i32_1 = arith.constant 0 : i32
    return %c0_i32, %c0_i32_0 : i32, i32
  }
  func.func @transform_9(%arg0: i32, %arg1: i32, %arg2: memref<7xi32, #tpu.memory_space<smem>>) -> (i32, i32) {
    %c0_i32 = arith.constant 0 : i32
    %c0_i32_0 = arith.constant 0 : i32
    %c0_i32_1 = arith.constant 0 : i32
    return %c0_i32, %c0_i32_0 : i32, i32
  }
  func.func @transform_10(%arg0: i32, %arg1: i32, %arg2: memref<7xi32, #tpu.memory_space<smem>>) -> (i32, i32) {
    %c0_i32 = arith.constant 0 : i32
    %c0_i32_0 = arith.constant 0 : i32
    %c0_i32_1 = arith.constant 0 : i32
    return %c0_i32, %c0_i32_0 : i32, i32
  }
  func.func @transform_11(%arg0: i32, %arg1: i32, %arg2: memref<7xi32, #tpu.memory_space<smem>>) -> (i32, i32) {
    %c0_i32 = arith.constant 0 : i32
    %c0_i32_0 = arith.constant 0 : i32
    %c0_i32_1 = arith.constant 0 : i32
    return %c0_i32, %c0_i32_0 : i32, i32
  }
  func.func @transform_12(%arg0: i32, %arg1: i32, %arg2: memref<7xi32, #tpu.memory_space<smem>>) -> (i32, i32) {
    %c0_i32 = arith.constant 0 : i32
    %c0_i32_0 = arith.constant 0 : i32
    return %c0_i32, %arg1 : i32, i32
  }
  func.func @transform_13(%arg0: i32, %arg1: i32, %arg2: memref<7xi32, #tpu.memory_space<smem>>) -> (i32, i32) {
    %c0_i32 = arith.constant 0 : i32
    %c0_i32_0 = arith.constant 0 : i32
    return %c0_i32, %arg1 : i32, i32
  }
  func.func @transform_14(%arg0: i32, %arg1: i32, %arg2: memref<7xi32, #tpu.memory_space<smem>>) -> (i32, i32, i32) {
    %c0_i32 = arith.constant 0 : i32
    %c0_i32_0 = arith.constant 0 : i32
    return %arg0, %c0_i32, %arg1 : i32, i32, i32
  }
}

</mosaic_0001>

<llo_original>
// kernel: seq2seq_forward.3
$region0: #{seq2seq_forward.3}
  #allocation0 [shape = 'u32[]', space=smem, size = 0x4, offset = 0x4, fixed_abs, tag = 'smem constant byte address 0x4 - core index']
  #allocation1 [shape = 'u32[144,128]{1,0:T(1,128)}', space=vmem, size = 0x12000, scoped, tag = 'internal scratch']
  #allocation2 [shape = 'f32[8,128]{1,0:T(8,128)}', space=vmem, size = 0x1000, scoped, tag = 'scratch operand']
  #allocation3 [shape = 'f32[8,128]{1,0:T(8,128)}', space=vmem, size = 0x1000, scoped, tag = 'scratch operand']
  #allocation4 [shape = 'f32[8,128]{1,0:T(8,128)}', space=vmem, size = 0x1000, scoped, tag = 'scratch operand']
  #allocation5 [shape = 'f32[8,128]{1,0:T(8,128)}', space=vmem, size = 0x1000, scoped, tag = 'scratch operand']
  #allocation6 [shape = 'f32[8,1]{1,0:T(8,128)}', space=vmem, size = 0x1000, scoped, tag = 'scratch operand']
  #allocation7 [shape = 'f32[8,1]{1,0:T(8,128)}', space=vmem, size = 0x1000, scoped, tag = 'scratch operand']
  #allocation8 [shape = 's32[1]{0}', space=sflag, size = 0x4, scoped, tag = 'scoped memory for seq2seq_forward.3']
  #allocation9 [shape = 'u8[512]{0}', space=smem, size = 0x200, scoped, tag = 'prefetched SMEM operand 0']
  %s0 = inlined_call_operand.vmem [shape: s32[7], index: 0, kind: input, shape index: {}]
  %s1 = inlined_call_operand.vmem [shape: bf16[7,8,128], index: 1, kind: input, shape index: {}]
  %s2 = inlined_call_operand.vmem [shape: f32[8,128], index: 2, kind: input, shape index: {}]
  %s3 = inlined_call_operand.vmem [shape: f32[8,128], index: 3, kind: input, shape index: {}]
  %s4 = inlined_call_operand.vmem [shape: f32[8,128], index: 4, kind: input, shape index: {}]
  %s5 = inlined_call_operand.vmem [shape: f32[8,128], index: 5, kind: input, shape index: {}]
  %s6 = inlined_call_operand.vmem [shape: bf16[128,512], index: 6, kind: input, shape index: {}]
  %s7 = inlined_call_operand.vmem [shape: bf16[128,512], index: 7, kind: input, shape index: {}]
  %s8 = inlined_call_operand.vmem [shape: f32[1,512], index: 8, kind: input, shape index: {}]
  %s9 = inlined_call_operand.vmem [shape: bf16[128,512], index: 9, kind: input, shape index: {}]
  %s10 = inlined_call_operand.vmem [shape: bf16[128,512], index: 10, kind: input, shape index: {}]
  %s11 = inlined_call_operand.vmem [shape: f32[1,512], index: 11, kind: input, shape index: {}]
  %s12 = inlined_call_operand.vmem [shape: bf16[128,128], index: 12, kind: input, shape index: {}]
  %s13 = inlined_call_operand.vmem [shape: bf16[128,128], index: 13, kind: input, shape index: {}]
  %s14 = inlined_call_operand.vmem [shape: f32[1,128], index: 14, kind: input, shape index: {}]
  %s15 = inlined_call_operand.vmem [shape: f32[7,8,128], index: 15, kind: output, shape index: {}]
  %s16 = sld [smem:[#allocation0]]
  $region97: #{seq2seq_forward.3} parent=0
    _
  %s18 = ssub.s32 1, %s16
  %s19 = scalar_select 0, %s18, %s16
  %s20 = sshll.u32 %s0, 4
  %s21 = int_to_ptr.vmem [resolvable:$true] %s20
  %23 = dma.vmem_to_smem %s21, 16, [#allocation9], [#allocation8]
  %24 = dma.done [#allocation8], 16
  %25 = sfence
  loop: start=0, step=1, limit=9
  $region2: #{seq2seq_forward.3} parent=0 // loop_pre_header
    _
  $region3: #{seq2seq_forward.3} parent=0 // loop_header
    %s27 = sphi 0, %s31
    %p28 = scmp.ge.s32.totalorder %s27, 9
    %s34 = sphi 0, %s46
    %s35 = sphi 0, %s42
    %s36 = sphi 0, %s34
    %s37 = sphi 0, %s35
    %s38 = sphi 0, %s36
    %s39 = sphi 0, %s37
    %s49 = sphi 0, %s51
    %s52 = sphi 0, %s49
    %s53 = sphi 0, %s52
    %s69 = sphi 0, %s53
    %s73 = sphi 0, %s73
    %s75 = sphi 0, %s73
    %s76 = sphi 0, %s75
    %s90 = sphi 0, %s76
    %s94 = sphi 0, %s94
    %s96 = sphi 0, %s94
    %s97 = sphi 0, %s96
    %s111 = sphi 0, %s97
    %s115 = sphi 0, %s115
    %s117 = sphi 0, %s115
    %s118 = sphi 0, %s117
    %s132 = sphi 0, %s118
    %s136 = sphi 0, %s136
    %s138 = sphi 0, %s136
    %s139 = sphi 0, %s138
    %s153 = sphi 0, %s139
    %s157 = sphi 0, %s157
    %s159 = sphi 0, %s157
    %s160 = sphi 0, %s159
    %s174 = sphi 0, %s160
    %s178 = sphi 0, %s178
    %s180 = sphi 0, %s178
    %s181 = sphi 0, %s180
    %s195 = sphi 0, %s181
    %s199 = sphi 0, %s199
    %s201 = sphi 0, %s199
    %s202 = sphi 0, %s201
    %s216 = sphi 0, %s202
    %s220 = sphi 0, %s220
    %s222 = sphi 0, %s220
    %s223 = sphi 0, %s222
    %s237 = sphi 0, %s223
    %s241 = sphi 0, %s241
    %s243 = sphi 0, %s241
    %s244 = sphi 0, %s243
    %s258 = sphi 0, %s244
    %s262 = sphi 0, %s262
    %s264 = sphi 0, %s262
    %s265 = sphi 0, %s264
    %s279 = sphi 0, %s265
    %s283 = sphi 0, %s283
    %s285 = sphi 0, %s283
    %s286 = sphi 0, %s285
    %s300 = sphi 0, %s286
    %s306 = sphi 0, %s308
    %s309 = sphi 0, %s306
    %s310 = sphi 0, %s309
    %s326 = sphi 0, %s310
    %s332 = sphi 0, %s334
    %s335 = sphi 0, %s332
    %s336 = sphi 0, %s335
    %s352 = sphi 0, %s336
    %s360 = sphi 0, %s362
    %s363 = sphi 0, %s360
    %s364 = sphi 0, %s363
    %s380 = sphi 0, %s364
  $region4: #{seq2seq_forward.3} parent=0 // loop_header_branch
    %30 = sbr.rel (%p28) target = $region8
  $region5: #{seq2seq_forward.3} parent=0 // loop_body
    %s32 = ssub.s32 %s27, 1
    %s33 = ssub.s32 %s27, 2
    %s40 = sadd.s32 1, %s35
    %p41 = scmp.ge.s32.totalorder %s40, 1
    %s42 = scalar_select %p41, 0, %s40
    %s43 = sadd.s32 1, %s34
    %s44 = scalar_select %p41, %s43, %s34
    %p45 = scmp.ge.s32.totalorder %s44, 7
    %s46 = scalar_select %p45, 0, %s44
    %s47 = ssub.s32 %s34, %s46
    %p48 = scmp.eq.s32.totalorder %s47, 0
    %s50 = sadd.s32 %s49, 1
    %s51 = scalar_select %p48, %s49, %s50
    %p54 = pneg %p48
    %p55 = scmp.eq.s32.totalorder %s27, 6
    %p56 = por %p54, %p55
    %p57 = scmp.ne.s32.totalorder %s49, %s52
    %p58 = scmp.eq.s32.totalorder %s27, 0
    %p59 = por %p57, %p58
    %p60 = scmp.ne.s32.totalorder %s49, %s52
    %p61 = scmp.eq.s32.totalorder %s32, 6
    %p62 = por %p60, %p61
    %p63 = scmp.ne.s32.totalorder %s52, %s53
    %p64 = scmp.eq.s32.totalorder %s32, 0
    %p65 = por %p63, %p64
    %p66 = scmp.ne.s32.totalorder %s52, %s53
    %p67 = scmp.eq.s32.totalorder %s33, 6
    %p68 = por %p66, %p67
    %p70 = scmp.ne.s32.totalorder %s53, %s69
    %p71 = scmp.eq.s32.totalorder %s33, 0
    %p72 = por %p70, %p71
    %s74 = sadd.s32 %s73, 1
    %p77 = scmp.eq.s32.totalorder %s27, 6
    %p78 = scmp.ne.s32.totalorder %s73, %s75
    %p79 = scmp.eq.s32.totalorder %s27, 0
    %p80 = por %p78, %p79
    %p81 = scmp.ne.s32.totalorder %s73, %s75
    %p82 = scmp.eq.s32.totalorder %s32, 6
    %p83 = por %p81, %p82
    %p84 = scmp.ne.s32.totalorder %s75, %s76
    %p85 = scmp.eq.s32.totalorder %s32, 0
    %p86 = por %p84, %p85
    %p87 = scmp.ne.s32.totalorder %s75, %s76
    %p88 = scmp.eq.s32.totalorder %s33, 6
    %p89 = por %p87, %p88
    %p91 = scmp.ne.s32.totalorder %s76, %s90
    %p92 = scmp.eq.s32.totalorder %s33, 0
    %p93 = por %p91, %p92
    %s95 = sadd.s32 %s94, 1
    %p98 = scmp.eq.s32.totalorder %s27, 6
    %p99 = scmp.ne.s32.totalorder %s94, %s96
    %p100 = scmp.eq.s32.totalorder %s27, 0
    %p101 = por %p99, %p100
    %p102 = scmp.ne.s32.totalorder %s94, %s96
    %p103 = scmp.eq.s32.totalorder %s32, 6
    %p104 = por %p102, %p103
    %p105 = scmp.ne.s32.totalorder %s96, %s97
    %p106 = scmp.eq.s32.totalorder %s32, 0
    %p107 = por %p105, %p106
    %p108 = scmp.ne.s32.totalorder %s96, %s97
    %p109 = scmp.eq.s32.totalorder %s33, 6
    %p110 = por %p108, %p109
    %p112 = scmp.ne.s32.totalorder %s97, %s111
    %p113 = scmp.eq.s32.totalorder %s33, 0
    %p114 = por %p112, %p113
    %s116 = sadd.s32 %s115, 1
    %p119 = scmp.eq.s32.totalorder %s27, 6
    %p120 = scmp.ne.s32.totalorder %s115, %s117
    %p121 = scmp.eq.s32.totalorder %s27, 0
    %p122 = por %p120, %p121
    %p123 = scmp.ne.s32.totalorder %s115, %s117
    %p124 = scmp.eq.s32.totalorder %s32, 6
    %p125 = por %p123, %p124
    %p126 = scmp.ne.s32.totalorder %s117, %s118
    %p127 = scmp.eq.s32.totalorder %s32, 0
    %p128 = por %p126, %p127
    %p129 = scmp.ne.s32.totalorder %s117, %s118
    %p130 = scmp.eq.s32.totalorder %s33, 6
    %p131 = por %p129, %p130
    %p133 = scmp.ne.s32.totalorder %s118, %s132
    %p134 = scmp.eq.s32.totalorder %s33, 0
    %p135 = por %p133, %p134
    %s137 = sadd.s32 %s136, 1
    %p140 = scmp.eq.s32.totalorder %s27, 6
    %p141 = scmp.ne.s32.totalorder %s136, %s138
    %p142 = scmp.eq.s32.totalorder %s27, 0
    %p143 = por %p141, %p142
    %p144 = scmp.ne.s32.totalorder %s136, %s138
    %p145 = scmp.eq.s32.totalorder %s32, 6
    %p146 = por %p144, %p145
    %p147 = scmp.ne.s32.totalorder %s138, %s139
    %p148 = scmp.eq.s32.totalorder %s32, 0
    %p149 = por %p147, %p148
    %p150 = scmp.ne.s32.totalorder %s138, %s139
    %p151 = scmp.eq.s32.totalorder %s33, 6
    %p152 = por %p150, %p151
    %p154 = scmp.ne.s32.totalorder %s139, %s153
    %p155 = scmp.eq.s32.totalorder %s33, 0
    %p156 = por %p154, %p155
    %s158 = sadd.s32 %s157, 1
    %p161 = scmp.eq.s32.totalorder %s27, 6
    %p162 = scmp.ne.s32.totalorder %s157, %s159
    %p163 = scmp.eq.s32.totalorder %s27, 0
    %p164 = por %p162, %p163
    %p165 = scmp.ne.s32.totalorder %s157, %s159
    %p166 = scmp.eq.s32.totalorder %s32, 6
    %p167 = por %p165, %p166
    %p168 = scmp.ne.s32.totalorder %s159, %s160
    %p169 = scmp.eq.s32.totalorder %s32, 0
    %p170 = por %p168, %p169
    %p171 = scmp.ne.s32.totalorder %s159, %s160
    %p172 = scmp.eq.s32.totalorder %s33, 6
    %p173 = por %p171, %p172
    %p175 = scmp.ne.s32.totalorder %s160, %s174
    %p176 = scmp.eq.s32.totalorder %s33, 0
    %p177 = por %p175, %p176
    %s179 = sadd.s32 %s178, 1
    %p182 = scmp.eq.s32.totalorder %s27, 6
    %p183 = scmp.ne.s32.totalorder %s178, %s180
    %p184 = scmp.eq.s32.totalorder %s27, 0
    %p185 = por %p183, %p184
    %p186 = scmp.ne.s32.totalorder %s178, %s180
    %p187 = scmp.eq.s32.totalorder %s32, 6
    %p188 = por %p186, %p187
    %p189 = scmp.ne.s32.totalorder %s180, %s181
    %p190 = scmp.eq.s32.totalorder %s32, 0
    %p191 = por %p189, %p190
    %p192 = scmp.ne.s32.totalorder %s180, %s181
    %p193 = scmp.eq.s32.totalorder %s33, 6
    %p194 = por %p192, %p193
    %p196 = scmp.ne.s32.totalorder %s181, %s195
    %p197 = scmp.eq.s32.totalorder %s33, 0
    %p198 = por %p196, %p197
    %s200 = sadd.s32 %s199, 1
    %p203 = scmp.eq.s32.totalorder %s27, 6
    %p204 = scmp.ne.s32.totalorder %s199, %s201
    %p205 = scmp.eq.s32.totalorder %s27, 0
    %p206 = por %p204, %p205
    %p207 = scmp.ne.s32.totalorder %s199, %s201
    %p208 = scmp.eq.s32.totalorder %s32, 6
    %p209 = por %p207, %p208
    %p210 = scmp.ne.s32.totalorder %s201, %s202
    %p211 = scmp.eq.s32.totalorder %s32, 0
    %p212 = por %p210, %p211
    %p213 = scmp.ne.s32.totalorder %s201, %s202
    %p214 = scmp.eq.s32.totalorder %s33, 6
    %p215 = por %p213, %p214
    %p217 = scmp.ne.s32.totalorder %s202, %s216
    %p218 = scmp.eq.s32.totalorder %s33, 0
    %p219 = por %p217, %p218
    %s221 = sadd.s32 %s220, 1
    %p224 = scmp.eq.s32.totalorder %s27, 6
    %p225 = scmp.ne.s32.totalorder %s220, %s222
    %p226 = scmp.eq.s32.totalorder %s27, 0
    %p227 = por %p225, %p226
    %p228 = scmp.ne.s32.totalorder %s220, %s222
    %p229 = scmp.eq.s32.totalorder %s32, 6
    %p230 = por %p228, %p229
    %p231 = scmp.ne.s32.totalorder %s222, %s223
    %p232 = scmp.eq.s32.totalorder %s32, 0
    %p233 = por %p231, %p232
    %p234 = scmp.ne.s32.totalorder %s222, %s223
    %p235 = scmp.eq.s32.totalorder %s33, 6
    %p236 = por %p234, %p235
    %p238 = scmp.ne.s32.totalorder %s223, %s237
    %p239 = scmp.eq.s32.totalorder %s33, 0
    %p240 = por %p238, %p239
    %s242 = sadd.s32 %s241, 1
    %p245 = scmp.eq.s32.totalorder %s27, 6
    %p246 = scmp.ne.s32.totalorder %s241, %s243
    %p247 = scmp.eq.s32.totalorder %s27, 0
    %p248 = por %p246, %p247
    %p249 = scmp.ne.s32.totalorder %s241, %s243
    %p250 = scmp.eq.s32.totalorder %s32, 6
    %p251 = por %p249, %p250
    %p252 = scmp.ne.s32.totalorder %s243, %s244
    %p253 = scmp.eq.s32.totalorder %s32, 0
    %p254 = por %p252, %p253
    %p255 = scmp.ne.s32.totalorder %s243, %s244
    %p256 = scmp.eq.s32.totalorder %s33, 6
    %p257 = por %p255, %p256
    %p259 = scmp.ne.s32.totalorder %s244, %s258
    %p260 = scmp.eq.s32.totalorder %s33, 0
    %p261 = por %p259, %p260
    %s263 = sadd.s32 %s262, 1
    %p266 = scmp.eq.s32.totalorder %s27, 6
    %p267 = scmp.ne.s32.totalorder %s262, %s264
    %p268 = scmp.eq.s32.totalorder %s27, 0
    %p269 = por %p267, %p268
    %p270 = scmp.ne.s32.totalorder %s262, %s264
    %p271 = scmp.eq.s32.totalorder %s32, 6
    %p272 = por %p270, %p271
    %p273 = scmp.ne.s32.totalorder %s264, %s265
    %p274 = scmp.eq.s32.totalorder %s32, 0
    %p275 = por %p273, %p274
    %p276 = scmp.ne.s32.totalorder %s264, %s265
    %p277 = scmp.eq.s32.totalorder %s33, 6
    %p278 = por %p276, %p277
    %p280 = scmp.ne.s32.totalorder %s265, %s279
    %p281 = scmp.eq.s32.totalorder %s33, 0
    %p282 = por %p280, %p281
    %s284 = sadd.s32 %s283, 1
    %p287 = scmp.eq.s32.totalorder %s27, 6
    %p288 = scmp.ne.s32.totalorder %s283, %s285
    %p289 = scmp.eq.s32.totalorder %s27, 0
    %p290 = por %p288, %p289
    %p291 = scmp.ne.s32.totalorder %s283, %s285
    %p292 = scmp.eq.s32.totalorder %s32, 6
    %p293 = por %p291, %p292
    %p294 = scmp.ne.s32.totalorder %s285, %s286
    %p295 = scmp.eq.s32.totalorder %s32, 0
    %p296 = por %p294, %p295
    %p297 = scmp.ne.s32.totalorder %s285, %s286
    %p298 = scmp.eq.s32.totalorder %s33, 6
    %p299 = por %p297, %p298
    %p301 = scmp.ne.s32.totalorder %s286, %s300
    %p302 = scmp.eq.s32.totalorder %s33, 0
    %p303 = por %p301, %p302
    %s304 = ssub.s32 %s35, %s42
    %p305 = scmp.eq.s32.totalorder %s304, 0
    %s307 = sadd.s32 %s306, 1
    %s308 = scalar_select %p305, %s306, %s307
    %p311 = pneg %p305
    %p312 = scmp.eq.s32.totalorder %s27, 6
    %p313 = por %p311, %p312
    %p314 = scmp.ne.s32.totalorder %s306, %s309
    %p315 = scmp.eq.s32.totalorder %s27, 0
    %p316 = por %p314, %p315
    %p317 = scmp.ne.s32.totalorder %s306, %s309
    %p318 = scmp.eq.s32.totalorder %s32, 6
    %p319 = por %p317, %p318
    %p320 = scmp.ne.s32.totalorder %s309, %s310
    %p321 = scmp.eq.s32.totalorder %s32, 0
    %p322 = por %p320, %p321
    %p323 = scmp.ne.s32.totalorder %s309, %s310
    %p324 = scmp.eq.s32.totalorder %s33, 6
    %p325 = por %p323, %p324
    %p327 = scmp.ne.s32.totalorder %s310, %s326
    %p328 = scmp.eq.s32.totalorder %s33, 0
    %p329 = por %p327, %p328
    %s330 = ssub.s32 %s35, %s42
    %p331 = scmp.eq.s32.totalorder %s330, 0
    %s333 = sadd.s32 %s332, 1
    %s334 = scalar_select %p331, %s332, %s333
    %p337 = pneg %p331
    %p338 = scmp.eq.s32.totalorder %s27, 6
    %p339 = por %p337, %p338
    %p340 = scmp.ne.s32.totalorder %s332, %s335
    %p341 = scmp.eq.s32.totalorder %s27, 0
    %p342 = por %p340, %p341
    %p343 = scmp.ne.s32.totalorder %s332, %s335
    %p344 = scmp.eq.s32.totalorder %s32, 6
    %p345 = por %p343, %p344
    %p346 = scmp.ne.s32.totalorder %s335, %s336
    %p347 = scmp.eq.s32.totalorder %s32, 0
    %p348 = por %p346, %p347
    %p349 = scmp.ne.s32.totalorder %s335, %s336
    %p350 = scmp.eq.s32.totalorder %s33, 6
    %p351 = por %p349, %p350
    %p353 = scmp.ne.s32.totalorder %s336, %s352
    %p354 = scmp.eq.s32.totalorder %s33, 0
    %p355 = por %p353, %p354
    %s356 = ssub.s32 %s34, %s46
    %s357 = ssub.s32 %s35, %s42
    %s358 = sor.u32 %s356, %s357
    %p359 = scmp.eq.s32.totalorder %s358, 0
    %s361 = sadd.s32 %s360, 1
    %s362 = scalar_select %p359, %s360, %s361
    %p365 = pneg %p359
    %p366 = scmp.eq.s32.totalorder %s27, 6
    %p367 = por %p365, %p366
    %p368 = scmp.ne.s32.totalorder %s360, %s363
    %p369 = scmp.eq.s32.totalorder %s27, 0
    %p370 = por %p368, %p369
    %p371 = scmp.ne.s32.totalorder %s360, %s363
    %p372 = scmp.eq.s32.totalorder %s32, 6
    %p373 = por %p371, %p372
    %p374 = scmp.ne.s32.totalorder %s363, %s364
    %p375 = scmp.eq.s32.totalorder %s32, 0
    %p376 = por %p374, %p375
    %p377 = scmp.ne.s32.totalorder %s363, %s364
    %p378 = scmp.eq.s32.totalorder %s33, 6
    %p379 = por %p377, %p378
    %p381 = scmp.ne.s32.totalorder %s364, %s380
    %p382 = scmp.eq.s32.totalorder %s33, 0
    %p383 = por %p381, %p382
    %p384 = scmp.le.s32.totalorder 1, %s27
    %p385 = scmp.lt.s32.totalorder %s27, 8
    %p386 = pnand %p384, %p385
    %p387 = pneg %p386
    // Predicated region
    $region9: #{seq2seq_forward.3} parent=5 // pred_check
      _
    $region10: #{seq2seq_forward.3} parent=5 // pred_check_branch
      %389 = sbr.rel (%p386) target = $region12
    $region11: #{seq2seq_forward.3} parent=5 // pred_region
      %s390 = ssub.s32 %s27, 1
      // Predicated region
      $region13: #{seq2seq_forward.3} parent=11 // pred_check
        %p391 = pneg %p86
      $region14: #{seq2seq_forward.3} parent=11 // pred_check_branch
        %393 = sbr.rel (%p391) target = $region16
      $region15: #{seq2seq_forward.3} parent=11 // pred_region
        _
      $region16: #{seq2seq_forward.3} parent=11 // pred_fallthru
        _
      // Predicated region
      $region17: #{seq2seq_forward.3} parent=11 // pred_check
        %p394 = pneg %p107
      $region18: #{seq2seq_forward.3} parent=11 // pred_check_branch
        %396 = sbr.rel (%p394) target = $region20
      $region19: #{seq2seq_forward.3} parent=11 // pred_region
        _
      $region20: #{seq2seq_forward.3} parent=11 // pred_fallthru
        _
      // Predicated region
      $region21: #{seq2seq_forward.3} parent=11 // pred_check
        %p397 = pneg %p128
      $region22: #{seq2seq_forward.3} parent=11 // pred_check_branch
        %399 = sbr.rel (%p397) target = $region24
      $region23: #{seq2seq_forward.3} parent=11 // pred_region
        _
      $region24: #{seq2seq_forward.3} parent=11 // pred_fallthru
        _
      // Predicated region
      $region25: #{seq2seq_forward.3} parent=11 // pred_check
        %p400 = pneg %p149
      $region26: #{seq2seq_forward.3} parent=11 // pred_check_branch
        %402 = sbr.rel (%p400) target = $region28
      $region27: #{seq2seq_forward.3} parent=11 // pred_region
        _
      $region28: #{seq2seq_forward.3} parent=11 // pred_fallthru
        _
      // Predicated region
      $region29: #{seq2seq_forward.3} parent=11 // pred_check
        %p403 = pneg %p170
      $region30: #{seq2seq_forward.3} parent=11 // pred_check_branch
        %405 = sbr.rel (%p403) target = $region32
      $region31: #{seq2seq_forward.3} parent=11 // pred_region
        _
      $region32: #{seq2seq_forward.3} parent=11 // pred_fallthru
        _
      // Predicated region
      $region33: #{seq2seq_forward.3} parent=11 // pred_check
        %p406 = pneg %p191
      $region34: #{seq2seq_forward.3} parent=11 // pred_check_branch
        %408 = sbr.rel (%p406) target = $region36
      $region35: #{seq2seq_forward.3} parent=11 // pred_region
        _
      $region36: #{seq2seq_forward.3} parent=11 // pred_fallthru
        _
      // Predicated region
      $region37: #{seq2seq_forward.3} parent=11 // pred_check
        %p409 = pneg %p212
      $region38: #{seq2seq_forward.3} parent=11 // pred_check_branch
        %411 = sbr.rel (%p409) target = $region40
      $region39: #{seq2seq_forward.3} parent=11 // pred_region
        _
      $region40: #{seq2seq_forward.3} parent=11 // pred_fallthru
        _
      // Predicated region
      $region41: #{seq2seq_forward.3} parent=11 // pred_check
        %p412 = pneg %p233
      $region42: #{seq2seq_forward.3} parent=11 // pred_check_branch
        %414 = sbr.rel (%p412) target = $region44
      $region43: #{seq2seq_forward.3} parent=11 // pred_region
        _
      $region44: #{seq2seq_forward.3} parent=11 // pred_fallthru
        _
      // Predicated region
      $region45: #{seq2seq_forward.3} parent=11 // pred_check
        %p415 = pneg %p254
      $region46: #{seq2seq_forward.3} parent=11 // pred_check_branch
        %417 = sbr.rel (%p415) target = $region48
      $region47: #{seq2seq_forward.3} parent=11 // pred_region
        _
      $region48: #{seq2seq_forward.3} parent=11 // pred_fallthru
        _
      // Predicated region
      $region49: #{seq2seq_forward.3} parent=11 // pred_check
        %p418 = pneg %p275
      $region50: #{seq2seq_forward.3} parent=11 // pred_check_branch
        %420 = sbr.rel (%p418) target = $region52
      $region51: #{seq2seq_forward.3} parent=11 // pred_region
        _
      $region52: #{seq2seq_forward.3} parent=11 // pred_fallthru
        _
      // Predicated region
      $region53: #{seq2seq_forward.3} parent=11 // pred_check
        %p421 = pneg %p296
      $region54: #{seq2seq_forward.3} parent=11 // pred_check_branch
        %423 = sbr.rel (%p421) target = $region56
      $region55: #{seq2seq_forward.3} parent=11 // pred_region
        _
      $region56: #{seq2seq_forward.3} parent=11 // pred_fallthru
        _
      // Predicated region
      $region57: #{seq2seq_forward.3} parent=11 // pred_check
        %p424 = pneg %p322
      $region58: #{seq2seq_forward.3} parent=11 // pred_check_branch
        %426 = sbr.rel (%p424) target = $region60
      $region59: #{seq2seq_forward.3} parent=11 // pred_region
        %p427 = scmp.lt.s32.totalorder %s37, 0
        %s428 = scalar_select %p427, %s37, 0
        %s429 = smul.addr %s428, 4
        %s430 = scalar_lea.vmem %s13, %s429
      $region60: #{seq2seq_forward.3} parent=11 // pred_fallthru
        _
      // Predicated region
      $region61: #{seq2seq_forward.3} parent=11 // pred_check
        %p431 = pneg %p348
      $region62: #{seq2seq_forward.3} parent=11 // pred_check_branch
        %433 = sbr.rel (%p431) target = $region64
      $region63: #{seq2seq_forward.3} parent=11 // pred_region
        %p434 = scmp.lt.s32.totalorder %s37, 0
        %s435 = scalar_select %p434, %s37, 0
        %s436 = scalar_lea.vmem %s14, %s435
      $region64: #{seq2seq_forward.3} parent=11 // pred_fallthru
        _
    $region12: #{seq2seq_forward.3} parent=5 // pred_fallthru
      _
    %p437 = scmp.lt.s32.totalorder %s27, 7
    // Predicated region
    $region65: #{seq2seq_forward.3} parent=5 // pred_check
      %p438 = pneg %p437
    $region66: #{seq2seq_forward.3} parent=5 // pred_check_branch
      %440 = sbr.rel (%p438) target = $region68
    $region67: #{seq2seq_forward.3} parent=5 // pred_region
      // Predicated region
      $region69: #{seq2seq_forward.3} parent=67 // pred_check
        %p441 = pneg %p59
      $region70: #{seq2seq_forward.3} parent=67 // pred_check_branch
        %443 = sbr.rel (%p441) target = $region72
      $region71: #{seq2seq_forward.3} parent=67 // pred_region
        %p444 = scmp.lt.s32.totalorder %s34, 6
        %s445 = scalar_select %p444, %s34, 6
        %s446 = smul.addr %s445, 4
        %s447 = scalar_lea.vmem %s1, %s446
      $region72: #{seq2seq_forward.3} parent=67 // pred_fallthru
        _
    $region68: #{seq2seq_forward.3} parent=5 // pred_fallthru
      _
    %p448 = scmp.le.s32.totalorder 1, %s27
    %p449 = scmp.lt.s32.totalorder %s27, 8
    %p450 = pnand %p448, %p449
    %p451 = pneg %p450
    // Predicated region
    $region73: #{seq2seq_forward.3} parent=5 // pred_check
      _
    $region74: #{seq2seq_forward.3} parent=5 // pred_check_branch
      %453 = sbr.rel (%p450) target = $region76
    $region75: #{seq2seq_forward.3} parent=5 // pred_region
      %s454 = ssub.s32 %s27, 1
      %p455 = scmp.lt.s32.totalorder %s36, 6
      %s456 = scalar_select %p455, %s36, 6
      %s457 = smul.addr %s456, 4
      %s458 = scalar_lea.vmem %s1, %s457
      %p459 = pneg %p65
      %p460 = pneg %p62
      %p461 = pneg %p86
      %p462 = pneg %p83
      %p463 = pneg %p107
      %p464 = pneg %p104
      %p465 = pneg %p128
      %p466 = pneg %p125
      %p467 = pneg %p149
      %p468 = pneg %p146
      %p469 = pneg %p170
      %p470 = pneg %p167
      %p471 = pneg %p191
      %p472 = pneg %p188
      %p473 = pneg %p212
      %p474 = pneg %p209
      %p475 = pneg %p233
      %p476 = pneg %p230
      %p477 = pneg %p254
      %p478 = pneg %p251
      %p479 = pneg %p275
      %p480 = pneg %p272
      %p481 = pneg %p296
      %p482 = pneg %p293
      %p483 = scmp.lt.s32.totalorder %s37, 0
      %s484 = scalar_select %p483, %s37, 0
      %s485 = smul.addr %s484, 4
      %s486 = scalar_lea.vmem %s13, %s485
      %p487 = pneg %p322
      %p488 = pneg %p319
      %p489 = scmp.lt.s32.totalorder %s37, 0
      %s490 = scalar_select %p489, %s37, 0
      %s491 = scalar_lea.vmem %s14, %s490
      %p492 = pneg %p348
      %p493 = pneg %p345
      %p494 = pneg %p376
      %p495 = pneg %p373
      %p496 = scmp.lt.s32.totalorder %s36, 6
      %s497 = scalar_select %p496, %s36, 6
      %p498 = scmp.lt.s32.totalorder %s37, 0
      %s499 = scalar_select %p498, %s37, 0
      %s500 = sadd.s32 %s499, %s497
      %s501 = smul.addr %s500, 8
      %s502 = scalar_lea.vmem %s15, %s501
      %p503 = scmp.lt.s32.totalorder %s36, 6
      %s504 = scalar_select %p503, %s36, 6
      %s505 = smul.addr %s504, 4
      %s506 = scalar_lea.vmem %s1, %s505
      %p507 = scmp.lt.s32.totalorder %s37, 0
      %s508 = scalar_select %p507, %s37, 0
      %s509 = smul.addr %s508, 4
      %s510 = scalar_lea.vmem %s13, %s509
      %p511 = scmp.lt.s32.totalorder %s37, 0
      %s512 = scalar_select %p511, %s37, 0
      %s513 = scalar_lea.vmem %s14, %s512
      %p514 = scmp.lt.s32.totalorder %s36, 6
      %s515 = scalar_select %p514, %s36, 6
      %p516 = scmp.lt.s32.totalorder %s37, 0
      %s517 = scalar_select %p516, %s37, 0
      %s518 = sadd.s32 %s517, %s515
      %s519 = smul.addr %s518, 8
      %s520 = scalar_lea.vmem %s15, %s519
      %p522 = scmp.eq.s32.totalorder %s37, 0
      // Predicated region
      $region77: #{seq2seq_forward.3} parent=75 // pred_check
        %p523 = pneg %p522
      $region78: #{seq2seq_forward.3} parent=75 // pred_check_branch
        %525 = sbr.rel (%p523) target = $region80
      $region79: #{seq2seq_forward.3} parent=75 // pred_region
        %p526 = scmp.eq.s32.totalorder %s36, 0
        // Predicated region
        $region81: #{seq2seq_forward.3} parent=79 // pred_check
          %p527 = pneg %p526
        $region82: #{seq2seq_forward.3} parent=79 // pred_check_branch
          %529 = sbr.rel (%p527) target = $region84
        $region83: #{seq2seq_forward.3} parent=79 // pred_region
          %v530 = vld [vmem:[%s2] sm:$0xff]
          %531 = vst [vmem:[#allocation2] sm:$0xff] %v530
          %v532 = vld [vmem:[%s3] sm:$0xff]
          %533 = vst [vmem:[#allocation3] sm:$0xff] %v532
          %v534 = vld [vmem:[%s4] sm:$0xff]
          %535 = vst [vmem:[#allocation4] sm:$0xff] %v534
          %v536 = vld [vmem:[%s5] sm:$0xff]
          %537 = vst [vmem:[#allocation5] sm:$0xff] %v536
          %vm538 = vcmask 7168
          %539 = vst.msk [vmem:[#allocation7] sm:$0xff] %vm538, 0.0
        $region84: #{seq2seq_forward.3} parent=79 // pred_fallthru
          _
        %v540 = vlaneseq
        %v541 = vand.u32 %v540, 127
        %v542 = vcvt.s32.f32 %v541
        %v543 = vld [vmem:[#allocation7] sm:$0xff]
        %545 = vset.pattern.permute.xlu0 0
        %546 = vperm.xlu0 %545, %v543
        %v547 = vpop.permute.xlu0 %546
        %vm549 = vcmp.eq.f32.partialorder %v542, %v547
        %v550 = vsel %vm549, 1, 0
        %v551 = vcvt.s32.f32 %v550
        %v552 = vpack.c.bf16 %v551, %v551
        %v553 = vld [vmem:[%s12] sm:$0xf]
        %v554 = vld [vmem:[%s12 + $0x4] sm:$0xf]
        %v555 = vld [vmem:[%s12 + $0x8] sm:$0xf]
        %v556 = vld [vmem:[%s12 + $0xc] sm:$0xf]
        %v557 = vld [vmem:[%s12 + $0x10] sm:$0xf]
        %v558 = vld [vmem:[%s12 + $0x14] sm:$0xf]
        %v559 = vld [vmem:[%s12 + $0x18] sm:$0xf]
        %v560 = vld [vmem:[%s12 + $0x1c] sm:$0xf]
        %v561 = vld [vmem:[%s12 + $0x20] sm:$0xf]
        %v562 = vld [vmem:[%s12 + $0x24] sm:$0xf]
        %v563 = vld [vmem:[%s12 + $0x28] sm:$0xf]
        %v564 = vld [vmem:[%s12 + $0x2c] sm:$0xf]
        %v565 = vld [vmem:[%s12 + $0x30] sm:$0xf]
        %v566 = vld [vmem:[%s12 + $0x34] sm:$0xf]
        %v567 = vld [vmem:[%s12 + $0x38] sm:$0xf]
        %v568 = vld [vmem:[%s12 + $0x3c] sm:$0xf]
        %v585 = vunpack.c.l.b16 %v553
        %v586 = vunpack.c.l.b16 %v554
        %v587 = vunpack.c.l.b16 %v555
        %v588 = vunpack.c.l.b16 %v556
        %v589 = vunpack.c.l.b16 %v557
        %v590 = vunpack.c.l.b16 %v558
        %v591 = vunpack.c.l.b16 %v559
        %v592 = vunpack.c.l.b16 %v560
        %v593 = vunpack.c.l.b16 %v561
        %v594 = vunpack.c.l.b16 %v562
        %v595 = vunpack.c.l.b16 %v563
        %v596 = vunpack.c.l.b16 %v564
        %v597 = vunpack.c.l.b16 %v565
        %v598 = vunpack.c.l.b16 %v566
        %v599 = vunpack.c.l.b16 %v567
        %v600 = vunpack.c.l.b16 %v568
        %v601 = vpack.c.b16 %v586, %v585
        %v602 = vpack.c.b16 %v588, %v587
        %v603 = vpack.c.b16 %v590, %v589
        %v604 = vpack.c.b16 %v592, %v591
        %v605 = vpack.c.b16 %v594, %v593
        %v606 = vpack.c.b16 %v596, %v595
        %v607 = vpack.c.b16 %v598, %v597
        %v608 = vpack.c.b16 %v600, %v599
        %617 = vmatprep.subr.bf16.mxu0 0
        %618 = vmatpush1.bf16.msra.mxu0 %v601
        %619 = vmatprep.subr.bf16.mxu0 0
        %620 = vmatpush1.bf16.msra.mxu0 %v602
        %621 = vmatprep.subr.bf16.mxu0 0
        %622 = vmatpush1.bf16.msra.mxu0 %v603
        %623 = vmatprep.subr.bf16.mxu0 0
        %624 = vmatpush1.bf16.msra.mxu0 %v604
        %625 = vmatprep.subr.bf16.mxu0 0
        %626 = vmatpush1.bf16.msra.mxu0 %v605
        %627 = vmatprep.subr.bf16.mxu0 0
        %628 = vmatpush1.bf16.msra.mxu0 %v606
        %629 = vmatprep.subr.bf16.mxu0 0
        %630 = vmatpush1.bf16.msra.mxu0 %v607
        %631 = vmatprep.subr.bf16.mxu0 0
        %632 = vmatpush1.bf16.msra.mxu0 %v608
        %633 = vmatprep.subr.bf16.mxu0 0
        %634 = vmatpush1.bf16.msra.mxu0 0
        %635 = vmatprep.subr.bf16.mxu0 0
        %636 = vmatpush1.bf16.msra.mxu0 0
        %637 = vmatprep.subr.bf16.mxu0 0
        %638 = vmatpush1.bf16.msra.mxu0 0
        %639 = vmatprep.subr.bf16.mxu0 0
        %640 = vmatpush1.bf16.msra.mxu0 0
        %641 = vmatprep.subr.bf16.mxu0 0
        %642 = vmatpush1.bf16.msra.mxu0 0
        %643 = vmatprep.subr.bf16.mxu0 0
        %644 = vmatpush1.bf16.msra.mxu0 0
        %645 = vmatprep.subr.bf16.mxu0 0
        %646 = vmatpush1.bf16.msra.mxu0 0
        %647 = vmatprep.subr.bf16.mxu0 0
        %648 = vmatpush1.bf16.msra.mxu0 0
        %649 = vmatprep.mubr.bf16.mxu0 0
        %650 = vmatmul.mubr.bf16.gmra.mrb[0].mxu0 %v552
        %v651 = vpop.f32.mrb[0].mxu0
        %v652 = vadd.f32 0.0, %v651
        %v653 = vpop.f32.mrb[0].mxu0
        %v654 = vpop.f32.mrb[0].mxu0
        %v655 = vpop.f32.mrb[0].mxu0
        %656 = vdwg.mxu0
        %v657 = vpack.c.bf16 %v652, %v652
        %s658 = sld [smem:[#allocation9 + %s36]]
        %p659 = scmp.ne.s32.totalorder %s658, 0
        %v660 = vld [vmem:[%s506] sm:$0xf]
        %s661 = scalar_select %p659, 1, 0
        %v662 = vstv %s661
        %vm663 = vcmp.eq.s32.totalorder %v662, 1
        %v664 = vsel %vm663, %v660, %v657
        %v665 = vld [vmem:[#allocation2] sm:$0xff]
        %v666 = vld [vmem:[#allocation3] sm:$0xff]
        %v667 = vld [vmem:[%s6] sm:$0xff]
        %v668 = vld [vmem:[%s6 + $0x8] sm:$0xff]
        %v669 = vld [vmem:[%s6 + $0x10] sm:$0xff]
        %v670 = vld [vmem:[%s6 + $0x18] sm:$0xff]
        %v671 = vld [vmem:[%s6 + $0x20] sm:$0xff]
        %v672 = vld [vmem:[%s6 + $0x28] sm:$0xff]
        %v673 = vld [vmem:[%s6 + $0x30] sm:$0xff]
        %v674 = vld [vmem:[%s6 + $0x38] sm:$0xff]
        %v675 = vld [vmem:[%s6 + $0x40] sm:$0xff]
        %v676 = vld [vmem:[%s6 + $0x48] sm:$0xff]
        %v677 = vld [vmem:[%s6 + $0x50] sm:$0xff]
        %v678 = vld [vmem:[%s6 + $0x58] sm:$0xff]
        %v679 = vld [vmem:[%s6 + $0x60] sm:$0xff]
        %v680 = vld [vmem:[%s6 + $0x68] sm:$0xff]
        %v681 = vld [vmem:[%s6 + $0x70] sm:$0xff]
        %v682 = vld [vmem:[%s6 + $0x78] sm:$0xff]
        %v683 = vld [vmem:[%s6 + $0x80] sm:$0xff]
        %v684 = vld [vmem:[%s6 + $0x88] sm:$0xff]
        %v685 = vld [vmem:[%s6 + $0x90] sm:$0xff]
        %v686 = vld [vmem:[%s6 + $0x98] sm:$0xff]
        %v687 = vld [vmem:[%s6 + $0xa0] sm:$0xff]
        %v688 = vld [vmem:[%s6 + $0xa8] sm:$0xff]
        %v689 = vld [vmem:[%s6 + $0xb0] sm:$0xff]
        %v690 = vld [vmem:[%s6 + $0xb8] sm:$0xff]
        %v691 = vld [vmem:[%s6 + $0xc0] sm:$0xff]
        %v692 = vld [vmem:[%s6 + $0xc8] sm:$0xff]
        %v693 = vld [vmem:[%s6 + $0xd0] sm:$0xff]
        %v694 = vld [vmem:[%s6 + $0xd8] sm:$0xff]
        %v695 = vld [vmem:[%s6 + $0xe0] sm:$0xff]
        %v696 = vld [vmem:[%s6 + $0xe8] sm:$0xff]
        %v697 = vld [vmem:[%s6 + $0xf0] sm:$0xff]
        %v698 = vld [vmem:[%s6 + $0xf8] sm:$0xff]
        %v699 = vld [vmem:[%s7] sm:$0xff]
        %v700 = vld [vmem:[%s7 + $0x8] sm:$0xff]
        %v701 = vld [vmem:[%s7 + $0x10] sm:$0xff]
        %v702 = vld [vmem:[%s7 + $0x18] sm:$0xff]
        %v703 = vld [vmem:[%s7 + $0x20] sm:$0xff]
        %v704 = vld [vmem:[%s7 + $0x28] sm:$0xff]
        %v705 = vld [vmem:[%s7 + $0x30] sm:$0xff]
        %v706 = vld [vmem:[%s7 + $0x38] sm:$0xff]
        %v707 = vld [vmem:[%s7 + $0x40] sm:$0xff]
        %v708 = vld [vmem:[%s7 + $0x48] sm:$0xff]
        %v709 = vld [vmem:[%s7 + $0x50] sm:$0xff]
        %v710 = vld [vmem:[%s7 + $0x58] sm:$0xff]
        %v711 = vld [vmem:[%s7 + $0x60] sm:$0xff]
        %v712 = vld [vmem:[%s7 + $0x68] sm:$0xff]
        %v713 = vld [vmem:[%s7 + $0x70] sm:$0xff]
        %v714 = vld [vmem:[%s7 + $0x78] sm:$0xff]
        %v715 = vld [vmem:[%s7 + $0x80] sm:$0xff]
        %v716 = vld [vmem:[%s7 + $0x88] sm:$0xff]
        %v717 = vld [vmem:[%s7 + $0x90] sm:$0xff]
        %v718 = vld [vmem:[%s7 + $0x98] sm:$0xff]
        %v719 = vld [vmem:[%s7 + $0xa0] sm:$0xff]
        %v720 = vld [vmem:[%s7 + $0xa8] sm:$0xff]
        %v721 = vld [vmem:[%s7 + $0xb0] sm:$0xff]
        %v722 = vld [vmem:[%s7 + $0xb8] sm:$0xff]
        %v723 = vld [vmem:[%s7 + $0xc0] sm:$0xff]
        %v724 = vld [vmem:[%s7 + $0xc8] sm:$0xff]
        %v725 = vld [vmem:[%s7 + $0xd0] sm:$0xff]
        %v726 = vld [vmem:[%s7 + $0xd8] sm:$0xff]
        %v727 = vld [vmem:[%s7 + $0xe0] sm:$0xff]
        %v728 = vld [vmem:[%s7 + $0xe8] sm:$0xff]
        %v729 = vld [vmem:[%s7 + $0xf0] sm:$0xff]
        %v730 = vld [vmem:[%s7 + $0xf8] sm:$0xff]
        %v731 = vld [vmem:[%s8] sm:$0xf]
        %v732 = vpack.c.bf16 %v665, %v665
        %v765 = vunpack.c.l.b16 %v699
        %v766 = vunpack.c.h.b16 %v699
        %v767 = vunpack.c.l.b16 %v700
        %v768 = vunpack.c.h.b16 %v700
        %v769 = vunpack.c.l.b16 %v701
        %v770 = vunpack.c.h.b16 %v701
        %v771 = vunpack.c.l.b16 %v702
        %v772 = vunpack.c.h.b16 %v702
        %v773 = vunpack.c.l.b16 %v703
        %v774 = vunpack.c.h.b16 %v703
        %v775 = vunpack.c.l.b16 %v704
        %v776 = vunpack.c.h.b16 %v704
        %v777 = vunpack.c.l.b16 %v705
        %v778 = vunpack.c.h.b16 %v705
        %v779 = vunpack.c.l.b16 %v706
        %v780 = vunpack.c.h.b16 %v706
        %v781 = vunpack.c.l.b16 %v707
        %v782 = vunpack.c.h.b16 %v707
        %v783 = vunpack.c.l.b16 %v708
        %v784 = vunpack.c.h.b16 %v708
        %v785 = vunpack.c.l.b16 %v709
        %v786 = vunpack.c.h.b16 %v709
        %v787 = vunpack.c.l.b16 %v710
        %v788 = vunpack.c.h.b16 %v710
        %v789 = vunpack.c.l.b16 %v711
        %v790 = vunpack.c.h.b16 %v711
        %v791 = vunpack.c.l.b16 %v712
        %v792 = vunpack.c.h.b16 %v712
        %v793 = vunpack.c.l.b16 %v713
        %v794 = vunpack.c.h.b16 %v713
        %v795 = vunpack.c.l.b16 %v714
        %v796 = vunpack.c.h.b16 %v714
        %v797 = vunpack.c.l.b16 %v715
        %v798 = vunpack.c.h.b16 %v715
        %v799 = vunpack.c.l.b16 %v716
        %v800 = vunpack.c.h.b16 %v716
        %v801 = vunpack.c.l.b16 %v717
        %v802 = vunpack.c.h.b16 %v717
        %v803 = vunpack.c.l.b16 %v718
        %v804 = vunpack.c.h.b16 %v718
        %v805 = vunpack.c.l.b16 %v719
        %v806 = vunpack.c.h.b16 %v719
        %v807 = vunpack.c.l.b16 %v720
        %v808 = vunpack.c.h.b16 %v720
        %v809 = vunpack.c.l.b16 %v721
        %v810 = vunpack.c.h.b16 %v721
        %v811 = vunpack.c.l.b16 %v722
        %v812 = vunpack.c.h.b16 %v722
        %v813 = vunpack.c.l.b16 %v723
        %v814 = vunpack.c.h.b16 %v723
        %v815 = vunpack.c.l.b16 %v724
        %v816 = vunpack.c.h.b16 %v724
        %v817 = vunpack.c.l.b16 %v725
        %v818 = vunpack.c.h.b16 %v725
        %v819 = vunpack.c.l.b16 %v726
        %v820 = vunpack.c.h.b16 %v726
        %v821 = vunpack.c.l.b16 %v727
        %v822 = vunpack.c.h.b16 %v727
        %v823 = vunpack.c.l.b16 %v728
        %v824 = vunpack.c.h.b16 %v728
        %v825 = vunpack.c.l.b16 %v729
        %v826 = vunpack.c.h.b16 %v729
        %v827 = vunpack.c.l.b16 %v730
        %v828 = vunpack.c.h.b16 %v730
        %v829 = vpack.c.b16 %v769, %v765
        %v830 = vpack.c.b16 %v770, %v766
        %v831 = vpack.c.b16 %v771, %v767
        %v832 = vpack.c.b16 %v772, %v768
        %v833 = vpack.c.b16 %v777, %v773
        %v834 = vpack.c.b16 %v778, %v774
        %v835 = vpack.c.b16 %v779, %v775
        %v836 = vpack.c.b16 %v780, %v776
        %v837 = vpack.c.b16 %v785, %v781
        %v838 = vpack.c.b16 %v786, %v782
        %v839 = vpack.c.b16 %v787, %v783
        %v840 = vpack.c.b16 %v788, %v784
        %v841 = vpack.c.b16 %v793, %v789
        %v842 = vpack.c.b16 %v794, %v790
        %v843 = vpack.c.b16 %v795, %v791
        %v844 = vpack.c.b16 %v796, %v792
        %v845 = vpack.c.b16 %v801, %v797
        %v846 = vpack.c.b16 %v802, %v798
        %v847 = vpack.c.b16 %v803, %v799
        %v848 = vpack.c.b16 %v804, %v800
        %v849 = vpack.c.b16 %v809, %v805
        %v850 = vpack.c.b16 %v810, %v806
        %v851 = vpack.c.b16 %v811, %v807
        %v852 = vpack.c.b16 %v812, %v808
        %v853 = vpack.c.b16 %v817, %v813
        %v854 = vpack.c.b16 %v818, %v814
        %v855 = vpack.c.b16 %v819, %v815
        %v856 = vpack.c.b16 %v820, %v816
        %v857 = vpack.c.b16 %v825, %v821
        %v858 = vpack.c.b16 %v826, %v822
        %v859 = vpack.c.b16 %v827, %v823
        %v860 = vpack.c.b16 %v828, %v824
        %893 = vmatprep.subr.bf16.mxu0 %v830
        %894 = vmatpush1.bf16.msra.mxu0 %v829
        %895 = vmatprep.subr.bf16.mxu0 %v834
        %896 = vmatpush1.bf16.msra.mxu0 %v833
        %897 = vmatprep.subr.bf16.mxu0 %v838
        %898 = vmatpush1.bf16.msra.mxu0 %v837
        %899 = vmatprep.subr.bf16.mxu0 %v842
        %900 = vmatpush1.bf16.msra.mxu0 %v841
        %901 = vmatprep.subr.bf16.mxu0 %v846
        %902 = vmatpush1.bf16.msra.mxu0 %v845
        %903 = vmatprep.subr.bf16.mxu0 %v850
        %904 = vmatpush1.bf16.msra.mxu0 %v849
        %905 = vmatprep.subr.bf16.mxu0 %v854
        %906 = vmatpush1.bf16.msra.mxu0 %v853
        %907 = vmatprep.subr.bf16.mxu0 %v858
        %908 = vmatpush1.bf16.msra.mxu0 %v857
        %909 = vmatprep.subr.bf16.mxu0 0
        %910 = vmatpush1.bf16.msra.mxu0 0
        %911 = vmatprep.subr.bf16.mxu0 0
        %912 = vmatpush1.bf16.msra.mxu0 0
        %913 = vmatprep.subr.bf16.mxu0 0
        %914 = vmatpush1.bf16.msra.mxu0 0
        %915 = vmatprep.subr.bf16.mxu0 0
        %916 = vmatpush1.bf16.msra.mxu0 0
        %917 = vmatprep.subr.bf16.mxu0 0
        %918 = vmatpush1.bf16.msra.mxu0 0
        %919 = vmatprep.subr.bf16.mxu0 0
        %920 = vmatpush1.bf16.msra.mxu0 0
        %921 = vmatprep.subr.bf16.mxu0 0
        %922 = vmatpush1.bf16.msra.mxu0 0
        %923 = vmatprep.subr.bf16.mxu0 0
        %924 = vmatpush1.bf16.msra.mxu0 0
        %925 = vmatprep.mubr.bf16.mxu0 0
        %926 = vmatmul.mubr.bf16.gmra.mrb[0].mxu0 %v732
        %v927 = vpop.f32.mrb[0].mxu0
        %v928 = vadd.f32 0.0, %v927
        %v929 = vpop.f32.mrb[0].mxu0
        %v930 = vadd.f32 0.0, %v929
        %v931 = vpop.f32.mrb[0].mxu0
        %v932 = vpop.f32.mrb[0].mxu0
        %933 = vdwg.mxu0
        %934 = vmatprep.subr.bf16.mxu0 %v832
        %935 = vmatpush1.bf16.msra.mxu0 %v831
        %936 = vmatprep.subr.bf16.mxu0 %v836
        %937 = vmatpush1.bf16.msra.mxu0 %v835
        %938 = vmatprep.subr.bf16.mxu0 %v840
        %939 = vmatpush1.bf16.msra.mxu0 %v839
        %940 = vmatprep.subr.bf16.mxu0 %v844
        %941 = vmatpush1.bf16.msra.mxu0 %v843
        %942 = vmatprep.subr.bf16.mxu0 %v848
        %943 = vmatpush1.bf16.msra.mxu0 %v847
        %944 = vmatprep.subr.bf16.mxu0 %v852
        %945 = vmatpush1.bf16.msra.mxu0 %v851
        %946 = vmatprep.subr.bf16.mxu0 %v856
        %947 = vmatpush1.bf16.msra.mxu0 %v855
        %948 = vmatprep.subr.bf16.mxu0 %v860
        %949 = vmatpush1.bf16.msra.mxu0 %v859
        %950 = vmatprep.subr.bf16.mxu0 0
        %951 = vmatpush1.bf16.msra.mxu0 0
        %952 = vmatprep.subr.bf16.mxu0 0
        %953 = vmatpush1.bf16.msra.mxu0 0
        %954 = vmatprep.subr.bf16.mxu0 0
        %955 = vmatpush1.bf16.msra.mxu0 0
        %956 = vmatprep.subr.bf16.mxu0 0
        %957 = vmatpush1.bf16.msra.mxu0 0
        %958 = vmatprep.subr.bf16.mxu0 0
        %959 = vmatpush1.bf16.msra.mxu0 0
        %960 = vmatprep.subr.bf16.mxu0 0
        %961 = vmatpush1.bf16.msra.mxu0 0
        %962 = vmatprep.subr.bf16.mxu0 0
        %963 = vmatpush1.bf16.msra.mxu0 0
        %964 = vmatprep.subr.bf16.mxu0 0
        %965 = vmatpush1.bf16.msra.mxu0 0
        %966 = vmatprep.mubr.bf16.mxu0 0
        %967 = vmatmul.mubr.bf16.gmra.mrb[0].mxu0 %v732
        %v968 = vpop.f32.mrb[0].mxu0
        %v969 = vadd.f32 0.0, %v968
        %v970 = vpop.f32.mrb[0].mxu0
        %v971 = vadd.f32 0.0, %v970
        %v972 = vpop.f32.mrb[0].mxu0
        %v973 = vpop.f32.mrb[0].mxu0
        %974 = vdwg.mxu0
        %v1007 = vunpack.c.l.b16 %v667
        %v1008 = vunpack.c.h.b16 %v667
        %v1009 = vunpack.c.l.b16 %v668
        %v1010 = vunpack.c.h.b16 %v668
        %v1011 = vunpack.c.l.b16 %v669
        %v1012 = vunpack.c.h.b16 %v669
        %v1013 = vunpack.c.l.b16 %v670
        %v1014 = vunpack.c.h.b16 %v670
        %v1015 = vunpack.c.l.b16 %v671
        %v1016 = vunpack.c.h.b16 %v671
        %v1017 = vunpack.c.l.b16 %v672
        %v1018 = vunpack.c.h.b16 %v672
        %v1019 = vunpack.c.l.b16 %v673
        %v1020 = vunpack.c.h.b16 %v673
        %v1021 = vunpack.c.l.b16 %v674
        %v1022 = vunpack.c.h.b16 %v674
        %v1023 = vunpack.c.l.b16 %v675
        %v1024 = vunpack.c.h.b16 %v675
        %v1025 = vunpack.c.l.b16 %v676
        %v1026 = vunpack.c.h.b16 %v676
        %v1027 = vunpack.c.l.b16 %v677
        %v1028 = vunpack.c.h.b16 %v677
        %v1029 = vunpack.c.l.b16 %v678
        %v1030 = vunpack.c.h.b16 %v678
        %v1031 = vunpack.c.l.b16 %v679
        %v1032 = vunpack.c.h.b16 %v679
        %v1033 = vunpack.c.l.b16 %v680
        %v1034 = vunpack.c.h.b16 %v680
        %v1035 = vunpack.c.l.b16 %v681
        %v1036 = vunpack.c.h.b16 %v681
        %v1037 = vunpack.c.l.b16 %v682
        %v1038 = vunpack.c.h.b16 %v682
        %v1039 = vunpack.c.l.b16 %v683
        %v1040 = vunpack.c.h.b16 %v683
        %v1041 = vunpack.c.l.b16 %v684
        %v1042 = vunpack.c.h.b16 %v684
        %v1043 = vunpack.c.l.b16 %v685
        %v1044 = vunpack.c.h.b16 %v685
        %v1045 = vunpack.c.l.b16 %v686
        %v1046 = vunpack.c.h.b16 %v686
        %v1047 = vunpack.c.l.b16 %v687
        %v1048 = vunpack.c.h.b16 %v687
        %v1049 = vunpack.c.l.b16 %v688
        %v1050 = vunpack.c.h.b16 %v688
        %v1051 = vunpack.c.l.b16 %v689
        %v1052 = vunpack.c.h.b16 %v689
        %v1053 = vunpack.c.l.b16 %v690
        %v1054 = vunpack.c.h.b16 %v690
        %v1055 = vunpack.c.l.b16 %v691
        %v1056 = vunpack.c.h.b16 %v691
        %v1057 = vunpack.c.l.b16 %v692
        %v1058 = vunpack.c.h.b16 %v692
        %v1059 = vunpack.c.l.b16 %v693
        %v1060 = vunpack.c.h.b16 %v693
        %v1061 = vunpack.c.l.b16 %v694
        %v1062 = vunpack.c.h.b16 %v694
        %v1063 = vunpack.c.l.b16 %v695
        %v1064 = vunpack.c.h.b16 %v695
        %v1065 = vunpack.c.l.b16 %v696
        %v1066 = vunpack.c.h.b16 %v696
        %v1067 = vunpack.c.l.b16 %v697
        %v1068 = vunpack.c.h.b16 %v697
        %v1069 = vunpack.c.l.b16 %v698
        %v1070 = vunpack.c.h.b16 %v698
        %v1071 = vpack.c.b16 %v1011, %v1007
        %v1072 = vpack.c.b16 %v1012, %v1008
        %v1073 = vpack.c.b16 %v1013, %v1009
        %v1074 = vpack.c.b16 %v1014, %v1010
        %v1075 = vpack.c.b16 %v1019, %v1015
        %v1076 = vpack.c.b16 %v1020, %v1016
        %v1077 = vpack.c.b16 %v1021, %v1017
        %v1078 = vpack.c.b16 %v1022, %v1018
        %v1079 = vpack.c.b16 %v1027, %v1023
        %v1080 = vpack.c.b16 %v1028, %v1024
        %v1081 = vpack.c.b16 %v1029, %v1025
        %v1082 = vpack.c.b16 %v1030, %v1026
        %v1083 = vpack.c.b16 %v1035, %v1031
        %v1084 = vpack.c.b16 %v1036, %v1032
        %v1085 = vpack.c.b16 %v1037, %v1033
        %v1086 = vpack.c.b16 %v1038, %v1034
        %v1087 = vpack.c.b16 %v1043, %v1039
        %v1088 = vpack.c.b16 %v1044, %v1040
        %v1089 = vpack.c.b16 %v1045, %v1041
        %v1090 = vpack.c.b16 %v1046, %v1042
        %v1091 = vpack.c.b16 %v1051, %v1047
        %v1092 = vpack.c.b16 %v1052, %v1048
        %v1093 = vpack.c.b16 %v1053, %v1049
        %v1094 = vpack.c.b16 %v1054, %v1050
        %v1095 = vpack.c.b16 %v1059, %v1055
        %v1096 = vpack.c.b16 %v1060, %v1056
        %v1097 = vpack.c.b16 %v1061, %v1057
        %v1098 = vpack.c.b16 %v1062, %v1058
        %v1099 = vpack.c.b16 %v1067, %v1063
        %v1100 = vpack.c.b16 %v1068, %v1064
        %v1101 = vpack.c.b16 %v1069, %v1065
        %v1102 = vpack.c.b16 %v1070, %v1066
        %1135 = vmatprep.subr.bf16.mxu0 %v1072
        %1136 = vmatpush1.bf16.msra.mxu0 %v1071
        %1137 = vmatprep.subr.bf16.mxu0 %v1076
        %1138 = vmatpush1.bf16.msra.mxu0 %v1075
        %1139 = vmatprep.subr.bf16.mxu0 %v1080
        %1140 = vmatpush1.bf16.msra.mxu0 %v1079
        %1141 = vmatprep.subr.bf16.mxu0 %v1084
        %1142 = vmatpush1.bf16.msra.mxu0 %v1083
        %1143 = vmatprep.subr.bf16.mxu0 %v1088
        %1144 = vmatpush1.bf16.msra.mxu0 %v1087
        %1145 = vmatprep.subr.bf16.mxu0 %v1092
        %1146 = vmatpush1.bf16.msra.mxu0 %v1091
        %1147 = vmatprep.subr.bf16.mxu0 %v1096
        %1148 = vmatpush1.bf16.msra.mxu0 %v1095
        %1149 = vmatprep.subr.bf16.mxu0 %v1100
        %1150 = vmatpush1.bf16.msra.mxu0 %v1099
        %1151 = vmatprep.subr.bf16.mxu0 0
        %1152 = vmatpush1.bf16.msra.mxu0 0
        %1153 = vmatprep.subr.bf16.mxu0 0
        %1154 = vmatpush1.bf16.msra.mxu0 0
        %1155 = vmatprep.subr.bf16.mxu0 0
        %1156 = vmatpush1.bf16.msra.mxu0 0
        %1157 = vmatprep.subr.bf16.mxu0 0
        %1158 = vmatpush1.bf16.msra.mxu0 0
        %1159 = vmatprep.subr.bf16.mxu0 0
        %1160 = vmatpush1.bf16.msra.mxu0 0
        %1161 = vmatprep.subr.bf16.mxu0 0
        %1162 = vmatpush1.bf16.msra.mxu0 0
        %1163 = vmatprep.subr.bf16.mxu0 0
        %1164 = vmatpush1.bf16.msra.mxu0 0
        %1165 = vmatprep.subr.bf16.mxu0 0
        %1166 = vmatpush1.bf16.msra.mxu0 0
        %1167 = vmatprep.mubr.bf16.mxu0 0
        %1168 = vmatmul.mubr.bf16.gmra.mrb[0].mxu0 %v664
        %v1169 = vpop.f32.mrb[0].mxu0
        %v1170 = vadd.f32 %v928, %v1169
        %v1171 = vpop.f32.mrb[0].mxu0
        %v1172 = vadd.f32 %v930, %v1171
        %v1173 = vpop.f32.mrb[0].mxu0
        %v1174 = vpop.f32.mrb[0].mxu0
        %1175 = vdwg.mxu0
        %1176 = vmatprep.subr.bf16.mxu0 %v1074
        %1177 = vmatpush1.bf16.msra.mxu0 %v1073
        %1178 = vmatprep.subr.bf16.mxu0 %v1078
        %1179 = vmatpush1.bf16.msra.mxu0 %v1077
        %1180 = vmatprep.subr.bf16.mxu0 %v1082
        %1181 = vmatpush1.bf16.msra.mxu0 %v1081
        %1182 = vmatprep.subr.bf16.mxu0 %v1086
        %1183 = vmatpush1.bf16.msra.mxu0 %v1085
        %1184 = vmatprep.subr.bf16.mxu0 %v1090
        %1185 = vmatpush1.bf16.msra.mxu0 %v1089
        %1186 = vmatprep.subr.bf16.mxu0 %v1094
        %1187 = vmatpush1.bf16.msra.mxu0 %v1093
        %1188 = vmatprep.subr.bf16.mxu0 %v1098
        %1189 = vmatpush1.bf16.msra.mxu0 %v1097
        %1190 = vmatprep.subr.bf16.mxu0 %v1102
        %1191 = vmatpush1.bf16.msra.mxu0 %v1101
        %1192 = vmatprep.subr.bf16.mxu0 0
        %1193 = vmatpush1.bf16.msra.mxu0 0
        %1194 = vmatprep.subr.bf16.mxu0 0
        %1195 = vmatpush1.bf16.msra.mxu0 0
        %1196 = vmatprep.subr.bf16.mxu0 0
        %1197 = vmatpush1.bf16.msra.mxu0 0
        %1198 = vmatprep.subr.bf16.mxu0 0
        %1199 = vmatpush1.bf16.msra.mxu0 0
        %1200 = vmatprep.subr.bf16.mxu0 0
        %1201 = vmatpush1.bf16.msra.mxu0 0
        %1202 = vmatprep.subr.bf16.mxu0 0
        %1203 = vmatpush1.bf16.msra.mxu0 0
        %1204 = vmatprep.subr.bf16.mxu0 0
        %1205 = vmatpush1.bf16.msra.mxu0 0
        %1206 = vmatprep.subr.bf16.mxu0 0
        %1207 = vmatpush1.bf16.msra.mxu0 0
        %1208 = vmatprep.mubr.bf16.mxu0 0
        %1209 = vmatmul.mubr.bf16.gmra.mrb[0].mxu0 %v664
        %v1210 = vpop.f32.mrb[0].mxu0
        %v1211 = vadd.f32 %v969, %v1210
        %v1212 = vpop.f32.mrb[0].mxu0
        %v1213 = vadd.f32 %v971, %v1212
        %v1214 = vpop.f32.mrb[0].mxu0
        %v1215 = vpop.f32.mrb[0].mxu0
        %1216 = vdwg.mxu0
        %v1218 = vlaneseq
        %v1219 = vshrl.u32 %v1218, 7
        %v1220 = vsub.s32 0, %v1219
        %v1221 = vrot.slane %v731, %v1220
        %v1222 = vlaneseq
        %v1223 = vshrl.u32 %v1222, 7
        %v1224 = vsub.s32 1, %v1223
        %v1225 = vrot.slane %v731, %v1224
        %v1226 = vlaneseq
        %v1227 = vshrl.u32 %v1226, 7
        %v1228 = vsub.s32 2, %v1227
        %v1229 = vrot.slane %v731, %v1228
        %v1230 = vlaneseq
        %v1231 = vshrl.u32 %v1230, 7
        %v1232 = vsub.s32 3, %v1231
        %v1233 = vrot.slane %v731, %v1232
        %v1238 = vadd.f32 %v1170, %v1221
        %v1239 = vadd.f32 %v1172, %v1225
        %v1240 = vadd.f32 %v1211, %v1229
        %v1241 = vadd.f32 %v1213, %v1233
        %v1242 = vxor.u32 %v1238, 2147483648
        %v1243 = vmul.f32 %v1242, 1.442695
        %v1244 = vpow.pop %v1243
        %v1245 = vadd.f32 %v1244, 1.0
        %v1246 = vrcp.pop %v1245
        %v1247 = vmul.f32 1.0, %v1246
        %v1248 = vxor.u32 %v1239, 2147483648
        %v1249 = vmul.f32 %v1248, 1.442695
        %v1250 = vpow.pop %v1249
        %v1251 = vadd.f32 %v1250, 1.0
        %v1252 = vrcp.pop %v1251
        %v1253 = vmul.f32 1.0, %v1252
        %v1254 = vtanh.pop %v1240
        %v1255 = vxor.u32 %v1241, 2147483648
        %v1256 = vmul.f32 %v1255, 1.442695
        %v1257 = vpow.pop %v1256
        %v1258 = vadd.f32 %v1257, 1.0
        %v1259 = vrcp.pop %v1258
        %v1260 = vmul.f32 1.0, %v1259
        %v1261 = vmul.f32 %v1253, %v666
        %v1262 = vmul.f32 %v1247, %v1254
        %v1263 = vadd.f32 %v1261, %v1262
        %v1264 = vtanh.pop %v1263
        %v1265 = vmul.f32 %v1260, %v1264
        %1266 = vst [vmem:[#allocation2] sm:$0xff] %v1265
        %1267 = vst [vmem:[#allocation3] sm:$0xff] %v1263
        %v1268 = vld [vmem:[#allocation4] sm:$0xff]
        %v1269 = vld [vmem:[#allocation5] sm:$0xff]
        %v1270 = vld [vmem:[%s9] sm:$0xff]
        %v1271 = vld [vmem:[%s9 + $0x8] sm:$0xff]
        %v1272 = vld [vmem:[%s9 + $0x10] sm:$0xff]
        %v1273 = vld [vmem:[%s9 + $0x18] sm:$0xff]
        %v1274 = vld [vmem:[%s9 + $0x20] sm:$0xff]
        %v1275 = vld [vmem:[%s9 + $0x28] sm:$0xff]
        %v1276 = vld [vmem:[%s9 + $0x30] sm:$0xff]
        %v1277 = vld [vmem:[%s9 + $0x38] sm:$0xff]
        %v1278 = vld [vmem:[%s9 + $0x40] sm:$0xff]
        %v1279 = vld [vmem:[%s9 + $0x48] sm:$0xff]
        %v1280 = vld [vmem:[%s9 + $0x50] sm:$0xff]
        %v1281 = vld [vmem:[%s9 + $0x58] sm:$0xff]
        %v1282 = vld [vmem:[%s9 + $0x60] sm:$0xff]
        %v1283 = vld [vmem:[%s9 + $0x68] sm:$0xff]
        %v1284 = vld [vmem:[%s9 + $0x70] sm:$0xff]
        %v1285 = vld [vmem:[%s9 + $0x78] sm:$0xff]
        %v1286 = vld [vmem:[%s9 + $0x80] sm:$0xff]
        %v1287 = vld [vmem:[%s9 + $0x88] sm:$0xff]
        %v1288 = vld [vmem:[%s9 + $0x90] sm:$0xff]
        %v1289 = vld [vmem:[%s9 + $0x98] sm:$0xff]
        %v1290 = vld [vmem:[%s9 + $0xa0] sm:$0xff]
        %v1291 = vld [vmem:[%s9 + $0xa8] sm:$0xff]
        %v1292 = vld [vmem:[%s9 + $0xb0] sm:$0xff]
        %v1293 = vld [vmem:[%s9 + $0xb8] sm:$0xff]
        %v1294 = vld [vmem:[%s9 + $0xc0] sm:$0xff]
        %v1295 = vld [vmem:[%s9 + $0xc8] sm:$0xff]
        %v1296 = vld [vmem:[%s9 + $0xd0] sm:$0xff]
        %v1297 = vld [vmem:[%s9 + $0xd8] sm:$0xff]
        %v1298 = vld [vmem:[%s9 + $0xe0] sm:$0xff]
        %v1299 = vld [vmem:[%s9 + $0xe8] sm:$0xff]
        %v1300 = vld [vmem:[%s9 + $0xf0] sm:$0xff]
        %v1301 = vld [vmem:[%s9 + $0xf8] sm:$0xff]
        %v1302 = vld [vmem:[%s10] sm:$0xff]
        %v1303 = vld [vmem:[%s10 + $0x8] sm:$0xff]
        %v1304 = vld [vmem:[%s10 + $0x10] sm:$0xff]
        %v1305 = vld [vmem:[%s10 + $0x18] sm:$0xff]
        %v1306 = vld [vmem:[%s10 + $0x20] sm:$0xff]
        %v1307 = vld [vmem:[%s10 + $0x28] sm:$0xff]
        %v1308 = vld [vmem:[%s10 + $0x30] sm:$0xff]
        %v1309 = vld [vmem:[%s10 + $0x38] sm:$0xff]
        %v1310 = vld [vmem:[%s10 + $0x40] sm:$0xff]
        %v1311 = vld [vmem:[%s10 + $0x48] sm:$0xff]
        %v1312 = vld [vmem:[%s10 + $0x50] sm:$0xff]
        %v1313 = vld [vmem:[%s10 + $0x58] sm:$0xff]
        %v1314 = vld [vmem:[%s10 + $0x60] sm:$0xff]
        %v1315 = vld [vmem:[%s10 + $0x68] sm:$0xff]
        %v1316 = vld [vmem:[%s10 + $0x70] sm:$0xff]
        %v1317 = vld [vmem:[%s10 + $0x78] sm:$0xff]
        %v1318 = vld [vmem:[%s10 + $0x80] sm:$0xff]
        %v1319 = vld [vmem:[%s10 + $0x88] sm:$0xff]
        %v1320 = vld [vmem:[%s10 + $0x90] sm:$0xff]
        %v1321 = vld [vmem:[%s10 + $0x98] sm:$0xff]
        %v1322 = vld [vmem:[%s10 + $0xa0] sm:$0xff]
        %v1323 = vld [vmem:[%s10 + $0xa8] sm:$0xff]
        %v1324 = vld [vmem:[%s10 + $0xb0] sm:$0xff]
        %v1325 = vld [vmem:[%s10 + $0xb8] sm:$0xff]
        %v1326 = vld [vmem:[%s10 + $0xc0] sm:$0xff]
        %v1327 = vld [vmem:[%s10 + $0xc8] sm:$0xff]
        %v1328 = vld [vmem:[%s10 + $0xd0] sm:$0xff]
        %v1329 = vld [vmem:[%s10 + $0xd8] sm:$0xff]
        %v1330 = vld [vmem:[%s10 + $0xe0] sm:$0xff]
        %v1331 = vld [vmem:[%s10 + $0xe8] sm:$0xff]
        %v1332 = vld [vmem:[%s10 + $0xf0] sm:$0xff]
        %v1333 = vld [vmem:[%s10 + $0xf8] sm:$0xff]
        %v1334 = vld [vmem:[%s11] sm:$0xf]
        %v1335 = vpack.c.bf16 %v1265, %v1265
        %v1336 = vpack.c.bf16 %v1268, %v1268
        %v1369 = vunpack.c.l.b16 %v1302
        %v1370 = vunpack.c.h.b16 %v1302
        %v1371 = vunpack.c.l.b16 %v1303
        %v1372 = vunpack.c.h.b16 %v1303
        %v1373 = vunpack.c.l.b16 %v1304
        %v1374 = vunpack.c.h.b16 %v1304
        %v1375 = vunpack.c.l.b16 %v1305
        %v1376 = vunpack.c.h.b16 %v1305
        %v1377 = vunpack.c.l.b16 %v1306
        %v1378 = vunpack.c.h.b16 %v1306
        %v1379 = vunpack.c.l.b16 %v1307
        %v1380 = vunpack.c.h.b16 %v1307
        %v1381 = vunpack.c.l.b16 %v1308
        %v1382 = vunpack.c.h.b16 %v1308
        %v1383 = vunpack.c.l.b16 %v1309
        %v1384 = vunpack.c.h.b16 %v1309
        %v1385 = vunpack.c.l.b16 %v1310
        %v1386 = vunpack.c.h.b16 %v1310
        %v1387 = vunpack.c.l.b16 %v1311
        %v1388 = vunpack.c.h.b16 %v1311
        %v1389 = vunpack.c.l.b16 %v1312
        %v1390 = vunpack.c.h.b16 %v1312
        %v1391 = vunpack.c.l.b16 %v1313
        %v1392 = vunpack.c.h.b16 %v1313
        %v1393 = vunpack.c.l.b16 %v1314
        %v1394 = vunpack.c.h.b16 %v1314
        %v1395 = vunpack.c.l.b16 %v1315
        %v1396 = vunpack.c.h.b16 %v1315
        %v1397 = vunpack.c.l.b16 %v1316
        %v1398 = vunpack.c.h.b16 %v1316
        %v1399 = vunpack.c.l.b16 %v1317
        %v1400 = vunpack.c.h.b16 %v1317
        %v1401 = vunpack.c.l.b16 %v1318
        %v1402 = vunpack.c.h.b16 %v1318
        %v1403 = vunpack.c.l.b16 %v1319
        %v1404 = vunpack.c.h.b16 %v1319
        %v1405 = vunpack.c.l.b16 %v1320
        %v1406 = vunpack.c.h.b16 %v1320
        %v1407 = vunpack.c.l.b16 %v1321
        %v1408 = vunpack.c.h.b16 %v1321
        %v1409 = vunpack.c.l.b16 %v1322
        %v1410 = vunpack.c.h.b16 %v1322
        %v1411 = vunpack.c.l.b16 %v1323
        %v1412 = vunpack.c.h.b16 %v1323
        %v1413 = vunpack.c.l.b16 %v1324
        %v1414 = vunpack.c.h.b16 %v1324
        %v1415 = vunpack.c.l.b16 %v1325
        %v1416 = vunpack.c.h.b16 %v1325
        %v1417 = vunpack.c.l.b16 %v1326
        %v1418 = vunpack.c.h.b16 %v1326
        %v1419 = vunpack.c.l.b16 %v1327
        %v1420 = vunpack.c.h.b16 %v1327
        %v1421 = vunpack.c.l.b16 %v1328
        %v1422 = vunpack.c.h.b16 %v1328
        %v1423 = vunpack.c.l.b16 %v1329
        %v1424 = vunpack.c.h.b16 %v1329
        %v1425 = vunpack.c.l.b16 %v1330
        %v1426 = vunpack.c.h.b16 %v1330
        %v1427 = vunpack.c.l.b16 %v1331
        %v1428 = vunpack.c.h.b16 %v1331
        %v1429 = vunpack.c.l.b16 %v1332
        %v1430 = vunpack.c.h.b16 %v1332
        %v1431 = vunpack.c.l.b16 %v1333
        %v1432 = vunpack.c.h.b16 %v1333
        %v1433 = vpack.c.b16 %v1373, %v1369
        %v1434 = vpack.c.b16 %v1374, %v1370
        %v1435 = vpack.c.b16 %v1375, %v1371
        %v1436 = vpack.c.b16 %v1376, %v1372
        %v1437 = vpack.c.b16 %v1381, %v1377
        %v1438 = vpack.c.b16 %v1382, %v1378
        %v1439 = vpack.c.b16 %v1383, %v1379
        %v1440 = vpack.c.b16 %v1384, %v1380
        %v1441 = vpack.c.b16 %v1389, %v1385
        %v1442 = vpack.c.b16 %v1390, %v1386
        %v1443 = vpack.c.b16 %v1391, %v1387
        %v1444 = vpack.c.b16 %v1392, %v1388
        %v1445 = vpack.c.b16 %v1397, %v1393
        %v1446 = vpack.c.b16 %v1398, %v1394
        %v1447 = vpack.c.b16 %v1399, %v1395
        %v1448 = vpack.c.b16 %v1400, %v1396
        %v1449 = vpack.c.b16 %v1405, %v1401
        %v1450 = vpack.c.b16 %v1406, %v1402
        %v1451 = vpack.c.b16 %v1407, %v1403
        %v1452 = vpack.c.b16 %v1408, %v1404
        %v1453 = vpack.c.b16 %v1413, %v1409
        %v1454 = vpack.c.b16 %v1414, %v1410
        %v1455 = vpack.c.b16 %v1415, %v1411
        %v1456 = vpack.c.b16 %v1416, %v1412
        %v1457 = vpack.c.b16 %v1421, %v1417
        %v1458 = vpack.c.b16 %v1422, %v1418
        %v1459 = vpack.c.b16 %v1423, %v1419
        %v1460 = vpack.c.b16 %v1424, %v1420
        %v1461 = vpack.c.b16 %v1429, %v1425
        %v1462 = vpack.c.b16 %v1430, %v1426
        %v1463 = vpack.c.b16 %v1431, %v1427
        %v1464 = vpack.c.b16 %v1432, %v1428
        %1497 = vmatprep.subr.bf16.mxu0 %v1434
        %1498 = vmatpush1.bf16.msra.mxu0 %v1433
        %1499 = vmatprep.subr.bf16.mxu0 %v1438
        %1500 = vmatpush1.bf16.msra.mxu0 %v1437
        %1501 = vmatprep.subr.bf16.mxu0 %v1442
        %1502 = vmatpush1.bf16.msra.mxu0 %v1441
        %1503 = vmatprep.subr.bf16.mxu0 %v1446
        %1504 = vmatpush1.bf16.msra.mxu0 %v1445
        %1505 = vmatprep.subr.bf16.mxu0 %v1450
        %1506 = vmatpush1.bf16.msra.mxu0 %v1449
        %1507 = vmatprep.subr.bf16.mxu0 %v1454
        %1508 = vmatpush1.bf16.msra.mxu0 %v1453
        %1509 = vmatprep.subr.bf16.mxu0 %v1458
        %1510 = vmatpush1.bf16.msra.mxu0 %v1457
        %1511 = vmatprep.subr.bf16.mxu0 %v1462
        %1512 = vmatpush1.bf16.msra.mxu0 %v1461
        %1513 = vmatprep.subr.bf16.mxu0 0
        %1514 = vmatpush1.bf16.msra.mxu0 0
        %1515 = vmatprep.subr.bf16.mxu0 0
        %1516 = vmatpush1.bf16.msra.mxu0 0
        %1517 = vmatprep.subr.bf16.mxu0 0
        %1518 = vmatpush1.bf16.msra.mxu0 0
        %1519 = vmatprep.subr.bf16.mxu0 0
        %1520 = vmatpush1.bf16.msra.mxu0 0
        %1521 = vmatprep.subr.bf16.mxu0 0
        %1522 = vmatpush1.bf16.msra.mxu0 0
        %1523 = vmatprep.subr.bf16.mxu0 0
        %1524 = vmatpush1.bf16.msra.mxu0 0
        %1525 = vmatprep.subr.bf16.mxu0 0
        %1526 = vmatpush1.bf16.msra.mxu0 0
        %1527 = vmatprep.subr.bf16.mxu0 0
        %1528 = vmatpush1.bf16.msra.mxu0 0
        %1529 = vmatprep.mubr.bf16.mxu0 0
        %1530 = vmatmul.mubr.bf16.gmra.mrb[0].mxu0 %v1336
        %v1531 = vpop.f32.mrb[0].mxu0
        %v1532 = vadd.f32 0.0, %v1531
        %v1533 = vpop.f32.mrb[0].mxu0
        %v1534 = vadd.f32 0.0, %v1533
        %v1535 = vpop.f32.mrb[0].mxu0
        %v1536 = vpop.f32.mrb[0].mxu0
        %1537 = vdwg.mxu0
        %1538 = vmatprep.subr.bf16.mxu0 %v1436
        %1539 = vmatpush1.bf16.msra.mxu0 %v1435
        %1540 = vmatprep.subr.bf16.mxu0 %v1440
        %1541 = vmatpush1.bf16.msra.mxu0 %v1439
        %1542 = vmatprep.subr.bf16.mxu0 %v1444
        %1543 = vmatpush1.bf16.msra.mxu0 %v1443
        %1544 = vmatprep.subr.bf16.mxu0 %v1448
        %1545 = vmatpush1.bf16.msra.mxu0 %v1447
        %1546 = vmatprep.subr.bf16.mxu0 %v1452
        %1547 = vmatpush1.bf16.msra.mxu0 %v1451
        %1548 = vmatprep.subr.bf16.mxu0 %v1456
        %1549 = vmatpush1.bf16.msra.mxu0 %v1455
        %1550 = vmatprep.subr.bf16.mxu0 %v1460
        %1551 = vmatpush1.bf16.msra.mxu0 %v1459
        %1552 = vmatprep.subr.bf16.mxu0 %v1464
        %1553 = vmatpush1.bf16.msra.mxu0 %v1463
        %1554 = vmatprep.subr.bf16.mxu0 0
        %1555 = vmatpush1.bf16.msra.mxu0 0
        %1556 = vmatprep.subr.bf16.mxu0 0
        %1557 = vmatpush1.bf16.msra.mxu0 0
        %1558 = vmatprep.subr.bf16.mxu0 0
        %1559 = vmatpush1.bf16.msra.mxu0 0
        %1560 = vmatprep.subr.bf16.mxu0 0
        %1561 = vmatpush1.bf16.msra.mxu0 0
        %1562 = vmatprep.subr.bf16.mxu0 0
        %1563 = vmatpush1.bf16.msra.mxu0 0
        %1564 = vmatprep.subr.bf16.mxu0 0
        %1565 = vmatpush1.bf16.msra.mxu0 0
        %1566 = vmatprep.subr.bf16.mxu0 0
        %1567 = vmatpush1.bf16.msra.mxu0 0
        %1568 = vmatprep.subr.bf16.mxu0 0
        %1569 = vmatpush1.bf16.msra.mxu0 0
        %1570 = vmatprep.mubr.bf16.mxu0 0
        %1571 = vmatmul.mubr.bf16.gmra.mrb[0].mxu0 %v1336
        %v1572 = vpop.f32.mrb[0].mxu0
        %v1573 = vadd.f32 0.0, %v1572
        %v1574 = vpop.f32.mrb[0].mxu0
        %v1575 = vadd.f32 0.0, %v1574
        %v1576 = vpop.f32.mrb[0].mxu0
        %v1577 = vpop.f32.mrb[0].mxu0
        %1578 = vdwg.mxu0
        %v1611 = vunpack.c.l.b16 %v1270
        %v1612 = vunpack.c.h.b16 %v1270
        %v1613 = vunpack.c.l.b16 %v1271
        %v1614 = vunpack.c.h.b16 %v1271
        %v1615 = vunpack.c.l.b16 %v1272
        %v1616 = vunpack.c.h.b16 %v1272
        %v1617 = vunpack.c.l.b16 %v1273
        %v1618 = vunpack.c.h.b16 %v1273
        %v1619 = vunpack.c.l.b16 %v1274
        %v1620 = vunpack.c.h.b16 %v1274
        %v1621 = vunpack.c.l.b16 %v1275
        %v1622 = vunpack.c.h.b16 %v1275
        %v1623 = vunpack.c.l.b16 %v1276
        %v1624 = vunpack.c.h.b16 %v1276
        %v1625 = vunpack.c.l.b16 %v1277
        %v1626 = vunpack.c.h.b16 %v1277
        %v1627 = vunpack.c.l.b16 %v1278
        %v1628 = vunpack.c.h.b16 %v1278
        %v1629 = vunpack.c.l.b16 %v1279
        %v1630 = vunpack.c.h.b16 %v1279
        %v1631 = vunpack.c.l.b16 %v1280
        %v1632 = vunpack.c.h.b16 %v1280
        %v1633 = vunpack.c.l.b16 %v1281
        %v1634 = vunpack.c.h.b16 %v1281
        %v1635 = vunpack.c.l.b16 %v1282
        %v1636 = vunpack.c.h.b16 %v1282
        %v1637 = vunpack.c.l.b16 %v1283
        %v1638 = vunpack.c.h.b16 %v1283
        %v1639 = vunpack.c.l.b16 %v1284
        %v1640 = vunpack.c.h.b16 %v1284
        %v1641 = vunpack.c.l.b16 %v1285
        %v1642 = vunpack.c.h.b16 %v1285
        %v1643 = vunpack.c.l.b16 %v1286
        %v1644 = vunpack.c.h.b16 %v1286
        %v1645 = vunpack.c.l.b16 %v1287
        %v1646 = vunpack.c.h.b16 %v1287
        %v1647 = vunpack.c.l.b16 %v1288
        %v1648 = vunpack.c.h.b16 %v1288
        %v1649 = vunpack.c.l.b16 %v1289
        %v1650 = vunpack.c.h.b16 %v1289
        %v1651 = vunpack.c.l.b16 %v1290
        %v1652 = vunpack.c.h.b16 %v1290
        %v1653 = vunpack.c.l.b16 %v1291
        %v1654 = vunpack.c.h.b16 %v1291
        %v1655 = vunpack.c.l.b16 %v1292
        %v1656 = vunpack.c.h.b16 %v1292
        %v1657 = vunpack.c.l.b16 %v1293
        %v1658 = vunpack.c.h.b16 %v1293
        %v1659 = vunpack.c.l.b16 %v1294
        %v1660 = vunpack.c.h.b16 %v1294
        %v1661 = vunpack.c.l.b16 %v1295
        %v1662 = vunpack.c.h.b16 %v1295
        %v1663 = vunpack.c.l.b16 %v1296
        %v1664 = vunpack.c.h.b16 %v1296
        %v1665 = vunpack.c.l.b16 %v1297
        %v1666 = vunpack.c.h.b16 %v1297
        %v1667 = vunpack.c.l.b16 %v1298
        %v1668 = vunpack.c.h.b16 %v1298
        %v1669 = vunpack.c.l.b16 %v1299
        %v1670 = vunpack.c.h.b16 %v1299
        %v1671 = vunpack.c.l.b16 %v1300
        %v1672 = vunpack.c.h.b16 %v1300
        %v1673 = vunpack.c.l.b16 %v1301
        %v1674 = vunpack.c.h.b16 %v1301
        %v1675 = vpack.c.b16 %v1615, %v1611
        %v1676 = vpack.c.b16 %v1616, %v1612
        %v1677 = vpack.c.b16 %v1617, %v1613
        %v1678 = vpack.c.b16 %v1618, %v1614
        %v1679 = vpack.c.b16 %v1623, %v1619
        %v1680 = vpack.c.b16 %v1624, %v1620
        %v1681 = vpack.c.b16 %v1625, %v1621
        %v1682 = vpack.c.b16 %v1626, %v1622
        %v1683 = vpack.c.b16 %v1631, %v1627
        %v1684 = vpack.c.b16 %v1632, %v1628
        %v1685 = vpack.c.b16 %v1633, %v1629
        %v1686 = vpack.c.b16 %v1634, %v1630
        %v1687 = vpack.c.b16 %v1639, %v1635
        %v1688 = vpack.c.b16 %v1640, %v1636
        %v1689 = vpack.c.b16 %v1641, %v1637
        %v1690 = vpack.c.b16 %v1642, %v1638
        %v1691 = vpack.c.b16 %v1647, %v1643
        %v1692 = vpack.c.b16 %v1648, %v1644
        %v1693 = vpack.c.b16 %v1649, %v1645
        %v1694 = vpack.c.b16 %v1650, %v1646
        %v1695 = vpack.c.b16 %v1655, %v1651
        %v1696 = vpack.c.b16 %v1656, %v1652
        %v1697 = vpack.c.b16 %v1657, %v1653
        %v1698 = vpack.c.b16 %v1658, %v1654
        %v1699 = vpack.c.b16 %v1663, %v1659
        %v1700 = vpack.c.b16 %v1664, %v1660
        %v1701 = vpack.c.b16 %v1665, %v1661
        %v1702 = vpack.c.b16 %v1666, %v1662
        %v1703 = vpack.c.b16 %v1671, %v1667
        %v1704 = vpack.c.b16 %v1672, %v1668
        %v1705 = vpack.c.b16 %v1673, %v1669
        %v1706 = vpack.c.b16 %v1674, %v1670
        %1739 = vmatprep.subr.bf16.mxu0 %v1676
        %1740 = vmatpush1.bf16.msra.mxu0 %v1675
        %1741 = vmatprep.subr.bf16.mxu0 %v1680
        %1742 = vmatpush1.bf16.msra.mxu0 %v1679
        %1743 = vmatprep.subr.bf16.mxu0 %v1684
        %1744 = vmatpush1.bf16.msra.mxu0 %v1683
        %1745 = vmatprep.subr.bf16.mxu0 %v1688
        %1746 = vmatpush1.bf16.msra.mxu0 %v1687
        %1747 = vmatprep.subr.bf16.mxu0 %v1692
        %1748 = vmatpush1.bf16.msra.mxu0 %v1691
        %1749 = vmatprep.subr.bf16.mxu0 %v1696
        %1750 = vmatpush1.bf16.msra.mxu0 %v1695
        %1751 = vmatprep.subr.bf16.mxu0 %v1700
        %1752 = vmatpush1.bf16.msra.mxu0 %v1699
        %1753 = vmatprep.subr.bf16.mxu0 %v1704
        %1754 = vmatpush1.bf16.msra.mxu0 %v1703
        %1755 = vmatprep.subr.bf16.mxu0 0
        %1756 = vmatpush1.bf16.msra.mxu0 0
        %1757 = vmatprep.subr.bf16.mxu0 0
        %1758 = vmatpush1.bf16.msra.mxu0 0
        %1759 = vmatprep.subr.bf16.mxu0 0
        %1760 = vmatpush1.bf16.msra.mxu0 0
        %1761 = vmatprep.subr.bf16.mxu0 0
        %1762 = vmatpush1.bf16.msra.mxu0 0
        %1763 = vmatprep.subr.bf16.mxu0 0
        %1764 = vmatpush1.bf16.msra.mxu0 0
        %1765 = vmatprep.subr.bf16.mxu0 0
        %1766 = vmatpush1.bf16.msra.mxu0 0
        %1767 = vmatprep.subr.bf16.mxu0 0
        %1768 = vmatpush1.bf16.msra.mxu0 0
        %1769 = vmatprep.subr.bf16.mxu0 0
        %1770 = vmatpush1.bf16.msra.mxu0 0
        %1771 = vmatprep.mubr.bf16.mxu0 0
        %1772 = vmatmul.mubr.bf16.gmra.mrb[0].mxu0 %v1335
        %v1773 = vpop.f32.mrb[0].mxu0
        %v1774 = vadd.f32 %v1532, %v1773
        %v1775 = vpop.f32.mrb[0].mxu0
        %v1776 = vadd.f32 %v1534, %v1775
        %v1777 = vpop.f32.mrb[0].mxu0
        %v1778 = vpop.f32.mrb[0].mxu0
        %1779 = vdwg.mxu0
        %1780 = vmatprep.subr.bf16.mxu0 %v1678
        %1781 = vmatpush1.bf16.msra.mxu0 %v1677
        %1782 = vmatprep.subr.bf16.mxu0 %v1682
        %1783 = vmatpush1.bf16.msra.mxu0 %v1681
        %1784 = vmatprep.subr.bf16.mxu0 %v1686
        %1785 = vmatpush1.bf16.msra.mxu0 %v1685
        %1786 = vmatprep.subr.bf16.mxu0 %v1690
        %1787 = vmatpush1.bf16.msra.mxu0 %v1689
        %1788 = vmatprep.subr.bf16.mxu0 %v1694
        %1789 = vmatpush1.bf16.msra.mxu0 %v1693
        %1790 = vmatprep.subr.bf16.mxu0 %v1698
        %1791 = vmatpush1.bf16.msra.mxu0 %v1697
        %1792 = vmatprep.subr.bf16.mxu0 %v1702
        %1793 = vmatpush1.bf16.msra.mxu0 %v1701
        %1794 = vmatprep.subr.bf16.mxu0 %v1706
        %1795 = vmatpush1.bf16.msra.mxu0 %v1705
        %1796 = vmatprep.subr.bf16.mxu0 0
        %1797 = vmatpush1.bf16.msra.mxu0 0
        %1798 = vmatprep.subr.bf16.mxu0 0
        %1799 = vmatpush1.bf16.msra.mxu0 0
        %1800 = vmatprep.subr.bf16.mxu0 0
        %1801 = vmatpush1.bf16.msra.mxu0 0
        %1802 = vmatprep.subr.bf16.mxu0 0
        %1803 = vmatpush1.bf16.msra.mxu0 0
        %1804 = vmatprep.subr.bf16.mxu0 0
        %1805 = vmatpush1.bf16.msra.mxu0 0
        %1806 = vmatprep.subr.bf16.mxu0 0
        %1807 = vmatpush1.bf16.msra.mxu0 0
        %1808 = vmatprep.subr.bf16.mxu0 0
        %1809 = vmatpush1.bf16.msra.mxu0 0
        %1810 = vmatprep.subr.bf16.mxu0 0
        %1811 = vmatpush1.bf16.msra.mxu0 0
        %1812 = vmatprep.mubr.bf16.mxu0 0
        %1813 = vmatmul.mubr.bf16.gmra.mrb[0].mxu0 %v1335
        %v1814 = vpop.f32.mrb[0].mxu0
        %v1815 = vadd.f32 %v1573, %v1814
        %v1816 = vpop.f32.mrb[0].mxu0
        %v1817 = vadd.f32 %v1575, %v1816
        %v1818 = vpop.f32.mrb[0].mxu0
        %v1819 = vpop.f32.mrb[0].mxu0
        %1820 = vdwg.mxu0
        %v1822 = vlaneseq
        %v1823 = vshrl.u32 %v1822, 7
        %v1824 = vsub.s32 0, %v1823
        %v1825 = vrot.slane %v1334, %v1824
        %v1826 = vlaneseq
        %v1827 = vshrl.u32 %v1826, 7
        %v1828 = vsub.s32 1, %v1827
        %v1829 = vrot.slane %v1334, %v1828
        %v1830 = vlaneseq
        %v1831 = vshrl.u32 %v1830, 7
        %v1832 = vsub.s32 2, %v1831
        %v1833 = vrot.slane %v1334, %v1832
        %v1834 = vlaneseq
        %v1835 = vshrl.u32 %v1834, 7
        %v1836 = vsub.s32 3, %v1835
        %v1837 = vrot.slane %v1334, %v1836
        %v1842 = vadd.f32 %v1774, %v1825
        %v1843 = vadd.f32 %v1776, %v1829
        %v1844 = vadd.f32 %v1815, %v1833
        %v1845 = vadd.f32 %v1817, %v1837
        %v1846 = vxor.u32 %v1842, 2147483648
        %v1847 = vmul.f32 %v1846, 1.442695
        %v1848 = vpow.pop %v1847
        %v1849 = vadd.f32 %v1848, 1.0
        %v1850 = vrcp.pop %v1849
        %v1851 = vmul.f32 1.0, %v1850
        %v1852 = vxor.u32 %v1843, 2147483648
        %v1853 = vmul.f32 %v1852, 1.442695
        %v1854 = vpow.pop %v1853
        %v1855 = vadd.f32 %v1854, 1.0
        %v1856 = vrcp.pop %v1855
        %v1857 = vmul.f32 1.0, %v1856
        %v1858 = vtanh.pop %v1844
        %v1859 = vxor.u32 %v1845, 2147483648
        %v1860 = vmul.f32 %v1859, 1.442695
        %v1861 = vpow.pop %v1860
        %v1862 = vadd.f32 %v1861, 1.0
        %v1863 = vrcp.pop %v1862
        %v1864 = vmul.f32 1.0, %v1863
        %v1865 = vmul.f32 %v1857, %v1269
        %v1866 = vmul.f32 %v1851, %v1858
        %v1867 = vadd.f32 %v1865, %v1866
        %v1868 = vtanh.pop %v1867
        %v1869 = vmul.f32 %v1864, %v1868
        %1870 = vst [vmem:[#allocation4] sm:$0xff] %v1869
        %1871 = vst [vmem:[#allocation5] sm:$0xff] %v1867
        %vm1872 = vcmask 7168
        %1873 = vst.msk [vmem:[#allocation6] sm:$0xff] %vm1872, -inf
      $region80: #{seq2seq_forward.3} parent=75 // pred_fallthru
        _
      %v1874 = vld [vmem:[#allocation4] sm:$0xff]
      %v1875 = vpack.c.bf16 %v1874, %v1874
      %v1876 = vld [vmem:[%s510] sm:$0xf]
      %v1877 = vld [vmem:[%s510 + $0x4] sm:$0xf]
      %v1878 = vld [vmem:[%s510 + $0x8] sm:$0xf]
      %v1879 = vld [vmem:[%s510 + $0xc] sm:$0xf]
      %v1880 = vld [vmem:[%s510 + $0x10] sm:$0xf]
      %v1881 = vld [vmem:[%s510 + $0x14] sm:$0xf]
      %v1882 = vld [vmem:[%s510 + $0x18] sm:$0xf]
      %v1883 = vld [vmem:[%s510 + $0x1c] sm:$0xf]
      %v1884 = vld [vmem:[%s510 + $0x20] sm:$0xf]
      %v1885 = vld [vmem:[%s510 + $0x24] sm:$0xf]
      %v1886 = vld [vmem:[%s510 + $0x28] sm:$0xf]
      %v1887 = vld [vmem:[%s510 + $0x2c] sm:$0xf]
      %v1888 = vld [vmem:[%s510 + $0x30] sm:$0xf]
      %v1889 = vld [vmem:[%s510 + $0x34] sm:$0xf]
      %v1890 = vld [vmem:[%s510 + $0x38] sm:$0xf]
      %v1891 = vld [vmem:[%s510 + $0x3c] sm:$0xf]
      %v1892 = vld [vmem:[%s513] sm:$0x1]
      %v1894 = vlaneseq
      %v1895 = vshrl.u32 %v1894, 7
      %v1896 = vsub.s32 0, %v1895
      %v1897 = vrot.slane %v1892, %v1896
      %v1915 = vunpack.c.l.b16 %v1876
      %v1916 = vunpack.c.l.b16 %v1877
      %v1917 = vunpack.c.l.b16 %v1878
      %v1918 = vunpack.c.l.b16 %v1879
      %v1919 = vunpack.c.l.b16 %v1880
      %v1920 = vunpack.c.l.b16 %v1881
      %v1921 = vunpack.c.l.b16 %v1882
      %v1922 = vunpack.c.l.b16 %v1883
      %v1923 = vunpack.c.l.b16 %v1884
      %v1924 = vunpack.c.l.b16 %v1885
      %v1925 = vunpack.c.l.b16 %v1886
      %v1926 = vunpack.c.l.b16 %v1887
      %v1927 = vunpack.c.l.b16 %v1888
      %v1928 = vunpack.c.l.b16 %v1889
      %v1929 = vunpack.c.l.b16 %v1890
      %v1930 = vunpack.c.l.b16 %v1891
      %v1931 = vpack.c.b16 %v1916, %v1915
      %v1932 = vpack.c.b16 %v1918, %v1917
      %v1933 = vpack.c.b16 %v1920, %v1919
      %v1934 = vpack.c.b16 %v1922, %v1921
      %v1935 = vpack.c.b16 %v1924, %v1923
      %v1936 = vpack.c.b16 %v1926, %v1925
      %v1937 = vpack.c.b16 %v1928, %v1927
      %v1938 = vpack.c.b16 %v1930, %v1929
      %1947 = vmatprep.subr.bf16.mxu0 0
      %1948 = vmatpush1.bf16.msra.mxu0 %v1931
      %1949 = vmatprep.subr.bf16.mxu0 0
      %1950 = vmatpush1.bf16.msra.mxu0 %v1932
      %1951 = vmatprep.subr.bf16.mxu0 0
      %1952 = vmatpush1.bf16.msra.mxu0 %v1933
      %1953 = vmatprep.subr.bf16.mxu0 0
      %1954 = vmatpush1.bf16.msra.mxu0 %v1934
      %1955 = vmatprep.subr.bf16.mxu0 0
      %1956 = vmatpush1.bf16.msra.mxu0 %v1935
      %1957 = vmatprep.subr.bf16.mxu0 0
      %1958 = vmatpush1.bf16.msra.mxu0 %v1936
      %1959 = vmatprep.subr.bf16.mxu0 0
      %1960 = vmatpush1.bf16.msra.mxu0 %v1937
      %1961 = vmatprep.subr.bf16.mxu0 0
      %1962 = vmatpush1.bf16.msra.mxu0 %v1938
      %1963 = vmatprep.subr.bf16.mxu0 0
      %1964 = vmatpush1.bf16.msra.mxu0 0
      %1965 = vmatprep.subr.bf16.mxu0 0
      %1966 = vmatpush1.bf16.msra.mxu0 0
      %1967 = vmatprep.subr.bf16.mxu0 0
      %1968 = vmatpush1.bf16.msra.mxu0 0
      %1969 = vmatprep.subr.bf16.mxu0 0
      %1970 = vmatpush1.bf16.msra.mxu0 0
      %1971 = vmatprep.subr.bf16.mxu0 0
      %1972 = vmatpush1.bf16.msra.mxu0 0
      %1973 = vmatprep.subr.bf16.mxu0 0
      %1974 = vmatpush1.bf16.msra.mxu0 0
      %1975 = vmatprep.subr.bf16.mxu0 0
      %1976 = vmatpush1.bf16.msra.mxu0 0
      %1977 = vmatprep.subr.bf16.mxu0 0
      %1978 = vmatpush1.bf16.msra.mxu0 0
      %1979 = vmatprep.mubr.bf16.mxu0 0
      %1980 = vmatmul.mubr.bf16.gmra.mrb[0].mxu0 %v1875
      %v1981 = vpop.f32.mrb[0].mxu0
      %v1982 = vadd.f32 %v1897, %v1981
      %v1983 = vpop.f32.mrb[0].mxu0
      %v1984 = vpop.f32.mrb[0].mxu0
      %v1985 = vpop.f32.mrb[0].mxu0
      %1986 = vdwg.mxu0
      %1987 = vst [vmem:[%s520] sm:$0xff] %v1982
      %s1988 = smul.u32 %s37, 128
      %v1989 = vlaneseq
      %v1990 = vand.u32 %v1989, 127
      %v1991 = vstv %s1988
      %v1992 = vadd.s32 %v1991, %v1990
      %vm1993 = vcmp.lt.s32.totalorder %v1992, 40
      %v1994 = vsel %vm1993, %v1982, -inf
      %1995 = vmax.xlane.f32.xlu0 %v1994
      %v1996 = vpop.xlane.xlu0 %1995
      %vm1997 = vcmp.eq.f32.partialorder %v1994, %v1996
      %v1998 = vcvt.s32.f32 %v1992
      %v1999 = vsel %vm1997, %v1998, 1e+09
      %2000 = vmin.xlane.f32.xlu0 %v1999
      %v2001 = vpop.xlane.xlu0 %2000
      %v2002 = vld [vmem:[#allocation6] sm:$0xff]
      %vm2003 = vcmp.gt.f32.partialorder %v1996, %v2002
      %v2004 = vld [vmem:[#allocation7] sm:$0xff]
      %v2005 = vsel %vm2003, %v2001, %v2004
      %vm2006 = vcmask 7168
      %2007 = vst.msk [vmem:[#allocation7] sm:$0xff] %vm2006, %v2005
      %v2008 = vld [vmem:[#allocation6] sm:$0xff]
      %v2009 = vmax.f32 %v1996, %v2008
      %2010 = vst.msk [vmem:[#allocation6] sm:$0xff] %vm2006, %v2009
      %p2011 = scmp.lt.s32.totalorder %s36, 6
      %s2012 = scalar_select %p2011, %s36, 6
      %p2013 = scmp.lt.s32.totalorder %s37, 0
      %s2014 = scalar_select %p2013, %s37, 0
      %s2015 = sadd.s32 %s2014, %s2012
      %s2016 = smul.addr %s2015, 8
      %s2017 = scalar_lea.vmem %s15, %s2016
      // Predicated region
      $region85: #{seq2seq_forward.3} parent=75 // pred_check
        %p2018 = pneg %p373
      $region86: #{seq2seq_forward.3} parent=75 // pred_check_branch
        %2020 = sbr.rel (%p2018) target = $region88
      $region87: #{seq2seq_forward.3} parent=75 // pred_region
        _
      $region88: #{seq2seq_forward.3} parent=75 // pred_fallthru
        _
    $region76: #{seq2seq_forward.3} parent=5 // pred_fallthru
      _
    %p2021 = scmp.le.s32.totalorder 2, %s27
    // Predicated region
    $region89: #{seq2seq_forward.3} parent=5 // pred_check
      %p2022 = pneg %p2021
    $region90: #{seq2seq_forward.3} parent=5 // pred_check_branch
      %2024 = sbr.rel (%p2022) target = $region92
    $region91: #{seq2seq_forward.3} parent=5 // pred_region
      %s2025 = ssub.s32 %s27, 2
      // Predicated region
      $region93: #{seq2seq_forward.3} parent=91 // pred_check
        %p2026 = pneg %p379
      $region94: #{seq2seq_forward.3} parent=91 // pred_check_branch
        %2028 = sbr.rel (%p2026) target = $region96
      $region95: #{seq2seq_forward.3} parent=91 // pred_region
        %p2029 = scmp.lt.s32.totalorder %s38, 6
        %s2030 = scalar_select %p2029, %s38, 6
        %p2031 = scmp.lt.s32.totalorder %s39, 0
        %s2032 = scalar_select %p2031, %s39, 0
        %s2033 = sadd.s32 %s2032, %s2030
        %s2034 = smul.addr %s2033, 8
        %s2035 = scalar_lea.vmem %s15, %s2034
      $region96: #{seq2seq_forward.3} parent=91 // pred_fallthru
        _
    $region92: #{seq2seq_forward.3} parent=5 // pred_fallthru
      _
  $region6: #{seq2seq_forward.3} parent=0 // loop_footer
    %s31 = sadd.s32 1, %s27
  $region7: #{seq2seq_forward.3} parent=0 // loop_footer_branch
    %26 = sbr.rel target = $region3
  $region8: #{seq2seq_forward.3} parent=0 // loop_exit
    _

// kernel: seq2seq_forward.2
$region0: #{seq2seq_forward.2}
  #allocation0 [shape = 'u32[]', space=smem, size = 0x4, offset = 0x4, fixed_abs, tag = 'smem constant byte address 0x4 - core index']
  #allocation1 [shape = 'u32[144,128]{1,0:T(1,128)}', space=vmem, size = 0x12000, scoped, tag = 'internal scratch']
  %s0 = inlined_call_operand.vmem [shape: f32[8,8,512], index: 0, kind: input, shape index: {}]
  %s1 = inlined_call_operand.vmem [shape: bf16[128,512], index: 1, kind: input, shape index: {}]
  %s2 = inlined_call_operand.vmem [shape: bf16[128,512], index: 2, kind: input, shape index: {}]
  %s3 = inlined_call_operand.vmem [shape: bf16[128,512], index: 3, kind: input, shape index: {}]
  %s4 = inlined_call_operand.vmem [shape: f32[1,512], index: 4, kind: input, shape index: {}]
  %s5 = inlined_call_operand.vmem [shape: f32[8,128], index: 5, kind: output, shape index: {0}]
  %s6 = inlined_call_operand.vmem [shape: f32[8,128], index: 6, kind: output, shape index: {1}]
  %s7 = inlined_call_operand.vmem [shape: f32[8,128], index: 7, kind: output, shape index: {2}]
  %s8 = inlined_call_operand.vmem [shape: f32[8,128], index: 8, kind: output, shape index: {3}]
  %9 = xla_tuple %s5, %s6, %s7, %s8
  %s10 = sld [smem:[#allocation0]]
  $region58: #{seq2seq_forward.2} parent=0
    _
  %s12 = ssub.s32 1, %s10
  %s13 = scalar_select 0, %s12, %s10
  // Predicated region
  $region2: #{seq2seq_forward.2} parent=0 // pred_check
    _
  $region3: #{seq2seq_forward.2} parent=0 // pred_check_branch
    %15 = sbr.rel (0) target = $region5
  $region4: #{seq2seq_forward.2} parent=0 // pred_region
    _
  $region5: #{seq2seq_forward.2} parent=0 // pred_fallthru
    _
  // Predicated region
  $region6: #{seq2seq_forward.2} parent=0 // pred_check
    _
  $region7: #{seq2seq_forward.2} parent=0 // pred_check_branch
    %17 = sbr.rel (0) target = $region9
  $region8: #{seq2seq_forward.2} parent=0 // pred_region
    _
  $region9: #{seq2seq_forward.2} parent=0 // pred_fallthru
    _
  // Predicated region
  $region10: #{seq2seq_forward.2} parent=0 // pred_check
    _
  $region11: #{seq2seq_forward.2} parent=0 // pred_check_branch
    %19 = sbr.rel (0) target = $region13
  $region12: #{seq2seq_forward.2} parent=0 // pred_region
    _
  $region13: #{seq2seq_forward.2} parent=0 // pred_fallthru
    _
  // Predicated region
  $region14: #{seq2seq_forward.2} parent=0 // pred_check
    _
  $region15: #{seq2seq_forward.2} parent=0 // pred_check_branch
    %21 = sbr.rel (0) target = $region17
  $region16: #{seq2seq_forward.2} parent=0 // pred_region
    _
  $region17: #{seq2seq_forward.2} parent=0 // pred_fallthru
    _
  // Predicated region
  $region18: #{seq2seq_forward.2} parent=0 // pred_check
    _
  $region19: #{seq2seq_forward.2} parent=0 // pred_check_branch
    %23 = sbr.rel (0) target = $region21
  $region20: #{seq2seq_forward.2} parent=0 // pred_region
    _
  $region21: #{seq2seq_forward.2} parent=0 // pred_fallthru
    _
  %p25 = scmp.eq.s32.totalorder 0, 0
  // Predicated region
  $region22: #{seq2seq_forward.2} parent=0 // pred_check
    %p26 = pneg %p25
  $region23: #{seq2seq_forward.2} parent=0 // pred_check_branch
    %28 = sbr.rel (%p26) target = $region25
  $region24: #{seq2seq_forward.2} parent=0 // pred_region
    %29 = vst [vmem:[%s5] sm:$0xff] 0.0
    %30 = vst [vmem:[%s6] sm:$0xff] 0.0
    %31 = vst [vmem:[%s7] sm:$0xff] 0.0
    %32 = vst [vmem:[%s8] sm:$0xff] 0.0
  $region25: #{seq2seq_forward.2} parent=0 // pred_fallthru
    _
  %v33 = vld [vmem:[%s1] sm:$0xff]
  %v34 = vld [vmem:[%s1 + $0x8] sm:$0xff]
  %v35 = vld [vmem:[%s1 + $0x10] sm:$0xff]
  %v36 = vld [vmem:[%s1 + $0x18] sm:$0xff]
  %v37 = vld [vmem:[%s1 + $0x20] sm:$0xff]
  %v38 = vld [vmem:[%s1 + $0x28] sm:$0xff]
  %v39 = vld [vmem:[%s1 + $0x30] sm:$0xff]
  %v40 = vld [vmem:[%s1 + $0x38] sm:$0xff]
  %v41 = vld [vmem:[%s1 + $0x40] sm:$0xff]
  %v42 = vld [vmem:[%s1 + $0x48] sm:$0xff]
  %v43 = vld [vmem:[%s1 + $0x50] sm:$0xff]
  %v44 = vld [vmem:[%s1 + $0x58] sm:$0xff]
  %v45 = vld [vmem:[%s1 + $0x60] sm:$0xff]
  %v46 = vld [vmem:[%s1 + $0x68] sm:$0xff]
  %v47 = vld [vmem:[%s1 + $0x70] sm:$0xff]
  %v48 = vld [vmem:[%s1 + $0x78] sm:$0xff]
  %v49 = vld [vmem:[%s1 + $0x80] sm:$0xff]
  %v50 = vld [vmem:[%s1 + $0x88] sm:$0xff]
  %v51 = vld [vmem:[%s1 + $0x90] sm:$0xff]
  %v52 = vld [vmem:[%s1 + $0x98] sm:$0xff]
  %v53 = vld [vmem:[%s1 + $0xa0] sm:$0xff]
  %v54 = vld [vmem:[%s1 + $0xa8] sm:$0xff]
  %v55 = vld [vmem:[%s1 + $0xb0] sm:$0xff]
  %v56 = vld [vmem:[%s1 + $0xb8] sm:$0xff]
  %v57 = vld [vmem:[%s1 + $0xc0] sm:$0xff]
  %v58 = vld [vmem:[%s1 + $0xc8] sm:$0xff]
  %v59 = vld [vmem:[%s1 + $0xd0] sm:$0xff]
  %v60 = vld [vmem:[%s1 + $0xd8] sm:$0xff]
  %v61 = vld [vmem:[%s1 + $0xe0] sm:$0xff]
  %v62 = vld [vmem:[%s1 + $0xe8] sm:$0xff]
  %v63 = vld [vmem:[%s1 + $0xf0] sm:$0xff]
  %v64 = vld [vmem:[%s1 + $0xf8] sm:$0xff]
  %v65 = vld [vmem:[%s2] sm:$0xff]
  %v66 = vld [vmem:[%s2 + $0x8] sm:$0xff]
  %v67 = vld [vmem:[%s2 + $0x10] sm:$0xff]
  %v68 = vld [vmem:[%s2 + $0x18] sm:$0xff]
  %v69 = vld [vmem:[%s2 + $0x20] sm:$0xff]
  %v70 = vld [vmem:[%s2 + $0x28] sm:$0xff]
  %v71 = vld [vmem:[%s2 + $0x30] sm:$0xff]
  %v72 = vld [vmem:[%s2 + $0x38] sm:$0xff]
  %v73 = vld [vmem:[%s2 + $0x40] sm:$0xff]
  %v74 = vld [vmem:[%s2 + $0x48] sm:$0xff]
  %v75 = vld [vmem:[%s2 + $0x50] sm:$0xff]
  %v76 = vld [vmem:[%s2 + $0x58] sm:$0xff]
  %v77 = vld [vmem:[%s2 + $0x60] sm:$0xff]
  %v78 = vld [vmem:[%s2 + $0x68] sm:$0xff]
  %v79 = vld [vmem:[%s2 + $0x70] sm:$0xff]
  %v80 = vld [vmem:[%s2 + $0x78] sm:$0xff]
  %v81 = vld [vmem:[%s2 + $0x80] sm:$0xff]
  %v82 = vld [vmem:[%s2 + $0x88] sm:$0xff]
  %v83 = vld [vmem:[%s2 + $0x90] sm:$0xff]
  %v84 = vld [vmem:[%s2 + $0x98] sm:$0xff]
  %v85 = vld [vmem:[%s2 + $0xa0] sm:$0xff]
  %v86 = vld [vmem:[%s2 + $0xa8] sm:$0xff]
  %v87 = vld [vmem:[%s2 + $0xb0] sm:$0xff]
  %v88 = vld [vmem:[%s2 + $0xb8] sm:$0xff]
  %v89 = vld [vmem:[%s2 + $0xc0] sm:$0xff]
  %v90 = vld [vmem:[%s2 + $0xc8] sm:$0xff]
  %v91 = vld [vmem:[%s2 + $0xd0] sm:$0xff]
  %v92 = vld [vmem:[%s2 + $0xd8] sm:$0xff]
  %v93 = vld [vmem:[%s2 + $0xe0] sm:$0xff]
  %v94 = vld [vmem:[%s2 + $0xe8] sm:$0xff]
  %v95 = vld [vmem:[%s2 + $0xf0] sm:$0xff]
  %v96 = vld [vmem:[%s2 + $0xf8] sm:$0xff]
  %v97 = vld [vmem:[%s3] sm:$0xff]
  %v98 = vld [vmem:[%s3 + $0x8] sm:$0xff]
  %v99 = vld [vmem:[%s3 + $0x10] sm:$0xff]
  %v100 = vld [vmem:[%s3 + $0x18] sm:$0xff]
  %v101 = vld [vmem:[%s3 + $0x20] sm:$0xff]
  %v102 = vld [vmem:[%s3 + $0x28] sm:$0xff]
  %v103 = vld [vmem:[%s3 + $0x30] sm:$0xff]
  %v104 = vld [vmem:[%s3 + $0x38] sm:$0xff]
  %v105 = vld [vmem:[%s3 + $0x40] sm:$0xff]
  %v106 = vld [vmem:[%s3 + $0x48] sm:$0xff]
  %v107 = vld [vmem:[%s3 + $0x50] sm:$0xff]
  %v108 = vld [vmem:[%s3 + $0x58] sm:$0xff]
  %v109 = vld [vmem:[%s3 + $0x60] sm:$0xff]
  %v110 = vld [vmem:[%s3 + $0x68] sm:$0xff]
  %v111 = vld [vmem:[%s3 + $0x70] sm:$0xff]
  %v112 = vld [vmem:[%s3 + $0x78] sm:$0xff]
  %v113 = vld [vmem:[%s3 + $0x80] sm:$0xff]
  %v114 = vld [vmem:[%s3 + $0x88] sm:$0xff]
  %v115 = vld [vmem:[%s3 + $0x90] sm:$0xff]
  %v116 = vld [vmem:[%s3 + $0x98] sm:$0xff]
  %v117 = vld [vmem:[%s3 + $0xa0] sm:$0xff]
  %v118 = vld [vmem:[%s3 + $0xa8] sm:$0xff]
  %v119 = vld [vmem:[%s3 + $0xb0] sm:$0xff]
  %v120 = vld [vmem:[%s3 + $0xb8] sm:$0xff]
  %v121 = vld [vmem:[%s3 + $0xc0] sm:$0xff]
  %v122 = vld [vmem:[%s3 + $0xc8] sm:$0xff]
  %v123 = vld [vmem:[%s3 + $0xd0] sm:$0xff]
  %v124 = vld [vmem:[%s3 + $0xd8] sm:$0xff]
  %v125 = vld [vmem:[%s3 + $0xe0] sm:$0xff]
  %v126 = vld [vmem:[%s3 + $0xe8] sm:$0xff]
  %v127 = vld [vmem:[%s3 + $0xf0] sm:$0xff]
  %v128 = vld [vmem:[%s3 + $0xf8] sm:$0xff]
  %v129 = vld [vmem:[%s4] sm:$0xf]
  %v130 = vld [vmem:[%s5] sm:$0xff]
  %v131 = vld [vmem:[%s6] sm:$0xff]
  %v132 = vld [vmem:[%s7] sm:$0xff]
  %v133 = vld [vmem:[%s8] sm:$0xff]
  %v134 = vld [vmem:[%s0] sm:$0xff]
  %v135 = vld [vmem:[%s0 + $0x8] sm:$0xff]
  %v136 = vld [vmem:[%s0 + $0x10] sm:$0xff]
  %v137 = vld [vmem:[%s0 + $0x18] sm:$0xff]
  %v138 = vpack.c.bf16 %v130, %v130
  %v171 = vunpack.c.l.b16 %v33
  %v172 = vunpack.c.h.b16 %v33
  %v173 = vunpack.c.l.b16 %v34
  %v174 = vunpack.c.h.b16 %v34
  %v175 = vunpack.c.l.b16 %v35
  %v176 = vunpack.c.h.b16 %v35
  %v177 = vunpack.c.l.b16 %v36
  %v178 = vunpack.c.h.b16 %v36
  %v179 = vunpack.c.l.b16 %v37
  %v180 = vunpack.c.h.b16 %v37
  %v181 = vunpack.c.l.b16 %v38
  %v182 = vunpack.c.h.b16 %v38
  %v183 = vunpack.c.l.b16 %v39
  %v184 = vunpack.c.h.b16 %v39
  %v185 = vunpack.c.l.b16 %v40
  %v186 = vunpack.c.h.b16 %v40
  %v187 = vunpack.c.l.b16 %v41
  %v188 = vunpack.c.h.b16 %v41
  %v189 = vunpack.c.l.b16 %v42
  %v190 = vunpack.c.h.b16 %v42
  %v191 = vunpack.c.l.b16 %v43
  %v192 = vunpack.c.h.b16 %v43
  %v193 = vunpack.c.l.b16 %v44
  %v194 = vunpack.c.h.b16 %v44
  %v195 = vunpack.c.l.b16 %v45
  %v196 = vunpack.c.h.b16 %v45
  %v197 = vunpack.c.l.b16 %v46
  %v198 = vunpack.c.h.b16 %v46
  %v199 = vunpack.c.l.b16 %v47
  %v200 = vunpack.c.h.b16 %v47
  %v201 = vunpack.c.l.b16 %v48
  %v202 = vunpack.c.h.b16 %v48
  %v203 = vunpack.c.l.b16 %v49
  %v204 = vunpack.c.h.b16 %v49
  %v205 = vunpack.c.l.b16 %v50
  %v206 = vunpack.c.h.b16 %v50
  %v207 = vunpack.c.l.b16 %v51
  %v208 = vunpack.c.h.b16 %v51
  %v209 = vunpack.c.l.b16 %v52
  %v210 = vunpack.c.h.b16 %v52
  %v211 = vunpack.c.l.b16 %v53
  %v212 = vunpack.c.h.b16 %v53
  %v213 = vunpack.c.l.b16 %v54
  %v214 = vunpack.c.h.b16 %v54
  %v215 = vunpack.c.l.b16 %v55
  %v216 = vunpack.c.h.b16 %v55
  %v217 = vunpack.c.l.b16 %v56
  %v218 = vunpack.c.h.b16 %v56
  %v219 = vunpack.c.l.b16 %v57
  %v220 = vunpack.c.h.b16 %v57
  %v221 = vunpack.c.l.b16 %v58
  %v222 = vunpack.c.h.b16 %v58
  %v223 = vunpack.c.l.b16 %v59
  %v224 = vunpack.c.h.b16 %v59
  %v225 = vunpack.c.l.b16 %v60
  %v226 = vunpack.c.h.b16 %v60
  %v227 = vunpack.c.l.b16 %v61
  %v228 = vunpack.c.h.b16 %v61
  %v229 = vunpack.c.l.b16 %v62
  %v230 = vunpack.c.h.b16 %v62
  %v231 = vunpack.c.l.b16 %v63
  %v232 = vunpack.c.h.b16 %v63
  %v233 = vunpack.c.l.b16 %v64
  %v234 = vunpack.c.h.b16 %v64
  %v235 = vpack.c.b16 %v175, %v171
  %v236 = vpack.c.b16 %v176, %v172
  %v237 = vpack.c.b16 %v177, %v173
  %v238 = vpack.c.b16 %v178, %v174
  %v239 = vpack.c.b16 %v183, %v179
  %v240 = vpack.c.b16 %v184, %v180
  %v241 = vpack.c.b16 %v185, %v181
  %v242 = vpack.c.b16 %v186, %v182
  %v243 = vpack.c.b16 %v191, %v187
  %v244 = vpack.c.b16 %v192, %v188
  %v245 = vpack.c.b16 %v193, %v189
  %v246 = vpack.c.b16 %v194, %v190
  %v247 = vpack.c.b16 %v199, %v195
  %v248 = vpack.c.b16 %v200, %v196
  %v249 = vpack.c.b16 %v201, %v197
  %v250 = vpack.c.b16 %v202, %v198
  %v251 = vpack.c.b16 %v207, %v203
  %v252 = vpack.c.b16 %v208, %v204
  %v253 = vpack.c.b16 %v209, %v205
  %v254 = vpack.c.b16 %v210, %v206
  %v255 = vpack.c.b16 %v215, %v211
  %v256 = vpack.c.b16 %v216, %v212
  %v257 = vpack.c.b16 %v217, %v213
  %v258 = vpack.c.b16 %v218, %v214
  %v259 = vpack.c.b16 %v223, %v219
  %v260 = vpack.c.b16 %v224, %v220
  %v261 = vpack.c.b16 %v225, %v221
  %v262 = vpack.c.b16 %v226, %v222
  %v263 = vpack.c.b16 %v231, %v227
  %v264 = vpack.c.b16 %v232, %v228
  %v265 = vpack.c.b16 %v233, %v229
  %v266 = vpack.c.b16 %v234, %v230
  %299 = vmatprep.subr.bf16.mxu0 %v236
  %300 = vmatpush1.bf16.msra.mxu0 %v235
  %301 = vmatprep.subr.bf16.mxu0 %v240
  %302 = vmatpush1.bf16.msra.mxu0 %v239
  %303 = vmatprep.subr.bf16.mxu0 %v244
  %304 = vmatpush1.bf16.msra.mxu0 %v243
  %305 = vmatprep.subr.bf16.mxu0 %v248
  %306 = vmatpush1.bf16.msra.mxu0 %v247
  %307 = vmatprep.subr.bf16.mxu0 %v252
  %308 = vmatpush1.bf16.msra.mxu0 %v251
  %309 = vmatprep.subr.bf16.mxu0 %v256
  %310 = vmatpush1.bf16.msra.mxu0 %v255
  %311 = vmatprep.subr.bf16.mxu0 %v260
  %312 = vmatpush1.bf16.msra.mxu0 %v259
  %313 = vmatprep.subr.bf16.mxu0 %v264
  %314 = vmatpush1.bf16.msra.mxu0 %v263
  %315 = vmatprep.subr.bf16.mxu0 0
  %316 = vmatpush1.bf16.msra.mxu0 0
  %317 = vmatprep.subr.bf16.mxu0 0
  %318 = vmatpush1.bf16.msra.mxu0 0
  %319 = vmatprep.subr.bf16.mxu0 0
  %320 = vmatpush1.bf16.msra.mxu0 0
  %321 = vmatprep.subr.bf16.mxu0 0
  %322 = vmatpush1.bf16.msra.mxu0 0
  %323 = vmatprep.subr.bf16.mxu0 0
  %324 = vmatpush1.bf16.msra.mxu0 0
  %325 = vmatprep.subr.bf16.mxu0 0
  %326 = vmatpush1.bf16.msra.mxu0 0
  %327 = vmatprep.subr.bf16.mxu0 0
  %328 = vmatpush1.bf16.msra.mxu0 0
  %329 = vmatprep.subr.bf16.mxu0 0
  %330 = vmatpush1.bf16.msra.mxu0 0
  %331 = vmatprep.mubr.bf16.mxu0 0
  %332 = vmatmul.mubr.bf16.gmra.mrb[0].mxu0 %v138
  %v333 = vpop.f32.mrb[0].mxu0
  %v334 = vadd.f32 0.0, %v333
  %v335 = vpop.f32.mrb[0].mxu0
  %v336 = vadd.f32 0.0, %v335
  %v337 = vpop.f32.mrb[0].mxu0
  %v338 = vpop.f32.mrb[0].mxu0
  %339 = vdwg.mxu0
  %340 = vmatprep.subr.bf16.mxu0 %v238
  %341 = vmatpush1.bf16.msra.mxu0 %v237
  %342 = vmatprep.subr.bf16.mxu0 %v242
  %343 = vmatpush1.bf16.msra.mxu0 %v241
  %344 = vmatprep.subr.bf16.mxu0 %v246
  %345 = vmatpush1.bf16.msra.mxu0 %v245
  %346 = vmatprep.subr.bf16.mxu0 %v250
  %347 = vmatpush1.bf16.msra.mxu0 %v249
  %348 = vmatprep.subr.bf16.mxu0 %v254
  %349 = vmatpush1.bf16.msra.mxu0 %v253
  %350 = vmatprep.subr.bf16.mxu0 %v258
  %351 = vmatpush1.bf16.msra.mxu0 %v257
  %352 = vmatprep.subr.bf16.mxu0 %v262
  %353 = vmatpush1.bf16.msra.mxu0 %v261
  %354 = vmatprep.subr.bf16.mxu0 %v266
  %355 = vmatpush1.bf16.msra.mxu0 %v265
  %356 = vmatprep.subr.bf16.mxu0 0
  %357 = vmatpush1.bf16.msra.mxu0 0
  %358 = vmatprep.subr.bf16.mxu0 0
  %359 = vmatpush1.bf16.msra.mxu0 0
  %360 = vmatprep.subr.bf16.mxu0 0
  %361 = vmatpush1.bf16.msra.mxu0 0
  %362 = vmatprep.subr.bf16.mxu0 0
  %363 = vmatpush1.bf16.msra.mxu0 0
  %364 = vmatprep.subr.bf16.mxu0 0
  %365 = vmatpush1.bf16.msra.mxu0 0
  %366 = vmatprep.subr.bf16.mxu0 0
  %367 = vmatpush1.bf16.msra.mxu0 0
  %368 = vmatprep.subr.bf16.mxu0 0
  %369 = vmatpush1.bf16.msra.mxu0 0
  %370 = vmatprep.subr.bf16.mxu0 0
  %371 = vmatpush1.bf16.msra.mxu0 0
  %372 = vmatprep.mubr.bf16.mxu0 0
  %373 = vmatmul.mubr.bf16.gmra.mrb[0].mxu0 %v138
  %v374 = vpop.f32.mrb[0].mxu0
  %v375 = vadd.f32 0.0, %v374
  %v376 = vpop.f32.mrb[0].mxu0
  %v377 = vadd.f32 0.0, %v376
  %v378 = vpop.f32.mrb[0].mxu0
  %v379 = vpop.f32.mrb[0].mxu0
  %380 = vdwg.mxu0
  %v381 = vadd.f32 %v134, %v334
  %v382 = vadd.f32 %v135, %v336
  %v383 = vadd.f32 %v136, %v375
  %v384 = vadd.f32 %v137, %v377
  %v385 = vxor.u32 %v381, 2147483648
  %v386 = vmul.f32 %v385, 1.442695
  %v387 = vpow.pop %v386
  %v388 = vadd.f32 %v387, 1.0
  %v389 = vrcp.pop %v388
  %v390 = vmul.f32 1.0, %v389
  %v391 = vxor.u32 %v382, 2147483648
  %v392 = vmul.f32 %v391, 1.442695
  %v393 = vpow.pop %v392
  %v394 = vadd.f32 %v393, 1.0
  %v395 = vrcp.pop %v394
  %v396 = vmul.f32 1.0, %v395
  %v397 = vtanh.pop %v383
  %v398 = vxor.u32 %v384, 2147483648
  %v399 = vmul.f32 %v398, 1.442695
  %v400 = vpow.pop %v399
  %v401 = vadd.f32 %v400, 1.0
  %v402 = vrcp.pop %v401
  %v403 = vmul.f32 1.0, %v402
  %v404 = vmul.f32 %v396, %v131
  %v405 = vmul.f32 %v390, %v397
  %v406 = vadd.f32 %v404, %v405
  %v407 = vtanh.pop %v406
  %v408 = vmul.f32 %v403, %v407
  %v409 = vpack.c.bf16 %v408, %v408
  %v410 = vpack.c.bf16 %v132, %v132
  %v443 = vunpack.c.l.b16 %v97
  %v444 = vunpack.c.h.b16 %v97
  %v445 = vunpack.c.l.b16 %v98
  %v446 = vunpack.c.h.b16 %v98
  %v447 = vunpack.c.l.b16 %v99
  %v448 = vunpack.c.h.b16 %v99
  %v449 = vunpack.c.l.b16 %v100
  %v450 = vunpack.c.h.b16 %v100
  %v451 = vunpack.c.l.b16 %v101
  %v452 = vunpack.c.h.b16 %v101
  %v453 = vunpack.c.l.b16 %v102
  %v454 = vunpack.c.h.b16 %v102
  %v455 = vunpack.c.l.b16 %v103
  %v456 = vunpack.c.h.b16 %v103
  %v457 = vunpack.c.l.b16 %v104
  %v458 = vunpack.c.h.b16 %v104
  %v459 = vunpack.c.l.b16 %v105
  %v460 = vunpack.c.h.b16 %v105
  %v461 = vunpack.c.l.b16 %v106
  %v462 = vunpack.c.h.b16 %v106
  %v463 = vunpack.c.l.b16 %v107
  %v464 = vunpack.c.h.b16 %v107
  %v465 = vunpack.c.l.b16 %v108
  %v466 = vunpack.c.h.b16 %v108
  %v467 = vunpack.c.l.b16 %v109
  %v468 = vunpack.c.h.b16 %v109
  %v469 = vunpack.c.l.b16 %v110
  %v470 = vunpack.c.h.b16 %v110
  %v471 = vunpack.c.l.b16 %v111
  %v472 = vunpack.c.h.b16 %v111
  %v473 = vunpack.c.l.b16 %v112
  %v474 = vunpack.c.h.b16 %v112
  %v475 = vunpack.c.l.b16 %v113
  %v476 = vunpack.c.h.b16 %v113
  %v477 = vunpack.c.l.b16 %v114
  %v478 = vunpack.c.h.b16 %v114
  %v479 = vunpack.c.l.b16 %v115
  %v480 = vunpack.c.h.b16 %v115
  %v481 = vunpack.c.l.b16 %v116
  %v482 = vunpack.c.h.b16 %v116
  %v483 = vunpack.c.l.b16 %v117
  %v484 = vunpack.c.h.b16 %v117
  %v485 = vunpack.c.l.b16 %v118
  %v486 = vunpack.c.h.b16 %v118
  %v487 = vunpack.c.l.b16 %v119
  %v488 = vunpack.c.h.b16 %v119
  %v489 = vunpack.c.l.b16 %v120
  %v490 = vunpack.c.h.b16 %v120
  %v491 = vunpack.c.l.b16 %v121
  %v492 = vunpack.c.h.b16 %v121
  %v493 = vunpack.c.l.b16 %v122
  %v494 = vunpack.c.h.b16 %v122
  %v495 = vunpack.c.l.b16 %v123
  %v496 = vunpack.c.h.b16 %v123
  %v497 = vunpack.c.l.b16 %v124
  %v498 = vunpack.c.h.b16 %v124
  %v499 = vunpack.c.l.b16 %v125
  %v500 = vunpack.c.h.b16 %v125
  %v501 = vunpack.c.l.b16 %v126
  %v502 = vunpack.c.h.b16 %v126
  %v503 = vunpack.c.l.b16 %v127
  %v504 = vunpack.c.h.b16 %v127
  %v505 = vunpack.c.l.b16 %v128
  %v506 = vunpack.c.h.b16 %v128
  %v507 = vpack.c.b16 %v447, %v443
  %v508 = vpack.c.b16 %v448, %v444
  %v509 = vpack.c.b16 %v449, %v445
  %v510 = vpack.c.b16 %v450, %v446
  %v511 = vpack.c.b16 %v455, %v451
  %v512 = vpack.c.b16 %v456, %v452
  %v513 = vpack.c.b16 %v457, %v453
  %v514 = vpack.c.b16 %v458, %v454
  %v515 = vpack.c.b16 %v463, %v459
  %v516 = vpack.c.b16 %v464, %v460
  %v517 = vpack.c.b16 %v465, %v461
  %v518 = vpack.c.b16 %v466, %v462
  %v519 = vpack.c.b16 %v471, %v467
  %v520 = vpack.c.b16 %v472, %v468
  %v521 = vpack.c.b16 %v473, %v469
  %v522 = vpack.c.b16 %v474, %v470
  %v523 = vpack.c.b16 %v479, %v475
  %v524 = vpack.c.b16 %v480, %v476
  %v525 = vpack.c.b16 %v481, %v477
  %v526 = vpack.c.b16 %v482, %v478
  %v527 = vpack.c.b16 %v487, %v483
  %v528 = vpack.c.b16 %v488, %v484
  %v529 = vpack.c.b16 %v489, %v485
  %v530 = vpack.c.b16 %v490, %v486
  %v531 = vpack.c.b16 %v495, %v491
  %v532 = vpack.c.b16 %v496, %v492
  %v533 = vpack.c.b16 %v497, %v493
  %v534 = vpack.c.b16 %v498, %v494
  %v535 = vpack.c.b16 %v503, %v499
  %v536 = vpack.c.b16 %v504, %v500
  %v537 = vpack.c.b16 %v505, %v501
  %v538 = vpack.c.b16 %v506, %v502
  %571 = vmatprep.subr.bf16.mxu0 %v508
  %572 = vmatpush1.bf16.msra.mxu0 %v507
  %573 = vmatprep.subr.bf16.mxu0 %v512
  %574 = vmatpush1.bf16.msra.mxu0 %v511
  %575 = vmatprep.subr.bf16.mxu0 %v516
  %576 = vmatpush1.bf16.msra.mxu0 %v515
  %577 = vmatprep.subr.bf16.mxu0 %v520
  %578 = vmatpush1.bf16.msra.mxu0 %v519
  %579 = vmatprep.subr.bf16.mxu0 %v524
  %580 = vmatpush1.bf16.msra.mxu0 %v523
  %581 = vmatprep.subr.bf16.mxu0 %v528
  %582 = vmatpush1.bf16.msra.mxu0 %v527
  %583 = vmatprep.subr.bf16.mxu0 %v532
  %584 = vmatpush1.bf16.msra.mxu0 %v531
  %585 = vmatprep.subr.bf16.mxu0 %v536
  %586 = vmatpush1.bf16.msra.mxu0 %v535
  %587 = vmatprep.subr.bf16.mxu0 0
  %588 = vmatpush1.bf16.msra.mxu0 0
  %589 = vmatprep.subr.bf16.mxu0 0
  %590 = vmatpush1.bf16.msra.mxu0 0
  %591 = vmatprep.subr.bf16.mxu0 0
  %592 = vmatpush1.bf16.msra.mxu0 0
  %593 = vmatprep.subr.bf16.mxu0 0
  %594 = vmatpush1.bf16.msra.mxu0 0
  %595 = vmatprep.subr.bf16.mxu0 0
  %596 = vmatpush1.bf16.msra.mxu0 0
  %597 = vmatprep.subr.bf16.mxu0 0
  %598 = vmatpush1.bf16.msra.mxu0 0
  %599 = vmatprep.subr.bf16.mxu0 0
  %600 = vmatpush1.bf16.msra.mxu0 0
  %601 = vmatprep.subr.bf16.mxu0 0
  %602 = vmatpush1.bf16.msra.mxu0 0
  %603 = vmatprep.mubr.bf16.mxu0 0
  %604 = vmatmul.mubr.bf16.gmra.mrb[0].mxu0 %v410
  %v605 = vpop.f32.mrb[0].mxu0
  %v606 = vadd.f32 0.0, %v605
  %v607 = vpop.f32.mrb[0].mxu0
  %v608 = vadd.f32 0.0, %v607
  %v609 = vpop.f32.mrb[0].mxu0
  %v610 = vpop.f32.mrb[0].mxu0
  %611 = vdwg.mxu0
  %612 = vmatprep.subr.bf16.mxu0 %v510
  %613 = vmatpush1.bf16.msra.mxu0 %v509
  %614 = vmatprep.subr.bf16.mxu0 %v514
  %615 = vmatpush1.bf16.msra.mxu0 %v513
  %616 = vmatprep.subr.bf16.mxu0 %v518
  %617 = vmatpush1.bf16.msra.mxu0 %v517
  %618 = vmatprep.subr.bf16.mxu0 %v522
  %619 = vmatpush1.bf16.msra.mxu0 %v521
  %620 = vmatprep.subr.bf16.mxu0 %v526
  %621 = vmatpush1.bf16.msra.mxu0 %v525
  %622 = vmatprep.subr.bf16.mxu0 %v530
  %623 = vmatpush1.bf16.msra.mxu0 %v529
  %624 = vmatprep.subr.bf16.mxu0 %v534
  %625 = vmatpush1.bf16.msra.mxu0 %v533
  %626 = vmatprep.subr.bf16.mxu0 %v538
  %627 = vmatpush1.bf16.msra.mxu0 %v537
  %628 = vmatprep.subr.bf16.mxu0 0
  %629 = vmatpush1.bf16.msra.mxu0 0
  %630 = vmatprep.subr.bf16.mxu0 0
  %631 = vmatpush1.bf16.msra.mxu0 0
  %632 = vmatprep.subr.bf16.mxu0 0
  %633 = vmatpush1.bf16.msra.mxu0 0
  %634 = vmatprep.subr.bf16.mxu0 0
  %635 = vmatpush1.bf16.msra.mxu0 0
  %636 = vmatprep.subr.bf16.mxu0 0
  %637 = vmatpush1.bf16.msra.mxu0 0
  %638 = vmatprep.subr.bf16.mxu0 0
  %639 = vmatpush1.bf16.msra.mxu0 0
  %640 = vmatprep.subr.bf16.mxu0 0
  %641 = vmatpush1.bf16.msra.mxu0 0
  %642 = vmatprep.subr.bf16.mxu0 0
  %643 = vmatpush1.bf16.msra.mxu0 0
  %644 = vmatprep.mubr.bf16.mxu0 0
  %645 = vmatmul.mubr.bf16.gmra.mrb[0].mxu0 %v410
  %v646 = vpop.f32.mrb[0].mxu0
  %v647 = vadd.f32 0.0, %v646
  %v648 = vpop.f32.mrb[0].mxu0
  %v649 = vadd.f32 0.0, %v648
  %v650 = vpop.f32.mrb[0].mxu0
  %v651 = vpop.f32.mrb[0].mxu0
  %652 = vdwg.mxu0
  %v685 = vunpack.c.l.b16 %v65
  %v686 = vunpack.c.h.b16 %v65
  %v687 = vunpack.c.l.b16 %v66
  %v688 = vunpack.c.h.b16 %v66
  %v689 = vunpack.c.l.b16 %v67
  %v690 = vunpack.c.h.b16 %v67
  %v691 = vunpack.c.l.b16 %v68
  %v692 = vunpack.c.h.b16 %v68
  %v693 = vunpack.c.l.b16 %v69
  %v694 = vunpack.c.h.b16 %v69
  %v695 = vunpack.c.l.b16 %v70
  %v696 = vunpack.c.h.b16 %v70
  %v697 = vunpack.c.l.b16 %v71
  %v698 = vunpack.c.h.b16 %v71
  %v699 = vunpack.c.l.b16 %v72
  %v700 = vunpack.c.h.b16 %v72
  %v701 = vunpack.c.l.b16 %v73
  %v702 = vunpack.c.h.b16 %v73
  %v703 = vunpack.c.l.b16 %v74
  %v704 = vunpack.c.h.b16 %v74
  %v705 = vunpack.c.l.b16 %v75
  %v706 = vunpack.c.h.b16 %v75
  %v707 = vunpack.c.l.b16 %v76
  %v708 = vunpack.c.h.b16 %v76
  %v709 = vunpack.c.l.b16 %v77
  %v710 = vunpack.c.h.b16 %v77
  %v711 = vunpack.c.l.b16 %v78
  %v712 = vunpack.c.h.b16 %v78
  %v713 = vunpack.c.l.b16 %v79
  %v714 = vunpack.c.h.b16 %v79
  %v715 = vunpack.c.l.b16 %v80
  %v716 = vunpack.c.h.b16 %v80
  %v717 = vunpack.c.l.b16 %v81
  %v718 = vunpack.c.h.b16 %v81
  %v719 = vunpack.c.l.b16 %v82
  %v720 = vunpack.c.h.b16 %v82
  %v721 = vunpack.c.l.b16 %v83
  %v722 = vunpack.c.h.b16 %v83
  %v723 = vunpack.c.l.b16 %v84
  %v724 = vunpack.c.h.b16 %v84
  %v725 = vunpack.c.l.b16 %v85
  %v726 = vunpack.c.h.b16 %v85
  %v727 = vunpack.c.l.b16 %v86
  %v728 = vunpack.c.h.b16 %v86
  %v729 = vunpack.c.l.b16 %v87
  %v730 = vunpack.c.h.b16 %v87
  %v731 = vunpack.c.l.b16 %v88
  %v732 = vunpack.c.h.b16 %v88
  %v733 = vunpack.c.l.b16 %v89
  %v734 = vunpack.c.h.b16 %v89
  %v735 = vunpack.c.l.b16 %v90
  %v736 = vunpack.c.h.b16 %v90
  %v737 = vunpack.c.l.b16 %v91
  %v738 = vunpack.c.h.b16 %v91
  %v739 = vunpack.c.l.b16 %v92
  %v740 = vunpack.c.h.b16 %v92
  %v741 = vunpack.c.l.b16 %v93
  %v742 = vunpack.c.h.b16 %v93
  %v743 = vunpack.c.l.b16 %v94
  %v744 = vunpack.c.h.b16 %v94
  %v745 = vunpack.c.l.b16 %v95
  %v746 = vunpack.c.h.b16 %v95
  %v747 = vunpack.c.l.b16 %v96
  %v748 = vunpack.c.h.b16 %v96
  %v749 = vpack.c.b16 %v689, %v685
  %v750 = vpack.c.b16 %v690, %v686
  %v751 = vpack.c.b16 %v691, %v687
  %v752 = vpack.c.b16 %v692, %v688
  %v753 = vpack.c.b16 %v697, %v693
  %v754 = vpack.c.b16 %v698, %v694
  %v755 = vpack.c.b16 %v699, %v695
  %v756 = vpack.c.b16 %v700, %v696
  %v757 = vpack.c.b16 %v705, %v701
  %v758 = vpack.c.b16 %v706, %v702
  %v759 = vpack.c.b16 %v707, %v703
  %v760 = vpack.c.b16 %v708, %v704
  %v761 = vpack.c.b16 %v713, %v709
  %v762 = vpack.c.b16 %v714, %v710
  %v763 = vpack.c.b16 %v715, %v711
  %v764 = vpack.c.b16 %v716, %v712
  %v765 = vpack.c.b16 %v721, %v717
  %v766 = vpack.c.b16 %v722, %v718
  %v767 = vpack.c.b16 %v723, %v719
  %v768 = vpack.c.b16 %v724, %v720
  %v769 = vpack.c.b16 %v729, %v725
  %v770 = vpack.c.b16 %v730, %v726
  %v771 = vpack.c.b16 %v731, %v727
  %v772 = vpack.c.b16 %v732, %v728
  %v773 = vpack.c.b16 %v737, %v733
  %v774 = vpack.c.b16 %v738, %v734
  %v775 = vpack.c.b16 %v739, %v735
  %v776 = vpack.c.b16 %v740, %v736
  %v777 = vpack.c.b16 %v745, %v741
  %v778 = vpack.c.b16 %v746, %v742
  %v779 = vpack.c.b16 %v747, %v743
  %v780 = vpack.c.b16 %v748, %v744
  %813 = vmatprep.subr.bf16.mxu0 %v750
  %814 = vmatpush1.bf16.msra.mxu0 %v749
  %815 = vmatprep.subr.bf16.mxu0 %v754
  %816 = vmatpush1.bf16.msra.mxu0 %v753
  %817 = vmatprep.subr.bf16.mxu0 %v758
  %818 = vmatpush1.bf16.msra.mxu0 %v757
  %819 = vmatprep.subr.bf16.mxu0 %v762
  %820 = vmatpush1.bf16.msra.mxu0 %v761
  %821 = vmatprep.subr.bf16.mxu0 %v766
  %822 = vmatpush1.bf16.msra.mxu0 %v765
  %823 = vmatprep.subr.bf16.mxu0 %v770
  %824 = vmatpush1.bf16.msra.mxu0 %v769
  %825 = vmatprep.subr.bf16.mxu0 %v774
  %826 = vmatpush1.bf16.msra.mxu0 %v773
  %827 = vmatprep.subr.bf16.mxu0 %v778
  %828 = vmatpush1.bf16.msra.mxu0 %v777
  %829 = vmatprep.subr.bf16.mxu0 0
  %830 = vmatpush1.bf16.msra.mxu0 0
  %831 = vmatprep.subr.bf16.mxu0 0
  %832 = vmatpush1.bf16.msra.mxu0 0
  %833 = vmatprep.subr.bf16.mxu0 0
  %834 = vmatpush1.bf16.msra.mxu0 0
  %835 = vmatprep.subr.bf16.mxu0 0
  %836 = vmatpush1.bf16.msra.mxu0 0
  %837 = vmatprep.subr.bf16.mxu0 0
  %838 = vmatpush1.bf16.msra.mxu0 0
  %839 = vmatprep.subr.bf16.mxu0 0
  %840 = vmatpush1.bf16.msra.mxu0 0
  %841 = vmatprep.subr.bf16.mxu0 0
  %842 = vmatpush1.bf16.msra.mxu0 0
  %843 = vmatprep.subr.bf16.mxu0 0
  %844 = vmatpush1.bf16.msra.mxu0 0
  %845 = vmatprep.mubr.bf16.mxu0 0
  %846 = vmatmul.mubr.bf16.gmra.mrb[0].mxu0 %v409
  %v847 = vpop.f32.mrb[0].mxu0
  %v848 = vadd.f32 %v606, %v847
  %v849 = vpop.f32.mrb[0].mxu0
  %v850 = vadd.f32 %v608, %v849
  %v851 = vpop.f32.mrb[0].mxu0
  %v852 = vpop.f32.mrb[0].mxu0
  %853 = vdwg.mxu0
  %854 = vmatprep.subr.bf16.mxu0 %v752
  %855 = vmatpush1.bf16.msra.mxu0 %v751
  %856 = vmatprep.subr.bf16.mxu0 %v756
  %857 = vmatpush1.bf16.msra.mxu0 %v755
  %858 = vmatprep.subr.bf16.mxu0 %v760
  %859 = vmatpush1.bf16.msra.mxu0 %v759
  %860 = vmatprep.subr.bf16.mxu0 %v764
  %861 = vmatpush1.bf16.msra.mxu0 %v763
  %862 = vmatprep.subr.bf16.mxu0 %v768
  %863 = vmatpush1.bf16.msra.mxu0 %v767
  %864 = vmatprep.subr.bf16.mxu0 %v772
  %865 = vmatpush1.bf16.msra.mxu0 %v771
  %866 = vmatprep.subr.bf16.mxu0 %v776
  %867 = vmatpush1.bf16.msra.mxu0 %v775
  %868 = vmatprep.subr.bf16.mxu0 %v780
  %869 = vmatpush1.bf16.msra.mxu0 %v779
  %870 = vmatprep.subr.bf16.mxu0 0
  %871 = vmatpush1.bf16.msra.mxu0 0
  %872 = vmatprep.subr.bf16.mxu0 0
  %873 = vmatpush1.bf16.msra.mxu0 0
  %874 = vmatprep.subr.bf16.mxu0 0
  %875 = vmatpush1.bf16.msra.mxu0 0
  %876 = vmatprep.subr.bf16.mxu0 0
  %877 = vmatpush1.bf16.msra.mxu0 0
  %878 = vmatprep.subr.bf16.mxu0 0
  %879 = vmatpush1.bf16.msra.mxu0 0
  %880 = vmatprep.subr.bf16.mxu0 0
  %881 = vmatpush1.bf16.msra.mxu0 0
  %882 = vmatprep.subr.bf16.mxu0 0
  %883 = vmatpush1.bf16.msra.mxu0 0
  %884 = vmatprep.subr.bf16.mxu0 0
  %885 = vmatpush1.bf16.msra.mxu0 0
  %886 = vmatprep.mubr.bf16.mxu0 0
  %887 = vmatmul.mubr.bf16.gmra.mrb[0].mxu0 %v409
  %v888 = vpop.f32.mrb[0].mxu0
  %v889 = vadd.f32 %v647, %v888
  %v890 = vpop.f32.mrb[0].mxu0
  %v891 = vadd.f32 %v649, %v890
  %v892 = vpop.f32.mrb[0].mxu0
  %v893 = vpop.f32.mrb[0].mxu0
  %894 = vdwg.mxu0
  %v896 = vlaneseq
  %v897 = vshrl.u32 %v896, 7
  %v898 = vsub.s32 0, %v897
  %v899 = vrot.slane %v129, %v898
  %v900 = vlaneseq
  %v901 = vshrl.u32 %v900, 7
  %v902 = vsub.s32 1, %v901
  %v903 = vrot.slane %v129, %v902
  %v904 = vlaneseq
  %v905 = vshrl.u32 %v904, 7
  %v906 = vsub.s32 2, %v905
  %v907 = vrot.slane %v129, %v906
  %v908 = vlaneseq
  %v909 = vshrl.u32 %v908, 7
  %v910 = vsub.s32 3, %v909
  %v911 = vrot.slane %v129, %v910
  %v916 = vadd.f32 %v848, %v899
  %v917 = vadd.f32 %v850, %v903
  %v918 = vadd.f32 %v889, %v907
  %v919 = vadd.f32 %v891, %v911
  %v920 = vxor.u32 %v916, 2147483648
  %v921 = vmul.f32 %v920, 1.442695
  %v922 = vpow.pop %v921
  %v923 = vadd.f32 %v922, 1.0
  %v924 = vrcp.pop %v923
  %v925 = vmul.f32 1.0, %v924
  %v926 = vxor.u32 %v917, 2147483648
  %v927 = vmul.f32 %v926, 1.442695
  %v928 = vpow.pop %v927
  %v929 = vadd.f32 %v928, 1.0
  %v930 = vrcp.pop %v929
  %v931 = vmul.f32 1.0, %v930
  %v932 = vtanh.pop %v918
  %v933 = vxor.u32 %v919, 2147483648
  %v934 = vmul.f32 %v933, 1.442695
  %v935 = vpow.pop %v934
  %v936 = vadd.f32 %v935, 1.0
  %v937 = vrcp.pop %v936
  %v938 = vmul.f32 1.0, %v937
  %v939 = vmul.f32 %v931, %v133
  %v940 = vmul.f32 %v925, %v932
  %v941 = vadd.f32 %v939, %v940
  %v942 = vtanh.pop %v941
  %v943 = vmul.f32 %v938, %v942
  %s944 = scalar_lea.vmem %s0, 32
  %v945 = vld [vmem:[%s944] sm:$0xff]
  %v946 = vld [vmem:[%s944 + $0x8] sm:$0xff]
  %v947 = vld [vmem:[%s944 + $0x10] sm:$0xff]
  %v948 = vld [vmem:[%s944 + $0x18] sm:$0xff]
  %949 = vmatprep.subr.bf16.mxu0 %v236
  %950 = vmatpush1.bf16.msra.mxu0 %v235
  %951 = vmatprep.subr.bf16.mxu0 %v240
  %952 = vmatpush1.bf16.msra.mxu0 %v239
  %953 = vmatprep.subr.bf16.mxu0 %v244
  %954 = vmatpush1.bf16.msra.mxu0 %v243
  %955 = vmatprep.subr.bf16.mxu0 %v248
  %956 = vmatpush1.bf16.msra.mxu0 %v247
  %957 = vmatprep.subr.bf16.mxu0 %v252
  %958 = vmatpush1.bf16.msra.mxu0 %v251
  %959 = vmatprep.subr.bf16.mxu0 %v256
  %960 = vmatpush1.bf16.msra.mxu0 %v255
  %961 = vmatprep.subr.bf16.mxu0 %v260
  %962 = vmatpush1.bf16.msra.mxu0 %v259
  %963 = vmatprep.subr.bf16.mxu0 %v264
  %964 = vmatpush1.bf16.msra.mxu0 %v263
  %965 = vmatprep.subr.bf16.mxu0 0
  %966 = vmatpush1.bf16.msra.mxu0 0
  %967 = vmatprep.subr.bf16.mxu0 0
  %968 = vmatpush1.bf16.msra.mxu0 0
  %969 = vmatprep.subr.bf16.mxu0 0
  %970 = vmatpush1.bf16.msra.mxu0 0
  %971 = vmatprep.subr.bf16.mxu0 0
  %972 = vmatpush1.bf16.msra.mxu0 0
  %973 = vmatprep.subr.bf16.mxu0 0
  %974 = vmatpush1.bf16.msra.mxu0 0
  %975 = vmatprep.subr.bf16.mxu0 0
  %976 = vmatpush1.bf16.msra.mxu0 0
  %977 = vmatprep.subr.bf16.mxu0 0
  %978 = vmatpush1.bf16.msra.mxu0 0
  %979 = vmatprep.subr.bf16.mxu0 0
  %980 = vmatpush1.bf16.msra.mxu0 0
  %981 = vmatprep.mubr.bf16.mxu0 0
  %982 = vmatmul.mubr.bf16.gmra.mrb[0].mxu0 %v409
  %v983 = vpop.f32.mrb[0].mxu0
  %v984 = vadd.f32 0.0, %v983
  %v985 = vpop.f32.mrb[0].mxu0
  %v986 = vadd.f32 0.0, %v985
  %v987 = vpop.f32.mrb[0].mxu0
  %v988 = vpop.f32.mrb[0].mxu0
  %989 = vdwg.mxu0
  %990 = vmatprep.subr.bf16.mxu0 %v238
  %991 = vmatpush1.bf16.msra.mxu0 %v237
  %992 = vmatprep.subr.bf16.mxu0 %v242
  %993 = vmatpush1.bf16.msra.mxu0 %v241
  %994 = vmatprep.subr.bf16.mxu0 %v246
  %995 = vmatpush1.bf16.msra.mxu0 %v245
  %996 = vmatprep.subr.bf16.mxu0 %v250
  %997 = vmatpush1.bf16.msra.mxu0 %v249
  %998 = vmatprep.subr.bf16.mxu0 %v254
  %999 = vmatpush1.bf16.msra.mxu0 %v253
  %1000 = vmatprep.subr.bf16.mxu0 %v258
  %1001 = vmatpush1.bf16.msra.mxu0 %v257
  %1002 = vmatprep.subr.bf16.mxu0 %v262
  %1003 = vmatpush1.bf16.msra.mxu0 %v261
  %1004 = vmatprep.subr.bf16.mxu0 %v266
  %1005 = vmatpush1.bf16.msra.mxu0 %v265
  %1006 = vmatprep.subr.bf16.mxu0 0
  %1007 = vmatpush1.bf16.msra.mxu0 0
  %1008 = vmatprep.subr.bf16.mxu0 0
  %1009 = vmatpush1.bf16.msra.mxu0 0
  %1010 = vmatprep.subr.bf16.mxu0 0
  %1011 = vmatpush1.bf16.msra.mxu0 0
  %1012 = vmatprep.subr.bf16.mxu0 0
  %1013 = vmatpush1.bf16.msra.mxu0 0
  %1014 = vmatprep.subr.bf16.mxu0 0
  %1015 = vmatpush1.bf16.msra.mxu0 0
  %1016 = vmatprep.subr.bf16.mxu0 0
  %1017 = vmatpush1.bf16.msra.mxu0 0
  %1018 = vmatprep.subr.bf16.mxu0 0
  %1019 = vmatpush1.bf16.msra.mxu0 0
  %1020 = vmatprep.subr.bf16.mxu0 0
  %1021 = vmatpush1.bf16.msra.mxu0 0
  %1022 = vmatprep.mubr.bf16.mxu0 0
  %1023 = vmatmul.mubr.bf16.gmra.mrb[0].mxu0 %v409
  %v1024 = vpop.f32.mrb[0].mxu0
  %v1025 = vadd.f32 0.0, %v1024
  %v1026 = vpop.f32.mrb[0].mxu0
  %v1027 = vadd.f32 0.0, %v1026
  %v1028 = vpop.f32.mrb[0].mxu0
  %v1029 = vpop.f32.mrb[0].mxu0
  %1030 = vdwg.mxu0
  %v1031 = vadd.f32 %v945, %v984
  %v1032 = vadd.f32 %v946, %v986
  %v1033 = vadd.f32 %v947, %v1025
  %v1034 = vadd.f32 %v948, %v1027
  %v1035 = vxor.u32 %v1031, 2147483648
  %v1036 = vmul.f32 %v1035, 1.442695
  %v1037 = vpow.pop %v1036
  %v1038 = vadd.f32 %v1037, 1.0
  %v1039 = vrcp.pop %v1038
  %v1040 = vmul.f32 1.0, %v1039
  %v1041 = vxor.u32 %v1032, 2147483648
  %v1042 = vmul.f32 %v1041, 1.442695
  %v1043 = vpow.pop %v1042
  %v1044 = vadd.f32 %v1043, 1.0
  %v1045 = vrcp.pop %v1044
  %v1046 = vmul.f32 1.0, %v1045
  %v1047 = vtanh.pop %v1033
  %v1048 = vxor.u32 %v1034, 2147483648
  %v1049 = vmul.f32 %v1048, 1.442695
  %v1050 = vpow.pop %v1049
  %v1051 = vadd.f32 %v1050, 1.0
  %v1052 = vrcp.pop %v1051
  %v1053 = vmul.f32 1.0, %v1052
  %v1054 = vmul.f32 %v1046, %v406
  %v1055 = vmul.f32 %v1040, %v1047
  %v1056 = vadd.f32 %v1054, %v1055
  %v1057 = vtanh.pop %v1056
  %v1058 = vmul.f32 %v1053, %v1057
  %v1059 = vpack.c.bf16 %v1058, %v1058
  %v1060 = vpack.c.bf16 %v943, %v943
  %1061 = vmatprep.subr.bf16.mxu0 %v508
  %1062 = vmatpush1.bf16.msra.mxu0 %v507
  %1063 = vmatprep.subr.bf16.mxu0 %v512
  %1064 = vmatpush1.bf16.msra.mxu0 %v511
  %1065 = vmatprep.subr.bf16.mxu0 %v516
  %1066 = vmatpush1.bf16.msra.mxu0 %v515
  %1067 = vmatprep.subr.bf16.mxu0 %v520
  %1068 = vmatpush1.bf16.msra.mxu0 %v519
  %1069 = vmatprep.subr.bf16.mxu0 %v524
  %1070 = vmatpush1.bf16.msra.mxu0 %v523
  %1071 = vmatprep.subr.bf16.mxu0 %v528
  %1072 = vmatpush1.bf16.msra.mxu0 %v527
  %1073 = vmatprep.subr.bf16.mxu0 %v532
  %1074 = vmatpush1.bf16.msra.mxu0 %v531
  %1075 = vmatprep.subr.bf16.mxu0 %v536
  %1076 = vmatpush1.bf16.msra.mxu0 %v535
  %1077 = vmatprep.subr.bf16.mxu0 0
  %1078 = vmatpush1.bf16.msra.mxu0 0
  %1079 = vmatprep.subr.bf16.mxu0 0
  %1080 = vmatpush1.bf16.msra.mxu0 0
  %1081 = vmatprep.subr.bf16.mxu0 0
  %1082 = vmatpush1.bf16.msra.mxu0 0
  %1083 = vmatprep.subr.bf16.mxu0 0
  %1084 = vmatpush1.bf16.msra.mxu0 0
  %1085 = vmatprep.subr.bf16.mxu0 0
  %1086 = vmatpush1.bf16.msra.mxu0 0
  %1087 = vmatprep.subr.bf16.mxu0 0
  %1088 = vmatpush1.bf16.msra.mxu0 0
  %1089 = vmatprep.subr.bf16.mxu0 0
  %1090 = vmatpush1.bf16.msra.mxu0 0
  %1091 = vmatprep.subr.bf16.mxu0 0
  %1092 = vmatpush1.bf16.msra.mxu0 0
  %1093 = vmatprep.mubr.bf16.mxu0 0
  %1094 = vmatmul.mubr.bf16.gmra.mrb[0].mxu0 %v1060
  %v1095 = vpop.f32.mrb[0].mxu0
  %v1096 = vadd.f32 0.0, %v1095
  %v1097 = vpop.f32.mrb[0].mxu0
  %v1098 = vadd.f32 0.0, %v1097
  %v1099 = vpop.f32.mrb[0].mxu0
  %v1100 = vpop.f32.mrb[0].mxu0
  %1101 = vdwg.mxu0
  %1102 = vmatprep.subr.bf16.mxu0 %v510
  %1103 = vmatpush1.bf16.msra.mxu0 %v509
  %1104 = vmatprep.subr.bf16.mxu0 %v514
  %1105 = vmatpush1.bf16.msra.mxu0 %v513
  %1106 = vmatprep.subr.bf16.mxu0 %v518
  %1107 = vmatpush1.bf16.msra.mxu0 %v517
  %1108 = vmatprep.subr.bf16.mxu0 %v522
  %1109 = vmatpush1.bf16.msra.mxu0 %v521
  %1110 = vmatprep.subr.bf16.mxu0 %v526
  %1111 = vmatpush1.bf16.msra.mxu0 %v525
  %1112 = vmatprep.subr.bf16.mxu0 %v530
  %1113 = vmatpush1.bf16.msra.mxu0 %v529
  %1114 = vmatprep.subr.bf16.mxu0 %v534
  %1115 = vmatpush1.bf16.msra.mxu0 %v533
  %1116 = vmatprep.subr.bf16.mxu0 %v538
  %1117 = vmatpush1.bf16.msra.mxu0 %v537
  %1118 = vmatprep.subr.bf16.mxu0 0
  %1119 = vmatpush1.bf16.msra.mxu0 0
  %1120 = vmatprep.subr.bf16.mxu0 0
  %1121 = vmatpush1.bf16.msra.mxu0 0
  %1122 = vmatprep.subr.bf16.mxu0 0
  %1123 = vmatpush1.bf16.msra.mxu0 0
  %1124 = vmatprep.subr.bf16.mxu0 0
  %1125 = vmatpush1.bf16.msra.mxu0 0
  %1126 = vmatprep.subr.bf16.mxu0 0
  %1127 = vmatpush1.bf16.msra.mxu0 0
  %1128 = vmatprep.subr.bf16.mxu0 0
  %1129 = vmatpush1.bf16.msra.mxu0 0
  %1130 = vmatprep.subr.bf16.mxu0 0
  %1131 = vmatpush1.bf16.msra.mxu0 0
  %1132 = vmatprep.subr.bf16.mxu0 0
  %1133 = vmatpush1.bf16.msra.mxu0 0
  %1134 = vmatprep.mubr.bf16.mxu0 0
  %1135 = vmatmul.mubr.bf16.gmra.mrb[0].mxu0 %v1060
  %v1136 = vpop.f32.mrb[0].mxu0
  %v1137 = vadd.f32 0.0, %v1136
  %v1138 = vpop.f32.mrb[0].mxu0
  %v1139 = vadd.f32 0.0, %v1138
  %v1140 = vpop.f32.mrb[0].mxu0
  %v1141 = vpop.f32.mrb[0].mxu0
  %1142 = vdwg.mxu0
  %1143 = vmatprep.subr.bf16.mxu0 %v750
  %1144 = vmatpush1.bf16.msra.mxu0 %v749
  %1145 = vmatprep.subr.bf16.mxu0 %v754
  %1146 = vmatpush1.bf16.msra.mxu0 %v753
  %1147 = vmatprep.subr.bf16.mxu0 %v758
  %1148 = vmatpush1.bf16.msra.mxu0 %v757
  %1149 = vmatprep.subr.bf16.mxu0 %v762
  %1150 = vmatpush1.bf16.msra.mxu0 %v761
  %1151 = vmatprep.subr.bf16.mxu0 %v766
  %1152 = vmatpush1.bf16.msra.mxu0 %v765
  %1153 = vmatprep.subr.bf16.mxu0 %v770
  %1154 = vmatpush1.bf16.msra.mxu0 %v769
  %1155 = vmatprep.subr.bf16.mxu0 %v774
  %1156 = vmatpush1.bf16.msra.mxu0 %v773
  %1157 = vmatprep.subr.bf16.mxu0 %v778
  %1158 = vmatpush1.bf16.msra.mxu0 %v777
  %1159 = vmatprep.subr.bf16.mxu0 0
  %1160 = vmatpush1.bf16.msra.mxu0 0
  %1161 = vmatprep.subr.bf16.mxu0 0
  %1162 = vmatpush1.bf16.msra.mxu0 0
  %1163 = vmatprep.subr.bf16.mxu0 0
  %1164 = vmatpush1.bf16.msra.mxu0 0
  %1165 = vmatprep.subr.bf16.mxu0 0
  %1166 = vmatpush1.bf16.msra.mxu0 0
  %1167 = vmatprep.subr.bf16.mxu0 0
  %1168 = vmatpush1.bf16.msra.mxu0 0
  %1169 = vmatprep.subr.bf16.mxu0 0
  %1170 = vmatpush1.bf16.msra.mxu0 0
  %1171 = vmatprep.subr.bf16.mxu0 0
  %1172 = vmatpush1.bf16.msra.mxu0 0
  %1173 = vmatprep.subr.bf16.mxu0 0
  %1174 = vmatpush1.bf16.msra.mxu0 0
  %1175 = vmatprep.mubr.bf16.mxu0 0
  %1176 = vmatmul.mubr.bf16.gmra.mrb[0].mxu0 %v1059
  %v1177 = vpop.f32.mrb[0].mxu0
  %v1178 = vadd.f32 %v1096, %v1177
  %v1179 = vpop.f32.mrb[0].mxu0
  %v1180 = vadd.f32 %v1098, %v1179
  %v1181 = vpop.f32.mrb[0].mxu0
  %v1182 = vpop.f32.mrb[0].mxu0
  %1183 = vdwg.mxu0
  %1184 = vmatprep.subr.bf16.mxu0 %v752
  %1185 = vmatpush1.bf16.msra.mxu0 %v751
  %1186 = vmatprep.subr.bf16.mxu0 %v756
  %1187 = vmatpush1.bf16.msra.mxu0 %v755
  %1188 = vmatprep.subr.bf16.mxu0 %v760
  %1189 = vmatpush1.bf16.msra.mxu0 %v759
  %1190 = vmatprep.subr.bf16.mxu0 %v764
  %1191 = vmatpush1.bf16.msra.mxu0 %v763
  %1192 = vmatprep.subr.bf16.mxu0 %v768
  %1193 = vmatpush1.bf16.msra.mxu0 %v767
  %1194 = vmatprep.subr.bf16.mxu0 %v772
  %1195 = vmatpush1.bf16.msra.mxu0 %v771
  %1196 = vmatprep.subr.bf16.mxu0 %v776
  %1197 = vmatpush1.bf16.msra.mxu0 %v775
  %1198 = vmatprep.subr.bf16.mxu0 %v780
  %1199 = vmatpush1.bf16.msra.mxu0 %v779
  %1200 = vmatprep.subr.bf16.mxu0 0
  %1201 = vmatpush1.bf16.msra.mxu0 0
  %1202 = vmatprep.subr.bf16.mxu0 0
  %1203 = vmatpush1.bf16.msra.mxu0 0
  %1204 = vmatprep.subr.bf16.mxu0 0
  %1205 = vmatpush1.bf16.msra.mxu0 0
  %1206 = vmatprep.subr.bf16.mxu0 0
  %1207 = vmatpush1.bf16.msra.mxu0 0
  %1208 = vmatprep.subr.bf16.mxu0 0
  %1209 = vmatpush1.bf16.msra.mxu0 0
  %1210 = vmatprep.subr.bf16.mxu0 0
  %1211 = vmatpush1.bf16.msra.mxu0 0
  %1212 = vmatprep.subr.bf16.mxu0 0
  %1213 = vmatpush1.bf16.msra.mxu0 0
  %1214 = vmatprep.subr.bf16.mxu0 0
  %1215 = vmatpush1.bf16.msra.mxu0 0
  %1216 = vmatprep.mubr.bf16.mxu0 0
  %1217 = vmatmul.mubr.bf16.gmra.mrb[0].mxu0 %v1059
  %v1218 = vpop.f32.mrb[0].mxu0
  %v1219 = vadd.f32 %v1137, %v1218
  %v1220 = vpop.f32.mrb[0].mxu0
  %v1221 = vadd.f32 %v1139, %v1220
  %v1222 = vpop.f32.mrb[0].mxu0
  %v1223 = vpop.f32.mrb[0].mxu0
  %1224 = vdwg.mxu0
  %v1225 = vadd.f32 %v1178, %v899
  %v1226 = vadd.f32 %v1180, %v903
  %v1227 = vadd.f32 %v1219, %v907
  %v1228 = vadd.f32 %v1221, %v911
  %v1229 = vxor.u32 %v1225, 2147483648
  %v1230 = vmul.f32 %v1229, 1.442695
  %v1231 = vpow.pop %v1230
  %v1232 = vadd.f32 %v1231, 1.0
  %v1233 = vrcp.pop %v1232
  %v1234 = vmul.f32 1.0, %v1233
  %v1235 = vxor.u32 %v1226, 2147483648
  %v1236 = vmul.f32 %v1235, 1.442695
  %v1237 = vpow.pop %v1236
  %v1238 = vadd.f32 %v1237, 1.0
  %v1239 = vrcp.pop %v1238
  %v1240 = vmul.f32 1.0, %v1239
  %v1241 = vtanh.pop %v1227
  %v1242 = vxor.u32 %v1228, 2147483648
  %v1243 = vmul.f32 %v1242, 1.442695
  %v1244 = vpow.pop %v1243
  %v1245 = vadd.f32 %v1244, 1.0
  %v1246 = vrcp.pop %v1245
  %v1247 = vmul.f32 1.0, %v1246
  %v1248 = vmul.f32 %v1240, %v941
  %v1249 = vmul.f32 %v1234, %v1241
  %v1250 = vadd.f32 %v1248, %v1249
  %v1251 = vtanh.pop %v1250
  %v1252 = vmul.f32 %v1247, %v1251
  %s1253 = scalar_lea.vmem %s0, 64
  %v1254 = vld [vmem:[%s1253] sm:$0xff]
  %v1255 = vld [vmem:[%s1253 + $0x8] sm:$0xff]
  %v1256 = vld [vmem:[%s1253 + $0x10] sm:$0xff]
  %v1257 = vld [vmem:[%s1253 + $0x18] sm:$0xff]
  %1258 = vmatprep.subr.bf16.mxu0 %v236
  %1259 = vmatpush1.bf16.msra.mxu0 %v235
  %1260 = vmatprep.subr.bf16.mxu0 %v240
  %1261 = vmatpush1.bf16.msra.mxu0 %v239
  %1262 = vmatprep.subr.bf16.mxu0 %v244
  %1263 = vmatpush1.bf16.msra.mxu0 %v243
  %1264 = vmatprep.subr.bf16.mxu0 %v248
  %1265 = vmatpush1.bf16.msra.mxu0 %v247
  %1266 = vmatprep.subr.bf16.mxu0 %v252
  %1267 = vmatpush1.bf16.msra.mxu0 %v251
  %1268 = vmatprep.subr.bf16.mxu0 %v256
  %1269 = vmatpush1.bf16.msra.mxu0 %v255
  %1270 = vmatprep.subr.bf16.mxu0 %v260
  %1271 = vmatpush1.bf16.msra.mxu0 %v259
  %1272 = vmatprep.subr.bf16.mxu0 %v264
  %1273 = vmatpush1.bf16.msra.mxu0 %v263
  %1274 = vmatprep.subr.bf16.mxu0 0
  %1275 = vmatpush1.bf16.msra.mxu0 0
  %1276 = vmatprep.subr.bf16.mxu0 0
  %1277 = vmatpush1.bf16.msra.mxu0 0
  %1278 = vmatprep.subr.bf16.mxu0 0
  %1279 = vmatpush1.bf16.msra.mxu0 0
  %1280 = vmatprep.subr.bf16.mxu0 0
  %1281 = vmatpush1.bf16.msra.mxu0 0
  %1282 = vmatprep.subr.bf16.mxu0 0
  %1283 = vmatpush1.bf16.msra.mxu0 0
  %1284 = vmatprep.subr.bf16.mxu0 0
  %1285 = vmatpush1.bf16.msra.mxu0 0
  %1286 = vmatprep.subr.bf16.mxu0 0
  %1287 = vmatpush1.bf16.msra.mxu0 0
  %1288 = vmatprep.subr.bf16.mxu0 0
  %1289 = vmatpush1.bf16.msra.mxu0 0
  %1290 = vmatprep.mubr.bf16.mxu0 0
  %1291 = vmatmul.mubr.bf16.gmra.mrb[0].mxu0 %v1059
  %v1292 = vpop.f32.mrb[0].mxu0
  %v1293 = vadd.f32 0.0, %v1292
  %v1294 = vpop.f32.mrb[0].mxu0
  %v1295 = vadd.f32 0.0, %v1294
  %v1296 = vpop.f32.mrb[0].mxu0
  %v1297 = vpop.f32.mrb[0].mxu0
  %1298 = vdwg.mxu0
  %1299 = vmatprep.subr.bf16.mxu0 %v238
  %1300 = vmatpush1.bf16.msra.mxu0 %v237
  %1301 = vmatprep.subr.bf16.mxu0 %v242
  %1302 = vmatpush1.bf16.msra.mxu0 %v241
  %1303 = vmatprep.subr.bf16.mxu0 %v246
  %1304 = vmatpush1.bf16.msra.mxu0 %v245
  %1305 = vmatprep.subr.bf16.mxu0 %v250
  %1306 = vmatpush1.bf16.msra.mxu0 %v249
  %1307 = vmatprep.subr.bf16.mxu0 %v254
  %1308 = vmatpush1.bf16.msra.mxu0 %v253
  %1309 = vmatprep.subr.bf16.mxu0 %v258
  %1310 = vmatpush1.bf16.msra.mxu0 %v257
  %1311 = vmatprep.subr.bf16.mxu0 %v262
  %1312 = vmatpush1.bf16.msra.mxu0 %v261
  %1313 = vmatprep.subr.bf16.mxu0 %v266
  %1314 = vmatpush1.bf16.msra.mxu0 %v265
  %1315 = vmatprep.subr.bf16.mxu0 0
  %1316 = vmatpush1.bf16.msra.mxu0 0
  %1317 = vmatprep.subr.bf16.mxu0 0
  %1318 = vmatpush1.bf16.msra.mxu0 0
  %1319 = vmatprep.subr.bf16.mxu0 0
  %1320 = vmatpush1.bf16.msra.mxu0 0
  %1321 = vmatprep.subr.bf16.mxu0 0
  %1322 = vmatpush1.bf16.msra.mxu0 0
  %1323 = vmatprep.subr.bf16.mxu0 0
  %1324 = vmatpush1.bf16.msra.mxu0 0
  %1325 = vmatprep.subr.bf16.mxu0 0
  %1326 = vmatpush1.bf16.msra.mxu0 0
  %1327 = vmatprep.subr.bf16.mxu0 0
  %1328 = vmatpush1.bf16.msra.mxu0 0
  %1329 = vmatprep.subr.bf16.mxu0 0
  %1330 = vmatpush1.bf16.msra.mxu0 0
  %1331 = vmatprep.mubr.bf16.mxu0 0
  %1332 = vmatmul.mubr.bf16.gmra.mrb[0].mxu0 %v1059
  %v1333 = vpop.f32.mrb[0].mxu0
  %v1334 = vadd.f32 0.0, %v1333
  %v1335 = vpop.f32.mrb[0].mxu0
  %v1336 = vadd.f32 0.0, %v1335
  %v1337 = vpop.f32.mrb[0].mxu0
  %v1338 = vpop.f32.mrb[0].mxu0
  %1339 = vdwg.mxu0
  %v1340 = vadd.f32 %v1254, %v1293
  %v1341 = vadd.f32 %v1255, %v1295
  %v1342 = vadd.f32 %v1256, %v1334
  %v1343 = vadd.f32 %v1257, %v1336
  %v1344 = vxor.u32 %v1340, 2147483648
  %v1345 = vmul.f32 %v1344, 1.442695
  %v1346 = vpow.pop %v1345
  %v1347 = vadd.f32 %v1346, 1.0
  %v1348 = vrcp.pop %v1347
  %v1349 = vmul.f32 1.0, %v1348
  %v1350 = vxor.u32 %v1341, 2147483648
  %v1351 = vmul.f32 %v1350, 1.442695
  %v1352 = vpow.pop %v1351
  %v1353 = vadd.f32 %v1352, 1.0
  %v1354 = vrcp.pop %v1353
  %v1355 = vmul.f32 1.0, %v1354
  %v1356 = vtanh.pop %v1342
  %v1357 = vxor.u32 %v1343, 2147483648
  %v1358 = vmul.f32 %v1357, 1.442695
  %v1359 = vpow.pop %v1358
  %v1360 = vadd.f32 %v1359, 1.0
  %v1361 = vrcp.pop %v1360
  %v1362 = vmul.f32 1.0, %v1361
  %v1363 = vmul.f32 %v1355, %v1056
  %v1364 = vmul.f32 %v1349, %v1356
  %v1365 = vadd.f32 %v1363, %v1364
  %v1366 = vtanh.pop %v1365
  %v1367 = vmul.f32 %v1362, %v1366
  %v1368 = vpack.c.bf16 %v1367, %v1367
  %v1369 = vpack.c.bf16 %v1252, %v1252
  %1370 = vmatprep.subr.bf16.mxu0 %v508
  %1371 = vmatpush1.bf16.msra.mxu0 %v507
  %1372 = vmatprep.subr.bf16.mxu0 %v512
  %1373 = vmatpush1.bf16.msra.mxu0 %v511
  %1374 = vmatprep.subr.bf16.mxu0 %v516
  %1375 = vmatpush1.bf16.msra.mxu0 %v515
  %1376 = vmatprep.subr.bf16.mxu0 %v520
  %1377 = vmatpush1.bf16.msra.mxu0 %v519
  %1378 = vmatprep.subr.bf16.mxu0 %v524
  %1379 = vmatpush1.bf16.msra.mxu0 %v523
  %1380 = vmatprep.subr.bf16.mxu0 %v528
  %1381 = vmatpush1.bf16.msra.mxu0 %v527
  %1382 = vmatprep.subr.bf16.mxu0 %v532
  %1383 = vmatpush1.bf16.msra.mxu0 %v531
  %1384 = vmatprep.subr.bf16.mxu0 %v536
  %1385 = vmatpush1.bf16.msra.mxu0 %v535
  %1386 = vmatprep.subr.bf16.mxu0 0
  %1387 = vmatpush1.bf16.msra.mxu0 0
  %1388 = vmatprep.subr.bf16.mxu0 0
  %1389 = vmatpush1.bf16.msra.mxu0 0
  %1390 = vmatprep.subr.bf16.mxu0 0
  %1391 = vmatpush1.bf16.msra.mxu0 0
  %1392 = vmatprep.subr.bf16.mxu0 0
  %1393 = vmatpush1.bf16.msra.mxu0 0
  %1394 = vmatprep.subr.bf16.mxu0 0
  %1395 = vmatpush1.bf16.msra.mxu0 0
  %1396 = vmatprep.subr.bf16.mxu0 0
  %1397 = vmatpush1.bf16.msra.mxu0 0
  %1398 = vmatprep.subr.bf16.mxu0 0
  %1399 = vmatpush1.bf16.msra.mxu0 0
  %1400 = vmatprep.subr.bf16.mxu0 0
  %1401 = vmatpush1.bf16.msra.mxu0 0
  %1402 = vmatprep.mubr.bf16.mxu0 0
  %1403 = vmatmul.mubr.bf16.gmra.mrb[0].mxu0 %v1369
  %v1404 = vpop.f32.mrb[0].mxu0
  %v1405 = vadd.f32 0.0, %v1404
  %v1406 = vpop.f32.mrb[0].mxu0
  %v1407 = vadd.f32 0.0, %v1406
  %v1408 = vpop.f32.mrb[0].mxu0
  %v1409 = vpop.f32.mrb[0].mxu0
  %1410 = vdwg.mxu0
  %1411 = vmatprep.subr.bf16.mxu0 %v510
  %1412 = vmatpush1.bf16.msra.mxu0 %v509
  %1413 = vmatprep.subr.bf16.mxu0 %v514
  %1414 = vmatpush1.bf16.msra.mxu0 %v513
  %1415 = vmatprep.subr.bf16.mxu0 %v518
  %1416 = vmatpush1.bf16.msra.mxu0 %v517
  %1417 = vmatprep.subr.bf16.mxu0 %v522
  %1418 = vmatpush1.bf16.msra.mxu0 %v521
  %1419 = vmatprep.subr.bf16.mxu0 %v526
  %1420 = vmatpush1.bf16.msra.mxu0 %v525
  %1421 = vmatprep.subr.bf16.mxu0 %v530
  %1422 = vmatpush1.bf16.msra.mxu0 %v529
  %1423 = vmatprep.subr.bf16.mxu0 %v534
  %1424 = vmatpush1.bf16.msra.mxu0 %v533
  %1425 = vmatprep.subr.bf16.mxu0 %v538
  %1426 = vmatpush1.bf16.msra.mxu0 %v537
  %1427 = vmatprep.subr.bf16.mxu0 0
  %1428 = vmatpush1.bf16.msra.mxu0 0
  %1429 = vmatprep.subr.bf16.mxu0 0
  %1430 = vmatpush1.bf16.msra.mxu0 0
  %1431 = vmatprep.subr.bf16.mxu0 0
  %1432 = vmatpush1.bf16.msra.mxu0 0
  %1433 = vmatprep.subr.bf16.mxu0 0
  %1434 = vmatpush1.bf16.msra.mxu0 0
  %1435 = vmatprep.subr.bf16.mxu0 0
  %1436 = vmatpush1.bf16.msra.mxu0 0
  %1437 = vmatprep.subr.bf16.mxu0 0
  %1438 = vmatpush1.bf16.msra.mxu0 0
  %1439 = vmatprep.subr.bf16.mxu0 0
  %1440 = vmatpush1.bf16.msra.mxu0 0
  %1441 = vmatprep.subr.bf16.mxu0 0
  %1442 = vmatpush1.bf16.msra.mxu0 0
  %1443 = vmatprep.mubr.bf16.mxu0 0
  %1444 = vmatmul.mubr.bf16.gmra.mrb[0].mxu0 %v1369
  %v1445 = vpop.f32.mrb[0].mxu0
  %v1446 = vadd.f32 0.0, %v1445
  %v1447 = vpop.f32.mrb[0].mxu0
  %v1448 = vadd.f32 0.0, %v1447
  %v1449 = vpop.f32.mrb[0].mxu0
  %v1450 = vpop.f32.mrb[0].mxu0
  %1451 = vdwg.mxu0
  %1452 = vmatprep.subr.bf16.mxu0 %v750
  %1453 = vmatpush1.bf16.msra.mxu0 %v749
  %1454 = vmatprep.subr.bf16.mxu0 %v754
  %1455 = vmatpush1.bf16.msra.mxu0 %v753
  %1456 = vmatprep.subr.bf16.mxu0 %v758
  %1457 = vmatpush1.bf16.msra.mxu0 %v757
  %1458 = vmatprep.subr.bf16.mxu0 %v762
  %1459 = vmatpush1.bf16.msra.mxu0 %v761
  %1460 = vmatprep.subr.bf16.mxu0 %v766
  %1461 = vmatpush1.bf16.msra.mxu0 %v765
  %1462 = vmatprep.subr.bf16.mxu0 %v770
  %1463 = vmatpush1.bf16.msra.mxu0 %v769
  %1464 = vmatprep.subr.bf16.mxu0 %v774
  %1465 = vmatpush1.bf16.msra.mxu0 %v773
  %1466 = vmatprep.subr.bf16.mxu0 %v778
  %1467 = vmatpush1.bf16.msra.mxu0 %v777
  %1468 = vmatprep.subr.bf16.mxu0 0
  %1469 = vmatpush1.bf16.msra.mxu0 0
  %1470 = vmatprep.subr.bf16.mxu0 0
  %1471 = vmatpush1.bf16.msra.mxu0 0
  %1472 = vmatprep.subr.bf16.mxu0 0
  %1473 = vmatpush1.bf16.msra.mxu0 0
  %1474 = vmatprep.subr.bf16.mxu0 0
  %1475 = vmatpush1.bf16.msra.mxu0 0
  %1476 = vmatprep.subr.bf16.mxu0 0
  %1477 = vmatpush1.bf16.msra.mxu0 0
  %1478 = vmatprep.subr.bf16.mxu0 0
  %1479 = vmatpush1.bf16.msra.mxu0 0
  %1480 = vmatprep.subr.bf16.mxu0 0
  %1481 = vmatpush1.bf16.msra.mxu0 0
  %1482 = vmatprep.subr.bf16.mxu0 0
  %1483 = vmatpush1.bf16.msra.mxu0 0
  %1484 = vmatprep.mubr.bf16.mxu0 0
  %1485 = vmatmul.mubr.bf16.gmra.mrb[0].mxu0 %v1368
  %v1486 = vpop.f32.mrb[0].mxu0
  %v1487 = vadd.f32 %v1405, %v1486
  %v1488 = vpop.f32.mrb[0].mxu0
  %v1489 = vadd.f32 %v1407, %v1488
  %v1490 = vpop.f32.mrb[0].mxu0
  %v1491 = vpop.f32.mrb[0].mxu0
  %1492 = vdwg.mxu0
  %1493 = vmatprep.subr.bf16.mxu0 %v752
  %1494 = vmatpush1.bf16.msra.mxu0 %v751
  %1495 = vmatprep.subr.bf16.mxu0 %v756
  %1496 = vmatpush1.bf16.msra.mxu0 %v755
  %1497 = vmatprep.subr.bf16.mxu0 %v760
  %1498 = vmatpush1.bf16.msra.mxu0 %v759
  %1499 = vmatprep.subr.bf16.mxu0 %v764
  %1500 = vmatpush1.bf16.msra.mxu0 %v763
  %1501 = vmatprep.subr.bf16.mxu0 %v768
  %1502 = vmatpush1.bf16.msra.mxu0 %v767
  %1503 = vmatprep.subr.bf16.mxu0 %v772
  %1504 = vmatpush1.bf16.msra.mxu0 %v771
  %1505 = vmatprep.subr.bf16.mxu0 %v776
  %1506 = vmatpush1.bf16.msra.mxu0 %v775
  %1507 = vmatprep.subr.bf16.mxu0 %v780
  %1508 = vmatpush1.bf16.msra.mxu0 %v779
  %1509 = vmatprep.subr.bf16.mxu0 0
  %1510 = vmatpush1.bf16.msra.mxu0 0
  %1511 = vmatprep.subr.bf16.mxu0 0
  %1512 = vmatpush1.bf16.msra.mxu0 0
  %1513 = vmatprep.subr.bf16.mxu0 0
  %1514 = vmatpush1.bf16.msra.mxu0 0
  %1515 = vmatprep.subr.bf16.mxu0 0
  %1516 = vmatpush1.bf16.msra.mxu0 0
  %1517 = vmatprep.subr.bf16.mxu0 0
  %1518 = vmatpush1.bf16.msra.mxu0 0
  %1519 = vmatprep.subr.bf16.mxu0 0
  %1520 = vmatpush1.bf16.msra.mxu0 0
  %1521 = vmatprep.subr.bf16.mxu0 0
  %1522 = vmatpush1.bf16.msra.mxu0 0
  %1523 = vmatprep.subr.bf16.mxu0 0
  %1524 = vmatpush1.bf16.msra.mxu0 0
  %1525 = vmatprep.mubr.bf16.mxu0 0
  %1526 = vmatmul.mubr.bf16.gmra.mrb[0].mxu0 %v1368
  %v1527 = vpop.f32.mrb[0].mxu0
  %v1528 = vadd.f32 %v1446, %v1527
  %v1529 = vpop.f32.mrb[0].mxu0
  %v1530 = vadd.f32 %v1448, %v1529
  %v1531 = vpop.f32.mrb[0].mxu0
  %v1532 = vpop.f32.mrb[0].mxu0
  %1533 = vdwg.mxu0
  %v1534 = vadd.f32 %v1487, %v899
  %v1535 = vadd.f32 %v1489, %v903
  %v1536 = vadd.f32 %v1528, %v907
  %v1537 = vadd.f32 %v1530, %v911
  %v1538 = vxor.u32 %v1534, 2147483648
  %v1539 = vmul.f32 %v1538, 1.442695
  %v1540 = vpow.pop %v1539
  %v1541 = vadd.f32 %v1540, 1.0
  %v1542 = vrcp.pop %v1541
  %v1543 = vmul.f32 1.0, %v1542
  %v1544 = vxor.u32 %v1535, 2147483648
  %v1545 = vmul.f32 %v1544, 1.442695
  %v1546 = vpow.pop %v1545
  %v1547 = vadd.f32 %v1546, 1.0
  %v1548 = vrcp.pop %v1547
  %v1549 = vmul.f32 1.0, %v1548
  %v1550 = vtanh.pop %v1536
  %v1551 = vxor.u32 %v1537, 2147483648
  %v1552 = vmul.f32 %v1551, 1.442695
  %v1553 = vpow.pop %v1552
  %v1554 = vadd.f32 %v1553, 1.0
  %v1555 = vrcp.pop %v1554
  %v1556 = vmul.f32 1.0, %v1555
  %v1557 = vmul.f32 %v1549, %v1250
  %v1558 = vmul.f32 %v1543, %v1550
  %v1559 = vadd.f32 %v1557, %v1558
  %v1560 = vtanh.pop %v1559
  %v1561 = vmul.f32 %v1556, %v1560
  %s1562 = scalar_lea.vmem %s0, 96
  %v1563 = vld [vmem:[%s1562] sm:$0xff]
  %v1564 = vld [vmem:[%s1562 + $0x8] sm:$0xff]
  %v1565 = vld [vmem:[%s1562 + $0x10] sm:$0xff]
  %v1566 = vld [vmem:[%s1562 + $0x18] sm:$0xff]
  %1567 = vmatprep.subr.bf16.mxu0 %v236
  %1568 = vmatpush1.bf16.msra.mxu0 %v235
  %1569 = vmatprep.subr.bf16.mxu0 %v240
  %1570 = vmatpush1.bf16.msra.mxu0 %v239
  %1571 = vmatprep.subr.bf16.mxu0 %v244
  %1572 = vmatpush1.bf16.msra.mxu0 %v243
  %1573 = vmatprep.subr.bf16.mxu0 %v248
  %1574 = vmatpush1.bf16.msra.mxu0 %v247
  %1575 = vmatprep.subr.bf16.mxu0 %v252
  %1576 = vmatpush1.bf16.msra.mxu0 %v251
  %1577 = vmatprep.subr.bf16.mxu0 %v256
  %1578 = vmatpush1.bf16.msra.mxu0 %v255
  %1579 = vmatprep.subr.bf16.mxu0 %v260
  %1580 = vmatpush1.bf16.msra.mxu0 %v259
  %1581 = vmatprep.subr.bf16.mxu0 %v264
  %1582 = vmatpush1.bf16.msra.mxu0 %v263
  %1583 = vmatprep.subr.bf16.mxu0 0
  %1584 = vmatpush1.bf16.msra.mxu0 0
  %1585 = vmatprep.subr.bf16.mxu0 0
  %1586 = vmatpush1.bf16.msra.mxu0 0
  %1587 = vmatprep.subr.bf16.mxu0 0
  %1588 = vmatpush1.bf16.msra.mxu0 0
  %1589 = vmatprep.subr.bf16.mxu0 0
  %1590 = vmatpush1.bf16.msra.mxu0 0
  %1591 = vmatprep.subr.bf16.mxu0 0
  %1592 = vmatpush1.bf16.msra.mxu0 0
  %1593 = vmatprep.subr.bf16.mxu0 0
  %1594 = vmatpush1.bf16.msra.mxu0 0
  %1595 = vmatprep.subr.bf16.mxu0 0
  %1596 = vmatpush1.bf16.msra.mxu0 0
  %1597 = vmatprep.subr.bf16.mxu0 0
  %1598 = vmatpush1.bf16.msra.mxu0 0
  %1599 = vmatprep.mubr.bf16.mxu0 0
  %1600 = vmatmul.mubr.bf16.gmra.mrb[0].mxu0 %v1368
  %v1601 = vpop.f32.mrb[0].mxu0
  %v1602 = vadd.f32 0.0, %v1601
  %v1603 = vpop.f32.mrb[0].mxu0
  %v1604 = vadd.f32 0.0, %v1603
  %v1605 = vpop.f32.mrb[0].mxu0
  %v1606 = vpop.f32.mrb[0].mxu0
  %1607 = vdwg.mxu0
  %1608 = vmatprep.subr.bf16.mxu0 %v238
  %1609 = vmatpush1.bf16.msra.mxu0 %v237
  %1610 = vmatprep.subr.bf16.mxu0 %v242
  %1611 = vmatpush1.bf16.msra.mxu0 %v241
  %1612 = vmatprep.subr.bf16.mxu0 %v246
  %1613 = vmatpush1.bf16.msra.mxu0 %v245
  %1614 = vmatprep.subr.bf16.mxu0 %v250
  %1615 = vmatpush1.bf16.msra.mxu0 %v249
  %1616 = vmatprep.subr.bf16.mxu0 %v254
  %1617 = vmatpush1.bf16.msra.mxu0 %v253
  %1618 = vmatprep.subr.bf16.mxu0 %v258
  %1619 = vmatpush1.bf16.msra.mxu0 %v257
  %1620 = vmatprep.subr.bf16.mxu0 %v262
  %1621 = vmatpush1.bf16.msra.mxu0 %v261
  %1622 = vmatprep.subr.bf16.mxu0 %v266
  %1623 = vmatpush1.bf16.msra.mxu0 %v265
  %1624 = vmatprep.subr.bf16.mxu0 0
  %1625 = vmatpush1.bf16.msra.mxu0 0
  %1626 = vmatprep.subr.bf16.mxu0 0
  %1627 = vmatpush1.bf16.msra.mxu0 0
  %1628 = vmatprep.subr.bf16.mxu0 0
  %1629 = vmatpush1.bf16.msra.mxu0 0
  %1630 = vmatprep.subr.bf16.mxu0 0
  %1631 = vmatpush1.bf16.msra.mxu0 0
  %1632 = vmatprep.subr.bf16.mxu0 0
  %1633 = vmatpush1.bf16.msra.mxu0 0
  %1634 = vmatprep.subr.bf16.mxu0 0
  %1635 = vmatpush1.bf16.msra.mxu0 0
  %1636 = vmatprep.subr.bf16.mxu0 0
  %1637 = vmatpush1.bf16.msra.mxu0 0
  %1638 = vmatprep.subr.bf16.mxu0 0
  %1639 = vmatpush1.bf16.msra.mxu0 0
  %1640 = vmatprep.mubr.bf16.mxu0 0
  %1641 = vmatmul.mubr.bf16.gmra.mrb[0].mxu0 %v1368
  %v1642 = vpop.f32.mrb[0].mxu0
  %v1643 = vadd.f32 0.0, %v1642
  %v1644 = vpop.f32.mrb[0].mxu0
  %v1645 = vadd.f32 0.0, %v1644
  %v1646 = vpop.f32.mrb[0].mxu0
  %v1647 = vpop.f32.mrb[0].mxu0
  %1648 = vdwg.mxu0
  %v1649 = vadd.f32 %v1563, %v1602
  %v1650 = vadd.f32 %v1564, %v1604
  %v1651 = vadd.f32 %v1565, %v1643
  %v1652 = vadd.f32 %v1566, %v1645
  %v1653 = vxor.u32 %v1649, 2147483648
  %v1654 = vmul.f32 %v1653, 1.442695
  %v1655 = vpow.pop %v1654
  %v1656 = vadd.f32 %v1655, 1.0
  %v1657 = vrcp.pop %v1656
  %v1658 = vmul.f32 1.0, %v1657
  %v1659 = vxor.u32 %v1650, 2147483648
  %v1660 = vmul.f32 %v1659, 1.442695
  %v1661 = vpow.pop %v1660
  %v1662 = vadd.f32 %v1661, 1.0
  %v1663 = vrcp.pop %v1662
  %v1664 = vmul.f32 1.0, %v1663
  %v1665 = vtanh.pop %v1651
  %v1666 = vxor.u32 %v1652, 2147483648
  %v1667 = vmul.f32 %v1666, 1.442695
  %v1668 = vpow.pop %v1667
  %v1669 = vadd.f32 %v1668, 1.0
  %v1670 = vrcp.pop %v1669
  %v1671 = vmul.f32 1.0, %v1670
  %v1672 = vmul.f32 %v1664, %v1365
  %v1673 = vmul.f32 %v1658, %v1665
  %v1674 = vadd.f32 %v1672, %v1673
  %v1675 = vtanh.pop %v1674
  %v1676 = vmul.f32 %v1671, %v1675
  %v1677 = vpack.c.bf16 %v1676, %v1676
  %v1678 = vpack.c.bf16 %v1561, %v1561
  %1679 = vmatprep.subr.bf16.mxu0 %v508
  %1680 = vmatpush1.bf16.msra.mxu0 %v507
  %1681 = vmatprep.subr.bf16.mxu0 %v512
  %1682 = vmatpush1.bf16.msra.mxu0 %v511
  %1683 = vmatprep.subr.bf16.mxu0 %v516
  %1684 = vmatpush1.bf16.msra.mxu0 %v515
  %1685 = vmatprep.subr.bf16.mxu0 %v520
  %1686 = vmatpush1.bf16.msra.mxu0 %v519
  %1687 = vmatprep.subr.bf16.mxu0 %v524
  %1688 = vmatpush1.bf16.msra.mxu0 %v523
  %1689 = vmatprep.subr.bf16.mxu0 %v528
  %1690 = vmatpush1.bf16.msra.mxu0 %v527
  %1691 = vmatprep.subr.bf16.mxu0 %v532
  %1692 = vmatpush1.bf16.msra.mxu0 %v531
  %1693 = vmatprep.subr.bf16.mxu0 %v536
  %1694 = vmatpush1.bf16.msra.mxu0 %v535
  %1695 = vmatprep.subr.bf16.mxu0 0
  %1696 = vmatpush1.bf16.msra.mxu0 0
  %1697 = vmatprep.subr.bf16.mxu0 0
  %1698 = vmatpush1.bf16.msra.mxu0 0
  %1699 = vmatprep.subr.bf16.mxu0 0
  %1700 = vmatpush1.bf16.msra.mxu0 0
  %1701 = vmatprep.subr.bf16.mxu0 0
  %1702 = vmatpush1.bf16.msra.mxu0 0
  %1703 = vmatprep.subr.bf16.mxu0 0
  %1704 = vmatpush1.bf16.msra.mxu0 0
  %1705 = vmatprep.subr.bf16.mxu0 0
  %1706 = vmatpush1.bf16.msra.mxu0 0
  %1707 = vmatprep.subr.bf16.mxu0 0
  %1708 = vmatpush1.bf16.msra.mxu0 0
  %1709 = vmatprep.subr.bf16.mxu0 0
  %1710 = vmatpush1.bf16.msra.mxu0 0
  %1711 = vmatprep.mubr.bf16.mxu0 0
  %1712 = vmatmul.mubr.bf16.gmra.mrb[0].mxu0 %v1678
  %v1713 = vpop.f32.mrb[0].mxu0
  %v1714 = vadd.f32 0.0, %v1713
  %v1715 = vpop.f32.mrb[0].mxu0
  %v1716 = vadd.f32 0.0, %v1715
  %v1717 = vpop.f32.mrb[0].mxu0
  %v1718 = vpop.f32.mrb[0].mxu0
  %1719 = vdwg.mxu0
  %1720 = vmatprep.subr.bf16.mxu0 %v510
  %1721 = vmatpush1.bf16.msra.mxu0 %v509
  %1722 = vmatprep.subr.bf16.mxu0 %v514
  %1723 = vmatpush1.bf16.msra.mxu0 %v513
  %1724 = vmatprep.subr.bf16.mxu0 %v518
  %1725 = vmatpush1.bf16.msra.mxu0 %v517
  %1726 = vmatprep.subr.bf16.mxu0 %v522
  %1727 = vmatpush1.bf16.msra.mxu0 %v521
  %1728 = vmatprep.subr.bf16.mxu0 %v526
  %1729 = vmatpush1.bf16.msra.mxu0 %v525
  %1730 = vmatprep.subr.bf16.mxu0 %v530
  %1731 = vmatpush1.bf16.msra.mxu0 %v529
  %1732 = vmatprep.subr.bf16.mxu0 %v534
  %1733 = vmatpush1.bf16.msra.mxu0 %v533
  %1734 = vmatprep.subr.bf16.mxu0 %v538
  %1735 = vmatpush1.bf16.msra.mxu0 %v537
  %1736 = vmatprep.subr.bf16.mxu0 0
  %1737 = vmatpush1.bf16.msra.mxu0 0
  %1738 = vmatprep.subr.bf16.mxu0 0
  %1739 = vmatpush1.bf16.msra.mxu0 0
  %1740 = vmatprep.subr.bf16.mxu0 0
  %1741 = vmatpush1.bf16.msra.mxu0 0
  %1742 = vmatprep.subr.bf16.mxu0 0
  %1743 = vmatpush1.bf16.msra.mxu0 0
  %1744 = vmatprep.subr.bf16.mxu0 0
  %1745 = vmatpush1.bf16.msra.mxu0 0
  %1746 = vmatprep.subr.bf16.mxu0 0
  %1747 = vmatpush1.bf16.msra.mxu0 0
  %1748 = vmatprep.subr.bf16.mxu0 0
  %1749 = vmatpush1.bf16.msra.mxu0 0
  %1750 = vmatprep.subr.bf16.mxu0 0
  %1751 = vmatpush1.bf16.msra.mxu0 0
  %1752 = vmatprep.mubr.bf16.mxu0 0
  %1753 = vmatmul.mubr.bf16.gmra.mrb[0].mxu0 %v1678
  %v1754 = vpop.f32.mrb[0].mxu0
  %v1755 = vadd.f32 0.0, %v1754
  %v1756 = vpop.f32.mrb[0].mxu0
  %v1757 = vadd.f32 0.0, %v1756
  %v1758 = vpop.f32.mrb[0].mxu0
  %v1759 = vpop.f32.mrb[0].mxu0
  %1760 = vdwg.mxu0
  %1761 = vmatprep.subr.bf16.mxu0 %v750
  %1762 = vmatpush1.bf16.msra.mxu0 %v749
  %1763 = vmatprep.subr.bf16.mxu0 %v754
  %1764 = vmatpush1.bf16.msra.mxu0 %v753
  %1765 = vmatprep.subr.bf16.mxu0 %v758
  %1766 = vmatpush1.bf16.msra.mxu0 %v757
  %1767 = vmatprep.subr.bf16.mxu0 %v762
  %1768 = vmatpush1.bf16.msra.mxu0 %v761
  %1769 = vmatprep.subr.bf16.mxu0 %v766
  %1770 = vmatpush1.bf16.msra.mxu0 %v765
  %1771 = vmatprep.subr.bf16.mxu0 %v770
  %1772 = vmatpush1.bf16.msra.mxu0 %v769
  %1773 = vmatprep.subr.bf16.mxu0 %v774
  %1774 = vmatpush1.bf16.msra.mxu0 %v773
  %1775 = vmatprep.subr.bf16.mxu0 %v778
  %1776 = vmatpush1.bf16.msra.mxu0 %v777
  %1777 = vmatprep.subr.bf16.mxu0 0
  %1778 = vmatpush1.bf16.msra.mxu0 0
  %1779 = vmatprep.subr.bf16.mxu0 0
  %1780 = vmatpush1.bf16.msra.mxu0 0
  %1781 = vmatprep.subr.bf16.mxu0 0
  %1782 = vmatpush1.bf16.msra.mxu0 0
  %1783 = vmatprep.subr.bf16.mxu0 0
  %1784 = vmatpush1.bf16.msra.mxu0 0
  %1785 = vmatprep.subr.bf16.mxu0 0
  %1786 = vmatpush1.bf16.msra.mxu0 0
  %1787 = vmatprep.subr.bf16.mxu0 0
  %1788 = vmatpush1.bf16.msra.mxu0 0
  %1789 = vmatprep.subr.bf16.mxu0 0
  %1790 = vmatpush1.bf16.msra.mxu0 0
  %1791 = vmatprep.subr.bf16.mxu0 0
  %1792 = vmatpush1.bf16.msra.mxu0 0
  %1793 = vmatprep.mubr.bf16.mxu0 0
  %1794 = vmatmul.mubr.bf16.gmra.mrb[0].mxu0 %v1677
  %v1795 = vpop.f32.mrb[0].mxu0
  %v1796 = vadd.f32 %v1714, %v1795
  %v1797 = vpop.f32.mrb[0].mxu0
  %v1798 = vadd.f32 %v1716, %v1797
  %v1799 = vpop.f32.mrb[0].mxu0
  %v1800 = vpop.f32.mrb[0].mxu0
  %1801 = vdwg.mxu0
  %1802 = vmatprep.subr.bf16.mxu0 %v752
  %1803 = vmatpush1.bf16.msra.mxu0 %v751
  %1804 = vmatprep.subr.bf16.mxu0 %v756
  %1805 = vmatpush1.bf16.msra.mxu0 %v755
  %1806 = vmatprep.subr.bf16.mxu0 %v760
  %1807 = vmatpush1.bf16.msra.mxu0 %v759
  %1808 = vmatprep.subr.bf16.mxu0 %v764
  %1809 = vmatpush1.bf16.msra.mxu0 %v763
  %1810 = vmatprep.subr.bf16.mxu0 %v768
  %1811 = vmatpush1.bf16.msra.mxu0 %v767
  %1812 = vmatprep.subr.bf16.mxu0 %v772
  %1813 = vmatpush1.bf16.msra.mxu0 %v771
  %1814 = vmatprep.subr.bf16.mxu0 %v776
  %1815 = vmatpush1.bf16.msra.mxu0 %v775
  %1816 = vmatprep.subr.bf16.mxu0 %v780
  %1817 = vmatpush1.bf16.msra.mxu0 %v779
  %1818 = vmatprep.subr.bf16.mxu0 0
  %1819 = vmatpush1.bf16.msra.mxu0 0
  %1820 = vmatprep.subr.bf16.mxu0 0
  %1821 = vmatpush1.bf16.msra.mxu0 0
  %1822 = vmatprep.subr.bf16.mxu0 0
  %1823 = vmatpush1.bf16.msra.mxu0 0
  %1824 = vmatprep.subr.bf16.mxu0 0
  %1825 = vmatpush1.bf16.msra.mxu0 0
  %1826 = vmatprep.subr.bf16.mxu0 0
  %1827 = vmatpush1.bf16.msra.mxu0 0
  %1828 = vmatprep.subr.bf16.mxu0 0
  %1829 = vmatpush1.bf16.msra.mxu0 0
  %1830 = vmatprep.subr.bf16.mxu0 0
  %1831 = vmatpush1.bf16.msra.mxu0 0
  %1832 = vmatprep.subr.bf16.mxu0 0
  %1833 = vmatpush1.bf16.msra.mxu0 0
  %1834 = vmatprep.mubr.bf16.mxu0 0
  %1835 = vmatmul.mubr.bf16.gmra.mrb[0].mxu0 %v1677
  %v1836 = vpop.f32.mrb[0].mxu0
  %v1837 = vadd.f32 %v1755, %v1836
  %v1838 = vpop.f32.mrb[0].mxu0
  %v1839 = vadd.f32 %v1757, %v1838
  %v1840 = vpop.f32.mrb[0].mxu0
  %v1841 = vpop.f32.mrb[0].mxu0
  %1842 = vdwg.mxu0
  %v1843 = vadd.f32 %v1796, %v899
  %v1844 = vadd.f32 %v1798, %v903
  %v1845 = vadd.f32 %v1837, %v907
  %v1846 = vadd.f32 %v1839, %v911
  %v1847 = vxor.u32 %v1843, 2147483648
  %v1848 = vmul.f32 %v1847, 1.442695
  %v1849 = vpow.pop %v1848
  %v1850 = vadd.f32 %v1849, 1.0
  %v1851 = vrcp.pop %v1850
  %v1852 = vmul.f32 1.0, %v1851
  %v1853 = vxor.u32 %v1844, 2147483648
  %v1854 = vmul.f32 %v1853, 1.442695
  %v1855 = vpow.pop %v1854
  %v1856 = vadd.f32 %v1855, 1.0
  %v1857 = vrcp.pop %v1856
  %v1858 = vmul.f32 1.0, %v1857
  %v1859 = vtanh.pop %v1845
  %v1860 = vxor.u32 %v1846, 2147483648
  %v1861 = vmul.f32 %v1860, 1.442695
  %v1862 = vpow.pop %v1861
  %v1863 = vadd.f32 %v1862, 1.0
  %v1864 = vrcp.pop %v1863
  %v1865 = vmul.f32 1.0, %v1864
  %v1866 = vmul.f32 %v1858, %v1559
  %v1867 = vmul.f32 %v1852, %v1859
  %v1868 = vadd.f32 %v1866, %v1867
  %v1869 = vtanh.pop %v1868
  %v1870 = vmul.f32 %v1865, %v1869
  %s1871 = scalar_lea.vmem %s0, 128
  %v1872 = vld [vmem:[%s1871] sm:$0xff]
  %v1873 = vld [vmem:[%s1871 + $0x8] sm:$0xff]
  %v1874 = vld [vmem:[%s1871 + $0x10] sm:$0xff]
  %v1875 = vld [vmem:[%s1871 + $0x18] sm:$0xff]
  %1876 = vmatprep.subr.bf16.mxu0 %v236
  %1877 = vmatpush1.bf16.msra.mxu0 %v235
  %1878 = vmatprep.subr.bf16.mxu0 %v240
  %1879 = vmatpush1.bf16.msra.mxu0 %v239
  %1880 = vmatprep.subr.bf16.mxu0 %v244
  %1881 = vmatpush1.bf16.msra.mxu0 %v243
  %1882 = vmatprep.subr.bf16.mxu0 %v248
  %1883 = vmatpush1.bf16.msra.mxu0 %v247
  %1884 = vmatprep.subr.bf16.mxu0 %v252
  %1885 = vmatpush1.bf16.msra.mxu0 %v251
  %1886 = vmatprep.subr.bf16.mxu0 %v256
  %1887 = vmatpush1.bf16.msra.mxu0 %v255
  %1888 = vmatprep.subr.bf16.mxu0 %v260
  %1889 = vmatpush1.bf16.msra.mxu0 %v259
  %1890 = vmatprep.subr.bf16.mxu0 %v264
  %1891 = vmatpush1.bf16.msra.mxu0 %v263
  %1892 = vmatprep.subr.bf16.mxu0 0
  %1893 = vmatpush1.bf16.msra.mxu0 0
  %1894 = vmatprep.subr.bf16.mxu0 0
  %1895 = vmatpush1.bf16.msra.mxu0 0
  %1896 = vmatprep.subr.bf16.mxu0 0
  %1897 = vmatpush1.bf16.msra.mxu0 0
  %1898 = vmatprep.subr.bf16.mxu0 0
  %1899 = vmatpush1.bf16.msra.mxu0 0
  %1900 = vmatprep.subr.bf16.mxu0 0
  %1901 = vmatpush1.bf16.msra.mxu0 0
  %1902 = vmatprep.subr.bf16.mxu0 0
  %1903 = vmatpush1.bf16.msra.mxu0 0
  %1904 = vmatprep.subr.bf16.mxu0 0
  %1905 = vmatpush1.bf16.msra.mxu0 0
  %1906 = vmatprep.subr.bf16.mxu0 0
  %1907 = vmatpush1.bf16.msra.mxu0 0
  %1908 = vmatprep.mubr.bf16.mxu0 0
  %1909 = vmatmul.mubr.bf16.gmra.mrb[0].mxu0 %v1677
  %v1910 = vpop.f32.mrb[0].mxu0
  %v1911 = vadd.f32 0.0, %v1910
  %v1912 = vpop.f32.mrb[0].mxu0
  %v1913 = vadd.f32 0.0, %v1912
  %v1914 = vpop.f32.mrb[0].mxu0
  %v1915 = vpop.f32.mrb[0].mxu0
  %1916 = vdwg.mxu0
  %1917 = vmatprep.subr.bf16.mxu0 %v238
  %1918 = vmatpush1.bf16.msra.mxu0 %v237
  %1919 = vmatprep.subr.bf16.mxu0 %v242
  %1920 = vmatpush1.bf16.msra.mxu0 %v241
  %1921 = vmatprep.subr.bf16.mxu0 %v246
  %1922 = vmatpush1.bf16.msra.mxu0 %v245
  %1923 = vmatprep.subr.bf16.mxu0 %v250
  %1924 = vmatpush1.bf16.msra.mxu0 %v249
  %1925 = vmatprep.subr.bf16.mxu0 %v254
  %1926 = vmatpush1.bf16.msra.mxu0 %v253
  %1927 = vmatprep.subr.bf16.mxu0 %v258
  %1928 = vmatpush1.bf16.msra.mxu0 %v257
  %1929 = vmatprep.subr.bf16.mxu0 %v262
  %1930 = vmatpush1.bf16.msra.mxu0 %v261
  %1931 = vmatprep.subr.bf16.mxu0 %v266
  %1932 = vmatpush1.bf16.msra.mxu0 %v265
  %1933 = vmatprep.subr.bf16.mxu0 0
  %1934 = vmatpush1.bf16.msra.mxu0 0
  %1935 = vmatprep.subr.bf16.mxu0 0
  %1936 = vmatpush1.bf16.msra.mxu0 0
  %1937 = vmatprep.subr.bf16.mxu0 0
  %1938 = vmatpush1.bf16.msra.mxu0 0
  %1939 = vmatprep.subr.bf16.mxu0 0
  %1940 = vmatpush1.bf16.msra.mxu0 0
  %1941 = vmatprep.subr.bf16.mxu0 0
  %1942 = vmatpush1.bf16.msra.mxu0 0
  %1943 = vmatprep.subr.bf16.mxu0 0
  %1944 = vmatpush1.bf16.msra.mxu0 0
  %1945 = vmatprep.subr.bf16.mxu0 0
  %1946 = vmatpush1.bf16.msra.mxu0 0
  %1947 = vmatprep.subr.bf16.mxu0 0
  %1948 = vmatpush1.bf16.msra.mxu0 0
  %1949 = vmatprep.mubr.bf16.mxu0 0
  %1950 = vmatmul.mubr.bf16.gmra.mrb[0].mxu0 %v1677
  %v1951 = vpop.f32.mrb[0].mxu0
  %v1952 = vadd.f32 0.0, %v1951
  %v1953 = vpop.f32.mrb[0].mxu0
  %v1954 = vadd.f32 0.0, %v1953
  %v1955 = vpop.f32.mrb[0].mxu0
  %v1956 = vpop.f32.mrb[0].mxu0
  %1957 = vdwg.mxu0
  %v1958 = vadd.f32 %v1872, %v1911
  %v1959 = vadd.f32 %v1873, %v1913
  %v1960 = vadd.f32 %v1874, %v1952
  %v1961 = vadd.f32 %v1875, %v1954
  %v1962 = vxor.u32 %v1958, 2147483648
  %v1963 = vmul.f32 %v1962, 1.442695
  %v1964 = vpow.pop %v1963
  %v1965 = vadd.f32 %v1964, 1.0
  %v1966 = vrcp.pop %v1965
  %v1967 = vmul.f32 1.0, %v1966
  %v1968 = vxor.u32 %v1959, 2147483648
  %v1969 = vmul.f32 %v1968, 1.442695
  %v1970 = vpow.pop %v1969
  %v1971 = vadd.f32 %v1970, 1.0
  %v1972 = vrcp.pop %v1971
  %v1973 = vmul.f32 1.0, %v1972
  %v1974 = vtanh.pop %v1960
  %v1975 = vxor.u32 %v1961, 2147483648
  %v1976 = vmul.f32 %v1975, 1.442695
  %v1977 = vpow.pop %v1976
  %v1978 = vadd.f32 %v1977, 1.0
  %v1979 = vrcp.pop %v1978
  %v1980 = vmul.f32 1.0, %v1979
  %v1981 = vmul.f32 %v1973, %v1674
  %v1982 = vmul.f32 %v1967, %v1974
  %v1983 = vadd.f32 %v1981, %v1982
  %v1984 = vtanh.pop %v1983
  %v1985 = vmul.f32 %v1980, %v1984
  %v1986 = vpack.c.bf16 %v1985, %v1985
  %v1987 = vpack.c.bf16 %v1870, %v1870
  %1988 = vmatprep.subr.bf16.mxu0 %v508
  %1989 = vmatpush1.bf16.msra.mxu0 %v507
  %1990 = vmatprep.subr.bf16.mxu0 %v512
  %1991 = vmatpush1.bf16.msra.mxu0 %v511
  %1992 = vmatprep.subr.bf16.mxu0 %v516
  %1993 = vmatpush1.bf16.msra.mxu0 %v515
  %1994 = vmatprep.subr.bf16.mxu0 %v520
  %1995 = vmatpush1.bf16.msra.mxu0 %v519
  %1996 = vmatprep.subr.bf16.mxu0 %v524
  %1997 = vmatpush1.bf16.msra.mxu0 %v523
  %1998 = vmatprep.subr.bf16.mxu0 %v528
  %1999 = vmatpush1.bf16.msra.mxu0 %v527
  %2000 = vmatprep.subr.bf16.mxu0 %v532
  %2001 = vmatpush1.bf16.msra.mxu0 %v531
  %2002 = vmatprep.subr.bf16.mxu0 %v536
  %2003 = vmatpush1.bf16.msra.mxu0 %v535
  %2004 = vmatprep.subr.bf16.mxu0 0
  %2005 = vmatpush1.bf16.msra.mxu0 0
  %2006 = vmatprep.subr.bf16.mxu0 0
  %2007 = vmatpush1.bf16.msra.mxu0 0
  %2008 = vmatprep.subr.bf16.mxu0 0
  %2009 = vmatpush1.bf16.msra.mxu0 0
  %2010 = vmatprep.subr.bf16.mxu0 0
  %2011 = vmatpush1.bf16.msra.mxu0 0
  %2012 = vmatprep.subr.bf16.mxu0 0
  %2013 = vmatpush1.bf16.msra.mxu0 0
  %2014 = vmatprep.subr.bf16.mxu0 0
  %2015 = vmatpush1.bf16.msra.mxu0 0
  %2016 = vmatprep.subr.bf16.mxu0 0
  %2017 = vmatpush1.bf16.msra.mxu0 0
  %2018 = vmatprep.subr.bf16.mxu0 0
  %2019 = vmatpush1.bf16.msra.mxu0 0
  %2020 = vmatprep.mubr.bf16.mxu0 0
  %2021 = vmatmul.mubr.bf16.gmra.mrb[0].mxu0 %v1987
  %v2022 = vpop.f32.mrb[0].mxu0
  %v2023 = vadd.f32 0.0, %v2022
  %v2024 = vpop.f32.mrb[0].mxu0
  %v2025 = vadd.f32 0.0, %v2024
  %v2026 = vpop.f32.mrb[0].mxu0
  %v2027 = vpop.f32.mrb[0].mxu0
  %2028 = vdwg.mxu0
  %2029 = vmatprep.subr.bf16.mxu0 %v510
  %2030 = vmatpush1.bf16.msra.mxu0 %v509
  %2031 = vmatprep.subr.bf16.mxu0 %v514
  %2032 = vmatpush1.bf16.msra.mxu0 %v513
  %2033 = vmatprep.subr.bf16.mxu0 %v518
  %2034 = vmatpush1.bf16.msra.mxu0 %v517
  %2035 = vmatprep.subr.bf16.mxu0 %v522
  %2036 = vmatpush1.bf16.msra.mxu0 %v521
  %2037 = vmatprep.subr.bf16.mxu0 %v526
  %2038 = vmatpush1.bf16.msra.mxu0 %v525
  %2039 = vmatprep.subr.bf16.mxu0 %v530
  %2040 = vmatpush1.bf16.msra.mxu0 %v529
  %2041 = vmatprep.subr.bf16.mxu0 %v534
  %2042 = vmatpush1.bf16.msra.mxu0 %v533
  %2043 = vmatprep.subr.bf16.mxu0 %v538
  %2044 = vmatpush1.bf16.msra.mxu0 %v537
  %2045 = vmatprep.subr.bf16.mxu0 0
  %2046 = vmatpush1.bf16.msra.mxu0 0
  %2047 = vmatprep.subr.bf16.mxu0 0
  %2048 = vmatpush1.bf16.msra.mxu0 0
  %2049 = vmatprep.subr.bf16.mxu0 0
  %2050 = vmatpush1.bf16.msra.mxu0 0
  %2051 = vmatprep.subr.bf16.mxu0 0
  %2052 = vmatpush1.bf16.msra.mxu0 0
  %2053 = vmatprep.subr.bf16.mxu0 0
  %2054 = vmatpush1.bf16.msra.mxu0 0
  %2055 = vmatprep.subr.bf16.mxu0 0
  %2056 = vmatpush1.bf16.msra.mxu0 0
  %2057 = vmatprep.subr.bf16.mxu0 0
  %2058 = vmatpush1.bf16.msra.mxu0 0
  %2059 = vmatprep.subr.bf16.mxu0 0
  %2060 = vmatpush1.bf16.msra.mxu0 0
  %2061 = vmatprep.mubr.bf16.mxu0 0
  %2062 = vmatmul.mubr.bf16.gmra.mrb[0].mxu0 %v1987
  %v2063 = vpop.f32.mrb[0].mxu0
  %v2064 = vadd.f32 0.0, %v2063
  %v2065 = vpop.f32.mrb[0].mxu0
  %v2066 = vadd.f32 0.0, %v2065
  %v2067 = vpop.f32.mrb[0].mxu0
  %v2068 = vpop.f32.mrb[0].mxu0
  %2069 = vdwg.mxu0
  %2070 = vmatprep.subr.bf16.mxu0 %v750
  %2071 = vmatpush1.bf16.msra.mxu0 %v749
  %2072 = vmatprep.subr.bf16.mxu0 %v754
  %2073 = vmatpush1.bf16.msra.mxu0 %v753
  %2074 = vmatprep.subr.bf16.mxu0 %v758
  %2075 = vmatpush1.bf16.msra.mxu0 %v757
  %2076 = vmatprep.subr.bf16.mxu0 %v762
  %2077 = vmatpush1.bf16.msra.mxu0 %v761
  %2078 = vmatprep.subr.bf16.mxu0 %v766
  %2079 = vmatpush1.bf16.msra.mxu0 %v765
  %2080 = vmatprep.subr.bf16.mxu0 %v770
  %2081 = vmatpush1.bf16.msra.mxu0 %v769
  %2082 = vmatprep.subr.bf16.mxu0 %v774
  %2083 = vmatpush1.bf16.msra.mxu0 %v773
  %2084 = vmatprep.subr.bf16.mxu0 %v778
  %2085 = vmatpush1.bf16.msra.mxu0 %v777
  %2086 = vmatprep.subr.bf16.mxu0 0
  %2087 = vmatpush1.bf16.msra.mxu0 0
  %2088 = vmatprep.subr.bf16.mxu0 0
  %2089 = vmatpush1.bf16.msra.mxu0 0
  %2090 = vmatprep.subr.bf16.mxu0 0
  %2091 = vmatpush1.bf16.msra.mxu0 0
  %2092 = vmatprep.subr.bf16.mxu0 0
  %2093 = vmatpush1.bf16.msra.mxu0 0
  %2094 = vmatprep.subr.bf16.mxu0 0
  %2095 = vmatpush1.bf16.msra.mxu0 0
  %2096 = vmatprep.subr.bf16.mxu0 0
  %2097 = vmatpush1.bf16.msra.mxu0 0
  %2098 = vmatprep.subr.bf16.mxu0 0
  %2099 = vmatpush1.bf16.msra.mxu0 0
  %2100 = vmatprep.subr.bf16.mxu0 0
  %2101 = vmatpush1.bf16.msra.mxu0 0
  %2102 = vmatprep.mubr.bf16.mxu0 0
  %2103 = vmatmul.mubr.bf16.gmra.mrb[0].mxu0 %v1986
  %v2104 = vpop.f32.mrb[0].mxu0
  %v2105 = vadd.f32 %v2023, %v2104
  %v2106 = vpop.f32.mrb[0].mxu0
  %v2107 = vadd.f32 %v2025, %v2106
  %v2108 = vpop.f32.mrb[0].mxu0
  %v2109 = vpop.f32.mrb[0].mxu0
  %2110 = vdwg.mxu0
  %2111 = vmatprep.subr.bf16.mxu0 %v752
  %2112 = vmatpush1.bf16.msra.mxu0 %v751
  %2113 = vmatprep.subr.bf16.mxu0 %v756
  %2114 = vmatpush1.bf16.msra.mxu0 %v755
  %2115 = vmatprep.subr.bf16.mxu0 %v760
  %2116 = vmatpush1.bf16.msra.mxu0 %v759
  %2117 = vmatprep.subr.bf16.mxu0 %v764
  %2118 = vmatpush1.bf16.msra.mxu0 %v763
  %2119 = vmatprep.subr.bf16.mxu0 %v768
  %2120 = vmatpush1.bf16.msra.mxu0 %v767
  %2121 = vmatprep.subr.bf16.mxu0 %v772
  %2122 = vmatpush1.bf16.msra.mxu0 %v771
  %2123 = vmatprep.subr.bf16.mxu0 %v776
  %2124 = vmatpush1.bf16.msra.mxu0 %v775
  %2125 = vmatprep.subr.bf16.mxu0 %v780
  %2126 = vmatpush1.bf16.msra.mxu0 %v779
  %2127 = vmatprep.subr.bf16.mxu0 0
  %2128 = vmatpush1.bf16.msra.mxu0 0
  %2129 = vmatprep.subr.bf16.mxu0 0
  %2130 = vmatpush1.bf16.msra.mxu0 0
  %2131 = vmatprep.subr.bf16.mxu0 0
  %2132 = vmatpush1.bf16.msra.mxu0 0
  %2133 = vmatprep.subr.bf16.mxu0 0
  %2134 = vmatpush1.bf16.msra.mxu0 0
  %2135 = vmatprep.subr.bf16.mxu0 0
  %2136 = vmatpush1.bf16.msra.mxu0 0
  %2137 = vmatprep.subr.bf16.mxu0 0
  %2138 = vmatpush1.bf16.msra.mxu0 0
  %2139 = vmatprep.subr.bf16.mxu0 0
  %2140 = vmatpush1.bf16.msra.mxu0 0
  %2141 = vmatprep.subr.bf16.mxu0 0
  %2142 = vmatpush1.bf16.msra.mxu0 0
  %2143 = vmatprep.mubr.bf16.mxu0 0
  %2144 = vmatmul.mubr.bf16.gmra.mrb[0].mxu0 %v1986
  %v2145 = vpop.f32.mrb[0].mxu0
  %v2146 = vadd.f32 %v2064, %v2145
  %v2147 = vpop.f32.mrb[0].mxu0
  %v2148 = vadd.f32 %v2066, %v2147
  %v2149 = vpop.f32.mrb[0].mxu0
  %v2150 = vpop.f32.mrb[0].mxu0
  %2151 = vdwg.mxu0
  %v2152 = vadd.f32 %v2105, %v899
  %v2153 = vadd.f32 %v2107, %v903
  %v2154 = vadd.f32 %v2146, %v907
  %v2155 = vadd.f32 %v2148, %v911
  %v2156 = vxor.u32 %v2152, 2147483648
  %v2157 = vmul.f32 %v2156, 1.442695
  %v2158 = vpow.pop %v2157
  %v2159 = vadd.f32 %v2158, 1.0
  %v2160 = vrcp.pop %v2159
  %v2161 = vmul.f32 1.0, %v2160
  %v2162 = vxor.u32 %v2153, 2147483648
  %v2163 = vmul.f32 %v2162, 1.442695
  %v2164 = vpow.pop %v2163
  %v2165 = vadd.f32 %v2164, 1.0
  %v2166 = vrcp.pop %v2165
  %v2167 = vmul.f32 1.0, %v2166
  %v2168 = vtanh.pop %v2154
  %v2169 = vxor.u32 %v2155, 2147483648
  %v2170 = vmul.f32 %v2169, 1.442695
  %v2171 = vpow.pop %v2170
  %v2172 = vadd.f32 %v2171, 1.0
  %v2173 = vrcp.pop %v2172
  %v2174 = vmul.f32 1.0, %v2173
  %v2175 = vmul.f32 %v2167, %v1868
  %v2176 = vmul.f32 %v2161, %v2168
  %v2177 = vadd.f32 %v2175, %v2176
  %v2178 = vtanh.pop %v2177
  %v2179 = vmul.f32 %v2174, %v2178
  %s2180 = scalar_lea.vmem %s0, 160
  %v2181 = vld [vmem:[%s2180] sm:$0xff]
  %v2182 = vld [vmem:[%s2180 + $0x8] sm:$0xff]
  %v2183 = vld [vmem:[%s2180 + $0x10] sm:$0xff]
  %v2184 = vld [vmem:[%s2180 + $0x18] sm:$0xff]
  %2185 = vmatprep.subr.bf16.mxu0 %v236
  %2186 = vmatpush1.bf16.msra.mxu0 %v235
  %2187 = vmatprep.subr.bf16.mxu0 %v240
  %2188 = vmatpush1.bf16.msra.mxu0 %v239
  %2189 = vmatprep.subr.bf16.mxu0 %v244
  %2190 = vmatpush1.bf16.msra.mxu0 %v243
  %2191 = vmatprep.subr.bf16.mxu0 %v248
  %2192 = vmatpush1.bf16.msra.mxu0 %v247
  %2193 = vmatprep.subr.bf16.mxu0 %v252
  %2194 = vmatpush1.bf16.msra.mxu0 %v251
  %2195 = vmatprep.subr.bf16.mxu0 %v256
  %2196 = vmatpush1.bf16.msra.mxu0 %v255
  %2197 = vmatprep.subr.bf16.mxu0 %v260
  %2198 = vmatpush1.bf16.msra.mxu0 %v259
  %2199 = vmatprep.subr.bf16.mxu0 %v264
  %2200 = vmatpush1.bf16.msra.mxu0 %v263
  %2201 = vmatprep.subr.bf16.mxu0 0
  %2202 = vmatpush1.bf16.msra.mxu0 0
  %2203 = vmatprep.subr.bf16.mxu0 0
  %2204 = vmatpush1.bf16.msra.mxu0 0
  %2205 = vmatprep.subr.bf16.mxu0 0
  %2206 = vmatpush1.bf16.msra.mxu0 0
  %2207 = vmatprep.subr.bf16.mxu0 0
  %2208 = vmatpush1.bf16.msra.mxu0 0
  %2209 = vmatprep.subr.bf16.mxu0 0
  %2210 = vmatpush1.bf16.msra.mxu0 0
  %2211 = vmatprep.subr.bf16.mxu0 0
  %2212 = vmatpush1.bf16.msra.mxu0 0
  %2213 = vmatprep.subr.bf16.mxu0 0
  %2214 = vmatpush1.bf16.msra.mxu0 0
  %2215 = vmatprep.subr.bf16.mxu0 0
  %2216 = vmatpush1.bf16.msra.mxu0 0
  %2217 = vmatprep.mubr.bf16.mxu0 0
  %2218 = vmatmul.mubr.bf16.gmra.mrb[0].mxu0 %v1986
  %v2219 = vpop.f32.mrb[0].mxu0
  %v2220 = vadd.f32 0.0, %v2219
  %v2221 = vpop.f32.mrb[0].mxu0
  %v2222 = vadd.f32 0.0, %v2221
  %v2223 = vpop.f32.mrb[0].mxu0
  %v2224 = vpop.f32.mrb[0].mxu0
  %2225 = vdwg.mxu0
  %2226 = vmatprep.subr.bf16.mxu0 %v238
  %2227 = vmatpush1.bf16.msra.mxu0 %v237
  %2228 = vmatprep.subr.bf16.mxu0 %v242
  %2229 = vmatpush1.bf16.msra.mxu0 %v241
  %2230 = vmatprep.subr.bf16.mxu0 %v246
  %2231 = vmatpush1.bf16.msra.mxu0 %v245
  %2232 = vmatprep.subr.bf16.mxu0 %v250
  %2233 = vmatpush1.bf16.msra.mxu0 %v249
  %2234 = vmatprep.subr.bf16.mxu0 %v254
  %2235 = vmatpush1.bf16.msra.mxu0 %v253
  %2236 = vmatprep.subr.bf16.mxu0 %v258
  %2237 = vmatpush1.bf16.msra.mxu0 %v257
  %2238 = vmatprep.subr.bf16.mxu0 %v262
  %2239 = vmatpush1.bf16.msra.mxu0 %v261
  %2240 = vmatprep.subr.bf16.mxu0 %v266
  %2241 = vmatpush1.bf16.msra.mxu0 %v265
  %2242 = vmatprep.subr.bf16.mxu0 0
  %2243 = vmatpush1.bf16.msra.mxu0 0
  %2244 = vmatprep.subr.bf16.mxu0 0
  %2245 = vmatpush1.bf16.msra.mxu0 0
  %2246 = vmatprep.subr.bf16.mxu0 0
  %2247 = vmatpush1.bf16.msra.mxu0 0
  %2248 = vmatprep.subr.bf16.mxu0 0
  %2249 = vmatpush1.bf16.msra.mxu0 0
  %2250 = vmatprep.subr.bf16.mxu0 0
  %2251 = vmatpush1.bf16.msra.mxu0 0
  %2252 = vmatprep.subr.bf16.mxu0 0
  %2253 = vmatpush1.bf16.msra.mxu0 0
  %2254 = vmatprep.subr.bf16.mxu0 0
  %2255 = vmatpush1.bf16.msra.mxu0 0
  %2256 = vmatprep.subr.bf16.mxu0 0
  %2257 = vmatpush1.bf16.msra.mxu0 0
  %2258 = vmatprep.mubr.bf16.mxu0 0
  %2259 = vmatmul.mubr.bf16.gmra.mrb[0].mxu0 %v1986
  %v2260 = vpop.f32.mrb[0].mxu0
  %v2261 = vadd.f32 0.0, %v2260
  %v2262 = vpop.f32.mrb[0].mxu0
  %v2263 = vadd.f32 0.0, %v2262
  %v2264 = vpop.f32.mrb[0].mxu0
  %v2265 = vpop.f32.mrb[0].mxu0
  %2266 = vdwg.mxu0
  %v2267 = vadd.f32 %v2181, %v2220
  %v2268 = vadd.f32 %v2182, %v2222
  %v2269 = vadd.f32 %v2183, %v2261
  %v2270 = vadd.f32 %v2184, %v2263
  %v2271 = vxor.u32 %v2267, 2147483648
  %v2272 = vmul.f32 %v2271, 1.442695
  %v2273 = vpow.pop %v2272
  %v2274 = vadd.f32 %v2273, 1.0
  %v2275 = vrcp.pop %v2274
  %v2276 = vmul.f32 1.0, %v2275
  %v2277 = vxor.u32 %v2268, 2147483648
  %v2278 = vmul.f32 %v2277, 1.442695
  %v2279 = vpow.pop %v2278
  %v2280 = vadd.f32 %v2279, 1.0
  %v2281 = vrcp.pop %v2280
  %v2282 = vmul.f32 1.0, %v2281
  %v2283 = vtanh.pop %v2269
  %v2284 = vxor.u32 %v2270, 2147483648
  %v2285 = vmul.f32 %v2284, 1.442695
  %v2286 = vpow.pop %v2285
  %v2287 = vadd.f32 %v2286, 1.0
  %v2288 = vrcp.pop %v2287
  %v2289 = vmul.f32 1.0, %v2288
  %v2290 = vmul.f32 %v2282, %v1983
  %v2291 = vmul.f32 %v2276, %v2283
  %v2292 = vadd.f32 %v2290, %v2291
  %v2293 = vtanh.pop %v2292
  %v2294 = vmul.f32 %v2289, %v2293
  %v2295 = vpack.c.bf16 %v2294, %v2294
  %v2296 = vpack.c.bf16 %v2179, %v2179
  %2297 = vmatprep.subr.bf16.mxu0 %v508
  %2298 = vmatpush1.bf16.msra.mxu0 %v507
  %2299 = vmatprep.subr.bf16.mxu0 %v512
  %2300 = vmatpush1.bf16.msra.mxu0 %v511
  %2301 = vmatprep.subr.bf16.mxu0 %v516
  %2302 = vmatpush1.bf16.msra.mxu0 %v515
  %2303 = vmatprep.subr.bf16.mxu0 %v520
  %2304 = vmatpush1.bf16.msra.mxu0 %v519
  %2305 = vmatprep.subr.bf16.mxu0 %v524
  %2306 = vmatpush1.bf16.msra.mxu0 %v523
  %2307 = vmatprep.subr.bf16.mxu0 %v528
  %2308 = vmatpush1.bf16.msra.mxu0 %v527
  %2309 = vmatprep.subr.bf16.mxu0 %v532
  %2310 = vmatpush1.bf16.msra.mxu0 %v531
  %2311 = vmatprep.subr.bf16.mxu0 %v536
  %2312 = vmatpush1.bf16.msra.mxu0 %v535
  %2313 = vmatprep.subr.bf16.mxu0 0
  %2314 = vmatpush1.bf16.msra.mxu0 0
  %2315 = vmatprep.subr.bf16.mxu0 0
  %2316 = vmatpush1.bf16.msra.mxu0 0
  %2317 = vmatprep.subr.bf16.mxu0 0
  %2318 = vmatpush1.bf16.msra.mxu0 0
  %2319 = vmatprep.subr.bf16.mxu0 0
  %2320 = vmatpush1.bf16.msra.mxu0 0
  %2321 = vmatprep.subr.bf16.mxu0 0
  %2322 = vmatpush1.bf16.msra.mxu0 0
  %2323 = vmatprep.subr.bf16.mxu0 0
  %2324 = vmatpush1.bf16.msra.mxu0 0
  %2325 = vmatprep.subr.bf16.mxu0 0
  %2326 = vmatpush1.bf16.msra.mxu0 0
  %2327 = vmatprep.subr.bf16.mxu0 0
  %2328 = vmatpush1.bf16.msra.mxu0 0
  %2329 = vmatprep.mubr.bf16.mxu0 0
  %2330 = vmatmul.mubr.bf16.gmra.mrb[0].mxu0 %v2296
  %v2331 = vpop.f32.mrb[0].mxu0
  %v2332 = vadd.f32 0.0, %v2331
  %v2333 = vpop.f32.mrb[0].mxu0
  %v2334 = vadd.f32 0.0, %v2333
  %v2335 = vpop.f32.mrb[0].mxu0
  %v2336 = vpop.f32.mrb[0].mxu0
  %2337 = vdwg.mxu0
  %2338 = vmatprep.subr.bf16.mxu0 %v510
  %2339 = vmatpush1.bf16.msra.mxu0 %v509
  %2340 = vmatprep.subr.bf16.mxu0 %v514
  %2341 = vmatpush1.bf16.msra.mxu0 %v513
  %2342 = vmatprep.subr.bf16.mxu0 %v518
  %2343 = vmatpush1.bf16.msra.mxu0 %v517
  %2344 = vmatprep.subr.bf16.mxu0 %v522
  %2345 = vmatpush1.bf16.msra.mxu0 %v521
  %2346 = vmatprep.subr.bf16.mxu0 %v526
  %2347 = vmatpush1.bf16.msra.mxu0 %v525
  %2348 = vmatprep.subr.bf16.mxu0 %v530
  %2349 = vmatpush1.bf16.msra.mxu0 %v529
  %2350 = vmatprep.subr.bf16.mxu0 %v534
  %2351 = vmatpush1.bf16.msra.mxu0 %v533
  %2352 = vmatprep.subr.bf16.mxu0 %v538
  %2353 = vmatpush1.bf16.msra.mxu0 %v537
  %2354 = vmatprep.subr.bf16.mxu0 0
  %2355 = vmatpush1.bf16.msra.mxu0 0
  %2356 = vmatprep.subr.bf16.mxu0 0
  %2357 = vmatpush1.bf16.msra.mxu0 0
  %2358 = vmatprep.subr.bf16.mxu0 0
  %2359 = vmatpush1.bf16.msra.mxu0 0
  %2360 = vmatprep.subr.bf16.mxu0 0
  %2361 = vmatpush1.bf16.msra.mxu0 0
  %2362 = vmatprep.subr.bf16.mxu0 0
  %2363 = vmatpush1.bf16.msra.mxu0 0
  %2364 = vmatprep.subr.bf16.mxu0 0
  %2365 = vmatpush1.bf16.msra.mxu0 0
  %2366 = vmatprep.subr.bf16.mxu0 0
  %2367 = vmatpush1.bf16.msra.mxu0 0
  %2368 = vmatprep.subr.bf16.mxu0 0
  %2369 = vmatpush1.bf16.msra.mxu0 0
  %2370 = vmatprep.mubr.bf16.mxu0 0
  %2371 = vmatmul.mubr.bf16.gmra.mrb[0].mxu0 %v2296
  %v2372 = vpop.f32.mrb[0].mxu0
  %v2373 = vadd.f32 0.0, %v2372
  %v2374 = vpop.f32.mrb[0].mxu0
  %v2375 = vadd.f32 0.0, %v2374
  %v2376 = vpop.f32.mrb[0].mxu0
  %v2377 = vpop.f32.mrb[0].mxu0
  %2378 = vdwg.mxu0
  %2379 = vmatprep.subr.bf16.mxu0 %v750
  %2380 = vmatpush1.bf16.msra.mxu0 %v749
  %2381 = vmatprep.subr.bf16.mxu0 %v754
  %2382 = vmatpush1.bf16.msra.mxu0 %v753
  %2383 = vmatprep.subr.bf16.mxu0 %v758
  %2384 = vmatpush1.bf16.msra.mxu0 %v757
  %2385 = vmatprep.subr.bf16.mxu0 %v762
  %2386 = vmatpush1.bf16.msra.mxu0 %v761
  %2387 = vmatprep.subr.bf16.mxu0 %v766
  %2388 = vmatpush1.bf16.msra.mxu0 %v765
  %2389 = vmatprep.subr.bf16.mxu0 %v770
  %2390 = vmatpush1.bf16.msra.mxu0 %v769
  %2391 = vmatprep.subr.bf16.mxu0 %v774
  %2392 = vmatpush1.bf16.msra.mxu0 %v773
  %2393 = vmatprep.subr.bf16.mxu0 %v778
  %2394 = vmatpush1.bf16.msra.mxu0 %v777
  %2395 = vmatprep.subr.bf16.mxu0 0
  %2396 = vmatpush1.bf16.msra.mxu0 0
  %2397 = vmatprep.subr.bf16.mxu0 0
  %2398 = vmatpush1.bf16.msra.mxu0 0
  %2399 = vmatprep.subr.bf16.mxu0 0
  %2400 = vmatpush1.bf16.msra.mxu0 0
  %2401 = vmatprep.subr.bf16.mxu0 0
  %2402 = vmatpush1.bf16.msra.mxu0 0
  %2403 = vmatprep.subr.bf16.mxu0 0
  %2404 = vmatpush1.bf16.msra.mxu0 0
  %2405 = vmatprep.subr.bf16.mxu0 0
  %2406 = vmatpush1.bf16.msra.mxu0 0
  %2407 = vmatprep.subr.bf16.mxu0 0
  %2408 = vmatpush1.bf16.msra.mxu0 0
  %2409 = vmatprep.subr.bf16.mxu0 0
  %2410 = vmatpush1.bf16.msra.mxu0 0
  %2411 = vmatprep.mubr.bf16.mxu0 0
  %2412 = vmatmul.mubr.bf16.gmra.mrb[0].mxu0 %v2295
  %v2413 = vpop.f32.mrb[0].mxu0
  %v2414 = vadd.f32 %v2332, %v2413
  %v2415 = vpop.f32.mrb[0].mxu0
  %v2416 = vadd.f32 %v2334, %v2415
  %v2417 = vpop.f32.mrb[0].mxu0
  %v2418 = vpop.f32.mrb[0].mxu0
  %2419 = vdwg.mxu0
  %2420 = vmatprep.subr.bf16.mxu0 %v752
  %2421 = vmatpush1.bf16.msra.mxu0 %v751
  %2422 = vmatprep.subr.bf16.mxu0 %v756
  %2423 = vmatpush1.bf16.msra.mxu0 %v755
  %2424 = vmatprep.subr.bf16.mxu0 %v760
  %2425 = vmatpush1.bf16.msra.mxu0 %v759
  %2426 = vmatprep.subr.bf16.mxu0 %v764
  %2427 = vmatpush1.bf16.msra.mxu0 %v763
  %2428 = vmatprep.subr.bf16.mxu0 %v768
  %2429 = vmatpush1.bf16.msra.mxu0 %v767
  %2430 = vmatprep.subr.bf16.mxu0 %v772
  %2431 = vmatpush1.bf16.msra.mxu0 %v771
  %2432 = vmatprep.subr.bf16.mxu0 %v776
  %2433 = vmatpush1.bf16.msra.mxu0 %v775
  %2434 = vmatprep.subr.bf16.mxu0 %v780
  %2435 = vmatpush1.bf16.msra.mxu0 %v779
  %2436 = vmatprep.subr.bf16.mxu0 0
  %2437 = vmatpush1.bf16.msra.mxu0 0
  %2438 = vmatprep.subr.bf16.mxu0 0
  %2439 = vmatpush1.bf16.msra.mxu0 0
  %2440 = vmatprep.subr.bf16.mxu0 0
  %2441 = vmatpush1.bf16.msra.mxu0 0
  %2442 = vmatprep.subr.bf16.mxu0 0
  %2443 = vmatpush1.bf16.msra.mxu0 0
  %2444 = vmatprep.subr.bf16.mxu0 0
  %2445 = vmatpush1.bf16.msra.mxu0 0
  %2446 = vmatprep.subr.bf16.mxu0 0
  %2447 = vmatpush1.bf16.msra.mxu0 0
  %2448 = vmatprep.subr.bf16.mxu0 0
  %2449 = vmatpush1.bf16.msra.mxu0 0
  %2450 = vmatprep.subr.bf16.mxu0 0
  %2451 = vmatpush1.bf16.msra.mxu0 0
  %2452 = vmatprep.mubr.bf16.mxu0 0
  %2453 = vmatmul.mubr.bf16.gmra.mrb[0].mxu0 %v2295
  %v2454 = vpop.f32.mrb[0].mxu0
  %v2455 = vadd.f32 %v2373, %v2454
  %v2456 = vpop.f32.mrb[0].mxu0
  %v2457 = vadd.f32 %v2375, %v2456
  %v2458 = vpop.f32.mrb[0].mxu0
  %v2459 = vpop.f32.mrb[0].mxu0
  %2460 = vdwg.mxu0
  %v2461 = vadd.f32 %v2414, %v899
  %v2462 = vadd.f32 %v2416, %v903
  %v2463 = vadd.f32 %v2455, %v907
  %v2464 = vadd.f32 %v2457, %v911
  %v2465 = vxor.u32 %v2461, 2147483648
  %v2466 = vmul.f32 %v2465, 1.442695
  %v2467 = vpow.pop %v2466
  %v2468 = vadd.f32 %v2467, 1.0
  %v2469 = vrcp.pop %v2468
  %v2470 = vmul.f32 1.0, %v2469
  %v2471 = vxor.u32 %v2462, 2147483648
  %v2472 = vmul.f32 %v2471, 1.442695
  %v2473 = vpow.pop %v2472
  %v2474 = vadd.f32 %v2473, 1.0
  %v2475 = vrcp.pop %v2474
  %v2476 = vmul.f32 1.0, %v2475
  %v2477 = vtanh.pop %v2463
  %v2478 = vxor.u32 %v2464, 2147483648
  %v2479 = vmul.f32 %v2478, 1.442695
  %v2480 = vpow.pop %v2479
  %v2481 = vadd.f32 %v2480, 1.0
  %v2482 = vrcp.pop %v2481
  %v2483 = vmul.f32 1.0, %v2482
  %v2484 = vmul.f32 %v2476, %v2177
  %v2485 = vmul.f32 %v2470, %v2477
  %v2486 = vadd.f32 %v2484, %v2485
  %v2487 = vtanh.pop %v2486
  %v2488 = vmul.f32 %v2483, %v2487
  %s2489 = scalar_lea.vmem %s0, 192
  %v2490 = vld [vmem:[%s2489] sm:$0xff]
  %v2491 = vld [vmem:[%s2489 + $0x8] sm:$0xff]
  %v2492 = vld [vmem:[%s2489 + $0x10] sm:$0xff]
  %v2493 = vld [vmem:[%s2489 + $0x18] sm:$0xff]
  %2494 = vmatprep.subr.bf16.mxu0 %v236
  %2495 = vmatpush1.bf16.msra.mxu0 %v235
  %2496 = vmatprep.subr.bf16.mxu0 %v240
  %2497 = vmatpush1.bf16.msra.mxu0 %v239
  %2498 = vmatprep.subr.bf16.mxu0 %v244
  %2499 = vmatpush1.bf16.msra.mxu0 %v243
  %2500 = vmatprep.subr.bf16.mxu0 %v248
  %2501 = vmatpush1.bf16.msra.mxu0 %v247
  %2502 = vmatprep.subr.bf16.mxu0 %v252
  %2503 = vmatpush1.bf16.msra.mxu0 %v251
  %2504 = vmatprep.subr.bf16.mxu0 %v256
  %2505 = vmatpush1.bf16.msra.mxu0 %v255
  %2506 = vmatprep.subr.bf16.mxu0 %v260
  %2507 = vmatpush1.bf16.msra.mxu0 %v259
  %2508 = vmatprep.subr.bf16.mxu0 %v264
  %2509 = vmatpush1.bf16.msra.mxu0 %v263
  %2510 = vmatprep.subr.bf16.mxu0 0
  %2511 = vmatpush1.bf16.msra.mxu0 0
  %2512 = vmatprep.subr.bf16.mxu0 0
  %2513 = vmatpush1.bf16.msra.mxu0 0
  %2514 = vmatprep.subr.bf16.mxu0 0
  %2515 = vmatpush1.bf16.msra.mxu0 0
  %2516 = vmatprep.subr.bf16.mxu0 0
  %2517 = vmatpush1.bf16.msra.mxu0 0
  %2518 = vmatprep.subr.bf16.mxu0 0
  %2519 = vmatpush1.bf16.msra.mxu0 0
  %2520 = vmatprep.subr.bf16.mxu0 0
  %2521 = vmatpush1.bf16.msra.mxu0 0
  %2522 = vmatprep.subr.bf16.mxu0 0
  %2523 = vmatpush1.bf16.msra.mxu0 0
  %2524 = vmatprep.subr.bf16.mxu0 0
  %2525 = vmatpush1.bf16.msra.mxu0 0
  %2526 = vmatprep.mubr.bf16.mxu0 0
  %2527 = vmatmul.mubr.bf16.gmra.mrb[0].mxu0 %v2295
  %v2528 = vpop.f32.mrb[0].mxu0
  %v2529 = vadd.f32 0.0, %v2528
  %v2530 = vpop.f32.mrb[0].mxu0
  %v2531 = vadd.f32 0.0, %v2530
  %v2532 = vpop.f32.mrb[0].mxu0
  %v2533 = vpop.f32.mrb[0].mxu0
  %2534 = vdwg.mxu0
  %2535 = vmatprep.subr.bf16.mxu0 %v238
  %2536 = vmatpush1.bf16.msra.mxu0 %v237
  %2537 = vmatprep.subr.bf16.mxu0 %v242
  %2538 = vmatpush1.bf16.msra.mxu0 %v241
  %2539 = vmatprep.subr.bf16.mxu0 %v246
  %2540 = vmatpush1.bf16.msra.mxu0 %v245
  %2541 = vmatprep.subr.bf16.mxu0 %v250
  %2542 = vmatpush1.bf16.msra.mxu0 %v249
  %2543 = vmatprep.subr.bf16.mxu0 %v254
  %2544 = vmatpush1.bf16.msra.mxu0 %v253
  %2545 = vmatprep.subr.bf16.mxu0 %v258
  %2546 = vmatpush1.bf16.msra.mxu0 %v257
  %2547 = vmatprep.subr.bf16.mxu0 %v262
  %2548 = vmatpush1.bf16.msra.mxu0 %v261
  %2549 = vmatprep.subr.bf16.mxu0 %v266
  %2550 = vmatpush1.bf16.msra.mxu0 %v265
  %2551 = vmatprep.subr.bf16.mxu0 0
  %2552 = vmatpush1.bf16.msra.mxu0 0
  %2553 = vmatprep.subr.bf16.mxu0 0
  %2554 = vmatpush1.bf16.msra.mxu0 0
  %2555 = vmatprep.subr.bf16.mxu0 0
  %2556 = vmatpush1.bf16.msra.mxu0 0
  %2557 = vmatprep.subr.bf16.mxu0 0
  %2558 = vmatpush1.bf16.msra.mxu0 0
  %2559 = vmatprep.subr.bf16.mxu0 0
  %2560 = vmatpush1.bf16.msra.mxu0 0
  %2561 = vmatprep.subr.bf16.mxu0 0
  %2562 = vmatpush1.bf16.msra.mxu0 0
  %2563 = vmatprep.subr.bf16.mxu0 0
  %2564 = vmatpush1.bf16.msra.mxu0 0
  %2565 = vmatprep.subr.bf16.mxu0 0
  %2566 = vmatpush1.bf16.msra.mxu0 0
  %2567 = vmatprep.mubr.bf16.mxu0 0
  %2568 = vmatmul.mubr.bf16.gmra.mrb[0].mxu0 %v2295
  %v2569 = vpop.f32.mrb[0].mxu0
  %v2570 = vadd.f32 0.0, %v2569
  %v2571 = vpop.f32.mrb[0].mxu0
  %v2572 = vadd.f32 0.0, %v2571
  %v2573 = vpop.f32.mrb[0].mxu0
  %v2574 = vpop.f32.mrb[0].mxu0
  %2575 = vdwg.mxu0
  %v2576 = vadd.f32 %v2490, %v2529
  %v2577 = vadd.f32 %v2491, %v2531
  %v2578 = vadd.f32 %v2492, %v2570
  %v2579 = vadd.f32 %v2493, %v2572
  %v2580 = vxor.u32 %v2576, 2147483648
  %v2581 = vmul.f32 %v2580, 1.442695
  %v2582 = vpow.pop %v2581
  %v2583 = vadd.f32 %v2582, 1.0
  %v2584 = vrcp.pop %v2583
  %v2585 = vmul.f32 1.0, %v2584
  %v2586 = vxor.u32 %v2577, 2147483648
  %v2587 = vmul.f32 %v2586, 1.442695
  %v2588 = vpow.pop %v2587
  %v2589 = vadd.f32 %v2588, 1.0
  %v2590 = vrcp.pop %v2589
  %v2591 = vmul.f32 1.0, %v2590
  %v2592 = vtanh.pop %v2578
  %v2593 = vxor.u32 %v2579, 2147483648
  %v2594 = vmul.f32 %v2593, 1.442695
  %v2595 = vpow.pop %v2594
  %v2596 = vadd.f32 %v2595, 1.0
  %v2597 = vrcp.pop %v2596
  %v2598 = vmul.f32 1.0, %v2597
  %v2599 = vmul.f32 %v2591, %v2292
  %v2600 = vmul.f32 %v2585, %v2592
  %v2601 = vadd.f32 %v2599, %v2600
  %v2602 = vtanh.pop %v2601
  %v2603 = vmul.f32 %v2598, %v2602
  %v2604 = vpack.c.bf16 %v2603, %v2603
  %v2605 = vpack.c.bf16 %v2488, %v2488
  %2606 = vmatprep.subr.bf16.mxu0 %v508
  %2607 = vmatpush1.bf16.msra.mxu0 %v507
  %2608 = vmatprep.subr.bf16.mxu0 %v512
  %2609 = vmatpush1.bf16.msra.mxu0 %v511
  %2610 = vmatprep.subr.bf16.mxu0 %v516
  %2611 = vmatpush1.bf16.msra.mxu0 %v515
  %2612 = vmatprep.subr.bf16.mxu0 %v520
  %2613 = vmatpush1.bf16.msra.mxu0 %v519
  %2614 = vmatprep.subr.bf16.mxu0 %v524
  %2615 = vmatpush1.bf16.msra.mxu0 %v523
  %2616 = vmatprep.subr.bf16.mxu0 %v528
  %2617 = vmatpush1.bf16.msra.mxu0 %v527
  %2618 = vmatprep.subr.bf16.mxu0 %v532
  %2619 = vmatpush1.bf16.msra.mxu0 %v531
  %2620 = vmatprep.subr.bf16.mxu0 %v536
  %2621 = vmatpush1.bf16.msra.mxu0 %v535
  %2622 = vmatprep.subr.bf16.mxu0 0
  %2623 = vmatpush1.bf16.msra.mxu0 0
  %2624 = vmatprep.subr.bf16.mxu0 0
  %2625 = vmatpush1.bf16.msra.mxu0 0
  %2626 = vmatprep.subr.bf16.mxu0 0
  %2627 = vmatpush1.bf16.msra.mxu0 0
  %2628 = vmatprep.subr.bf16.mxu0 0
  %2629 = vmatpush1.bf16.msra.mxu0 0
  %2630 = vmatprep.subr.bf16.mxu0 0
  %2631 = vmatpush1.bf16.msra.mxu0 0
  %2632 = vmatprep.subr.bf16.mxu0 0
  %2633 = vmatpush1.bf16.msra.mxu0 0
  %2634 = vmatprep.subr.bf16.mxu0 0
  %2635 = vmatpush1.bf16.msra.mxu0 0
  %2636 = vmatprep.subr.bf16.mxu0 0
  %2637 = vmatpush1.bf16.msra.mxu0 0
  %2638 = vmatprep.mubr.bf16.mxu0 0
  %2639 = vmatmul.mubr.bf16.gmra.mrb[0].mxu0 %v2605
  %v2640 = vpop.f32.mrb[0].mxu0
  %v2641 = vadd.f32 0.0, %v2640
  %v2642 = vpop.f32.mrb[0].mxu0
  %v2643 = vadd.f32 0.0, %v2642
  %v2644 = vpop.f32.mrb[0].mxu0
  %v2645 = vpop.f32.mrb[0].mxu0
  %2646 = vdwg.mxu0
  %2647 = vmatprep.subr.bf16.mxu0 %v510
  %2648 = vmatpush1.bf16.msra.mxu0 %v509
  %2649 = vmatprep.subr.bf16.mxu0 %v514
  %2650 = vmatpush1.bf16.msra.mxu0 %v513
  %2651 = vmatprep.subr.bf16.mxu0 %v518
  %2652 = vmatpush1.bf16.msra.mxu0 %v517
  %2653 = vmatprep.subr.bf16.mxu0 %v522
  %2654 = vmatpush1.bf16.msra.mxu0 %v521
  %2655 = vmatprep.subr.bf16.mxu0 %v526
  %2656 = vmatpush1.bf16.msra.mxu0 %v525
  %2657 = vmatprep.subr.bf16.mxu0 %v530
  %2658 = vmatpush1.bf16.msra.mxu0 %v529
  %2659 = vmatprep.subr.bf16.mxu0 %v534
  %2660 = vmatpush1.bf16.msra.mxu0 %v533
  %2661 = vmatprep.subr.bf16.mxu0 %v538
  %2662 = vmatpush1.bf16.msra.mxu0 %v537
  %2663 = vmatprep.subr.bf16.mxu0 0
  %2664 = vmatpush1.bf16.msra.mxu0 0
  %2665 = vmatprep.subr.bf16.mxu0 0
  %2666 = vmatpush1.bf16.msra.mxu0 0
  %2667 = vmatprep.subr.bf16.mxu0 0
  %2668 = vmatpush1.bf16.msra.mxu0 0
  %2669 = vmatprep.subr.bf16.mxu0 0
  %2670 = vmatpush1.bf16.msra.mxu0 0
  %2671 = vmatprep.subr.bf16.mxu0 0
  %2672 = vmatpush1.bf16.msra.mxu0 0
  %2673 = vmatprep.subr.bf16.mxu0 0
  %2674 = vmatpush1.bf16.msra.mxu0 0
  %2675 = vmatprep.subr.bf16.mxu0 0
  %2676 = vmatpush1.bf16.msra.mxu0 0
  %2677 = vmatprep.subr.bf16.mxu0 0
  %2678 = vmatpush1.bf16.msra.mxu0 0
  %2679 = vmatprep.mubr.bf16.mxu0 0
  %2680 = vmatmul.mubr.bf16.gmra.mrb[0].mxu0 %v2605
  %v2681 = vpop.f32.mrb[0].mxu0
  %v2682 = vadd.f32 0.0, %v2681
  %v2683 = vpop.f32.mrb[0].mxu0
  %v2684 = vadd.f32 0.0, %v2683
  %v2685 = vpop.f32.mrb[0].mxu0
  %v2686 = vpop.f32.mrb[0].mxu0
  %2687 = vdwg.mxu0
  %2688 = vmatprep.subr.bf16.mxu0 %v750
  %2689 = vmatpush1.bf16.msra.mxu0 %v749
  %2690 = vmatprep.subr.bf16.mxu0 %v754
  %2691 = vmatpush1.bf16.msra.mxu0 %v753
  %2692 = vmatprep.subr.bf16.mxu0 %v758
  %2693 = vmatpush1.bf16.msra.mxu0 %v757
  %2694 = vmatprep.subr.bf16.mxu0 %v762
  %2695 = vmatpush1.bf16.msra.mxu0 %v761
  %2696 = vmatprep.subr.bf16.mxu0 %v766
  %2697 = vmatpush1.bf16.msra.mxu0 %v765
  %2698 = vmatprep.subr.bf16.mxu0 %v770
  %2699 = vmatpush1.bf16.msra.mxu0 %v769
  %2700 = vmatprep.subr.bf16.mxu0 %v774
  %2701 = vmatpush1.bf16.msra.mxu0 %v773
  %2702 = vmatprep.subr.bf16.mxu0 %v778
  %2703 = vmatpush1.bf16.msra.mxu0 %v777
  %2704 = vmatprep.subr.bf16.mxu0 0
  %2705 = vmatpush1.bf16.msra.mxu0 0
  %2706 = vmatprep.subr.bf16.mxu0 0
  %2707 = vmatpush1.bf16.msra.mxu0 0
  %2708 = vmatprep.subr.bf16.mxu0 0
  %2709 = vmatpush1.bf16.msra.mxu0 0
  %2710 = vmatprep.subr.bf16.mxu0 0
  %2711 = vmatpush1.bf16.msra.mxu0 0
  %2712 = vmatprep.subr.bf16.mxu0 0
  %2713 = vmatpush1.bf16.msra.mxu0 0
  %2714 = vmatprep.subr.bf16.mxu0 0
  %2715 = vmatpush1.bf16.msra.mxu0 0
  %2716 = vmatprep.subr.bf16.mxu0 0
  %2717 = vmatpush1.bf16.msra.mxu0 0
  %2718 = vmatprep.subr.bf16.mxu0 0
  %2719 = vmatpush1.bf16.msra.mxu0 0
  %2720 = vmatprep.mubr.bf16.mxu0 0
  %2721 = vmatmul.mubr.bf16.gmra.mrb[0].mxu0 %v2604
  %v2722 = vpop.f32.mrb[0].mxu0
  %v2723 = vadd.f32 %v2641, %v2722
  %v2724 = vpop.f32.mrb[0].mxu0
  %v2725 = vadd.f32 %v2643, %v2724
  %v2726 = vpop.f32.mrb[0].mxu0
  %v2727 = vpop.f32.mrb[0].mxu0
  %2728 = vdwg.mxu0
  %2729 = vmatprep.subr.bf16.mxu0 %v752
  %2730 = vmatpush1.bf16.msra.mxu0 %v751
  %2731 = vmatprep.subr.bf16.mxu0 %v756
  %2732 = vmatpush1.bf16.msra.mxu0 %v755
  %2733 = vmatprep.subr.bf16.mxu0 %v760
  %2734 = vmatpush1.bf16.msra.mxu0 %v759
  %2735 = vmatprep.subr.bf16.mxu0 %v764
  %2736 = vmatpush1.bf16.msra.mxu0 %v763
  %2737 = vmatprep.subr.bf16.mxu0 %v768
  %2738 = vmatpush1.bf16.msra.mxu0 %v767
  %2739 = vmatprep.subr.bf16.mxu0 %v772
  %2740 = vmatpush1.bf16.msra.mxu0 %v771
  %2741 = vmatprep.subr.bf16.mxu0 %v776
  %2742 = vmatpush1.bf16.msra.mxu0 %v775
  %2743 = vmatprep.subr.bf16.mxu0 %v780
  %2744 = vmatpush1.bf16.msra.mxu0 %v779
  %2745 = vmatprep.subr.bf16.mxu0 0
  %2746 = vmatpush1.bf16.msra.mxu0 0
  %2747 = vmatprep.subr.bf16.mxu0 0
  %2748 = vmatpush1.bf16.msra.mxu0 0
  %2749 = vmatprep.subr.bf16.mxu0 0
  %2750 = vmatpush1.bf16.msra.mxu0 0
  %2751 = vmatprep.subr.bf16.mxu0 0
  %2752 = vmatpush1.bf16.msra.mxu0 0
  %2753 = vmatprep.subr.bf16.mxu0 0
  %2754 = vmatpush1.bf16.msra.mxu0 0
  %2755 = vmatprep.subr.bf16.mxu0 0
  %2756 = vmatpush1.bf16.msra.mxu0 0
  %2757 = vmatprep.subr.bf16.mxu0 0
  %2758 = vmatpush1.bf16.msra.mxu0 0
  %2759 = vmatprep.subr.bf16.mxu0 0
  %2760 = vmatpush1.bf16.msra.mxu0 0
  %2761 = vmatprep.mubr.bf16.mxu0 0
  %2762 = vmatmul.mubr.bf16.gmra.mrb[0].mxu0 %v2604
  %v2763 = vpop.f32.mrb[0].mxu0
  %v2764 = vadd.f32 %v2682, %v2763
  %v2765 = vpop.f32.mrb[0].mxu0
  %v2766 = vadd.f32 %v2684, %v2765
  %v2767 = vpop.f32.mrb[0].mxu0
  %v2768 = vpop.f32.mrb[0].mxu0
  %2769 = vdwg.mxu0
  %v2770 = vadd.f32 %v2723, %v899
  %v2771 = vadd.f32 %v2725, %v903
  %v2772 = vadd.f32 %v2764, %v907
  %v2773 = vadd.f32 %v2766, %v911
  %v2774 = vxor.u32 %v2770, 2147483648
  %v2775 = vmul.f32 %v2774, 1.442695
  %v2776 = vpow.pop %v2775
  %v2777 = vadd.f32 %v2776, 1.0
  %v2778 = vrcp.pop %v2777
  %v2779 = vmul.f32 1.0, %v2778
  %v2780 = vxor.u32 %v2771, 2147483648
  %v2781 = vmul.f32 %v2780, 1.442695
  %v2782 = vpow.pop %v2781
  %v2783 = vadd.f32 %v2782, 1.0
  %v2784 = vrcp.pop %v2783
  %v2785 = vmul.f32 1.0, %v2784
  %v2786 = vtanh.pop %v2772
  %v2787 = vxor.u32 %v2773, 2147483648
  %v2788 = vmul.f32 %v2787, 1.442695
  %v2789 = vpow.pop %v2788
  %v2790 = vadd.f32 %v2789, 1.0
  %v2791 = vrcp.pop %v2790
  %v2792 = vmul.f32 1.0, %v2791
  %v2793 = vmul.f32 %v2785, %v2486
  %v2794 = vmul.f32 %v2779, %v2786
  %v2795 = vadd.f32 %v2793, %v2794
  %v2796 = vtanh.pop %v2795
  %v2797 = vmul.f32 %v2792, %v2796
  %s2798 = scalar_lea.vmem %s0, 224
  %v2799 = vld [vmem:[%s2798] sm:$0xff]
  %v2800 = vld [vmem:[%s2798 + $0x8] sm:$0xff]
  %v2801 = vld [vmem:[%s2798 + $0x10] sm:$0xff]
  %v2802 = vld [vmem:[%s2798 + $0x18] sm:$0xff]
  %2803 = vmatprep.subr.bf16.mxu0 %v236
  %2804 = vmatpush1.bf16.msra.mxu0 %v235
  %2805 = vmatprep.subr.bf16.mxu0 %v240
  %2806 = vmatpush1.bf16.msra.mxu0 %v239
  %2807 = vmatprep.subr.bf16.mxu0 %v244
  %2808 = vmatpush1.bf16.msra.mxu0 %v243
  %2809 = vmatprep.subr.bf16.mxu0 %v248
  %2810 = vmatpush1.bf16.msra.mxu0 %v247
  %2811 = vmatprep.subr.bf16.mxu0 %v252
  %2812 = vmatpush1.bf16.msra.mxu0 %v251
  %2813 = vmatprep.subr.bf16.mxu0 %v256
  %2814 = vmatpush1.bf16.msra.mxu0 %v255
  %2815 = vmatprep.subr.bf16.mxu0 %v260
  %2816 = vmatpush1.bf16.msra.mxu0 %v259
  %2817 = vmatprep.subr.bf16.mxu0 %v264
  %2818 = vmatpush1.bf16.msra.mxu0 %v263
  %2819 = vmatprep.subr.bf16.mxu0 0
  %2820 = vmatpush1.bf16.msra.mxu0 0
  %2821 = vmatprep.subr.bf16.mxu0 0
  %2822 = vmatpush1.bf16.msra.mxu0 0
  %2823 = vmatprep.subr.bf16.mxu0 0
  %2824 = vmatpush1.bf16.msra.mxu0 0
  %2825 = vmatprep.subr.bf16.mxu0 0
  %2826 = vmatpush1.bf16.msra.mxu0 0
  %2827 = vmatprep.subr.bf16.mxu0 0
  %2828 = vmatpush1.bf16.msra.mxu0 0
  %2829 = vmatprep.subr.bf16.mxu0 0
  %2830 = vmatpush1.bf16.msra.mxu0 0
  %2831 = vmatprep.subr.bf16.mxu0 0
  %2832 = vmatpush1.bf16.msra.mxu0 0
  %2833 = vmatprep.subr.bf16.mxu0 0
  %2834 = vmatpush1.bf16.msra.mxu0 0
  %2835 = vmatprep.mubr.bf16.mxu0 0
  %2836 = vmatmul.mubr.bf16.gmra.mrb[0].mxu0 %v2604
  %v2837 = vpop.f32.mrb[0].mxu0
  %v2838 = vadd.f32 0.0, %v2837
  %v2839 = vpop.f32.mrb[0].mxu0
  %v2840 = vadd.f32 0.0, %v2839
  %v2841 = vpop.f32.mrb[0].mxu0
  %v2842 = vpop.f32.mrb[0].mxu0
  %2843 = vdwg.mxu0
  %2844 = vmatprep.subr.bf16.mxu0 %v238
  %2845 = vmatpush1.bf16.msra.mxu0 %v237
  %2846 = vmatprep.subr.bf16.mxu0 %v242
  %2847 = vmatpush1.bf16.msra.mxu0 %v241
  %2848 = vmatprep.subr.bf16.mxu0 %v246
  %2849 = vmatpush1.bf16.msra.mxu0 %v245
  %2850 = vmatprep.subr.bf16.mxu0 %v250
  %2851 = vmatpush1.bf16.msra.mxu0 %v249
  %2852 = vmatprep.subr.bf16.mxu0 %v254
  %2853 = vmatpush1.bf16.msra.mxu0 %v253
  %2854 = vmatprep.subr.bf16.mxu0 %v258
  %2855 = vmatpush1.bf16.msra.mxu0 %v257
  %2856 = vmatprep.subr.bf16.mxu0 %v262
  %2857 = vmatpush1.bf16.msra.mxu0 %v261
  %2858 = vmatprep.subr.bf16.mxu0 %v266
  %2859 = vmatpush1.bf16.msra.mxu0 %v265
  %2860 = vmatprep.subr.bf16.mxu0 0
  %2861 = vmatpush1.bf16.msra.mxu0 0
  %2862 = vmatprep.subr.bf16.mxu0 0
  %2863 = vmatpush1.bf16.msra.mxu0 0
  %2864 = vmatprep.subr.bf16.mxu0 0
  %2865 = vmatpush1.bf16.msra.mxu0 0
  %2866 = vmatprep.subr.bf16.mxu0 0
  %2867 = vmatpush1.bf16.msra.mxu0 0
  %2868 = vmatprep.subr.bf16.mxu0 0
  %2869 = vmatpush1.bf16.msra.mxu0 0
  %2870 = vmatprep.subr.bf16.mxu0 0
  %2871 = vmatpush1.bf16.msra.mxu0 0
  %2872 = vmatprep.subr.bf16.mxu0 0
  %2873 = vmatpush1.bf16.msra.mxu0 0
  %2874 = vmatprep.subr.bf16.mxu0 0
  %2875 = vmatpush1.bf16.msra.mxu0 0
  %2876 = vmatprep.mubr.bf16.mxu0 0
  %2877 = vmatmul.mubr.bf16.gmra.mrb[0].mxu0 %v2604
  %v2878 = vpop.f32.mrb[0].mxu0
  %v2879 = vadd.f32 0.0, %v2878
  %v2880 = vpop.f32.mrb[0].mxu0
  %v2881 = vadd.f32 0.0, %v2880
  %v2882 = vpop.f32.mrb[0].mxu0
  %v2883 = vpop.f32.mrb[0].mxu0
  %2884 = vdwg.mxu0
  %v2885 = vadd.f32 %v2799, %v2838
  %v2886 = vadd.f32 %v2800, %v2840
  %v2887 = vadd.f32 %v2801, %v2879
  %v2888 = vadd.f32 %v2802, %v2881
  %v2889 = vxor.u32 %v2885, 2147483648
  %v2890 = vmul.f32 %v2889, 1.442695
  %v2891 = vpow.pop %v2890
  %v2892 = vadd.f32 %v2891, 1.0
  %v2893 = vrcp.pop %v2892
  %v2894 = vmul.f32 1.0, %v2893
  %v2895 = vxor.u32 %v2886, 2147483648
  %v2896 = vmul.f32 %v2895, 1.442695
  %v2897 = vpow.pop %v2896
  %v2898 = vadd.f32 %v2897, 1.0
  %v2899 = vrcp.pop %v2898
  %v2900 = vmul.f32 1.0, %v2899
  %v2901 = vtanh.pop %v2887
  %v2902 = vxor.u32 %v2888, 2147483648
  %v2903 = vmul.f32 %v2902, 1.442695
  %v2904 = vpow.pop %v2903
  %v2905 = vadd.f32 %v2904, 1.0
  %v2906 = vrcp.pop %v2905
  %v2907 = vmul.f32 1.0, %v2906
  %v2908 = vmul.f32 %v2900, %v2601
  %v2909 = vmul.f32 %v2894, %v2901
  %v2910 = vadd.f32 %v2908, %v2909
  %v2911 = vtanh.pop %v2910
  %v2912 = vmul.f32 %v2907, %v2911
  %v2913 = vpack.c.bf16 %v2912, %v2912
  %v2914 = vpack.c.bf16 %v2797, %v2797
  %2915 = vmatprep.subr.bf16.mxu0 %v508
  %2916 = vmatpush1.bf16.msra.mxu0 %v507
  %2917 = vmatprep.subr.bf16.mxu0 %v512
  %2918 = vmatpush1.bf16.msra.mxu0 %v511
  %2919 = vmatprep.subr.bf16.mxu0 %v516
  %2920 = vmatpush1.bf16.msra.mxu0 %v515
  %2921 = vmatprep.subr.bf16.mxu0 %v520
  %2922 = vmatpush1.bf16.msra.mxu0 %v519
  %2923 = vmatprep.subr.bf16.mxu0 %v524
  %2924 = vmatpush1.bf16.msra.mxu0 %v523
  %2925 = vmatprep.subr.bf16.mxu0 %v528
  %2926 = vmatpush1.bf16.msra.mxu0 %v527
  %2927 = vmatprep.subr.bf16.mxu0 %v532
  %2928 = vmatpush1.bf16.msra.mxu0 %v531
  %2929 = vmatprep.subr.bf16.mxu0 %v536
  %2930 = vmatpush1.bf16.msra.mxu0 %v535
  %2931 = vmatprep.subr.bf16.mxu0 0
  %2932 = vmatpush1.bf16.msra.mxu0 0
  %2933 = vmatprep.subr.bf16.mxu0 0
  %2934 = vmatpush1.bf16.msra.mxu0 0
  %2935 = vmatprep.subr.bf16.mxu0 0
  %2936 = vmatpush1.bf16.msra.mxu0 0
  %2937 = vmatprep.subr.bf16.mxu0 0
  %2938 = vmatpush1.bf16.msra.mxu0 0
  %2939 = vmatprep.subr.bf16.mxu0 0
  %2940 = vmatpush1.bf16.msra.mxu0 0
  %2941 = vmatprep.subr.bf16.mxu0 0
  %2942 = vmatpush1.bf16.msra.mxu0 0
  %2943 = vmatprep.subr.bf16.mxu0 0
  %2944 = vmatpush1.bf16.msra.mxu0 0
  %2945 = vmatprep.subr.bf16.mxu0 0
  %2946 = vmatpush1.bf16.msra.mxu0 0
  %2947 = vmatprep.mubr.bf16.mxu0 0
  %2948 = vmatmul.mubr.bf16.gmra.mrb[0].mxu0 %v2914
  %v2949 = vpop.f32.mrb[0].mxu0
  %v2950 = vadd.f32 0.0, %v2949
  %v2951 = vpop.f32.mrb[0].mxu0
  %v2952 = vadd.f32 0.0, %v2951
  %v2953 = vpop.f32.mrb[0].mxu0
  %v2954 = vpop.f32.mrb[0].mxu0
  %2955 = vdwg.mxu0
  %2956 = vmatprep.subr.bf16.mxu0 %v510
  %2957 = vmatpush1.bf16.msra.mxu0 %v509
  %2958 = vmatprep.subr.bf16.mxu0 %v514
  %2959 = vmatpush1.bf16.msra.mxu0 %v513
  %2960 = vmatprep.subr.bf16.mxu0 %v518
  %2961 = vmatpush1.bf16.msra.mxu0 %v517
  %2962 = vmatprep.subr.bf16.mxu0 %v522
  %2963 = vmatpush1.bf16.msra.mxu0 %v521
  %2964 = vmatprep.subr.bf16.mxu0 %v526
  %2965 = vmatpush1.bf16.msra.mxu0 %v525
  %2966 = vmatprep.subr.bf16.mxu0 %v530
  %2967 = vmatpush1.bf16.msra.mxu0 %v529
  %2968 = vmatprep.subr.bf16.mxu0 %v534
  %2969 = vmatpush1.bf16.msra.mxu0 %v533
  %2970 = vmatprep.subr.bf16.mxu0 %v538
  %2971 = vmatpush1.bf16.msra.mxu0 %v537
  %2972 = vmatprep.subr.bf16.mxu0 0
  %2973 = vmatpush1.bf16.msra.mxu0 0
  %2974 = vmatprep.subr.bf16.mxu0 0
  %2975 = vmatpush1.bf16.msra.mxu0 0
  %2976 = vmatprep.subr.bf16.mxu0 0
  %2977 = vmatpush1.bf16.msra.mxu0 0
  %2978 = vmatprep.subr.bf16.mxu0 0
  %2979 = vmatpush1.bf16.msra.mxu0 0
  %2980 = vmatprep.subr.bf16.mxu0 0
  %2981 = vmatpush1.bf16.msra.mxu0 0
  %2982 = vmatprep.subr.bf16.mxu0 0
  %2983 = vmatpush1.bf16.msra.mxu0 0
  %2984 = vmatprep.subr.bf16.mxu0 0
  %2985 = vmatpush1.bf16.msra.mxu0 0
  %2986 = vmatprep.subr.bf16.mxu0 0
  %2987 = vmatpush1.bf16.msra.mxu0 0
  %2988 = vmatprep.mubr.bf16.mxu0 0
  %2989 = vmatmul.mubr.bf16.gmra.mrb[0].mxu0 %v2914
  %v2990 = vpop.f32.mrb[0].mxu0
  %v2991 = vadd.f32 0.0, %v2990
  %v2992 = vpop.f32.mrb[0].mxu0
  %v2993 = vadd.f32 0.0, %v2992
  %v2994 = vpop.f32.mrb[0].mxu0
  %v2995 = vpop.f32.mrb[0].mxu0
  %2996 = vdwg.mxu0
  %2997 = vmatprep.subr.bf16.mxu0 %v750
  %2998 = vmatpush1.bf16.msra.mxu0 %v749
  %2999 = vmatprep.subr.bf16.mxu0 %v754
  %3000 = vmatpush1.bf16.msra.mxu0 %v753
  %3001 = vmatprep.subr.bf16.mxu0 %v758
  %3002 = vmatpush1.bf16.msra.mxu0 %v757
  %3003 = vmatprep.subr.bf16.mxu0 %v762
  %3004 = vmatpush1.bf16.msra.mxu0 %v761
  %3005 = vmatprep.subr.bf16.mxu0 %v766
  %3006 = vmatpush1.bf16.msra.mxu0 %v765
  %3007 = vmatprep.subr.bf16.mxu0 %v770
  %3008 = vmatpush1.bf16.msra.mxu0 %v769
  %3009 = vmatprep.subr.bf16.mxu0 %v774
  %3010 = vmatpush1.bf16.msra.mxu0 %v773
  %3011 = vmatprep.subr.bf16.mxu0 %v778
  %3012 = vmatpush1.bf16.msra.mxu0 %v777
  %3013 = vmatprep.subr.bf16.mxu0 0
  %3014 = vmatpush1.bf16.msra.mxu0 0
  %3015 = vmatprep.subr.bf16.mxu0 0
  %3016 = vmatpush1.bf16.msra.mxu0 0
  %3017 = vmatprep.subr.bf16.mxu0 0
  %3018 = vmatpush1.bf16.msra.mxu0 0
  %3019 = vmatprep.subr.bf16.mxu0 0
  %3020 = vmatpush1.bf16.msra.mxu0 0
  %3021 = vmatprep.subr.bf16.mxu0 0
  %3022 = vmatpush1.bf16.msra.mxu0 0
  %3023 = vmatprep.subr.bf16.mxu0 0
  %3024 = vmatpush1.bf16.msra.mxu0 0
  %3025 = vmatprep.subr.bf16.mxu0 0
  %3026 = vmatpush1.bf16.msra.mxu0 0
  %3027 = vmatprep.subr.bf16.mxu0 0
  %3028 = vmatpush1.bf16.msra.mxu0 0
  %3029 = vmatprep.mubr.bf16.mxu0 0
  %3030 = vmatmul.mubr.bf16.gmra.mrb[0].mxu0 %v2913
  %v3031 = vpop.f32.mrb[0].mxu0
  %v3032 = vadd.f32 %v2950, %v3031
  %v3033 = vpop.f32.mrb[0].mxu0
  %v3034 = vadd.f32 %v2952, %v3033
  %v3035 = vpop.f32.mrb[0].mxu0
  %v3036 = vpop.f32.mrb[0].mxu0
  %3037 = vdwg.mxu0
  %3038 = vmatprep.subr.bf16.mxu0 %v752
  %3039 = vmatpush1.bf16.msra.mxu0 %v751
  %3040 = vmatprep.subr.bf16.mxu0 %v756
  %3041 = vmatpush1.bf16.msra.mxu0 %v755
  %3042 = vmatprep.subr.bf16.mxu0 %v760
  %3043 = vmatpush1.bf16.msra.mxu0 %v759
  %3044 = vmatprep.subr.bf16.mxu0 %v764
  %3045 = vmatpush1.bf16.msra.mxu0 %v763
  %3046 = vmatprep.subr.bf16.mxu0 %v768
  %3047 = vmatpush1.bf16.msra.mxu0 %v767
  %3048 = vmatprep.subr.bf16.mxu0 %v772
  %3049 = vmatpush1.bf16.msra.mxu0 %v771
  %3050 = vmatprep.subr.bf16.mxu0 %v776
  %3051 = vmatpush1.bf16.msra.mxu0 %v775
  %3052 = vmatprep.subr.bf16.mxu0 %v780
  %3053 = vmatpush1.bf16.msra.mxu0 %v779
  %3054 = vmatprep.subr.bf16.mxu0 0
  %3055 = vmatpush1.bf16.msra.mxu0 0
  %3056 = vmatprep.subr.bf16.mxu0 0
  %3057 = vmatpush1.bf16.msra.mxu0 0
  %3058 = vmatprep.subr.bf16.mxu0 0
  %3059 = vmatpush1.bf16.msra.mxu0 0
  %3060 = vmatprep.subr.bf16.mxu0 0
  %3061 = vmatpush1.bf16.msra.mxu0 0
  %3062 = vmatprep.subr.bf16.mxu0 0
  %3063 = vmatpush1.bf16.msra.mxu0 0
  %3064 = vmatprep.subr.bf16.mxu0 0
  %3065 = vmatpush1.bf16.msra.mxu0 0
  %3066 = vmatprep.subr.bf16.mxu0 0
  %3067 = vmatpush1.bf16.msra.mxu0 0
  %3068 = vmatprep.subr.bf16.mxu0 0
  %3069 = vmatpush1.bf16.msra.mxu0 0
  %3070 = vmatprep.mubr.bf16.mxu0 0
  %3071 = vmatmul.mubr.bf16.gmra.mrb[0].mxu0 %v2913
  %v3072 = vpop.f32.mrb[0].mxu0
  %v3073 = vadd.f32 %v2991, %v3072
  %v3074 = vpop.f32.mrb[0].mxu0
  %v3075 = vadd.f32 %v2993, %v3074
  %v3076 = vpop.f32.mrb[0].mxu0
  %v3077 = vpop.f32.mrb[0].mxu0
  %3078 = vdwg.mxu0
  %v3079 = vadd.f32 %v3032, %v899
  %v3080 = vadd.f32 %v3034, %v903
  %v3081 = vadd.f32 %v3073, %v907
  %v3082 = vadd.f32 %v3075, %v911
  %v3083 = vxor.u32 %v3079, 2147483648
  %v3084 = vmul.f32 %v3083, 1.442695
  %v3085 = vpow.pop %v3084
  %v3086 = vadd.f32 %v3085, 1.0
  %v3087 = vrcp.pop %v3086
  %v3088 = vmul.f32 1.0, %v3087
  %v3089 = vxor.u32 %v3080, 2147483648
  %v3090 = vmul.f32 %v3089, 1.442695
  %v3091 = vpow.pop %v3090
  %v3092 = vadd.f32 %v3091, 1.0
  %v3093 = vrcp.pop %v3092
  %v3094 = vmul.f32 1.0, %v3093
  %v3095 = vtanh.pop %v3081
  %v3096 = vxor.u32 %v3082, 2147483648
  %v3097 = vmul.f32 %v3096, 1.442695
  %v3098 = vpow.pop %v3097
  %v3099 = vadd.f32 %v3098, 1.0
  %v3100 = vrcp.pop %v3099
  %v3101 = vmul.f32 1.0, %v3100
  %v3102 = vmul.f32 %v3094, %v2795
  %v3103 = vmul.f32 %v3088, %v3095
  %v3104 = vadd.f32 %v3102, %v3103
  %v3105 = vtanh.pop %v3104
  %v3106 = vmul.f32 %v3101, %v3105
  %3107 = vst [vmem:[%s5] sm:$0xff] %v2912
  %3108 = vst [vmem:[%s6] sm:$0xff] %v2910
  %3109 = vst [vmem:[%s7] sm:$0xff] %v3106
  %3110 = vst [vmem:[%s8] sm:$0xff] %v3104
  // Predicated region
  $region26: #{seq2seq_forward.2} parent=0 // pred_check
    _
  $region27: #{seq2seq_forward.2} parent=0 // pred_check_branch
    %3112 = sbr.rel (0) target = $region29
  $region28: #{seq2seq_forward.2} parent=0 // pred_region
    _
  $region29: #{seq2seq_forward.2} parent=0 // pred_fallthru
    _
  // Predicated region
  $region30: #{seq2seq_forward.2} parent=0 // pred_check
    _
  $region31: #{seq2seq_forward.2} parent=0 // pred_check_branch
    %3114 = sbr.rel (0) target = $region33
  $region32: #{seq2seq_forward.2} parent=0 // pred_region
    _
  $region33: #{seq2seq_forward.2} parent=0 // pred_fallthru
    _
  // Predicated region
  $region34: #{seq2seq_forward.2} parent=0 // pred_check
    _
  $region35: #{seq2seq_forward.2} parent=0 // pred_check_branch
    %3116 = sbr.rel (0) target = $region37
  $region36: #{seq2seq_forward.2} parent=0 // pred_region
    _
  $region37: #{seq2seq_forward.2} parent=0 // pred_fallthru
    _
  // Predicated region
  $region38: #{seq2seq_forward.2} parent=0 // pred_check
    _
  $region39: #{seq2seq_forward.2} parent=0 // pred_check_branch
    %3118 = sbr.rel (0) target = $region41
  $region40: #{seq2seq_forward.2} parent=0 // pred_region
    _
  $region41: #{seq2seq_forward.2} parent=0 // pred_fallthru
    _
  // Predicated region
  $region42: #{seq2seq_forward.2} parent=0 // pred_check
    _
  $region43: #{seq2seq_forward.2} parent=0 // pred_check_branch
    %3120 = sbr.rel (0) target = $region45
  $region44: #{seq2seq_forward.2} parent=0 // pred_region
    _
  $region45: #{seq2seq_forward.2} parent=0 // pred_fallthru
    _
  // Predicated region
  $region46: #{seq2seq_forward.2} parent=0 // pred_check
    _
  $region47: #{seq2seq_forward.2} parent=0 // pred_check_branch
    %3122 = sbr.rel (0) target = $region49
  $region48: #{seq2seq_forward.2} parent=0 // pred_region
    _
  $region49: #{seq2seq_forward.2} parent=0 // pred_fallthru
    _
  // Predicated region
  $region50: #{seq2seq_forward.2} parent=0 // pred_check
    _
  $region51: #{seq2seq_forward.2} parent=0 // pred_check_branch
    %3124 = sbr.rel (0) target = $region53
  $region52: #{seq2seq_forward.2} parent=0 // pred_region
    _
  $region53: #{seq2seq_forward.2} parent=0 // pred_fallthru
    _
  // Predicated region
  $region54: #{seq2seq_forward.2} parent=0 // pred_check
    _
  $region55: #{seq2seq_forward.2} parent=0 // pred_check_branch
    %3126 = sbr.rel (0) target = $region57
  $region56: #{seq2seq_forward.2} parent=0 // pred_region
    _
  $region57: #{seq2seq_forward.2} parent=0 // pred_fallthru
    _

</llo_original>
